<compile_context>
chip_gen: v7x
topology: tpu7x:2x2x1
jax: 0.10.0
libtpu: 0.0.40
codegen_flags: <defaults>
</compile_context>

<pallas_src>
import math
from functools import partial

import jax
import jax.numpy as jnp
from jax import lax
from jax.experimental import pallas as pl
from jax.experimental.pallas import tpu as pltpu


def _vmem_limit_bytes():
    """Per-generation VMEM limit: physical capacity minus 16 MiB headroom."""
    try:
        cap = int(pltpu.get_tpu_info().vmem_capacity_bytes)
    except Exception:
        cap = 64 * 1024 * 1024          # conservative (v7x-sized) fallback
    return max(32 * 1024 * 1024, cap - 16 * 1024 * 1024)


def _attn_kernel(hs_ref, wq_ref, bq_ref, wkvv2_ref, bkvv2_ref, mask_ref,
                 posw_ref, negw_ref, out_ref, k_ref, vv2_ref,
                 *, num_heads, head_dim, q_tile, dipole, transpose_k):
    H = num_heads * head_dim
    qi = pl.program_id(1)

    # --- K | V | V2 projection: one full-width (S,H)x(H,3H) matmul, computed
    # once per batch element (qi == 0) and cached in VMEM scratch across the
    # query-tile axis.  K is stored pre-transposed when the layout allows so
    # the per-head score matmul never re-transposes it. ----------------------
    @pl.when(qi == 0)
    def _():
        xf = hs_ref[0]                                            # (S, H)
        kvv2 = (jnp.dot(xf, wkvv2_ref[...],
                        preferred_element_type=jnp.float32)
                + bkvv2_ref[...])                                 # (S, 3H)
        k = kvv2[:, 0:H]
        k_ref[...] = k.T if transpose_k else k                    # (H,S) or (S,H)
        vv2_ref[...] = kvv2[:, H:]                                # (S, 2H) = V | V2

    # --- Q projection for this query tile, sliced from the resident full-seq
    # block (no duplicated hidden_states input); 1/sqrt(d) folded in once. ---
    start = pl.multiple_of(qi * q_tile, q_tile)
    xq = hs_ref[0, pl.ds(start, q_tile), :]                       # (TQ, H)
    scale = 1.0 / math.sqrt(head_dim)
    q_all = (jnp.dot(xq, wq_ref[...], preferred_element_type=jnp.float32)
             + bq_ref[...]) * scale                               # (TQ, H)

    # Hoist the (1,S) -> (TQ,S) broadcasts out of the head loop (no CSE in JAX).
    mask_row = mask_ref[0]                                        # (1, S) additive
    S = mask_row.shape[-1]
    mask_b = jnp.broadcast_to(mask_row, (q_tile, S))
    if dipole:
        neg_zero_b = mask_b < -1.0

    # qd,kd -> qk : contract last dims (only used for the non-transposed K path)
    dnums = (((1,), (1,)), ((), ()))

    for h in range(num_heads):                                    # static, small body
        lo, hi = h * head_dim, (h + 1) * head_dim
        q = q_all[:, lo:hi]                                       # (TQ, d)
        v = vv2_ref[:, lo:hi]                                     # (S, d)
        if transpose_k:
            kt = k_ref[lo:hi, :]                                  # (d, S)
            scores = jnp.dot(q, kt, preferred_element_type=jnp.float32) + mask_b
        else:
            k = k_ref[:, lo:hi]                                   # (S, d)
            scores = lax.dot_general(q, k, dnums,
                                     preferred_element_type=jnp.float32) + mask_b

        if dipole:
            v2 = vv2_ref[:, H + lo:H + hi]                        # (S, d)
            attn = jnp.exp(scores)            # faithful to torch.exp (no max-sub)
            neg = 1.0 / (attn + 1e-6)
            neg = jnp.where(neg_zero_b, jnp.zeros_like(neg), neg)
            # Fold pos_w/neg_w into the row-sum reciprocals (O(TQ) divides),
            # then a plain multiply -- no extra (TQ,d) scaling after the dots.
            attn = attn * (posw_ref[0, h] / jnp.sum(attn, axis=-1, keepdims=True))
            neg = neg * (negw_ref[0, h] / jnp.sum(neg, axis=-1, keepdims=True))
            # self.dropout(...) is identity at inference time.
            ctx = (jnp.dot(attn, v, preferred_element_type=jnp.float32)
                   + jnp.dot(neg, v2, preferred_element_type=jnp.float32))
        else:
            m = jnp.max(scores, axis=-1, keepdims=True)
            p = jnp.exp(scores - m)
            probs = p * (1.0 / jnp.sum(p, axis=-1, keepdims=True))
            ctx = jnp.dot(probs, v, preferred_element_type=jnp.float32)

        # Write this head directly into its column range of the output block
        # (the out block is the lane-dense slab; HBM writeback is one full
        # (TQ, H) DMA by the pipeline).  Keeps only one head's ctx live.
        out_ref[0, :, lo:hi] = ctx.astype(out_ref.dtype)


def patched_bert_self_attention(hidden_states, attention_mask, params, *,
                                num_heads, dipole_attn, q_tile=None):
    B, S, H = hidden_states.shape
    head_dim = H // num_heads
    if q_tile is None:
        q_tile = 128

    # Pad the sequence to a multiple of q_tile (padded keys masked with -10000,
    # which is exact: exp(-1e4 + s) underflows to 0), instead of the
    # un-pipelined q_tile = S fallback.
    S_pad = q_tile * ((S + q_tile - 1) // q_tile)
    if S_pad != S:
        hidden_states = jnp.pad(hidden_states, ((0, 0), (0, S_pad - S), (0, 0)))
        attention_mask = jnp.pad(attention_mask, ((0, 0), (0, 0), (0, S_pad - S)),
                                 constant_values=-10000.0)
    n_qt = S_pad // q_tile

    # Fuse the K/V/V2 weights & biases wrapper-side into one full-width matmul.
    wkvv2 = jnp.concatenate([params["wk"], params["wv"], params["wv2"]], axis=1)  # (H, 3H)
    bkvv2 = jnp.concatenate([params["bk"], params["bv"], params["bv2"]], axis=1)  # (1, 3H)

    # Pre-transpose the cached K only when both dims are 128-aligned (the
    # realistic BERT shapes); tiny unaligned shapes keep the (S, H) layout.
    transpose_k = (S_pad % 128 == 0) and (H % 128 == 0)
    k_scratch_shape = (H, S_pad) if transpose_k else (S_pad, H)

    kernel = partial(_attn_kernel, num_heads=num_heads, head_dim=head_dim,
                     q_tile=q_tile, dipole=dipole_attn, transpose_k=transpose_k)

    vmem_limit = _vmem_limit_bytes()
    smem_spec = pl.BlockSpec(memory_space=pltpu.MemorySpace.SMEM)

    def build(weight_mode):
        const2 = lambda b, qi: (0, 0)

        def wspec(shape):
            if weight_mode is None:
                return pl.BlockSpec(shape, const2)
            return pl.BlockSpec(shape, const2, pipeline_mode=weight_mode)

        return pl.pallas_call(
            kernel,
            out_shape=jax.ShapeDtypeStruct((B, S_pad, H), hidden_states.dtype),
            grid=(B, n_qt),
            in_specs=[
                pl.BlockSpec((1, S_pad, H), lambda b, qi: (b, 0, 0)),   # x (full seq)
                wspec((H, H)),                                          # Wq
                wspec((1, H)),                                          # bq
                wspec((H, 3 * H)),                                      # Wk|Wv|Wv2
                wspec((1, 3 * H)),                                      # bk|bv|bv2
                pl.BlockSpec((1, 1, S_pad), lambda b, qi: (b, 0, 0)),   # additive mask
                smem_spec, smem_spec,                                   # pos_w, neg_w
            ],
            out_specs=pl.BlockSpec((1, q_tile, H), lambda b, qi: (b, qi, 0)),
            scratch_shapes=[pltpu.VMEM(k_scratch_shape, jnp.float32),   # cached K (maybe K^T)
                            pltpu.VMEM((S_pad, 2 * H), jnp.float32)],   # cached V | V2
            compiler_params=pltpu.CompilerParams(
                # qi must stay 'arbitrary': the KVV2 scratch is written at
                # qi == 0 and read on every subsequent query tile.
                dimension_semantics=("parallel", "arbitrary"),
                vmem_limit_bytes=vmem_limit),
        )

    args = (hidden_states, params["wq"], params["bq"], wkvv2, bkvv2,
            attention_mask, params["pos_w"], params["neg_w"])
    try:
        # Single-buffer the constant-index weight/bias blocks.
        out = build(pl.Buffered(1))(*args)
    except Exception:
        # TODO(synk): pl.Buffered(1) single-buffering rejected on this jax
        # build; fall back to default double-buffering.
        out = build(None)(*args)

    return out[:, :S, :] if S_pad != S else out


def reference(hidden_states, attention_mask, params, *, num_heads, dipole_attn):
    """Pure-JAX mirror of the PyTorch forward (eval mode), f32-precision matmuls."""
    B, S, H = hidden_states.shape
    d = H // num_heads
    pr = jax.lax.Precision.HIGHEST

    def proj(w, b):
        y = jnp.einsum("bsh,hk->bsk", hidden_states, w, precision=pr) + b[0]
        return y.reshape(B, S, num_heads, d).transpose(0, 2, 1, 3)   # (B, nH, S, d)

    q = proj(params["wq"], params["bq"])
    k = proj(params["wk"], params["bk"])
    v = proj(params["wv"], params["bv"])
    v2 = proj(params["wv2"], params["bv2"])

    scores = jnp.einsum("bhqd,bhkd->bhqk", q, k, precision=pr) / math.sqrt(d)
    mask4 = attention_mask[:, :, None, :]                           # (B,1,1,S)
    scores = scores + mask4

    if dipole_attn:
        attn = jnp.exp(scores)
        neg = 1.0 / (attn + 1e-6)
        neg = jnp.where(mask4 < -1.0, jnp.zeros_like(neg), neg)
        attn = attn / attn.sum(-1, keepdims=True)
        neg = neg / neg.sum(-1, keepdims=True)
        pw = params["pos_w"][0][None, :, None, None]
        nw = params["neg_w"][0][None, :, None, None]
        ctx = jnp.einsum("bhqk,bhkd->bhqd", attn, v, precision=pr) * pw \
            + jnp.einsum("bhqk,bhkd->bhqd", neg, v2, precision=pr) * nw
    else:
        probs = jax.nn.softmax(scores, axis=-1)
        ctx = jnp.einsum("bhqk,bhkd->bhqd", probs, v, precision=pr)

    return ctx.transpose(0, 2, 1, 3).reshape(B, S, H)


def make_params(key, hidden_size, num_heads):
    ks = jax.random.split(key, 8)
    s = 1.0 / math.sqrt(hidden_size)
    return {
        # nn.Linear weights stored pre-transposed as (in, out) so y = x @ W + b
        "wq": jax.random.normal(ks[0], (hidden_size, hidden_size), jnp.float32) * s,
        "bq": jax.random.normal(ks[1], (1, hidden_size), jnp.float32) * s,
        "wk": jax.random.normal(ks[2], (hidden_size, hidden_size), jnp.float32) * s,
        "bk": jax.random.normal(ks[3], (1, hidden_size), jnp.float32) * s,
        "wv": jax.random.normal(ks[4], (hidden_size, hidden_size), jnp.float32) * s,
        "bv": jax.random.normal(ks[5], (1, hidden_size), jnp.float32) * s,
        "wv2": jax.random.normal(ks[6], (hidden_size, hidden_size), jnp.float32) * s,
        "bv2": jax.random.normal(ks[7], (1, hidden_size), jnp.float32) * s,
        # module __init__ sets these to ones (shape (1, nH, 1, 1)); stored as (1, nH)
        "pos_w": jnp.ones((1, num_heads), jnp.float32),
        "neg_w": jnp.ones((1, num_heads), jnp.float32),
    }


if __name__ == "__main__":
    # TODO(synk): relative_key(_query) position embeddings and decoder KV-cache
    # concatenation are not exercised (config uses 'absolute', is_decoder=False).
    configs = [
        dict(B=2, S=8, H=32, nH=4),      # tiny; exercises the seq-padding path
        dict(B=2, S=256, H=128, nH=4),   # 128-aligned; exercises K^T cache + 2 query tiles
    ]

    key = jax.random.PRNGKey(0)
    ok = True
    for cfg in configs:
        B, S, HIDDEN, NUM_HEADS = cfg["B"], cfg["S"], cfg["H"], cfg["nH"]
        key, k_hs, k_p = jax.random.split(key, 3)
        hidden_states = jax.random.normal(k_hs, (B, S, HIDDEN), jnp.float32)
        params = make_params(k_p, HIDDEN, NUM_HEADS)

        # HF-style additive mask: 0 visible, -10000 padded. Mask the last two
        # key positions of the second batch element.
        mask = jnp.zeros((B, 1, S), jnp.float32)
        mask = mask.at[1, 0, S - 2:].set(-10000.0)

        for dipole in (False, True):
            out = patched_bert_self_attention(hidden_states, mask, params,
                                              num_heads=NUM_HEADS, dipole_attn=dipole)
            out = jax.block_until_ready(out)
            ref = reference(hidden_states, mask, params,
                            num_heads=NUM_HEADS, dipole_attn=dipole)
            if not jnp.allclose(out, ref, atol=1e-4, rtol=1e-4):
                ok = False

    print("KERNEL_OK" if ok else "KERNEL_MISMATCH")
</pallas_src>

<mosaic_0001>
module attributes {stable_mosaic.version = 11 : i64} {
  func.func @_attn_kernel(%arg0: i32, %arg1: i32, %arg2: memref<1x128x32xf32, #tpu.memory_space<vmem>>, %arg3: memref<32x32xf32, #tpu.memory_space<vmem>>, %arg4: memref<1x32xf32, #tpu.memory_space<vmem>>, %arg5: memref<32x96xf32, #tpu.memory_space<vmem>>, %arg6: memref<1x96xf32, #tpu.memory_space<vmem>>, %arg7: memref<1x1x128xf32, #tpu.memory_space<vmem>>, %arg8: memref<1x4xf32, #tpu.memory_space<smem>>, %arg9: memref<1x4xf32, #tpu.memory_space<smem>>, %arg10: memref<1x128x32xf32, #tpu.memory_space<vmem>>, %arg11: memref<128x32xf32, #tpu.memory_space<vmem>>, %arg12: memref<128x64xf32, #tpu.memory_space<vmem>>) attributes {dimension_semantics = [#tpu.dimension_semantics<parallel>, #tpu.dimension_semantics<arbitrary>], iteration_bounds = array<i64: 2, 1>, scalar_prefetch = 0 : i64, scratch_operands = 2 : i64, tpu.core_type = #tpu.core_type<tc>, window_params = [{transform_indices = @transform_0, window_bounds = array<i64: 1, 128, 32>}, {pipeline_mode = #tpu.pipeline_mode<synchronous>, transform_indices = @transform_1, window_bounds = array<i64: 32, 32>}, {pipeline_mode = #tpu.pipeline_mode<synchronous>, transform_indices = @transform_2, window_bounds = array<i64: 1, 32>}, {pipeline_mode = #tpu.pipeline_mode<synchronous>, transform_indices = @transform_3, window_bounds = array<i64: 32, 96>}, {pipeline_mode = #tpu.pipeline_mode<synchronous>, transform_indices = @transform_4, window_bounds = array<i64: 1, 96>}, {transform_indices = @transform_5, window_bounds = array<i64: 1, 1, 128>}, {transform_indices = @transform_6, window_bounds = array<i64: 1, 4>}, {transform_indices = @transform_7, window_bounds = array<i64: 1, 4>}, {transform_indices = @transform_8, window_bounds = array<i64: 1, 128, 32>}]} {
    %c0_i32 = arith.constant 0 : i32
    %0 = arith.cmpi eq, %arg1, %c0_i32 : i32
    %1 = arith.extui %0 : i1 to i32
    %c0_i32_0 = arith.constant 0 : i32
    %2 = arith.cmpi ne, %1, %c0_i32_0 : i32
    scf.if %2 {
      %c0_55 = arith.constant 0 : index
      %c0_56 = arith.constant 0 : index
      %c0_57 = arith.constant 0 : index
      %99 = vector.load %arg2[%c0_55, %c0_56, %c0_57] : memref<1x128x32xf32, #tpu.memory_space<vmem>>, vector<1x128x32xf32>
      %100 = vector.shape_cast %99 : vector<1x128x32xf32> to vector<128x32xf32>
      %c0_58 = arith.constant 0 : index
      %c0_59 = arith.constant 0 : index
      %101 = vector.load %arg5[%c0_58, %c0_59] : memref<32x96xf32, #tpu.memory_space<vmem>>, vector<32x96xf32>
      %cst_60 = arith.constant dense<0.000000e+00> : vector<128x96xf32>
      %102 = tpu.matmul %100, %101, %cst_60 {dimension_numbers = #tpu.dot_dimension_numbers<[1], [0], [0], [1], [0, 0, 1, 1], [], []>} : vector<128x32xf32>, vector<32x96xf32>, vector<128x96xf32> -> vector<128x96xf32>
      %c0_61 = arith.constant 0 : index
      %c0_62 = arith.constant 0 : index
      %103 = vector.load %arg6[%c0_61, %c0_62] : memref<1x96xf32, #tpu.memory_space<vmem>>, vector<1x96xf32>
      %104 = vector.broadcast %103 : vector<1x96xf32> to vector<128x96xf32>
      %105 = arith.addf %102, %104 : vector<128x96xf32>
      %106 = vector.extract_strided_slice %105 {offsets = [0, 0], sizes = [128, 32], strides = [1, 1]} : vector<128x96xf32> to vector<128x32xf32>
      %c0_63 = arith.constant 0 : index
      %c0_64 = arith.constant 0 : index
      %107 = vector.load %arg11[%c0_63, %c0_64] : memref<128x32xf32, #tpu.memory_space<vmem>>, vector<128x32xf32>
      tpu.vector_store %arg11[%c0_63, %c0_64], %106 {strides = array<i32>} : memref<128x32xf32, #tpu.memory_space<vmem>>, vector<128x32xf32>,
      %108 = vector.extract_strided_slice %105 {offsets = [0, 32], sizes = [128, 64], strides = [1, 1]} : vector<128x96xf32> to vector<128x64xf32>
      %c0_65 = arith.constant 0 : index
      %c0_66 = arith.constant 0 : index
      %109 = vector.load %arg12[%c0_65, %c0_66] : memref<128x64xf32, #tpu.memory_space<vmem>>, vector<128x64xf32>
      tpu.vector_store %arg12[%c0_65, %c0_66], %108 {strides = array<i32>} : memref<128x64xf32, #tpu.memory_space<vmem>>, vector<128x64xf32>,
    } else {
    }
    %c128_i32 = arith.constant 128 : i32
    %3 = arith.muli %arg1, %c128_i32 : i32
    %4 = tpu.assume_multiple %3, 128 : i32
    %c0 = arith.constant 0 : index
    %5 = arith.index_cast %4 : i32 to index
    %c0_1 = arith.constant 0 : index
    %6 = vector.load %arg2[%c0, %5, %c0_1] : memref<1x128x32xf32, #tpu.memory_space<vmem>>, vector<1x128x32xf32>
    %7 = vector.shape_cast %6 : vector<1x128x32xf32> to vector<128x32xf32>
    %c0_2 = arith.constant 0 : index
    %c0_3 = arith.constant 0 : index
    %8 = vector.load %arg3[%c0_2, %c0_3] : memref<32x32xf32, #tpu.memory_space<vmem>>, vector<32x32xf32>
    %cst = arith.constant dense<0.000000e+00> : vector<128x32xf32>
    %9 = tpu.matmul %7, %8, %cst {dimension_numbers = #tpu.dot_dimension_numbers<[1], [0], [0], [1], [0, 0, 1, 1], [], []>} : vector<128x32xf32>, vector<32x32xf32>, vector<128x32xf32> -> vector<128x32xf32>
    %c0_4 = arith.constant 0 : index
    %c0_5 = arith.constant 0 : index
    %10 = vector.load %arg4[%c0_4, %c0_5] : memref<1x32xf32, #tpu.memory_space<vmem>>, vector<1x32xf32>
    %11 = vector.broadcast %10 : vector<1x32xf32> to vector<128x32xf32>
    %12 = arith.addf %9, %11 : vector<128x32xf32>
    %cst_6 = arith.constant 0.353553385 : f32
    %13 = vector.broadcast %cst_6 : f32 to vector<128x32xf32>
    %14 = arith.mulf %12, %13 : vector<128x32xf32>
    %c0_7 = arith.constant 0 : index
    %c0_8 = arith.constant 0 : index
    %c0_9 = arith.constant 0 : index
    %15 = vector.load %arg7[%c0_7, %c0_8, %c0_9] : memref<1x1x128xf32, #tpu.memory_space<vmem>>, vector<1x1x128xf32>
    %16 = vector.shape_cast %15 : vector<1x1x128xf32> to vector<1x128xf32>
    %17 = vector.shape_cast %16 : vector<1x128xf32> to vector<1x128xf32>
    %18 = vector.broadcast %17 : vector<1x128xf32> to vector<128x128xf32>
    %19 = vector.extract_strided_slice %14 {offsets = [0, 0], sizes = [128, 8], strides = [1, 1]} : vector<128x32xf32> to vector<128x8xf32>
    %c0_10 = arith.constant 0 : index
    %c0_11 = arith.constant 0 : index
    %20 = vector.load %arg12[%c0_10, %c0_11] : memref<128x64xf32, #tpu.memory_space<vmem>>, vector<128x8xf32>
    %c0_12 = arith.constant 0 : index
    %c0_13 = arith.constant 0 : index
    %21 = vector.load %arg11[%c0_12, %c0_13] : memref<128x32xf32, #tpu.memory_space<vmem>>, vector<128x8xf32>
    %cst_14 = arith.constant dense<0.000000e+00> : vector<128x128xf32>
    %22 = tpu.matmul %19, %21, %cst_14 {dimension_numbers = #tpu.dot_dimension_numbers<[1], [1], [0], [0], [0, 0, 1, 0], [], []>} : vector<128x8xf32>, vector<128x8xf32>, vector<128x128xf32> -> vector<128x128xf32>
    %23 = arith.addf %22, %18 : vector<128x128xf32>
    %cst_15 = arith.constant dense<0xFF800000> : vector<128xf32>
    %24 = vector.multi_reduction <maximumf>, %23, %cst_15 [1] : vector<128x128xf32> to vector<128xf32>
    %25 = vector.shape_cast %24 : vector<128xf32> to vector<128x1xf32>
    %26 = vector.broadcast %25 : vector<128x1xf32> to vector<128x128xf32>
    %27 = arith.subf %23, %26 : vector<128x128xf32>
    %28 = math.exp %27 : vector<128x128xf32>
    %cst_16 = arith.constant dense<0.000000e+00> : vector<128xf32>
    %29 = vector.multi_reduction <add>, %28, %cst_16 [1] : vector<128x128xf32> to vector<128xf32>
    %30 = vector.shape_cast %29 : vector<128xf32> to vector<128x1xf32>
    %cst_17 = arith.constant 1.000000e+00 : f32
    %31 = vector.broadcast %cst_17 : f32 to vector<128x1xf32>
    %32 = arith.divf %31, %30 : vector<128x1xf32>
    %33 = vector.broadcast %32 : vector<128x1xf32> to vector<128x128xf32>
    %34 = arith.mulf %28, %33 : vector<128x128xf32>
    %cst_18 = arith.constant dense<0.000000e+00> : vector<128x8xf32>
    %35 = tpu.matmul %34, %20, %cst_18 {dimension_numbers = #tpu.dot_dimension_numbers<[1], [0], [0], [1], [0, 0, 1, 1], [], []>} : vector<128x128xf32>, vector<128x8xf32>, vector<128x8xf32> -> vector<128x8xf32>
    %c0_19 = arith.constant 0 : index
    %c0_20 = arith.constant 0 : index
    %c0_21 = arith.constant 0 : index
    %36 = vector.load %arg10[%c0_19, %c0_20, %c0_21] : memref<1x128x32xf32, #tpu.memory_space<vmem>>, vector<1x128x8xf32>
    %37 = vector.shape_cast %36 : vector<1x128x8xf32> to vector<128x8xf32>
    %38 = vector.shape_cast %35 : vector<128x8xf32> to vector<1x128x8xf32>
    tpu.vector_store %arg10[%c0_19, %c0_20, %c0_21], %38 {strides = array<i32>} : memref<1x128x32xf32, #tpu.memory_space<vmem>>, vector<1x128x8xf32>,
    %39 = vector.extract_strided_slice %14 {offsets = [0, 8], sizes = [128, 8], strides = [1, 1]} : vector<128x32xf32> to vector<128x8xf32>
    %c0_22 = arith.constant 0 : index
    %c8 = arith.constant 8 : index
    %40 = vector.load %arg12[%c0_22, %c8] : memref<128x64xf32, #tpu.memory_space<vmem>>, vector<128x8xf32>
    %c0_23 = arith.constant 0 : index
    %c8_24 = arith.constant 8 : index
    %41 = vector.load %arg11[%c0_23, %c8_24] : memref<128x32xf32, #tpu.memory_space<vmem>>, vector<128x8xf32>
    %cst_25 = arith.constant dense<0.000000e+00> : vector<128x128xf32>
    %42 = tpu.matmul %39, %41, %cst_25 {dimension_numbers = #tpu.dot_dimension_numbers<[1], [1], [0], [0], [0, 0, 1, 0], [], []>} : vector<128x8xf32>, vector<128x8xf32>, vector<128x128xf32> -> vector<128x128xf32>
    %43 = arith.addf %42, %18 : vector<128x128xf32>
    %cst_26 = arith.constant dense<0xFF800000> : vector<128xf32>
    %44 = vector.multi_reduction <maximumf>, %43, %cst_26 [1] : vector<128x128xf32> to vector<128xf32>
    %45 = vector.shape_cast %44 : vector<128xf32> to vector<128x1xf32>
    %46 = vector.broadcast %45 : vector<128x1xf32> to vector<128x128xf32>
    %47 = arith.subf %43, %46 : vector<128x128xf32>
    %48 = math.exp %47 : vector<128x128xf32>
    %cst_27 = arith.constant dense<0.000000e+00> : vector<128xf32>
    %49 = vector.multi_reduction <add>, %48, %cst_27 [1] : vector<128x128xf32> to vector<128xf32>
    %50 = vector.shape_cast %49 : vector<128xf32> to vector<128x1xf32>
    %cst_28 = arith.constant 1.000000e+00 : f32
    %51 = vector.broadcast %cst_28 : f32 to vector<128x1xf32>
    %52 = arith.divf %51, %50 : vector<128x1xf32>
    %53 = vector.broadcast %52 : vector<128x1xf32> to vector<128x128xf32>
    %54 = arith.mulf %48, %53 : vector<128x128xf32>
    %cst_29 = arith.constant dense<0.000000e+00> : vector<128x8xf32>
    %55 = tpu.matmul %54, %40, %cst_29 {dimension_numbers = #tpu.dot_dimension_numbers<[1], [0], [0], [1], [0, 0, 1, 1], [], []>} : vector<128x128xf32>, vector<128x8xf32>, vector<128x8xf32> -> vector<128x8xf32>
    %c0_30 = arith.constant 0 : index
    %c0_31 = arith.constant 0 : index
    %c8_32 = arith.constant 8 : index
    %56 = vector.load %arg10[%c0_30, %c0_31, %c8_32] : memref<1x128x32xf32, #tpu.memory_space<vmem>>, vector<1x128x8xf32>
    %57 = vector.shape_cast %56 : vector<1x128x8xf32> to vector<128x8xf32>
    %58 = vector.shape_cast %55 : vector<128x8xf32> to vector<1x128x8xf32>
    tpu.vector_store %arg10[%c0_30, %c0_31, %c8_32], %58 {strides = array<i32>} : memref<1x128x32xf32, #tpu.memory_space<vmem>>, vector<1x128x8xf32>,
    %59 = vector.extract_strided_slice %14 {offsets = [0, 16], sizes = [128, 8], strides = [1, 1]} : vector<128x32xf32> to vector<128x8xf32>
    %c0_33 = arith.constant 0 : index
    %c16 = arith.constant 16 : index
    %60 = vector.load %arg12[%c0_33, %c16] : memref<128x64xf32, #tpu.memory_space<vmem>>, vector<128x8xf32>
    %c0_34 = arith.constant 0 : index
    %c16_35 = arith.constant 16 : index
    %61 = vector.load %arg11[%c0_34, %c16_35] : memref<128x32xf32, #tpu.memory_space<vmem>>, vector<128x8xf32>
    %cst_36 = arith.constant dense<0.000000e+00> : vector<128x128xf32>
    %62 = tpu.matmul %59, %61, %cst_36 {dimension_numbers = #tpu.dot_dimension_numbers<[1], [1], [0], [0], [0, 0, 1, 0], [], []>} : vector<128x8xf32>, vector<128x8xf32>, vector<128x128xf32> -> vector<128x128xf32>
    %63 = arith.addf %62, %18 : vector<128x128xf32>
    %cst_37 = arith.constant dense<0xFF800000> : vector<128xf32>
    %64 = vector.multi_reduction <maximumf>, %63, %cst_37 [1] : vector<128x128xf32> to vector<128xf32>
    %65 = vector.shape_cast %64 : vector<128xf32> to vector<128x1xf32>
    %66 = vector.broadcast %65 : vector<128x1xf32> to vector<128x128xf32>
    %67 = arith.subf %63, %66 : vector<128x128xf32>
    %68 = math.exp %67 : vector<128x128xf32>
    %cst_38 = arith.constant dense<0.000000e+00> : vector<128xf32>
    %69 = vector.multi_reduction <add>, %68, %cst_38 [1] : vector<128x128xf32> to vector<128xf32>
    %70 = vector.shape_cast %69 : vector<128xf32> to vector<128x1xf32>
    %cst_39 = arith.constant 1.000000e+00 : f32
    %71 = vector.broadcast %cst_39 : f32 to vector<128x1xf32>
    %72 = arith.divf %71, %70 : vector<128x1xf32>
    %73 = vector.broadcast %72 : vector<128x1xf32> to vector<128x128xf32>
    %74 = arith.mulf %68, %73 : vector<128x128xf32>
    %cst_40 = arith.constant dense<0.000000e+00> : vector<128x8xf32>
    %75 = tpu.matmul %74, %60, %cst_40 {dimension_numbers = #tpu.dot_dimension_numbers<[1], [0], [0], [1], [0, 0, 1, 1], [], []>} : vector<128x128xf32>, vector<128x8xf32>, vector<128x8xf32> -> vector<128x8xf32>
    %c0_41 = arith.constant 0 : index
    %c0_42 = arith.constant 0 : index
    %c16_43 = arith.constant 16 : index
    %76 = vector.load %arg10[%c0_41, %c0_42, %c16_43] : memref<1x128x32xf32, #tpu.memory_space<vmem>>, vector<1x128x8xf32>
    %77 = vector.shape_cast %76 : vector<1x128x8xf32> to vector<128x8xf32>
    %78 = vector.shape_cast %75 : vector<128x8xf32> to vector<1x128x8xf32>
    tpu.vector_store %arg10[%c0_41, %c0_42, %c16_43], %78 {strides = array<i32>} : memref<1x128x32xf32, #tpu.memory_space<vmem>>, vector<1x128x8xf32>,
    %79 = vector.extract_strided_slice %14 {offsets = [0, 24], sizes = [128, 8], strides = [1, 1]} : vector<128x32xf32> to vector<128x8xf32>
    %c0_44 = arith.constant 0 : index
    %c24 = arith.constant 24 : index
    %80 = vector.load %arg12[%c0_44, %c24] : memref<128x64xf32, #tpu.memory_space<vmem>>, vector<128x8xf32>
    %c0_45 = arith.constant 0 : index
    %c24_46 = arith.constant 24 : index
    %81 = vector.load %arg11[%c0_45, %c24_46] : memref<128x32xf32, #tpu.memory_space<vmem>>, vector<128x8xf32>
    %cst_47 = arith.constant dense<0.000000e+00> : vector<128x128xf32>
    %82 = tpu.matmul %79, %81, %cst_47 {dimension_numbers = #tpu.dot_dimension_numbers<[1], [1], [0], [0], [0, 0, 1, 0], [], []>} : vector<128x8xf32>, vector<128x8xf32>, vector<128x128xf32> -> vector<128x128xf32>
    %83 = arith.addf %82, %18 : vector<128x128xf32>
    %cst_48 = arith.constant dense<0xFF800000> : vector<128xf32>
    %84 = vector.multi_reduction <maximumf>, %83, %cst_48 [1] : vector<128x128xf32> to vector<128xf32>
    %85 = vector.shape_cast %84 : vector<128xf32> to vector<128x1xf32>
    %86 = vector.broadcast %85 : vector<128x1xf32> to vector<128x128xf32>
    %87 = arith.subf %83, %86 : vector<128x128xf32>
    %88 = math.exp %87 : vector<128x128xf32>
    %cst_49 = arith.constant dense<0.000000e+00> : vector<128xf32>
    %89 = vector.multi_reduction <add>, %88, %cst_49 [1] : vector<128x128xf32> to vector<128xf32>
    %90 = vector.shape_cast %89 : vector<128xf32> to vector<128x1xf32>
    %cst_50 = arith.constant 1.000000e+00 : f32
    %91 = vector.broadcast %cst_50 : f32 to vector<128x1xf32>
    %92 = arith.divf %91, %90 : vector<128x1xf32>
    %93 = vector.broadcast %92 : vector<128x1xf32> to vector<128x128xf32>
    %94 = arith.mulf %88, %93 : vector<128x128xf32>
    %cst_51 = arith.constant dense<0.000000e+00> : vector<128x8xf32>
    %95 = tpu.matmul %94, %80, %cst_51 {dimension_numbers = #tpu.dot_dimension_numbers<[1], [0], [0], [1], [0, 0, 1, 1], [], []>} : vector<128x128xf32>, vector<128x8xf32>, vector<128x8xf32> -> vector<128x8xf32>
    %c0_52 = arith.constant 0 : index
    %c0_53 = arith.constant 0 : index
    %c24_54 = arith.constant 24 : index
    %96 = vector.load %arg10[%c0_52, %c0_53, %c24_54] : memref<1x128x32xf32, #tpu.memory_space<vmem>>, vector<1x128x8xf32>
    %97 = vector.shape_cast %96 : vector<1x128x8xf32> to vector<128x8xf32>
    %98 = vector.shape_cast %95 : vector<128x8xf32> to vector<1x128x8xf32>
    tpu.vector_store %arg10[%c0_52, %c0_53, %c24_54], %98 {strides = array<i32>} : memref<1x128x32xf32, #tpu.memory_space<vmem>>, vector<1x128x8xf32>,
    return
  }
  func.func @transform_0(%arg0: i32, %arg1: i32) -> (i32, i32, i32) {
    %c0_i32 = arith.constant 0 : i32
    %c0_i32_0 = arith.constant 0 : i32
    %c0_i32_1 = arith.constant 0 : i32
    return %arg0, %c0_i32, %c0_i32_0 : i32, i32, i32
  }
  func.func @transform_1(%arg0: i32, %arg1: i32) -> (i32, i32) {
    %c0_i32 = arith.constant 0 : i32
    %c0_i32_0 = arith.constant 0 : i32
    %c0_i32_1 = arith.constant 0 : i32
    return %c0_i32, %c0_i32_0 : i32, i32
  }
  func.func @transform_2(%arg0: i32, %arg1: i32) -> (i32, i32) {
    %c0_i32 = arith.constant 0 : i32
    %c0_i32_0 = arith.constant 0 : i32
    %c0_i32_1 = arith.constant 0 : i32
    return %c0_i32, %c0_i32_0 : i32, i32
  }
  func.func @transform_3(%arg0: i32, %arg1: i32) -> (i32, i32) {
    %c0_i32 = arith.constant 0 : i32
    %c0_i32_0 = arith.constant 0 : i32
    %c0_i32_1 = arith.constant 0 : i32
    return %c0_i32, %c0_i32_0 : i32, i32
  }
  func.func @transform_4(%arg0: i32, %arg1: i32) -> (i32, i32) {
    %c0_i32 = arith.constant 0 : i32
    %c0_i32_0 = arith.constant 0 : i32
    %c0_i32_1 = arith.constant 0 : i32
    return %c0_i32, %c0_i32_0 : i32, i32
  }
  func.func @transform_5(%arg0: i32, %arg1: i32) -> (i32, i32, i32) {
    %c0_i32 = arith.constant 0 : i32
    %c0_i32_0 = arith.constant 0 : i32
    %c0_i32_1 = arith.constant 0 : i32
    return %arg0, %c0_i32, %c0_i32_0 : i32, i32, i32
  }
  func.func @transform_6(%arg0: i32, %arg1: i32) -> (i32, i32) {
    %c0_i32 = arith.constant 0 : i32
    %c0_i32_0 = arith.constant 0 : i32
    %c0_i32_1 = arith.constant 0 : i32
    return %c0_i32, %c0_i32_0 : i32, i32
  }
  func.func @transform_7(%arg0: i32, %arg1: i32) -> (i32, i32) {
    %c0_i32 = arith.constant 0 : i32
    %c0_i32_0 = arith.constant 0 : i32
    %c0_i32_1 = arith.constant 0 : i32
    return %c0_i32, %c0_i32_0 : i32, i32
  }
  func.func @transform_8(%arg0: i32, %arg1: i32) -> (i32, i32, i32) {
    %c0_i32 = arith.constant 0 : i32
    %c0_i32_0 = arith.constant 0 : i32
    return %arg0, %arg1, %c0_i32 : i32, i32, i32
  }
}

module attributes {stable_mosaic.version = 11 : i64} {
  func.func @_attn_kernel(%arg0: i32, %arg1: i32, %arg2: memref<1x128x32xf32, #tpu.memory_space<vmem>>, %arg3: memref<32x32xf32, #tpu.memory_space<vmem>>, %arg4: memref<1x32xf32, #tpu.memory_space<vmem>>, %arg5: memref<32x96xf32, #tpu.memory_space<vmem>>, %arg6: memref<1x96xf32, #tpu.memory_space<vmem>>, %arg7: memref<1x1x128xf32, #tpu.memory_space<vmem>>, %arg8: memref<1x4xf32, #tpu.memory_space<smem>>, %arg9: memref<1x4xf32, #tpu.memory_space<smem>>, %arg10: memref<1x128x32xf32, #tpu.memory_space<vmem>>, %arg11: memref<128x32xf32, #tpu.memory_space<vmem>>, %arg12: memref<128x64xf32, #tpu.memory_space<vmem>>) attributes {dimension_semantics = [#tpu.dimension_semantics<parallel>, #tpu.dimension_semantics<arbitrary>], iteration_bounds = array<i64: 2, 1>, scalar_prefetch = 0 : i64, scratch_operands = 2 : i64, tpu.core_type = #tpu.core_type<tc>, window_params = [{transform_indices = @transform_0, window_bounds = array<i64: 1, 128, 32>}, {pipeline_mode = #tpu.pipeline_mode<synchronous>, transform_indices = @transform_1, window_bounds = array<i64: 32, 32>}, {pipeline_mode = #tpu.pipeline_mode<synchronous>, transform_indices = @transform_2, window_bounds = array<i64: 1, 32>}, {pipeline_mode = #tpu.pipeline_mode<synchronous>, transform_indices = @transform_3, window_bounds = array<i64: 32, 96>}, {pipeline_mode = #tpu.pipeline_mode<synchronous>, transform_indices = @transform_4, window_bounds = array<i64: 1, 96>}, {transform_indices = @transform_5, window_bounds = array<i64: 1, 1, 128>}, {transform_indices = @transform_6, window_bounds = array<i64: 1, 4>}, {transform_indices = @transform_7, window_bounds = array<i64: 1, 4>}, {transform_indices = @transform_8, window_bounds = array<i64: 1, 128, 32>}]} {
    %c0_i32 = arith.constant 0 : i32
    %0 = arith.cmpi eq, %arg1, %c0_i32 : i32
    %1 = arith.extui %0 : i1 to i32
    %c0_i32_0 = arith.constant 0 : i32
    %2 = arith.cmpi ne, %1, %c0_i32_0 : i32
    scf.if %2 {
      %c0_55 = arith.constant 0 : index
      %c0_56 = arith.constant 0 : index
      %c0_57 = arith.constant 0 : index
      %99 = vector.load %arg2[%c0_55, %c0_56, %c0_57] : memref<1x128x32xf32, #tpu.memory_space<vmem>>, vector<1x128x32xf32>
      %100 = vector.shape_cast %99 : vector<1x128x32xf32> to vector<128x32xf32>
      %c0_58 = arith.constant 0 : index
      %c0_59 = arith.constant 0 : index
      %101 = vector.load %arg5[%c0_58, %c0_59] : memref<32x96xf32, #tpu.memory_space<vmem>>, vector<32x96xf32>
      %cst_60 = arith.constant dense<0.000000e+00> : vector<128x96xf32>
      %102 = tpu.matmul %100, %101, %cst_60 {dimension_numbers = #tpu.dot_dimension_numbers<[1], [0], [0], [1], [0, 0, 1, 1], [], []>} : vector<128x32xf32>, vector<32x96xf32>, vector<128x96xf32> -> vector<128x96xf32>
      %c0_61 = arith.constant 0 : index
      %c0_62 = arith.constant 0 : index
      %103 = vector.load %arg6[%c0_61, %c0_62] : memref<1x96xf32, #tpu.memory_space<vmem>>, vector<1x96xf32>
      %104 = vector.broadcast %103 : vector<1x96xf32> to vector<128x96xf32>
      %105 = arith.addf %102, %104 : vector<128x96xf32>
      %106 = vector.extract_strided_slice %105 {offsets = [0, 0], sizes = [128, 32], strides = [1, 1]} : vector<128x96xf32> to vector<128x32xf32>
      %c0_63 = arith.constant 0 : index
      %c0_64 = arith.constant 0 : index
      %107 = vector.load %arg11[%c0_63, %c0_64] : memref<128x32xf32, #tpu.memory_space<vmem>>, vector<128x32xf32>
      tpu.vector_store %arg11[%c0_63, %c0_64], %106 {strides = array<i32>} : memref<128x32xf32, #tpu.memory_space<vmem>>, vector<128x32xf32>,
      %108 = vector.extract_strided_slice %105 {offsets = [0, 32], sizes = [128, 64], strides = [1, 1]} : vector<128x96xf32> to vector<128x64xf32>
      %c0_65 = arith.constant 0 : index
      %c0_66 = arith.constant 0 : index
      %109 = vector.load %arg12[%c0_65, %c0_66] : memref<128x64xf32, #tpu.memory_space<vmem>>, vector<128x64xf32>
      tpu.vector_store %arg12[%c0_65, %c0_66], %108 {strides = array<i32>} : memref<128x64xf32, #tpu.memory_space<vmem>>, vector<128x64xf32>,
    } else {
    }
    %c128_i32 = arith.constant 128 : i32
    %3 = arith.muli %arg1, %c128_i32 : i32
    %4 = tpu.assume_multiple %3, 128 : i32
    %c0 = arith.constant 0 : index
    %5 = arith.index_cast %4 : i32 to index
    %c0_1 = arith.constant 0 : index
    %6 = vector.load %arg2[%c0, %5, %c0_1] : memref<1x128x32xf32, #tpu.memory_space<vmem>>, vector<1x128x32xf32>
    %7 = vector.shape_cast %6 : vector<1x128x32xf32> to vector<128x32xf32>
    %c0_2 = arith.constant 0 : index
    %c0_3 = arith.constant 0 : index
    %8 = vector.load %arg3[%c0_2, %c0_3] : memref<32x32xf32, #tpu.memory_space<vmem>>, vector<32x32xf32>
    %cst = arith.constant dense<0.000000e+00> : vector<128x32xf32>
    %9 = tpu.matmul %7, %8, %cst {dimension_numbers = #tpu.dot_dimension_numbers<[1], [0], [0], [1], [0, 0, 1, 1], [], []>} : vector<128x32xf32>, vector<32x32xf32>, vector<128x32xf32> -> vector<128x32xf32>
    %c0_4 = arith.constant 0 : index
    %c0_5 = arith.constant 0 : index
    %10 = vector.load %arg4[%c0_4, %c0_5] : memref<1x32xf32, #tpu.memory_space<vmem>>, vector<1x32xf32>
    %11 = vector.broadcast %10 : vector<1x32xf32> to vector<128x32xf32>
    %12 = arith.addf %9, %11 : vector<128x32xf32>
    %cst_6 = arith.constant 0.353553385 : f32
    %13 = vector.broadcast %cst_6 : f32 to vector<128x32xf32>
    %14 = arith.mulf %12, %13 : vector<128x32xf32>
    %c0_7 = arith.constant 0 : index
    %c0_8 = arith.constant 0 : index
    %c0_9 = arith.constant 0 : index
    %15 = vector.load %arg7[%c0_7, %c0_8, %c0_9] : memref<1x1x128xf32, #tpu.memory_space<vmem>>, vector<1x1x128xf32>
    %16 = vector.shape_cast %15 : vector<1x1x128xf32> to vector<1x128xf32>
    %17 = vector.shape_cast %16 : vector<1x128xf32> to vector<1x128xf32>
    %18 = vector.broadcast %17 : vector<1x128xf32> to vector<128x128xf32>
    %19 = vector.extract_strided_slice %14 {offsets = [0, 0], sizes = [128, 8], strides = [1, 1]} : vector<128x32xf32> to vector<128x8xf32>
    %c0_10 = arith.constant 0 : index
    %c0_11 = arith.constant 0 : index
    %20 = vector.load %arg12[%c0_10, %c0_11] : memref<128x64xf32, #tpu.memory_space<vmem>>, vector<128x8xf32>
    %c0_12 = arith.constant 0 : index
    %c0_13 = arith.constant 0 : index
    %21 = vector.load %arg11[%c0_12, %c0_13] : memref<128x32xf32, #tpu.memory_space<vmem>>, vector<128x8xf32>
    %cst_14 = arith.constant dense<0.000000e+00> : vector<128x128xf32>
    %22 = tpu.matmul %19, %21, %cst_14 {dimension_numbers = #tpu.dot_dimension_numbers<[1], [1], [0], [0], [0, 0, 1, 0], [], []>} : vector<128x8xf32>, vector<128x8xf32>, vector<128x128xf32> -> vector<128x128xf32>
    %23 = arith.addf %22, %18 : vector<128x128xf32>
    %cst_15 = arith.constant dense<0xFF800000> : vector<128xf32>
    %24 = vector.multi_reduction <maximumf>, %23, %cst_15 [1] : vector<128x128xf32> to vector<128xf32>
    %25 = vector.shape_cast %24 : vector<128xf32> to vector<128x1xf32>
    %26 = vector.broadcast %25 : vector<128x1xf32> to vector<128x128xf32>
    %27 = arith.subf %23, %26 : vector<128x128xf32>
    %28 = math.exp %27 : vector<128x128xf32>
    %cst_16 = arith.constant dense<0.000000e+00> : vector<128xf32>
    %29 = vector.multi_reduction <add>, %28, %cst_16 [1] : vector<128x128xf32> to vector<128xf32>
    %30 = vector.shape_cast %29 : vector<128xf32> to vector<128x1xf32>
    %cst_17 = arith.constant 1.000000e+00 : f32
    %31 = vector.broadcast %cst_17 : f32 to vector<128x1xf32>
    %32 = arith.divf %31, %30 : vector<128x1xf32>
    %33 = vector.broadcast %32 : vector<128x1xf32> to vector<128x128xf32>
    %34 = arith.mulf %28, %33 : vector<128x128xf32>
    %cst_18 = arith.constant dense<0.000000e+00> : vector<128x8xf32>
    %35 = tpu.matmul %34, %20, %cst_18 {dimension_numbers = #tpu.dot_dimension_numbers<[1], [0], [0], [1], [0, 0, 1, 1], [], []>} : vector<128x128xf32>, vector<128x8xf32>, vector<128x8xf32> -> vector<128x8xf32>
    %c0_19 = arith.constant 0 : index
    %c0_20 = arith.constant 0 : index
    %c0_21 = arith.constant 0 : index
    %36 = vector.load %arg10[%c0_19, %c0_20, %c0_21] : memref<1x128x32xf32, #tpu.memory_space<vmem>>, vector<1x128x8xf32>
    %37 = vector.shape_cast %36 : vector<1x128x8xf32> to vector<128x8xf32>
    %38 = vector.shape_cast %35 : vector<128x8xf32> to vector<1x128x8xf32>
    tpu.vector_store %arg10[%c0_19, %c0_20, %c0_21], %38 {strides = array<i32>} : memref<1x128x32xf32, #tpu.memory_space<vmem>>, vector<1x128x8xf32>,
    %39 = vector.extract_strided_slice %14 {offsets = [0, 8], sizes = [128, 8], strides = [1, 1]} : vector<128x32xf32> to vector<128x8xf32>
    %c0_22 = arith.constant 0 : index
    %c8 = arith.constant 8 : index
    %40 = vector.load %arg12[%c0_22, %c8] : memref<128x64xf32, #tpu.memory_space<vmem>>, vector<128x8xf32>
    %c0_23 = arith.constant 0 : index
    %c8_24 = arith.constant 8 : index
    %41 = vector.load %arg11[%c0_23, %c8_24] : memref<128x32xf32, #tpu.memory_space<vmem>>, vector<128x8xf32>
    %cst_25 = arith.constant dense<0.000000e+00> : vector<128x128xf32>
    %42 = tpu.matmul %39, %41, %cst_25 {dimension_numbers = #tpu.dot_dimension_numbers<[1], [1], [0], [0], [0, 0, 1, 0], [], []>} : vector<128x8xf32>, vector<128x8xf32>, vector<128x128xf32> -> vector<128x128xf32>
    %43 = arith.addf %42, %18 : vector<128x128xf32>
    %cst_26 = arith.constant dense<0xFF800000> : vector<128xf32>
    %44 = vector.multi_reduction <maximumf>, %43, %cst_26 [1] : vector<128x128xf32> to vector<128xf32>
    %45 = vector.shape_cast %44 : vector<128xf32> to vector<128x1xf32>
    %46 = vector.broadcast %45 : vector<128x1xf32> to vector<128x128xf32>
    %47 = arith.subf %43, %46 : vector<128x128xf32>
    %48 = math.exp %47 : vector<128x128xf32>
    %cst_27 = arith.constant dense<0.000000e+00> : vector<128xf32>
    %49 = vector.multi_reduction <add>, %48, %cst_27 [1] : vector<128x128xf32> to vector<128xf32>
    %50 = vector.shape_cast %49 : vector<128xf32> to vector<128x1xf32>
    %cst_28 = arith.constant 1.000000e+00 : f32
    %51 = vector.broadcast %cst_28 : f32 to vector<128x1xf32>
    %52 = arith.divf %51, %50 : vector<128x1xf32>
    %53 = vector.broadcast %52 : vector<128x1xf32> to vector<128x128xf32>
    %54 = arith.mulf %48, %53 : vector<128x128xf32>
    %cst_29 = arith.constant dense<0.000000e+00> : vector<128x8xf32>
    %55 = tpu.matmul %54, %40, %cst_29 {dimension_numbers = #tpu.dot_dimension_numbers<[1], [0], [0], [1], [0, 0, 1, 1], [], []>} : vector<128x128xf32>, vector<128x8xf32>, vector<128x8xf32> -> vector<128x8xf32>
    %c0_30 = arith.constant 0 : index
    %c0_31 = arith.constant 0 : index
    %c8_32 = arith.constant 8 : index
    %56 = vector.load %arg10[%c0_30, %c0_31, %c8_32] : memref<1x128x32xf32, #tpu.memory_space<vmem>>, vector<1x128x8xf32>
    %57 = vector.shape_cast %56 : vector<1x128x8xf32> to vector<128x8xf32>
    %58 = vector.shape_cast %55 : vector<128x8xf32> to vector<1x128x8xf32>
    tpu.vector_store %arg10[%c0_30, %c0_31, %c8_32], %58 {strides = array<i32>} : memref<1x128x32xf32, #tpu.memory_space<vmem>>, vector<1x128x8xf32>,
    %59 = vector.extract_strided_slice %14 {offsets = [0, 16], sizes = [128, 8], strides = [1, 1]} : vector<128x32xf32> to vector<128x8xf32>
    %c0_33 = arith.constant 0 : index
    %c16 = arith.constant 16 : index
    %60 = vector.load %arg12[%c0_33, %c16] : memref<128x64xf32, #tpu.memory_space<vmem>>, vector<128x8xf32>
    %c0_34 = arith.constant 0 : index
    %c16_35 = arith.constant 16 : index
    %61 = vector.load %arg11[%c0_34, %c16_35] : memref<128x32xf32, #tpu.memory_space<vmem>>, vector<128x8xf32>
    %cst_36 = arith.constant dense<0.000000e+00> : vector<128x128xf32>
    %62 = tpu.matmul %59, %61, %cst_36 {dimension_numbers = #tpu.dot_dimension_numbers<[1], [1], [0], [0], [0, 0, 1, 0], [], []>} : vector<128x8xf32>, vector<128x8xf32>, vector<128x128xf32> -> vector<128x128xf32>
    %63 = arith.addf %62, %18 : vector<128x128xf32>
    %cst_37 = arith.constant dense<0xFF800000> : vector<128xf32>
    %64 = vector.multi_reduction <maximumf>, %63, %cst_37 [1] : vector<128x128xf32> to vector<128xf32>
    %65 = vector.shape_cast %64 : vector<128xf32> to vector<128x1xf32>
    %66 = vector.broadcast %65 : vector<128x1xf32> to vector<128x128xf32>
    %67 = arith.subf %63, %66 : vector<128x128xf32>
    %68 = math.exp %67 : vector<128x128xf32>
    %cst_38 = arith.constant dense<0.000000e+00> : vector<128xf32>
    %69 = vector.multi_reduction <add>, %68, %cst_38 [1] : vector<128x128xf32> to vector<128xf32>
    %70 = vector.shape_cast %69 : vector<128xf32> to vector<128x1xf32>
    %cst_39 = arith.constant 1.000000e+00 : f32
    %71 = vector.broadcast %cst_39 : f32 to vector<128x1xf32>
    %72 = arith.divf %71, %70 : vector<128x1xf32>
    %73 = vector.broadcast %72 : vector<128x1xf32> to vector<128x128xf32>
    %74 = arith.mulf %68, %73 : vector<128x128xf32>
    %cst_40 = arith.constant dense<0.000000e+00> : vector<128x8xf32>
    %75 = tpu.matmul %74, %60, %cst_40 {dimension_numbers = #tpu.dot_dimension_numbers<[1], [0], [0], [1], [0, 0, 1, 1], [], []>} : vector<128x128xf32>, vector<128x8xf32>, vector<128x8xf32> -> vector<128x8xf32>
    %c0_41 = arith.constant 0 : index
    %c0_42 = arith.constant 0 : index
    %c16_43 = arith.constant 16 : index
    %76 = vector.load %arg10[%c0_41, %c0_42, %c16_43] : memref<1x128x32xf32, #tpu.memory_space<vmem>>, vector<1x128x8xf32>
    %77 = vector.shape_cast %76 : vector<1x128x8xf32> to vector<128x8xf32>
    %78 = vector.shape_cast %75 : vector<128x8xf32> to vector<1x128x8xf32>
    tpu.vector_store %arg10[%c0_41, %c0_42, %c16_43], %78 {strides = array<i32>} : memref<1x128x32xf32, #tpu.memory_space<vmem>>, vector<1x128x8xf32>,
    %79 = vector.extract_strided_slice %14 {offsets = [0, 24], sizes = [128, 8], strides = [1, 1]} : vector<128x32xf32> to vector<128x8xf32>
    %c0_44 = arith.constant 0 : index
    %c24 = arith.constant 24 : index
    %80 = vector.load %arg12[%c0_44, %c24] : memref<128x64xf32, #tpu.memory_space<vmem>>, vector<128x8xf32>
    %c0_45 = arith.constant 0 : index
    %c24_46 = arith.constant 24 : index
    %81 = vector.load %arg11[%c0_45, %c24_46] : memref<128x32xf32, #tpu.memory_space<vmem>>, vector<128x8xf32>
    %cst_47 = arith.constant dense<0.000000e+00> : vector<128x128xf32>
    %82 = tpu.matmul %79, %81, %cst_47 {dimension_numbers = #tpu.dot_dimension_numbers<[1], [1], [0], [0], [0, 0, 1, 0], [], []>} : vector<128x8xf32>, vector<128x8xf32>, vector<128x128xf32> -> vector<128x128xf32>
    %83 = arith.addf %82, %18 : vector<128x128xf32>
    %cst_48 = arith.constant dense<0xFF800000> : vector<128xf32>
    %84 = vector.multi_reduction <maximumf>, %83, %cst_48 [1] : vector<128x128xf32> to vector<128xf32>
    %85 = vector.shape_cast %84 : vector<128xf32> to vector<128x1xf32>
    %86 = vector.broadcast %85 : vector<128x1xf32> to vector<128x128xf32>
    %87 = arith.subf %83, %86 : vector<128x128xf32>
    %88 = math.exp %87 : vector<128x128xf32>
    %cst_49 = arith.constant dense<0.000000e+00> : vector<128xf32>
    %89 = vector.multi_reduction <add>, %88, %cst_49 [1] : vector<128x128xf32> to vector<128xf32>
    %90 = vector.shape_cast %89 : vector<128xf32> to vector<128x1xf32>
    %cst_50 = arith.constant 1.000000e+00 : f32
    %91 = vector.broadcast %cst_50 : f32 to vector<128x1xf32>
    %92 = arith.divf %91, %90 : vector<128x1xf32>
    %93 = vector.broadcast %92 : vector<128x1xf32> to vector<128x128xf32>
    %94 = arith.mulf %88, %93 : vector<128x128xf32>
    %cst_51 = arith.constant dense<0.000000e+00> : vector<128x8xf32>
    %95 = tpu.matmul %94, %80, %cst_51 {dimension_numbers = #tpu.dot_dimension_numbers<[1], [0], [0], [1], [0, 0, 1, 1], [], []>} : vector<128x128xf32>, vector<128x8xf32>, vector<128x8xf32> -> vector<128x8xf32>
    %c0_52 = arith.constant 0 : index
    %c0_53 = arith.constant 0 : index
    %c24_54 = arith.constant 24 : index
    %96 = vector.load %arg10[%c0_52, %c0_53, %c24_54] : memref<1x128x32xf32, #tpu.memory_space<vmem>>, vector<1x128x8xf32>
    %97 = vector.shape_cast %96 : vector<1x128x8xf32> to vector<128x8xf32>
    %98 = vector.shape_cast %95 : vector<128x8xf32> to vector<1x128x8xf32>
    tpu.vector_store %arg10[%c0_52, %c0_53, %c24_54], %98 {strides = array<i32>} : memref<1x128x32xf32, #tpu.memory_space<vmem>>, vector<1x128x8xf32>,
    return
  }
  func.func @transform_0(%arg0: i32, %arg1: i32) -> (i32, i32, i32) {
    %c0_i32 = arith.constant 0 : i32
    %c0_i32_0 = arith.constant 0 : i32
    %c0_i32_1 = arith.constant 0 : i32
    return %arg0, %c0_i32, %c0_i32_0 : i32, i32, i32
  }
  func.func @transform_1(%arg0: i32, %arg1: i32) -> (i32, i32) {
    %c0_i32 = arith.constant 0 : i32
    %c0_i32_0 = arith.constant 0 : i32
    %c0_i32_1 = arith.constant 0 : i32
    return %c0_i32, %c0_i32_0 : i32, i32
  }
  func.func @transform_2(%arg0: i32, %arg1: i32) -> (i32, i32) {
    %c0_i32 = arith.constant 0 : i32
    %c0_i32_0 = arith.constant 0 : i32
    %c0_i32_1 = arith.constant 0 : i32
    return %c0_i32, %c0_i32_0 : i32, i32
  }
  func.func @transform_3(%arg0: i32, %arg1: i32) -> (i32, i32) {
    %c0_i32 = arith.constant 0 : i32
    %c0_i32_0 = arith.constant 0 : i32
    %c0_i32_1 = arith.constant 0 : i32
    return %c0_i32, %c0_i32_0 : i32, i32
  }
  func.func @transform_4(%arg0: i32, %arg1: i32) -> (i32, i32) {
    %c0_i32 = arith.constant 0 : i32
    %c0_i32_0 = arith.constant 0 : i32
    %c0_i32_1 = arith.constant 0 : i32
    return %c0_i32, %c0_i32_0 : i32, i32
  }
  func.func @transform_5(%arg0: i32, %arg1: i32) -> (i32, i32, i32) {
    %c0_i32 = arith.constant 0 : i32
    %c0_i32_0 = arith.constant 0 : i32
    %c0_i32_1 = arith.constant 0 : i32
    return %arg0, %c0_i32, %c0_i32_0 : i32, i32, i32
  }
  func.func @transform_6(%arg0: i32, %arg1: i32) -> (i32, i32) {
    %c0_i32 = arith.constant 0 : i32
    %c0_i32_0 = arith.constant 0 : i32
    %c0_i32_1 = arith.constant 0 : i32
    return %c0_i32, %c0_i32_0 : i32, i32
  }
  func.func @transform_7(%arg0: i32, %arg1: i32) -> (i32, i32) {
    %c0_i32 = arith.constant 0 : i32
    %c0_i32_0 = arith.constant 0 : i32
    %c0_i32_1 = arith.constant 0 : i32
    return %c0_i32, %c0_i32_0 : i32, i32
  }
  func.func @transform_8(%arg0: i32, %arg1: i32) -> (i32, i32, i32) {
    %c0_i32 = arith.constant 0 : i32
    %c0_i32_0 = arith.constant 0 : i32
    return %arg0, %arg1, %c0_i32 : i32, i32, i32
  }
}

</mosaic_0001>

<llo_original>
// kernel: tpu_custom_call.1
$region0: #{tpu_custom_call.1}
  #allocation0 [shape = 'u32[]', space=smem, size = 0x4, offset = 0x4, fixed_abs, tag = 'smem constant byte address 0x4 - core index']
  #allocation1 [shape = 'u32[144,128]{1,0:T(1,128)}', space=vmem, size = 0x12000, scoped, tag = 'internal scratch']
  #allocation2 [shape = 'f32[128,32]{1,0:T(8,128)}', space=vmem, size = 0x10000, scoped, tag = 'scratch operand']
  #allocation3 [shape = 'f32[128,64]{1,0:T(8,128)}', space=vmem, size = 0x10000, scoped, tag = 'scratch operand']
  %s0 = inlined_call_operand.vmem [shape: f32[2,128,32], index: 0, kind: input, shape index: {}]
  %s1 = inlined_call_operand.vmem [shape: f32[32,32], index: 1, kind: input, shape index: {}]
  %s2 = inlined_call_operand.vmem [shape: f32[1,32], index: 2, kind: input, shape index: {}]
  %s3 = inlined_call_operand.vmem [shape: f32[32,96], index: 3, kind: input, shape index: {}]
  %s4 = inlined_call_operand.vmem [shape: f32[1,96], index: 4, kind: input, shape index: {}]
  %s5 = inlined_call_operand.vmem [shape: f32[2,1,128], index: 5, kind: input, shape index: {}]
  %s6 = inlined_call_operand.vmem [shape: f32[1,4], index: 6, kind: input, shape index: {}]
  %s7 = inlined_call_operand.vmem [shape: f32[1,4], index: 7, kind: input, shape index: {}]
  %s8 = inlined_call_operand.vmem [shape: f32[2,128,32], index: 8, kind: output, shape index: {}]
  %s9 = sld [smem:[#allocation0]]
  $region77: #{tpu_custom_call.1} parent=0
    _
  %s11 = ssub.s32 1, %s9
  %s12 = scalar_select 0, %s11, %s9
  $region1: #{tpu_custom_call.1} parent=0
    #allocation4 [shape = 'u8[512]{0}', space=smem, size = 0x200, scoped, tag = 'input window, operand 6, single buffered']
    #allocation5 [shape = 's32[2]{0}', space=sflag, size = 0x8, scoped, tag = 'scoped memory for tpu_custom_call.1']
    #allocation6 [shape = 'u8[512]{0}', space=smem, size = 0x200, scoped, tag = 'input window, operand 7, single buffered']
    #allocation7 [shape = 's32[1]{0}', space=sflag, size = 0x4, scoped, tag = 'scoped memory for tpu_custom_call.1']
    %13 = vsyncpa [#allocation5], 0
    %14 = vsyncpa [#allocation7], 0
    loop: start=0, step=1, limit=4
    $region2: #{tpu_custom_call.1} parent=1 // loop_pre_header
      _
    $region3: #{tpu_custom_call.1} parent=1 // loop_header
      %s16 = sphi 0, %s20
      %p17 = scmp.ge.s32.totalorder %s16, 4
      %s23 = sphi 0, %s35
      %s24 = sphi 0, %s31
      %s25 = sphi 0, %s23
      %s26 = sphi 0, %s24
      %s27 = sphi 0, %s25
      %s28 = sphi 0, %s26
      %s38 = sphi 0, %s40
      %s41 = sphi 0, %s38
      %s42 = sphi 0, %s41
      %s58 = sphi 0, %s42
      %s62 = sphi 0, %s62
      %s64 = sphi 0, %s62
      %s65 = sphi 0, %s64
      %s79 = sphi 0, %s65
      %s83 = sphi 0, %s83
      %s85 = sphi 0, %s83
      %s86 = sphi 0, %s85
      %s100 = sphi 0, %s86
      %s104 = sphi 0, %s104
      %s106 = sphi 0, %s104
      %s107 = sphi 0, %s106
      %s121 = sphi 0, %s107
      %s125 = sphi 0, %s125
      %s127 = sphi 0, %s125
      %s128 = sphi 0, %s127
      %s142 = sphi 0, %s128
      %s148 = sphi 0, %s150
      %s151 = sphi 0, %s148
      %s152 = sphi 0, %s151
      %s168 = sphi 0, %s152
      %s172 = sphi 0, %s172
      %s174 = sphi 0, %s172
      %s175 = sphi 0, %s174
      %s189 = sphi 0, %s175
      %s193 = sphi 0, %s193
      %s195 = sphi 0, %s193
      %s196 = sphi 0, %s195
      %s210 = sphi 0, %s196
      %s218 = sphi 0, %s220
      %s221 = sphi 0, %s218
      %s222 = sphi 0, %s221
      %s238 = sphi 0, %s222
    $region4: #{tpu_custom_call.1} parent=1 // loop_header_branch
      %19 = sbr.rel (%p17) target = $region8
    $region5: #{tpu_custom_call.1} parent=1 // loop_body
      %s21 = ssub.s32 %s16, 1
      %s22 = ssub.s32 %s16, 2
      %s29 = sadd.s32 1, %s24
      %p30 = scmp.ge.s32.totalorder %s29, 1
      %s31 = scalar_select %p30, 0, %s29
      %s32 = sadd.s32 1, %s23
      %s33 = scalar_select %p30, %s32, %s23
      %p34 = scmp.ge.s32.totalorder %s33, 2
      %s35 = scalar_select %p34, 0, %s33
      %s36 = ssub.s32 %s23, %s35
      %p37 = scmp.eq.s32.totalorder %s36, 0
      %s39 = sadd.s32 %s38, 1
      %s40 = scalar_select %p37, %s38, %s39
      %p43 = pneg %p37
      %p44 = scmp.eq.s32.totalorder %s16, 1
      %p45 = por %p43, %p44
      %p46 = scmp.ne.s32.totalorder %s38, %s41
      %p47 = scmp.eq.s32.totalorder %s16, 0
      %p48 = por %p46, %p47
      %p49 = scmp.ne.s32.totalorder %s38, %s41
      %p50 = scmp.eq.s32.totalorder %s21, 1
      %p51 = por %p49, %p50
      %p52 = scmp.ne.s32.totalorder %s41, %s42
      %p53 = scmp.eq.s32.totalorder %s21, 0
      %p54 = por %p52, %p53
      %p55 = scmp.ne.s32.totalorder %s41, %s42
      %p56 = scmp.eq.s32.totalorder %s22, 1
      %p57 = por %p55, %p56
      %p59 = scmp.ne.s32.totalorder %s42, %s58
      %p60 = scmp.eq.s32.totalorder %s22, 0
      %p61 = por %p59, %p60
      %s63 = sadd.s32 %s62, 1
      %p66 = scmp.eq.s32.totalorder %s16, 1
      %p67 = scmp.ne.s32.totalorder %s62, %s64
      %p68 = scmp.eq.s32.totalorder %s16, 0
      %p69 = por %p67, %p68
      %p70 = scmp.ne.s32.totalorder %s62, %s64
      %p71 = scmp.eq.s32.totalorder %s21, 1
      %p72 = por %p70, %p71
      %p73 = scmp.ne.s32.totalorder %s64, %s65
      %p74 = scmp.eq.s32.totalorder %s21, 0
      %p75 = por %p73, %p74
      %p76 = scmp.ne.s32.totalorder %s64, %s65
      %p77 = scmp.eq.s32.totalorder %s22, 1
      %p78 = por %p76, %p77
      %p80 = scmp.ne.s32.totalorder %s65, %s79
      %p81 = scmp.eq.s32.totalorder %s22, 0
      %p82 = por %p80, %p81
      %s84 = sadd.s32 %s83, 1
      %p87 = scmp.eq.s32.totalorder %s16, 1
      %p88 = scmp.ne.s32.totalorder %s83, %s85
      %p89 = scmp.eq.s32.totalorder %s16, 0
      %p90 = por %p88, %p89
      %p91 = scmp.ne.s32.totalorder %s83, %s85
      %p92 = scmp.eq.s32.totalorder %s21, 1
      %p93 = por %p91, %p92
      %p94 = scmp.ne.s32.totalorder %s85, %s86
      %p95 = scmp.eq.s32.totalorder %s21, 0
      %p96 = por %p94, %p95
      %p97 = scmp.ne.s32.totalorder %s85, %s86
      %p98 = scmp.eq.s32.totalorder %s22, 1
      %p99 = por %p97, %p98
      %p101 = scmp.ne.s32.totalorder %s86, %s100
      %p102 = scmp.eq.s32.totalorder %s22, 0
      %p103 = por %p101, %p102
      %s105 = sadd.s32 %s104, 1
      %p108 = scmp.eq.s32.totalorder %s16, 1
      %p109 = scmp.ne.s32.totalorder %s104, %s106
      %p110 = scmp.eq.s32.totalorder %s16, 0
      %p111 = por %p109, %p110
      %p112 = scmp.ne.s32.totalorder %s104, %s106
      %p113 = scmp.eq.s32.totalorder %s21, 1
      %p114 = por %p112, %p113
      %p115 = scmp.ne.s32.totalorder %s106, %s107
      %p116 = scmp.eq.s32.totalorder %s21, 0
      %p117 = por %p115, %p116
      %p118 = scmp.ne.s32.totalorder %s106, %s107
      %p119 = scmp.eq.s32.totalorder %s22, 1
      %p120 = por %p118, %p119
      %p122 = scmp.ne.s32.totalorder %s107, %s121
      %p123 = scmp.eq.s32.totalorder %s22, 0
      %p124 = por %p122, %p123
      %s126 = sadd.s32 %s125, 1
      %p129 = scmp.eq.s32.totalorder %s16, 1
      %p130 = scmp.ne.s32.totalorder %s125, %s127
      %p131 = scmp.eq.s32.totalorder %s16, 0
      %p132 = por %p130, %p131
      %p133 = scmp.ne.s32.totalorder %s125, %s127
      %p134 = scmp.eq.s32.totalorder %s21, 1
      %p135 = por %p133, %p134
      %p136 = scmp.ne.s32.totalorder %s127, %s128
      %p137 = scmp.eq.s32.totalorder %s21, 0
      %p138 = por %p136, %p137
      %p139 = scmp.ne.s32.totalorder %s127, %s128
      %p140 = scmp.eq.s32.totalorder %s22, 1
      %p141 = por %p139, %p140
      %p143 = scmp.ne.s32.totalorder %s128, %s142
      %p144 = scmp.eq.s32.totalorder %s22, 0
      %p145 = por %p143, %p144
      %s146 = ssub.s32 %s23, %s35
      %p147 = scmp.eq.s32.totalorder %s146, 0
      %s149 = sadd.s32 %s148, 1
      %s150 = scalar_select %p147, %s148, %s149
      %p153 = pneg %p147
      %p154 = scmp.eq.s32.totalorder %s16, 1
      %p155 = por %p153, %p154
      %p156 = scmp.ne.s32.totalorder %s148, %s151
      %p157 = scmp.eq.s32.totalorder %s16, 0
      %p158 = por %p156, %p157
      %p159 = scmp.ne.s32.totalorder %s148, %s151
      %p160 = scmp.eq.s32.totalorder %s21, 1
      %p161 = por %p159, %p160
      %p162 = scmp.ne.s32.totalorder %s151, %s152
      %p163 = scmp.eq.s32.totalorder %s21, 0
      %p164 = por %p162, %p163
      %p165 = scmp.ne.s32.totalorder %s151, %s152
      %p166 = scmp.eq.s32.totalorder %s22, 1
      %p167 = por %p165, %p166
      %p169 = scmp.ne.s32.totalorder %s152, %s168
      %p170 = scmp.eq.s32.totalorder %s22, 0
      %p171 = por %p169, %p170
      %s173 = sadd.s32 %s172, 1
      %p176 = scmp.eq.s32.totalorder %s16, 1
      %p177 = scmp.ne.s32.totalorder %s172, %s174
      %p178 = scmp.eq.s32.totalorder %s16, 0
      %p179 = por %p177, %p178
      %p180 = scmp.ne.s32.totalorder %s172, %s174
      %p181 = scmp.eq.s32.totalorder %s21, 1
      %p182 = por %p180, %p181
      %p183 = scmp.ne.s32.totalorder %s174, %s175
      %p184 = scmp.eq.s32.totalorder %s21, 0
      %p185 = por %p183, %p184
      %p186 = scmp.ne.s32.totalorder %s174, %s175
      %p187 = scmp.eq.s32.totalorder %s22, 1
      %p188 = por %p186, %p187
      %p190 = scmp.ne.s32.totalorder %s175, %s189
      %p191 = scmp.eq.s32.totalorder %s22, 0
      %p192 = por %p190, %p191
      %s194 = sadd.s32 %s193, 1
      %p197 = scmp.eq.s32.totalorder %s16, 1
      %p198 = scmp.ne.s32.totalorder %s193, %s195
      %p199 = scmp.eq.s32.totalorder %s16, 0
      %p200 = por %p198, %p199
      %p201 = scmp.ne.s32.totalorder %s193, %s195
      %p202 = scmp.eq.s32.totalorder %s21, 1
      %p203 = por %p201, %p202
      %p204 = scmp.ne.s32.totalorder %s195, %s196
      %p205 = scmp.eq.s32.totalorder %s21, 0
      %p206 = por %p204, %p205
      %p207 = scmp.ne.s32.totalorder %s195, %s196
      %p208 = scmp.eq.s32.totalorder %s22, 1
      %p209 = por %p207, %p208
      %p211 = scmp.ne.s32.totalorder %s196, %s210
      %p212 = scmp.eq.s32.totalorder %s22, 0
      %p213 = por %p211, %p212
      %s214 = ssub.s32 %s23, %s35
      %s215 = ssub.s32 %s24, %s31
      %s216 = sor.u32 %s214, %s215
      %p217 = scmp.eq.s32.totalorder %s216, 0
      %s219 = sadd.s32 %s218, 1
      %s220 = scalar_select %p217, %s218, %s219
      %p223 = pneg %p217
      %p224 = scmp.eq.s32.totalorder %s16, 1
      %p225 = por %p223, %p224
      %p226 = scmp.ne.s32.totalorder %s218, %s221
      %p227 = scmp.eq.s32.totalorder %s16, 0
      %p228 = por %p226, %p227
      %p229 = scmp.ne.s32.totalorder %s218, %s221
      %p230 = scmp.eq.s32.totalorder %s21, 1
      %p231 = por %p229, %p230
      %p232 = scmp.ne.s32.totalorder %s221, %s222
      %p233 = scmp.eq.s32.totalorder %s21, 0
      %p234 = por %p232, %p233
      %p235 = scmp.ne.s32.totalorder %s221, %s222
      %p236 = scmp.eq.s32.totalorder %s22, 1
      %p237 = por %p235, %p236
      %p239 = scmp.ne.s32.totalorder %s222, %s238
      %p240 = scmp.eq.s32.totalorder %s22, 0
      %p241 = por %p239, %p240
      %p242 = scmp.le.s32.totalorder 1, %s16
      %p243 = scmp.lt.s32.totalorder %s16, 3
      %p244 = pnand %p242, %p243
      %p245 = pneg %p244
      // Predicated region
      $region9: #{tpu_custom_call.1} parent=5 // pred_check
        _
      $region10: #{tpu_custom_call.1} parent=5 // pred_check_branch
        %247 = sbr.rel (%p244) target = $region12
      $region11: #{tpu_custom_call.1} parent=5 // pred_region
        %s248 = ssub.s32 %s16, 1
        // Predicated region
        $region13: #{tpu_custom_call.1} parent=11 // pred_check
          %p249 = pneg %p75
        $region14: #{tpu_custom_call.1} parent=11 // pred_check_branch
          %251 = sbr.rel (%p249) target = $region16
        $region15: #{tpu_custom_call.1} parent=11 // pred_region
          _
        $region16: #{tpu_custom_call.1} parent=11 // pred_fallthru
          _
        // Predicated region
        $region17: #{tpu_custom_call.1} parent=11 // pred_check
          %p252 = pneg %p96
        $region18: #{tpu_custom_call.1} parent=11 // pred_check_branch
          %254 = sbr.rel (%p252) target = $region20
        $region19: #{tpu_custom_call.1} parent=11 // pred_region
          _
        $region20: #{tpu_custom_call.1} parent=11 // pred_fallthru
          _
        // Predicated region
        $region21: #{tpu_custom_call.1} parent=11 // pred_check
          %p255 = pneg %p117
        $region22: #{tpu_custom_call.1} parent=11 // pred_check_branch
          %257 = sbr.rel (%p255) target = $region24
        $region23: #{tpu_custom_call.1} parent=11 // pred_region
          _
        $region24: #{tpu_custom_call.1} parent=11 // pred_fallthru
          _
        // Predicated region
        $region25: #{tpu_custom_call.1} parent=11 // pred_check
          %p258 = pneg %p138
        $region26: #{tpu_custom_call.1} parent=11 // pred_check_branch
          %260 = sbr.rel (%p258) target = $region28
        $region27: #{tpu_custom_call.1} parent=11 // pred_region
          _
        $region28: #{tpu_custom_call.1} parent=11 // pred_fallthru
          _
        // Predicated region
        $region29: #{tpu_custom_call.1} parent=11 // pred_check
          %p261 = pneg %p185
        $region30: #{tpu_custom_call.1} parent=11 // pred_check_branch
          %263 = sbr.rel (%p261) target = $region32
        $region31: #{tpu_custom_call.1} parent=11 // pred_region
          %s265 = ssub.s32 16, 16
          %266 = vsyncadd [#allocation5], %s265
          %s268 = sshll.u32 %s6, 4
          %s269 = int_to_ptr.vmem [resolvable:$true] %s268
          %271 = dma.vmem_to_smem %s269, 16, [#allocation4], [#allocation5]
        $region32: #{tpu_custom_call.1} parent=11 // pred_fallthru
          _
        // Predicated region
        $region33: #{tpu_custom_call.1} parent=11 // pred_check
          %p272 = pneg %p206
        $region34: #{tpu_custom_call.1} parent=11 // pred_check_branch
          %274 = sbr.rel (%p272) target = $region36
        $region35: #{tpu_custom_call.1} parent=11 // pred_region
          %s276 = ssub.s32 16, 16
          %277 = vsyncadd [#allocation7], %s276
          %s279 = sshll.u32 %s7, 4
          %s280 = int_to_ptr.vmem [resolvable:$true] %s279
          %282 = dma.vmem_to_smem %s280, 16, [#allocation6], [#allocation7]
        $region36: #{tpu_custom_call.1} parent=11 // pred_fallthru
          _
      $region12: #{tpu_custom_call.1} parent=5 // pred_fallthru
        _
      %p283 = scmp.lt.s32.totalorder %s16, 2
      // Predicated region
      $region37: #{tpu_custom_call.1} parent=5 // pred_check
        %p284 = pneg %p283
      $region38: #{tpu_custom_call.1} parent=5 // pred_check_branch
        %286 = sbr.rel (%p284) target = $region40
      $region39: #{tpu_custom_call.1} parent=5 // pred_region
        // Predicated region
        $region41: #{tpu_custom_call.1} parent=39 // pred_check
          %p287 = pneg %p48
        $region42: #{tpu_custom_call.1} parent=39 // pred_check_branch
          %289 = sbr.rel (%p287) target = $region44
        $region43: #{tpu_custom_call.1} parent=39 // pred_region
          %p290 = scmp.lt.s32.totalorder %s23, 1
          %s291 = scalar_select %p290, %s23, 1
          %s292 = smul.addr %s291, 16
          %s293 = smul.addr %s292, 8
          %s294 = scalar_lea.vmem %s0, %s293
        $region44: #{tpu_custom_call.1} parent=39 // pred_fallthru
          _
        // Predicated region
        $region45: #{tpu_custom_call.1} parent=39 // pred_check
          %p295 = pneg %p158
        $region46: #{tpu_custom_call.1} parent=39 // pred_check_branch
          %297 = sbr.rel (%p295) target = $region48
        $region47: #{tpu_custom_call.1} parent=39 // pred_region
          %p298 = scmp.lt.s32.totalorder %s23, 1
          %s299 = scalar_select %p298, %s23, 1
          %s300 = scalar_lea.vmem %s5, %s299
        $region48: #{tpu_custom_call.1} parent=39 // pred_fallthru
          _
      $region40: #{tpu_custom_call.1} parent=5 // pred_fallthru
        _
      %p301 = scmp.le.s32.totalorder 1, %s16
      %p302 = scmp.lt.s32.totalorder %s16, 3
      %p303 = pnand %p301, %p302
      %p304 = pneg %p303
      // Predicated region
      $region49: #{tpu_custom_call.1} parent=5 // pred_check
        _
      $region50: #{tpu_custom_call.1} parent=5 // pred_check_branch
        %306 = sbr.rel (%p303) target = $region52
      $region51: #{tpu_custom_call.1} parent=5 // pred_region
        %s307 = ssub.s32 %s16, 1
        // Predicated region
        $region53: #{tpu_custom_call.1} parent=51 // pred_check
          %p308 = pneg %p185
        $region54: #{tpu_custom_call.1} parent=51 // pred_check_branch
          %310 = sbr.rel (%p308) target = $region56
        $region55: #{tpu_custom_call.1} parent=51 // pred_region
          %311 = dma.done [#allocation5], 16
        $region56: #{tpu_custom_call.1} parent=51 // pred_fallthru
          _
        // Predicated region
        $region57: #{tpu_custom_call.1} parent=51 // pred_check
          %p312 = pneg %p206
        $region58: #{tpu_custom_call.1} parent=51 // pred_check_branch
          %314 = sbr.rel (%p312) target = $region60
        $region59: #{tpu_custom_call.1} parent=51 // pred_region
          %315 = dma.done [#allocation7], 16
        $region60: #{tpu_custom_call.1} parent=51 // pred_fallthru
          _
        %316 = sfence
        %p317 = scmp.lt.s32.totalorder %s25, 1
        %s318 = scalar_select %p317, %s25, 1
        %s319 = smul.addr %s318, 16
        %s320 = smul.addr %s319, 8
        %s321 = scalar_lea.vmem %s0, %s320
        %p322 = pneg %p54
        %p323 = pneg %p51
        %p324 = pneg %p75
        %p325 = pneg %p72
        %p326 = pneg %p96
        %p327 = pneg %p93
        %p328 = pneg %p117
        %p329 = pneg %p114
        %p330 = pneg %p138
        %p331 = pneg %p135
        %p332 = scmp.lt.s32.totalorder %s25, 1
        %s333 = scalar_select %p332, %s25, 1
        %s334 = scalar_lea.vmem %s5, %s333
        %p335 = pneg %p164
        %p336 = pneg %p161
        %p337 = pneg %p185
        %p338 = pneg %p182
        %p339 = pneg %p206
        %p340 = pneg %p203
        %p341 = pneg %p234
        %p342 = pneg %p231
        %s343 = smul.u32 16, %s26
        %p344 = scmp.lt.s32.totalorder %s25, 1
        %s345 = scalar_select %p344, %s25, 1
        %p346 = scmp.lt.s32.totalorder %s343, 15
        %s347 = scalar_select %p346, %s343, 15
        %s348 = smul.addr %s345, 16
        %s349 = sadd.s32 %s347, %s348
        %s350 = smul.addr %s349, 8
        %s351 = scalar_lea.vmem %s8, %s350
        %p352 = scmp.lt.s32.totalorder %s25, 1
        %s353 = scalar_select %p352, %s25, 1
        %s354 = smul.addr %s353, 16
        %s355 = smul.addr %s354, 8
        %s356 = scalar_lea.vmem %s0, %s355
        %p357 = scmp.lt.s32.totalorder %s25, 1
        %s358 = scalar_select %p357, %s25, 1
        %s359 = scalar_lea.vmem %s5, %s358
        %s360 = smul.u32 16, %s26
        %p361 = scmp.lt.s32.totalorder %s25, 1
        %s362 = scalar_select %p361, %s25, 1
        %p363 = scmp.lt.s32.totalorder %s360, 15
        %s364 = scalar_select %p363, %s360, 15
        %s365 = smul.addr %s362, 16
        %s366 = sadd.s32 %s364, %s365
        %s367 = smul.addr %s366, 8
        %s368 = scalar_lea.vmem %s8, %s367
        %s369 = smul.u32 16, %s26
        %p370 = scmp.eq.s32.totalorder %s26, 0
        // Predicated region
        $region61: #{tpu_custom_call.1} parent=51 // pred_check
          %p371 = pneg %p370
        $region62: #{tpu_custom_call.1} parent=51 // pred_check_branch
          %373 = sbr.rel (%p371) target = $region64
        $region63: #{tpu_custom_call.1} parent=51 // pred_region
          %v374 = vld [vmem:[%s356] sm:$0xff]
          %v375 = vld [vmem:[%s356 + $0x8] sm:$0xff]
          %v376 = vld [vmem:[%s356 + $0x10] sm:$0xff]
          %v377 = vld [vmem:[%s356 + $0x18] sm:$0xff]
          %v378 = vld [vmem:[%s356 + $0x20] sm:$0xff]
          %v379 = vld [vmem:[%s356 + $0x28] sm:$0xff]
          %v380 = vld [vmem:[%s356 + $0x30] sm:$0xff]
          %v381 = vld [vmem:[%s356 + $0x38] sm:$0xff]
          %v382 = vld [vmem:[%s356 + $0x40] sm:$0xff]
          %v383 = vld [vmem:[%s356 + $0x48] sm:$0xff]
          %v384 = vld [vmem:[%s356 + $0x50] sm:$0xff]
          %v385 = vld [vmem:[%s356 + $0x58] sm:$0xff]
          %v386 = vld [vmem:[%s356 + $0x60] sm:$0xff]
          %v387 = vld [vmem:[%s356 + $0x68] sm:$0xff]
          %v388 = vld [vmem:[%s356 + $0x70] sm:$0xff]
          %v389 = vld [vmem:[%s356 + $0x78] sm:$0xff]
          %v390 = vld [vmem:[%s3] sm:$0xff]
          %v391 = vld [vmem:[%s3 + $0x8] sm:$0xff]
          %v392 = vld [vmem:[%s3 + $0x10] sm:$0xff]
          %v393 = vld [vmem:[%s3 + $0x18] sm:$0xff]
          %v394 = vld [vmem:[%s4] sm:$0x1]
          %v396 = vlaneseq
          %v397 = vshrl.u32 %v396, 7
          %v398 = vsub.s32 0, %v397
          %v399 = vrot.slane %v394, %v398
          %vm401 = vcmask 261120
          %v403 = vsel %vm401, %v374, 0
          %v406 = vsel %vm401, %v375, 0
          %v409 = vsel %vm401, %v376, 0
          %v412 = vsel %vm401, %v377, 0
          %v415 = vsel %vm401, %v378, 0
          %v418 = vsel %vm401, %v379, 0
          %v421 = vsel %vm401, %v380, 0
          %v424 = vsel %vm401, %v381, 0
          %v427 = vsel %vm401, %v382, 0
          %v430 = vsel %vm401, %v383, 0
          %v433 = vsel %vm401, %v384, 0
          %v436 = vsel %vm401, %v385, 0
          %v439 = vsel %vm401, %v386, 0
          %v442 = vsel %vm401, %v387, 0
          %v445 = vsel %vm401, %v388, 0
          %v448 = vsel %vm401, %v389, 0
          %450 = vmatprep.subr.mxu0 0.0
          %451 = vmatpush1.msra.mxu0 %v390
          %452 = vmatprep.subr.mxu0 0.0
          %453 = vmatpush1.msra.mxu0 %v391
          %454 = vmatprep.subr.mxu0 0.0
          %455 = vmatpush1.msra.mxu0 %v392
          %456 = vmatprep.subr.mxu0 0.0
          %457 = vmatpush1.msra.mxu0 %v393
          %458 = vmatprep.subr.mxu0 0.0
          %459 = vmatpush1.msra.mxu0 0.0
          %460 = vmatprep.subr.mxu0 0.0
          %461 = vmatpush1.msra.mxu0 0.0
          %462 = vmatprep.subr.mxu0 0.0
          %463 = vmatpush1.msra.mxu0 0.0
          %464 = vmatprep.subr.mxu0 0.0
          %465 = vmatpush1.msra.mxu0 0.0
          %466 = vmatprep.subr.mxu0 0.0
          %467 = vmatpush1.msra.mxu0 0.0
          %468 = vmatprep.subr.mxu0 0.0
          %469 = vmatpush1.msra.mxu0 0.0
          %470 = vmatprep.subr.mxu0 0.0
          %471 = vmatpush1.msra.mxu0 0.0
          %472 = vmatprep.subr.mxu0 0.0
          %473 = vmatpush1.msra.mxu0 0.0
          %474 = vmatprep.subr.mxu0 0.0
          %475 = vmatpush1.msra.mxu0 0.0
          %476 = vmatprep.subr.mxu0 0.0
          %477 = vmatpush1.msra.mxu0 0.0
          %478 = vmatprep.subr.mxu0 0.0
          %479 = vmatpush1.msra.mxu0 0.0
          %480 = vmatprep.subr.mxu0 0.0
          %481 = vmatpush1.msra.mxu0 0.0
          %482 = vmatprep.subr.mxu0 0.0
          %483 = vmatpush1.msra.mxu0 0.0
          %484 = vmatprep.subr.mxu0 0.0
          %485 = vmatpush1.msra.mxu0 0.0
          %486 = vmatprep.subr.mxu0 0.0
          %487 = vmatpush1.msra.mxu0 0.0
          %488 = vmatprep.subr.mxu0 0.0
          %489 = vmatpush1.msra.mxu0 0.0
          %490 = vmatprep.subr.mxu0 0.0
          %491 = vmatpush1.msra.mxu0 0.0
          %492 = vmatprep.subr.mxu0 0.0
          %493 = vmatpush1.msra.mxu0 0.0
          %494 = vmatprep.subr.mxu0 0.0
          %495 = vmatpush1.msra.mxu0 0.0
          %496 = vmatprep.subr.mxu0 0.0
          %497 = vmatpush1.msra.mxu0 0.0
          %498 = vmatprep.subr.mxu0 0.0
          %499 = vmatpush1.msra.mxu0 0.0
          %500 = vmatprep.subr.mxu0 0.0
          %501 = vmatpush1.msra.mxu0 0.0
          %502 = vmatprep.subr.mxu0 0.0
          %503 = vmatpush1.msra.mxu0 0.0
          %504 = vmatprep.subr.mxu0 0.0
          %505 = vmatpush1.msra.mxu0 0.0
          %506 = vmatprep.subr.mxu0 0.0
          %507 = vmatpush1.msra.mxu0 0.0
          %508 = vmatprep.subr.mxu0 0.0
          %509 = vmatpush1.msra.mxu0 0.0
          %510 = vmatprep.subr.mxu0 0.0
          %511 = vmatpush1.msra.mxu0 0.0
          %512 = vmatprep.subr.mxu0 0.0
          %513 = vmatpush1.msra.mxu0 0.0
          %514 = vmatprep.mubr.f32.mxu0 0.0
          %515 = vmatmul.mubr.f32.gmra.mrb[0].mxu0 %v403
          %v516 = vpop.f32.mrb[0].mxu0
          %v517 = vadd.f32 %v399, %v516
          %v518 = vpop.f32.mrb[0].mxu0
          %519 = vmatprep.mubr.f32.mxu0 0.0
          %520 = vmatmul.mubr.f32.gmra.mrb[0].mxu0 %v406
          %v521 = vpop.f32.mrb[0].mxu0
          %v522 = vadd.f32 %v399, %v521
          %v523 = vpop.f32.mrb[0].mxu0
          %524 = vmatprep.mubr.f32.mxu0 0.0
          %525 = vmatmul.mubr.f32.gmra.mrb[0].mxu0 %v409
          %v526 = vpop.f32.mrb[0].mxu0
          %v527 = vadd.f32 %v399, %v526
          %v528 = vpop.f32.mrb[0].mxu0
          %529 = vmatprep.mubr.f32.mxu0 0.0
          %530 = vmatmul.mubr.f32.gmra.mrb[0].mxu0 %v412
          %v531 = vpop.f32.mrb[0].mxu0
          %v532 = vadd.f32 %v399, %v531
          %v533 = vpop.f32.mrb[0].mxu0
          %534 = vmatprep.mubr.f32.mxu0 0.0
          %535 = vmatmul.mubr.f32.gmra.mrb[0].mxu0 %v415
          %v536 = vpop.f32.mrb[0].mxu0
          %v537 = vadd.f32 %v399, %v536
          %v538 = vpop.f32.mrb[0].mxu0
          %539 = vmatprep.mubr.f32.mxu0 0.0
          %540 = vmatmul.mubr.f32.gmra.mrb[0].mxu0 %v418
          %v541 = vpop.f32.mrb[0].mxu0
          %v542 = vadd.f32 %v399, %v541
          %v543 = vpop.f32.mrb[0].mxu0
          %544 = vmatprep.mubr.f32.mxu0 0.0
          %545 = vmatmul.mubr.f32.gmra.mrb[0].mxu0 %v421
          %v546 = vpop.f32.mrb[0].mxu0
          %v547 = vadd.f32 %v399, %v546
          %v548 = vpop.f32.mrb[0].mxu0
          %549 = vmatprep.mubr.f32.mxu0 0.0
          %550 = vmatmul.mubr.f32.gmra.mrb[0].mxu0 %v424
          %v551 = vpop.f32.mrb[0].mxu0
          %v552 = vadd.f32 %v399, %v551
          %v553 = vpop.f32.mrb[0].mxu0
          %554 = vmatprep.mubr.f32.mxu0 0.0
          %555 = vmatmul.mubr.f32.gmra.mrb[0].mxu0 %v427
          %v556 = vpop.f32.mrb[0].mxu0
          %v557 = vadd.f32 %v399, %v556
          %v558 = vpop.f32.mrb[0].mxu0
          %559 = vmatprep.mubr.f32.mxu0 0.0
          %560 = vmatmul.mubr.f32.gmra.mrb[0].mxu0 %v430
          %v561 = vpop.f32.mrb[0].mxu0
          %v562 = vadd.f32 %v399, %v561
          %v563 = vpop.f32.mrb[0].mxu0
          %564 = vmatprep.mubr.f32.mxu0 0.0
          %565 = vmatmul.mubr.f32.gmra.mrb[0].mxu0 %v433
          %v566 = vpop.f32.mrb[0].mxu0
          %v567 = vadd.f32 %v399, %v566
          %v568 = vpop.f32.mrb[0].mxu0
          %569 = vmatprep.mubr.f32.mxu0 0.0
          %570 = vmatmul.mubr.f32.gmra.mrb[0].mxu0 %v436
          %v571 = vpop.f32.mrb[0].mxu0
          %v572 = vadd.f32 %v399, %v571
          %v573 = vpop.f32.mrb[0].mxu0
          %574 = vmatprep.mubr.f32.mxu0 0.0
          %575 = vmatmul.mubr.f32.gmra.mrb[0].mxu0 %v439
          %v576 = vpop.f32.mrb[0].mxu0
          %v577 = vadd.f32 %v399, %v576
          %v578 = vpop.f32.mrb[0].mxu0
          %579 = vmatprep.mubr.f32.mxu0 0.0
          %580 = vmatmul.mubr.f32.gmra.mrb[0].mxu0 %v442
          %v581 = vpop.f32.mrb[0].mxu0
          %v582 = vadd.f32 %v399, %v581
          %v583 = vpop.f32.mrb[0].mxu0
          %584 = vmatprep.mubr.f32.mxu0 0.0
          %585 = vmatmul.mubr.f32.gmra.mrb[0].mxu0 %v445
          %v586 = vpop.f32.mrb[0].mxu0
          %v587 = vadd.f32 %v399, %v586
          %v588 = vpop.f32.mrb[0].mxu0
          %589 = vmatprep.mubr.f32.mxu0 0.0
          %590 = vmatmul.mubr.f32.gmra.mrb[0].mxu0 %v448
          %v591 = vpop.f32.mrb[0].mxu0
          %v592 = vadd.f32 %v399, %v591
          %v593 = vpop.f32.mrb[0].mxu0
          %594 = vdwg.mxu0
          %595 = vst.msk [vmem:[#allocation2] sm:$0xff] %vm401, %v517
          %596 = vst.msk [vmem:[#allocation2 + $0x8] sm:$0xff] %vm401, %v522
          %597 = vst.msk [vmem:[#allocation2 + $0x10] sm:$0xff] %vm401, %v527
          %598 = vst.msk [vmem:[#allocation2 + $0x18] sm:$0xff] %vm401, %v532
          %599 = vst.msk [vmem:[#allocation2 + $0x20] sm:$0xff] %vm401, %v537
          %600 = vst.msk [vmem:[#allocation2 + $0x28] sm:$0xff] %vm401, %v542
          %601 = vst.msk [vmem:[#allocation2 + $0x30] sm:$0xff] %vm401, %v547
          %602 = vst.msk [vmem:[#allocation2 + $0x38] sm:$0xff] %vm401, %v552
          %603 = vst.msk [vmem:[#allocation2 + $0x40] sm:$0xff] %vm401, %v557
          %604 = vst.msk [vmem:[#allocation2 + $0x48] sm:$0xff] %vm401, %v562
          %605 = vst.msk [vmem:[#allocation2 + $0x50] sm:$0xff] %vm401, %v567
          %606 = vst.msk [vmem:[#allocation2 + $0x58] sm:$0xff] %vm401, %v572
          %607 = vst.msk [vmem:[#allocation2 + $0x60] sm:$0xff] %vm401, %v577
          %608 = vst.msk [vmem:[#allocation2 + $0x68] sm:$0xff] %vm401, %v582
          %609 = vst.msk [vmem:[#allocation2 + $0x70] sm:$0xff] %vm401, %v587
          %610 = vst.msk [vmem:[#allocation2 + $0x78] sm:$0xff] %vm401, %v592
          %627 = vrot.lane.b32.xlu0 %v517, 96
          %v628 = vpop.permute.xlu0 %627
          %629 = vrot.lane.b32.xlu0 %v522, 96
          %v630 = vpop.permute.xlu0 %629
          %631 = vrot.lane.b32.xlu0 %v527, 96
          %v632 = vpop.permute.xlu0 %631
          %633 = vrot.lane.b32.xlu0 %v532, 96
          %v634 = vpop.permute.xlu0 %633
          %635 = vrot.lane.b32.xlu0 %v537, 96
          %v636 = vpop.permute.xlu0 %635
          %637 = vrot.lane.b32.xlu0 %v542, 96
          %v638 = vpop.permute.xlu0 %637
          %639 = vrot.lane.b32.xlu0 %v547, 96
          %v640 = vpop.permute.xlu0 %639
          %641 = vrot.lane.b32.xlu0 %v552, 96
          %v642 = vpop.permute.xlu0 %641
          %643 = vrot.lane.b32.xlu0 %v557, 96
          %v644 = vpop.permute.xlu0 %643
          %645 = vrot.lane.b32.xlu0 %v562, 96
          %v646 = vpop.permute.xlu0 %645
          %647 = vrot.lane.b32.xlu0 %v567, 96
          %v648 = vpop.permute.xlu0 %647
          %649 = vrot.lane.b32.xlu0 %v572, 96
          %v650 = vpop.permute.xlu0 %649
          %651 = vrot.lane.b32.xlu0 %v577, 96
          %v652 = vpop.permute.xlu0 %651
          %653 = vrot.lane.b32.xlu0 %v582, 96
          %v654 = vpop.permute.xlu0 %653
          %655 = vrot.lane.b32.xlu0 %v587, 96
          %v656 = vpop.permute.xlu0 %655
          %657 = vrot.lane.b32.xlu0 %v592, 96
          %v658 = vpop.permute.xlu0 %657
          %vm675 = vcmask 523264
          %676 = vst.msk [vmem:[#allocation3] sm:$0xff] %vm675, %v628
          %677 = vst.msk [vmem:[#allocation3 + $0x8] sm:$0xff] %vm675, %v630
          %678 = vst.msk [vmem:[#allocation3 + $0x10] sm:$0xff] %vm675, %v632
          %679 = vst.msk [vmem:[#allocation3 + $0x18] sm:$0xff] %vm675, %v634
          %680 = vst.msk [vmem:[#allocation3 + $0x20] sm:$0xff] %vm675, %v636
          %681 = vst.msk [vmem:[#allocation3 + $0x28] sm:$0xff] %vm675, %v638
          %682 = vst.msk [vmem:[#allocation3 + $0x30] sm:$0xff] %vm675, %v640
          %683 = vst.msk [vmem:[#allocation3 + $0x38] sm:$0xff] %vm675, %v642
          %684 = vst.msk [vmem:[#allocation3 + $0x40] sm:$0xff] %vm675, %v644
          %685 = vst.msk [vmem:[#allocation3 + $0x48] sm:$0xff] %vm675, %v646
          %686 = vst.msk [vmem:[#allocation3 + $0x50] sm:$0xff] %vm675, %v648
          %687 = vst.msk [vmem:[#allocation3 + $0x58] sm:$0xff] %vm675, %v650
          %688 = vst.msk [vmem:[#allocation3 + $0x60] sm:$0xff] %vm675, %v652
          %689 = vst.msk [vmem:[#allocation3 + $0x68] sm:$0xff] %vm675, %v654
          %690 = vst.msk [vmem:[#allocation3 + $0x70] sm:$0xff] %vm675, %v656
          %691 = vst.msk [vmem:[#allocation3 + $0x78] sm:$0xff] %vm675, %v658
        $region64: #{tpu_custom_call.1} parent=51 // pred_fallthru
          _
        %s692 = smul.u32 %s26, 128
        %s693 = scalar_lea.vmem %s356, %s692
        %v694 = vld [vmem:[%s693] sm:$0xff]
        %v695 = vld [vmem:[%s693 + $0x8] sm:$0xff]
        %v696 = vld [vmem:[%s693 + $0x10] sm:$0xff]
        %v697 = vld [vmem:[%s693 + $0x18] sm:$0xff]
        %v698 = vld [vmem:[%s693 + $0x20] sm:$0xff]
        %v699 = vld [vmem:[%s693 + $0x28] sm:$0xff]
        %v700 = vld [vmem:[%s693 + $0x30] sm:$0xff]
        %v701 = vld [vmem:[%s693 + $0x38] sm:$0xff]
        %v702 = vld [vmem:[%s693 + $0x40] sm:$0xff]
        %v703 = vld [vmem:[%s693 + $0x48] sm:$0xff]
        %v704 = vld [vmem:[%s693 + $0x50] sm:$0xff]
        %v705 = vld [vmem:[%s693 + $0x58] sm:$0xff]
        %v706 = vld [vmem:[%s693 + $0x60] sm:$0xff]
        %v707 = vld [vmem:[%s693 + $0x68] sm:$0xff]
        %v708 = vld [vmem:[%s693 + $0x70] sm:$0xff]
        %v709 = vld [vmem:[%s693 + $0x78] sm:$0xff]
        %v710 = vld [vmem:[%s1] sm:$0xff]
        %v711 = vld [vmem:[%s1 + $0x8] sm:$0xff]
        %v712 = vld [vmem:[%s1 + $0x10] sm:$0xff]
        %v713 = vld [vmem:[%s1 + $0x18] sm:$0xff]
        %v714 = vld [vmem:[%s2] sm:$0x1]
        %v716 = vlaneseq
        %v717 = vshrl.u32 %v716, 7
        %v718 = vsub.s32 0, %v717
        %v719 = vrot.slane %v714, %v718
        %vm721 = vcmask 261120
        %v723 = vsel %vm721, %v694, 0
        %v726 = vsel %vm721, %v695, 0
        %v729 = vsel %vm721, %v696, 0
        %v732 = vsel %vm721, %v697, 0
        %v735 = vsel %vm721, %v698, 0
        %v738 = vsel %vm721, %v699, 0
        %v741 = vsel %vm721, %v700, 0
        %v744 = vsel %vm721, %v701, 0
        %v747 = vsel %vm721, %v702, 0
        %v750 = vsel %vm721, %v703, 0
        %v753 = vsel %vm721, %v704, 0
        %v756 = vsel %vm721, %v705, 0
        %v759 = vsel %vm721, %v706, 0
        %v762 = vsel %vm721, %v707, 0
        %v765 = vsel %vm721, %v708, 0
        %v768 = vsel %vm721, %v709, 0
        %770 = vmatprep.subr.mxu0 0.0
        %771 = vmatpush1.msra.mxu0 %v710
        %772 = vmatprep.subr.mxu0 0.0
        %773 = vmatpush1.msra.mxu0 %v711
        %774 = vmatprep.subr.mxu0 0.0
        %775 = vmatpush1.msra.mxu0 %v712
        %776 = vmatprep.subr.mxu0 0.0
        %777 = vmatpush1.msra.mxu0 %v713
        %778 = vmatprep.subr.mxu0 0.0
        %779 = vmatpush1.msra.mxu0 0.0
        %780 = vmatprep.subr.mxu0 0.0
        %781 = vmatpush1.msra.mxu0 0.0
        %782 = vmatprep.subr.mxu0 0.0
        %783 = vmatpush1.msra.mxu0 0.0
        %784 = vmatprep.subr.mxu0 0.0
        %785 = vmatpush1.msra.mxu0 0.0
        %786 = vmatprep.subr.mxu0 0.0
        %787 = vmatpush1.msra.mxu0 0.0
        %788 = vmatprep.subr.mxu0 0.0
        %789 = vmatpush1.msra.mxu0 0.0
        %790 = vmatprep.subr.mxu0 0.0
        %791 = vmatpush1.msra.mxu0 0.0
        %792 = vmatprep.subr.mxu0 0.0
        %793 = vmatpush1.msra.mxu0 0.0
        %794 = vmatprep.subr.mxu0 0.0
        %795 = vmatpush1.msra.mxu0 0.0
        %796 = vmatprep.subr.mxu0 0.0
        %797 = vmatpush1.msra.mxu0 0.0
        %798 = vmatprep.subr.mxu0 0.0
        %799 = vmatpush1.msra.mxu0 0.0
        %800 = vmatprep.subr.mxu0 0.0
        %801 = vmatpush1.msra.mxu0 0.0
        %802 = vmatprep.subr.mxu0 0.0
        %803 = vmatpush1.msra.mxu0 0.0
        %804 = vmatprep.subr.mxu0 0.0
        %805 = vmatpush1.msra.mxu0 0.0
        %806 = vmatprep.subr.mxu0 0.0
        %807 = vmatpush1.msra.mxu0 0.0
        %808 = vmatprep.subr.mxu0 0.0
        %809 = vmatpush1.msra.mxu0 0.0
        %810 = vmatprep.subr.mxu0 0.0
        %811 = vmatpush1.msra.mxu0 0.0
        %812 = vmatprep.subr.mxu0 0.0
        %813 = vmatpush1.msra.mxu0 0.0
        %814 = vmatprep.subr.mxu0 0.0
        %815 = vmatpush1.msra.mxu0 0.0
        %816 = vmatprep.subr.mxu0 0.0
        %817 = vmatpush1.msra.mxu0 0.0
        %818 = vmatprep.subr.mxu0 0.0
        %819 = vmatpush1.msra.mxu0 0.0
        %820 = vmatprep.subr.mxu0 0.0
        %821 = vmatpush1.msra.mxu0 0.0
        %822 = vmatprep.subr.mxu0 0.0
        %823 = vmatpush1.msra.mxu0 0.0
        %824 = vmatprep.subr.mxu0 0.0
        %825 = vmatpush1.msra.mxu0 0.0
        %826 = vmatprep.subr.mxu0 0.0
        %827 = vmatpush1.msra.mxu0 0.0
        %828 = vmatprep.subr.mxu0 0.0
        %829 = vmatpush1.msra.mxu0 0.0
        %830 = vmatprep.subr.mxu0 0.0
        %831 = vmatpush1.msra.mxu0 0.0
        %832 = vmatprep.subr.mxu0 0.0
        %833 = vmatpush1.msra.mxu0 0.0
        %834 = vmatprep.mubr.f32.mxu0 0.0
        %835 = vmatmul.mubr.f32.gmra.mrb[0].mxu0 %v723
        %v836 = vpop.f32.mrb[0].mxu0
        %v837 = vadd.f32 %v719, %v836
        %v838 = vpop.f32.mrb[0].mxu0
        %839 = vmatprep.mubr.f32.mxu0 0.0
        %840 = vmatmul.mubr.f32.gmra.mrb[0].mxu0 %v726
        %v841 = vpop.f32.mrb[0].mxu0
        %v842 = vadd.f32 %v719, %v841
        %v843 = vpop.f32.mrb[0].mxu0
        %844 = vmatprep.mubr.f32.mxu0 0.0
        %845 = vmatmul.mubr.f32.gmra.mrb[0].mxu0 %v729
        %v846 = vpop.f32.mrb[0].mxu0
        %v847 = vadd.f32 %v719, %v846
        %v848 = vpop.f32.mrb[0].mxu0
        %849 = vmatprep.mubr.f32.mxu0 0.0
        %850 = vmatmul.mubr.f32.gmra.mrb[0].mxu0 %v732
        %v851 = vpop.f32.mrb[0].mxu0
        %v852 = vadd.f32 %v719, %v851
        %v853 = vpop.f32.mrb[0].mxu0
        %854 = vmatprep.mubr.f32.mxu0 0.0
        %855 = vmatmul.mubr.f32.gmra.mrb[0].mxu0 %v735
        %v856 = vpop.f32.mrb[0].mxu0
        %v857 = vadd.f32 %v719, %v856
        %v858 = vpop.f32.mrb[0].mxu0
        %859 = vmatprep.mubr.f32.mxu0 0.0
        %860 = vmatmul.mubr.f32.gmra.mrb[0].mxu0 %v738
        %v861 = vpop.f32.mrb[0].mxu0
        %v862 = vadd.f32 %v719, %v861
        %v863 = vpop.f32.mrb[0].mxu0
        %864 = vmatprep.mubr.f32.mxu0 0.0
        %865 = vmatmul.mubr.f32.gmra.mrb[0].mxu0 %v741
        %v866 = vpop.f32.mrb[0].mxu0
        %v867 = vadd.f32 %v719, %v866
        %v868 = vpop.f32.mrb[0].mxu0
        %869 = vmatprep.mubr.f32.mxu0 0.0
        %870 = vmatmul.mubr.f32.gmra.mrb[0].mxu0 %v744
        %v871 = vpop.f32.mrb[0].mxu0
        %v872 = vadd.f32 %v719, %v871
        %v873 = vpop.f32.mrb[0].mxu0
        %874 = vmatprep.mubr.f32.mxu0 0.0
        %875 = vmatmul.mubr.f32.gmra.mrb[0].mxu0 %v747
        %v876 = vpop.f32.mrb[0].mxu0
        %v877 = vadd.f32 %v719, %v876
        %v878 = vpop.f32.mrb[0].mxu0
        %879 = vmatprep.mubr.f32.mxu0 0.0
        %880 = vmatmul.mubr.f32.gmra.mrb[0].mxu0 %v750
        %v881 = vpop.f32.mrb[0].mxu0
        %v882 = vadd.f32 %v719, %v881
        %v883 = vpop.f32.mrb[0].mxu0
        %884 = vmatprep.mubr.f32.mxu0 0.0
        %885 = vmatmul.mubr.f32.gmra.mrb[0].mxu0 %v753
        %v886 = vpop.f32.mrb[0].mxu0
        %v887 = vadd.f32 %v719, %v886
        %v888 = vpop.f32.mrb[0].mxu0
        %889 = vmatprep.mubr.f32.mxu0 0.0
        %890 = vmatmul.mubr.f32.gmra.mrb[0].mxu0 %v756
        %v891 = vpop.f32.mrb[0].mxu0
        %v892 = vadd.f32 %v719, %v891
        %v893 = vpop.f32.mrb[0].mxu0
        %894 = vmatprep.mubr.f32.mxu0 0.0
        %895 = vmatmul.mubr.f32.gmra.mrb[0].mxu0 %v759
        %v896 = vpop.f32.mrb[0].mxu0
        %v897 = vadd.f32 %v719, %v896
        %v898 = vpop.f32.mrb[0].mxu0
        %899 = vmatprep.mubr.f32.mxu0 0.0
        %900 = vmatmul.mubr.f32.gmra.mrb[0].mxu0 %v762
        %v901 = vpop.f32.mrb[0].mxu0
        %v902 = vadd.f32 %v719, %v901
        %v903 = vpop.f32.mrb[0].mxu0
        %904 = vmatprep.mubr.f32.mxu0 0.0
        %905 = vmatmul.mubr.f32.gmra.mrb[0].mxu0 %v765
        %v906 = vpop.f32.mrb[0].mxu0
        %v907 = vadd.f32 %v719, %v906
        %v908 = vpop.f32.mrb[0].mxu0
        %909 = vmatprep.mubr.f32.mxu0 0.0
        %910 = vmatmul.mubr.f32.gmra.mrb[0].mxu0 %v768
        %v911 = vpop.f32.mrb[0].mxu0
        %v912 = vadd.f32 %v719, %v911
        %v913 = vpop.f32.mrb[0].mxu0
        %914 = vdwg.mxu0
        %v915 = vmul.f32 %v837, 0.35355338
        %v916 = vmul.f32 %v842, 0.35355338
        %v917 = vmul.f32 %v847, 0.35355338
        %v918 = vmul.f32 %v852, 0.35355338
        %v919 = vmul.f32 %v857, 0.35355338
        %v920 = vmul.f32 %v862, 0.35355338
        %v921 = vmul.f32 %v867, 0.35355338
        %v922 = vmul.f32 %v872, 0.35355338
        %v923 = vmul.f32 %v877, 0.35355338
        %v924 = vmul.f32 %v882, 0.35355338
        %v925 = vmul.f32 %v887, 0.35355338
        %v926 = vmul.f32 %v892, 0.35355338
        %v927 = vmul.f32 %v897, 0.35355338
        %v928 = vmul.f32 %v902, 0.35355338
        %v929 = vmul.f32 %v907, 0.35355338
        %v930 = vmul.f32 %v912, 0.35355338
        %v931 = vld [vmem:[%s359] sm:$0x1]
        %v933 = vlaneseq
        %v934 = vshrl.u32 %v933, 7
        %v935 = vsub.s32 0, %v934
        %v936 = vrot.slane %v931, %v935
        %v938 = vld [vmem:[#allocation3] sm:$0xff]
        %v939 = vld [vmem:[#allocation3 + $0x8] sm:$0xff]
        %v940 = vld [vmem:[#allocation3 + $0x10] sm:$0xff]
        %v941 = vld [vmem:[#allocation3 + $0x18] sm:$0xff]
        %v942 = vld [vmem:[#allocation3 + $0x20] sm:$0xff]
        %v943 = vld [vmem:[#allocation3 + $0x28] sm:$0xff]
        %v944 = vld [vmem:[#allocation3 + $0x30] sm:$0xff]
        %v945 = vld [vmem:[#allocation3 + $0x38] sm:$0xff]
        %v946 = vld [vmem:[#allocation3 + $0x40] sm:$0xff]
        %v947 = vld [vmem:[#allocation3 + $0x48] sm:$0xff]
        %v948 = vld [vmem:[#allocation3 + $0x50] sm:$0xff]
        %v949 = vld [vmem:[#allocation3 + $0x58] sm:$0xff]
        %v950 = vld [vmem:[#allocation3 + $0x60] sm:$0xff]
        %v951 = vld [vmem:[#allocation3 + $0x68] sm:$0xff]
        %v952 = vld [vmem:[#allocation3 + $0x70] sm:$0xff]
        %v953 = vld [vmem:[#allocation3 + $0x78] sm:$0xff]
        %v954 = vld [vmem:[#allocation2] sm:$0xff]
        %v955 = vld [vmem:[#allocation2 + $0x8] sm:$0xff]
        %v956 = vld [vmem:[#allocation2 + $0x10] sm:$0xff]
        %v957 = vld [vmem:[#allocation2 + $0x18] sm:$0xff]
        %v958 = vld [vmem:[#allocation2 + $0x20] sm:$0xff]
        %v959 = vld [vmem:[#allocation2 + $0x28] sm:$0xff]
        %v960 = vld [vmem:[#allocation2 + $0x30] sm:$0xff]
        %v961 = vld [vmem:[#allocation2 + $0x38] sm:$0xff]
        %v962 = vld [vmem:[#allocation2 + $0x40] sm:$0xff]
        %v963 = vld [vmem:[#allocation2 + $0x48] sm:$0xff]
        %v964 = vld [vmem:[#allocation2 + $0x50] sm:$0xff]
        %v965 = vld [vmem:[#allocation2 + $0x58] sm:$0xff]
        %v966 = vld [vmem:[#allocation2 + $0x60] sm:$0xff]
        %v967 = vld [vmem:[#allocation2 + $0x68] sm:$0xff]
        %v968 = vld [vmem:[#allocation2 + $0x70] sm:$0xff]
        %v969 = vld [vmem:[#allocation2 + $0x78] sm:$0xff]
        %vm970 = vcmask 64512
        %v972 = vsel %vm970, %v915, 0
        %v975 = vsel %vm970, %v916, 0
        %v978 = vsel %vm970, %v917, 0
        %v981 = vsel %vm970, %v918, 0
        %v984 = vsel %vm970, %v919, 0
        %v987 = vsel %vm970, %v920, 0
        %v990 = vsel %vm970, %v921, 0
        %v993 = vsel %vm970, %v922, 0
        %v996 = vsel %vm970, %v923, 0
        %v999 = vsel %vm970, %v924, 0
        %v1002 = vsel %vm970, %v925, 0
        %v1005 = vsel %vm970, %v926, 0
        %v1008 = vsel %vm970, %v927, 0
        %v1011 = vsel %vm970, %v928, 0
        %v1014 = vsel %vm970, %v929, 0
        %v1017 = vsel %vm970, %v930, 0
        %v1020 = vsel %vm970, %v954, 0
        %v1023 = vsel %vm970, %v955, 0
        %v1026 = vsel %vm970, %v956, 0
        %v1029 = vsel %vm970, %v957, 0
        %v1032 = vsel %vm970, %v958, 0
        %v1035 = vsel %vm970, %v959, 0
        %v1038 = vsel %vm970, %v960, 0
        %v1041 = vsel %vm970, %v961, 0
        %v1044 = vsel %vm970, %v962, 0
        %v1047 = vsel %vm970, %v963, 0
        %v1050 = vsel %vm970, %v964, 0
        %v1053 = vsel %vm970, %v965, 0
        %v1056 = vsel %vm970, %v966, 0
        %v1059 = vsel %vm970, %v967, 0
        %v1062 = vsel %vm970, %v968, 0
        %v1065 = vsel %vm970, %v969, 0
        %1067 = vmatprep.subr.mxu0 0.0
        %1068 = vmatpush1.xpose.msra.mxu0 %v1020
        %1069 = vmatprep.subr.mxu0 0.0
        %1070 = vmatpush1.xpose.msra.mxu0 %v1023
        %1071 = vmatprep.subr.mxu0 0.0
        %1072 = vmatpush1.xpose.msra.mxu0 %v1026
        %1073 = vmatprep.subr.mxu0 0.0
        %1074 = vmatpush1.xpose.msra.mxu0 %v1029
        %1075 = vmatprep.subr.mxu0 0.0
        %1076 = vmatpush1.xpose.msra.mxu0 %v1032
        %1077 = vmatprep.subr.mxu0 0.0
        %1078 = vmatpush1.xpose.msra.mxu0 %v1035
        %1079 = vmatprep.subr.mxu0 0.0
        %1080 = vmatpush1.xpose.msra.mxu0 %v1038
        %1081 = vmatprep.subr.mxu0 0.0
        %1082 = vmatpush1.xpose.msra.mxu0 %v1041
        %1083 = vmatprep.subr.mxu0 0.0
        %1084 = vmatpush1.xpose.msra.mxu0 %v1044
        %1085 = vmatprep.subr.mxu0 0.0
        %1086 = vmatpush1.xpose.msra.mxu0 %v1047
        %1087 = vmatprep.subr.mxu0 0.0
        %1088 = vmatpush1.xpose.msra.mxu0 %v1050
        %1089 = vmatprep.subr.mxu0 0.0
        %1090 = vmatpush1.xpose.msra.mxu0 %v1053
        %1091 = vmatprep.subr.mxu0 0.0
        %1092 = vmatpush1.xpose.msra.mxu0 %v1056
        %1093 = vmatprep.subr.mxu0 0.0
        %1094 = vmatpush1.xpose.msra.mxu0 %v1059
        %1095 = vmatprep.subr.mxu0 0.0
        %1096 = vmatpush1.xpose.msra.mxu0 %v1062
        %1097 = vmatprep.subr.mxu0 0.0
        %1098 = vmatpush1.xpose.msra.mxu0 %v1065
        %1099 = vmatprep.subr.mxu0 0.0
        %1100 = vmatpush1.xpose.msra.mxu0 0.0
        %1101 = vmatprep.subr.mxu0 0.0
        %1102 = vmatpush1.xpose.msra.mxu0 0.0
        %1103 = vmatprep.subr.mxu0 0.0
        %1104 = vmatpush1.xpose.msra.mxu0 0.0
        %1105 = vmatprep.subr.mxu0 0.0
        %1106 = vmatpush1.xpose.msra.mxu0 0.0
        %1107 = vmatprep.subr.mxu0 0.0
        %1108 = vmatpush1.xpose.msra.mxu0 0.0
        %1109 = vmatprep.subr.mxu0 0.0
        %1110 = vmatpush1.xpose.msra.mxu0 0.0
        %1111 = vmatprep.subr.mxu0 0.0
        %1112 = vmatpush1.xpose.msra.mxu0 0.0
        %1113 = vmatprep.subr.mxu0 0.0
        %1114 = vmatpush1.xpose.msra.mxu0 0.0
        %1115 = vmatprep.subr.mxu0 0.0
        %1116 = vmatpush1.xpose.msra.mxu0 0.0
        %1117 = vmatprep.subr.mxu0 0.0
        %1118 = vmatpush1.xpose.msra.mxu0 0.0
        %1119 = vmatprep.subr.mxu0 0.0
        %1120 = vmatpush1.xpose.msra.mxu0 0.0
        %1121 = vmatprep.subr.mxu0 0.0
        %1122 = vmatpush1.xpose.msra.mxu0 0.0
        %1123 = vmatprep.subr.mxu0 0.0
        %1124 = vmatpush1.xpose.msra.mxu0 0.0
        %1125 = vmatprep.subr.mxu0 0.0
        %1126 = vmatpush1.xpose.msra.mxu0 0.0
        %1127 = vmatprep.subr.mxu0 0.0
        %1128 = vmatpush1.xpose.msra.mxu0 0.0
        %1129 = vmatprep.subr.mxu0 0.0
        %1130 = vmatpush1.xpose.msra.mxu0 0.0
        %1131 = vmatprep.mubr.f32.mxu0 0.0
        %1132 = vmatmul.mubr.f32.gmra.mrb[0].mxu0 %v972
        %v1133 = vpop.f32.mrb[0].mxu0
        %v1134 = vadd.f32 %v936, %v1133
        %v1135 = vpop.f32.mrb[0].mxu0
        %1136 = vmatprep.mubr.f32.mxu0 0.0
        %1137 = vmatmul.mubr.f32.gmra.mrb[0].mxu0 %v975
        %v1138 = vpop.f32.mrb[0].mxu0
        %v1139 = vadd.f32 %v936, %v1138
        %v1140 = vpop.f32.mrb[0].mxu0
        %1141 = vmatprep.mubr.f32.mxu0 0.0
        %1142 = vmatmul.mubr.f32.gmra.mrb[0].mxu0 %v978
        %v1143 = vpop.f32.mrb[0].mxu0
        %v1144 = vadd.f32 %v936, %v1143
        %v1145 = vpop.f32.mrb[0].mxu0
        %1146 = vmatprep.mubr.f32.mxu0 0.0
        %1147 = vmatmul.mubr.f32.gmra.mrb[0].mxu0 %v981
        %v1148 = vpop.f32.mrb[0].mxu0
        %v1149 = vadd.f32 %v936, %v1148
        %v1150 = vpop.f32.mrb[0].mxu0
        %1151 = vmatprep.mubr.f32.mxu0 0.0
        %1152 = vmatmul.mubr.f32.gmra.mrb[0].mxu0 %v984
        %v1153 = vpop.f32.mrb[0].mxu0
        %v1154 = vadd.f32 %v936, %v1153
        %v1155 = vpop.f32.mrb[0].mxu0
        %1156 = vmatprep.mubr.f32.mxu0 0.0
        %1157 = vmatmul.mubr.f32.gmra.mrb[0].mxu0 %v987
        %v1158 = vpop.f32.mrb[0].mxu0
        %v1159 = vadd.f32 %v936, %v1158
        %v1160 = vpop.f32.mrb[0].mxu0
        %1161 = vmatprep.mubr.f32.mxu0 0.0
        %1162 = vmatmul.mubr.f32.gmra.mrb[0].mxu0 %v990
        %v1163 = vpop.f32.mrb[0].mxu0
        %v1164 = vadd.f32 %v936, %v1163
        %v1165 = vpop.f32.mrb[0].mxu0
        %1166 = vmatprep.mubr.f32.mxu0 0.0
        %1167 = vmatmul.mubr.f32.gmra.mrb[0].mxu0 %v993
        %v1168 = vpop.f32.mrb[0].mxu0
        %v1169 = vadd.f32 %v936, %v1168
        %v1170 = vpop.f32.mrb[0].mxu0
        %1171 = vmatprep.mubr.f32.mxu0 0.0
        %1172 = vmatmul.mubr.f32.gmra.mrb[0].mxu0 %v996
        %v1173 = vpop.f32.mrb[0].mxu0
        %v1174 = vadd.f32 %v936, %v1173
        %v1175 = vpop.f32.mrb[0].mxu0
        %1176 = vmatprep.mubr.f32.mxu0 0.0
        %1177 = vmatmul.mubr.f32.gmra.mrb[0].mxu0 %v999
        %v1178 = vpop.f32.mrb[0].mxu0
        %v1179 = vadd.f32 %v936, %v1178
        %v1180 = vpop.f32.mrb[0].mxu0
        %1181 = vmatprep.mubr.f32.mxu0 0.0
        %1182 = vmatmul.mubr.f32.gmra.mrb[0].mxu0 %v1002
        %v1183 = vpop.f32.mrb[0].mxu0
        %v1184 = vadd.f32 %v936, %v1183
        %v1185 = vpop.f32.mrb[0].mxu0
        %1186 = vmatprep.mubr.f32.mxu0 0.0
        %1187 = vmatmul.mubr.f32.gmra.mrb[0].mxu0 %v1005
        %v1188 = vpop.f32.mrb[0].mxu0
        %v1189 = vadd.f32 %v936, %v1188
        %v1190 = vpop.f32.mrb[0].mxu0
        %1191 = vmatprep.mubr.f32.mxu0 0.0
        %1192 = vmatmul.mubr.f32.gmra.mrb[0].mxu0 %v1008
        %v1193 = vpop.f32.mrb[0].mxu0
        %v1194 = vadd.f32 %v936, %v1193
        %v1195 = vpop.f32.mrb[0].mxu0
        %1196 = vmatprep.mubr.f32.mxu0 0.0
        %1197 = vmatmul.mubr.f32.gmra.mrb[0].mxu0 %v1011
        %v1198 = vpop.f32.mrb[0].mxu0
        %v1199 = vadd.f32 %v936, %v1198
        %v1200 = vpop.f32.mrb[0].mxu0
        %1201 = vmatprep.mubr.f32.mxu0 0.0
        %1202 = vmatmul.mubr.f32.gmra.mrb[0].mxu0 %v1014
        %v1203 = vpop.f32.mrb[0].mxu0
        %v1204 = vadd.f32 %v936, %v1203
        %v1205 = vpop.f32.mrb[0].mxu0
        %1206 = vmatprep.mubr.f32.mxu0 0.0
        %1207 = vmatmul.mubr.f32.gmra.mrb[0].mxu0 %v1017
        %v1208 = vpop.f32.mrb[0].mxu0
        %v1209 = vadd.f32 %v936, %v1208
        %v1210 = vpop.f32.mrb[0].mxu0
        %1211 = vdwg.mxu0
        %1212 = vmax.xlane.f32.xlu0 %v1134
        %v1213 = vpop.xlane.xlu0 %1212
        %1214 = vmax.xlane.f32.xlu0 %v1139
        %v1215 = vpop.xlane.xlu0 %1214
        %1216 = vmax.xlane.f32.xlu0 %v1144
        %v1217 = vpop.xlane.xlu0 %1216
        %1218 = vmax.xlane.f32.xlu0 %v1149
        %v1219 = vpop.xlane.xlu0 %1218
        %1220 = vmax.xlane.f32.xlu0 %v1154
        %v1221 = vpop.xlane.xlu0 %1220
        %1222 = vmax.xlane.f32.xlu0 %v1159
        %v1223 = vpop.xlane.xlu0 %1222
        %1224 = vmax.xlane.f32.xlu0 %v1164
        %v1225 = vpop.xlane.xlu0 %1224
        %1226 = vmax.xlane.f32.xlu0 %v1169
        %v1227 = vpop.xlane.xlu0 %1226
        %1228 = vmax.xlane.f32.xlu0 %v1174
        %v1229 = vpop.xlane.xlu0 %1228
        %1230 = vmax.xlane.f32.xlu0 %v1179
        %v1231 = vpop.xlane.xlu0 %1230
        %1232 = vmax.xlane.f32.xlu0 %v1184
        %v1233 = vpop.xlane.xlu0 %1232
        %1234 = vmax.xlane.f32.xlu0 %v1189
        %v1235 = vpop.xlane.xlu0 %1234
        %1236 = vmax.xlane.f32.xlu0 %v1194
        %v1237 = vpop.xlane.xlu0 %1236
        %1238 = vmax.xlane.f32.xlu0 %v1199
        %v1239 = vpop.xlane.xlu0 %1238
        %1240 = vmax.xlane.f32.xlu0 %v1204
        %v1241 = vpop.xlane.xlu0 %1240
        %1242 = vmax.xlane.f32.xlu0 %v1209
        %v1243 = vpop.xlane.xlu0 %1242
        %v1244 = vsub.f32 %v1134, %v1213
        %v1245 = vsub.f32 %v1139, %v1215
        %v1246 = vsub.f32 %v1144, %v1217
        %v1247 = vsub.f32 %v1149, %v1219
        %v1248 = vsub.f32 %v1154, %v1221
        %v1249 = vsub.f32 %v1159, %v1223
        %v1250 = vsub.f32 %v1164, %v1225
        %v1251 = vsub.f32 %v1169, %v1227
        %v1252 = vsub.f32 %v1174, %v1229
        %v1253 = vsub.f32 %v1179, %v1231
        %v1254 = vsub.f32 %v1184, %v1233
        %v1255 = vsub.f32 %v1189, %v1235
        %v1256 = vsub.f32 %v1194, %v1237
        %v1257 = vsub.f32 %v1199, %v1239
        %v1258 = vsub.f32 %v1204, %v1241
        %v1259 = vsub.f32 %v1209, %v1243
        %v1260 = vmul.f32 %v1244, 1.442695
        %v1261 = vpow.pop %v1260
        %v1262 = vmul.f32 %v1245, 1.442695
        %v1263 = vpow.pop %v1262
        %v1264 = vmul.f32 %v1246, 1.442695
        %v1265 = vpow.pop %v1264
        %v1266 = vmul.f32 %v1247, 1.442695
        %v1267 = vpow.pop %v1266
        %v1268 = vmul.f32 %v1248, 1.442695
        %v1269 = vpow.pop %v1268
        %v1270 = vmul.f32 %v1249, 1.442695
        %v1271 = vpow.pop %v1270
        %v1272 = vmul.f32 %v1250, 1.442695
        %v1273 = vpow.pop %v1272
        %v1274 = vmul.f32 %v1251, 1.442695
        %v1275 = vpow.pop %v1274
        %v1276 = vmul.f32 %v1252, 1.442695
        %v1277 = vpow.pop %v1276
        %v1278 = vmul.f32 %v1253, 1.442695
        %v1279 = vpow.pop %v1278
        %v1280 = vmul.f32 %v1254, 1.442695
        %v1281 = vpow.pop %v1280
        %v1282 = vmul.f32 %v1255, 1.442695
        %v1283 = vpow.pop %v1282
        %v1284 = vmul.f32 %v1256, 1.442695
        %v1285 = vpow.pop %v1284
        %v1286 = vmul.f32 %v1257, 1.442695
        %v1287 = vpow.pop %v1286
        %v1288 = vmul.f32 %v1258, 1.442695
        %v1289 = vpow.pop %v1288
        %v1290 = vmul.f32 %v1259, 1.442695
        %v1291 = vpow.pop %v1290
        %1292 = vadd.xlane.f32.xlu0 %v1261
        %v1293 = vpop.xlane.xlu0 %1292
        %1294 = vadd.xlane.f32.xlu0 %v1263
        %v1295 = vpop.xlane.xlu0 %1294
        %1296 = vadd.xlane.f32.xlu0 %v1265
        %v1297 = vpop.xlane.xlu0 %1296
        %1298 = vadd.xlane.f32.xlu0 %v1267
        %v1299 = vpop.xlane.xlu0 %1298
        %1300 = vadd.xlane.f32.xlu0 %v1269
        %v1301 = vpop.xlane.xlu0 %1300
        %1302 = vadd.xlane.f32.xlu0 %v1271
        %v1303 = vpop.xlane.xlu0 %1302
        %1304 = vadd.xlane.f32.xlu0 %v1273
        %v1305 = vpop.xlane.xlu0 %1304
        %1306 = vadd.xlane.f32.xlu0 %v1275
        %v1307 = vpop.xlane.xlu0 %1306
        %1308 = vadd.xlane.f32.xlu0 %v1277
        %v1309 = vpop.xlane.xlu0 %1308
        %1310 = vadd.xlane.f32.xlu0 %v1279
        %v1311 = vpop.xlane.xlu0 %1310
        %1312 = vadd.xlane.f32.xlu0 %v1281
        %v1313 = vpop.xlane.xlu0 %1312
        %1314 = vadd.xlane.f32.xlu0 %v1283
        %v1315 = vpop.xlane.xlu0 %1314
        %1316 = vadd.xlane.f32.xlu0 %v1285
        %v1317 = vpop.xlane.xlu0 %1316
        %1318 = vadd.xlane.f32.xlu0 %v1287
        %v1319 = vpop.xlane.xlu0 %1318
        %1320 = vadd.xlane.f32.xlu0 %v1289
        %v1321 = vpop.xlane.xlu0 %1320
        %1322 = vadd.xlane.f32.xlu0 %v1291
        %v1323 = vpop.xlane.xlu0 %1322
        %v1324 = vrcp.pop %v1293
        %v1325 = vmul.f32 1.0, %v1324
        %v1326 = vrcp.pop %v1295
        %v1327 = vmul.f32 1.0, %v1326
        %v1328 = vrcp.pop %v1297
        %v1329 = vmul.f32 1.0, %v1328
        %v1330 = vrcp.pop %v1299
        %v1331 = vmul.f32 1.0, %v1330
        %v1332 = vrcp.pop %v1301
        %v1333 = vmul.f32 1.0, %v1332
        %v1334 = vrcp.pop %v1303
        %v1335 = vmul.f32 1.0, %v1334
        %v1336 = vrcp.pop %v1305
        %v1337 = vmul.f32 1.0, %v1336
        %v1338 = vrcp.pop %v1307
        %v1339 = vmul.f32 1.0, %v1338
        %v1340 = vrcp.pop %v1309
        %v1341 = vmul.f32 1.0, %v1340
        %v1342 = vrcp.pop %v1311
        %v1343 = vmul.f32 1.0, %v1342
        %v1344 = vrcp.pop %v1313
        %v1345 = vmul.f32 1.0, %v1344
        %v1346 = vrcp.pop %v1315
        %v1347 = vmul.f32 1.0, %v1346
        %v1348 = vrcp.pop %v1317
        %v1349 = vmul.f32 1.0, %v1348
        %v1350 = vrcp.pop %v1319
        %v1351 = vmul.f32 1.0, %v1350
        %v1352 = vrcp.pop %v1321
        %v1353 = vmul.f32 1.0, %v1352
        %v1354 = vrcp.pop %v1323
        %v1355 = vmul.f32 1.0, %v1354
        %v1356 = vmul.f32 %v1261, %v1325
        %v1357 = vmul.f32 %v1263, %v1327
        %v1358 = vmul.f32 %v1265, %v1329
        %v1359 = vmul.f32 %v1267, %v1331
        %v1360 = vmul.f32 %v1269, %v1333
        %v1361 = vmul.f32 %v1271, %v1335
        %v1362 = vmul.f32 %v1273, %v1337
        %v1363 = vmul.f32 %v1275, %v1339
        %v1364 = vmul.f32 %v1277, %v1341
        %v1365 = vmul.f32 %v1279, %v1343
        %v1366 = vmul.f32 %v1281, %v1345
        %v1367 = vmul.f32 %v1283, %v1347
        %v1368 = vmul.f32 %v1285, %v1349
        %v1369 = vmul.f32 %v1287, %v1351
        %v1370 = vmul.f32 %v1289, %v1353
        %v1371 = vmul.f32 %v1291, %v1355
        %1372 = vmatprep.subr.mxu0 0.0
        %1373 = vmatpush1.msra.mxu0 %v938
        %1374 = vmatprep.subr.mxu0 0.0
        %1375 = vmatpush1.msra.mxu0 %v939
        %1376 = vmatprep.subr.mxu0 0.0
        %1377 = vmatpush1.msra.mxu0 %v940
        %1378 = vmatprep.subr.mxu0 0.0
        %1379 = vmatpush1.msra.mxu0 %v941
        %1380 = vmatprep.subr.mxu0 0.0
        %1381 = vmatpush1.msra.mxu0 %v942
        %1382 = vmatprep.subr.mxu0 0.0
        %1383 = vmatpush1.msra.mxu0 %v943
        %1384 = vmatprep.subr.mxu0 0.0
        %1385 = vmatpush1.msra.mxu0 %v944
        %1386 = vmatprep.subr.mxu0 0.0
        %1387 = vmatpush1.msra.mxu0 %v945
        %1388 = vmatprep.subr.mxu0 0.0
        %1389 = vmatpush1.msra.mxu0 %v946
        %1390 = vmatprep.subr.mxu0 0.0
        %1391 = vmatpush1.msra.mxu0 %v947
        %1392 = vmatprep.subr.mxu0 0.0
        %1393 = vmatpush1.msra.mxu0 %v948
        %1394 = vmatprep.subr.mxu0 0.0
        %1395 = vmatpush1.msra.mxu0 %v949
        %1396 = vmatprep.subr.mxu0 0.0
        %1397 = vmatpush1.msra.mxu0 %v950
        %1398 = vmatprep.subr.mxu0 0.0
        %1399 = vmatpush1.msra.mxu0 %v951
        %1400 = vmatprep.subr.mxu0 0.0
        %1401 = vmatpush1.msra.mxu0 %v952
        %1402 = vmatprep.subr.mxu0 0.0
        %1403 = vmatpush1.msra.mxu0 %v953
        %1404 = vmatprep.subr.mxu0 0.0
        %1405 = vmatpush1.msra.mxu0 0.0
        %1406 = vmatprep.subr.mxu0 0.0
        %1407 = vmatpush1.msra.mxu0 0.0
        %1408 = vmatprep.subr.mxu0 0.0
        %1409 = vmatpush1.msra.mxu0 0.0
        %1410 = vmatprep.subr.mxu0 0.0
        %1411 = vmatpush1.msra.mxu0 0.0
        %1412 = vmatprep.subr.mxu0 0.0
        %1413 = vmatpush1.msra.mxu0 0.0
        %1414 = vmatprep.subr.mxu0 0.0
        %1415 = vmatpush1.msra.mxu0 0.0
        %1416 = vmatprep.subr.mxu0 0.0
        %1417 = vmatpush1.msra.mxu0 0.0
        %1418 = vmatprep.subr.mxu0 0.0
        %1419 = vmatpush1.msra.mxu0 0.0
        %1420 = vmatprep.subr.mxu0 0.0
        %1421 = vmatpush1.msra.mxu0 0.0
        %1422 = vmatprep.subr.mxu0 0.0
        %1423 = vmatpush1.msra.mxu0 0.0
        %1424 = vmatprep.subr.mxu0 0.0
        %1425 = vmatpush1.msra.mxu0 0.0
        %1426 = vmatprep.subr.mxu0 0.0
        %1427 = vmatpush1.msra.mxu0 0.0
        %1428 = vmatprep.subr.mxu0 0.0
        %1429 = vmatpush1.msra.mxu0 0.0
        %1430 = vmatprep.subr.mxu0 0.0
        %1431 = vmatpush1.msra.mxu0 0.0
        %1432 = vmatprep.subr.mxu0 0.0
        %1433 = vmatpush1.msra.mxu0 0.0
        %1434 = vmatprep.subr.mxu0 0.0
        %1435 = vmatpush1.msra.mxu0 0.0
        %1436 = vmatprep.mubr.f32.mxu0 0.0
        %1437 = vmatmul.mubr.f32.gmra.mrb[0].mxu0 %v1356
        %v1438 = vpop.f32.mrb[0].mxu0
        %v1439 = vadd.f32 0.0, %v1438
        %v1440 = vpop.f32.mrb[0].mxu0
        %1441 = vmatprep.mubr.f32.mxu0 0.0
        %1442 = vmatmul.mubr.f32.gmra.mrb[0].mxu0 %v1357
        %v1443 = vpop.f32.mrb[0].mxu0
        %v1444 = vadd.f32 0.0, %v1443
        %v1445 = vpop.f32.mrb[0].mxu0
        %1446 = vmatprep.mubr.f32.mxu0 0.0
        %1447 = vmatmul.mubr.f32.gmra.mrb[0].mxu0 %v1358
        %v1448 = vpop.f32.mrb[0].mxu0
        %v1449 = vadd.f32 0.0, %v1448
        %v1450 = vpop.f32.mrb[0].mxu0
        %1451 = vmatprep.mubr.f32.mxu0 0.0
        %1452 = vmatmul.mubr.f32.gmra.mrb[0].mxu0 %v1359
        %v1453 = vpop.f32.mrb[0].mxu0
        %v1454 = vadd.f32 0.0, %v1453
        %v1455 = vpop.f32.mrb[0].mxu0
        %1456 = vmatprep.mubr.f32.mxu0 0.0
        %1457 = vmatmul.mubr.f32.gmra.mrb[0].mxu0 %v1360
        %v1458 = vpop.f32.mrb[0].mxu0
        %v1459 = vadd.f32 0.0, %v1458
        %v1460 = vpop.f32.mrb[0].mxu0
        %1461 = vmatprep.mubr.f32.mxu0 0.0
        %1462 = vmatmul.mubr.f32.gmra.mrb[0].mxu0 %v1361
        %v1463 = vpop.f32.mrb[0].mxu0
        %v1464 = vadd.f32 0.0, %v1463
        %v1465 = vpop.f32.mrb[0].mxu0
        %1466 = vmatprep.mubr.f32.mxu0 0.0
        %1467 = vmatmul.mubr.f32.gmra.mrb[0].mxu0 %v1362
        %v1468 = vpop.f32.mrb[0].mxu0
        %v1469 = vadd.f32 0.0, %v1468
        %v1470 = vpop.f32.mrb[0].mxu0
        %1471 = vmatprep.mubr.f32.mxu0 0.0
        %1472 = vmatmul.mubr.f32.gmra.mrb[0].mxu0 %v1363
        %v1473 = vpop.f32.mrb[0].mxu0
        %v1474 = vadd.f32 0.0, %v1473
        %v1475 = vpop.f32.mrb[0].mxu0
        %1476 = vmatprep.mubr.f32.mxu0 0.0
        %1477 = vmatmul.mubr.f32.gmra.mrb[0].mxu0 %v1364
        %v1478 = vpop.f32.mrb[0].mxu0
        %v1479 = vadd.f32 0.0, %v1478
        %v1480 = vpop.f32.mrb[0].mxu0
        %1481 = vmatprep.mubr.f32.mxu0 0.0
        %1482 = vmatmul.mubr.f32.gmra.mrb[0].mxu0 %v1365
        %v1483 = vpop.f32.mrb[0].mxu0
        %v1484 = vadd.f32 0.0, %v1483
        %v1485 = vpop.f32.mrb[0].mxu0
        %1486 = vmatprep.mubr.f32.mxu0 0.0
        %1487 = vmatmul.mubr.f32.gmra.mrb[0].mxu0 %v1366
        %v1488 = vpop.f32.mrb[0].mxu0
        %v1489 = vadd.f32 0.0, %v1488
        %v1490 = vpop.f32.mrb[0].mxu0
        %1491 = vmatprep.mubr.f32.mxu0 0.0
        %1492 = vmatmul.mubr.f32.gmra.mrb[0].mxu0 %v1367
        %v1493 = vpop.f32.mrb[0].mxu0
        %v1494 = vadd.f32 0.0, %v1493
        %v1495 = vpop.f32.mrb[0].mxu0
        %1496 = vmatprep.mubr.f32.mxu0 0.0
        %1497 = vmatmul.mubr.f32.gmra.mrb[0].mxu0 %v1368
        %v1498 = vpop.f32.mrb[0].mxu0
        %v1499 = vadd.f32 0.0, %v1498
        %v1500 = vpop.f32.mrb[0].mxu0
        %1501 = vmatprep.mubr.f32.mxu0 0.0
        %1502 = vmatmul.mubr.f32.gmra.mrb[0].mxu0 %v1369
        %v1503 = vpop.f32.mrb[0].mxu0
        %v1504 = vadd.f32 0.0, %v1503
        %v1505 = vpop.f32.mrb[0].mxu0
        %1506 = vmatprep.mubr.f32.mxu0 0.0
        %1507 = vmatmul.mubr.f32.gmra.mrb[0].mxu0 %v1370
        %v1508 = vpop.f32.mrb[0].mxu0
        %v1509 = vadd.f32 0.0, %v1508
        %v1510 = vpop.f32.mrb[0].mxu0
        %1511 = vmatprep.mubr.f32.mxu0 0.0
        %1512 = vmatmul.mubr.f32.gmra.mrb[0].mxu0 %v1371
        %v1513 = vpop.f32.mrb[0].mxu0
        %v1514 = vadd.f32 0.0, %v1513
        %v1515 = vpop.f32.mrb[0].mxu0
        %1516 = vdwg.mxu0
        %1517 = vst.msk [vmem:[%s368] sm:$0xff] %vm970, %v1439
        %1518 = vst.msk [vmem:[%s368 + $0x8] sm:$0xff] %vm970, %v1444
        %1519 = vst.msk [vmem:[%s368 + $0x10] sm:$0xff] %vm970, %v1449
        %1520 = vst.msk [vmem:[%s368 + $0x18] sm:$0xff] %vm970, %v1454
        %1521 = vst.msk [vmem:[%s368 + $0x20] sm:$0xff] %vm970, %v1459
        %1522 = vst.msk [vmem:[%s368 + $0x28] sm:$0xff] %vm970, %v1464
        %1523 = vst.msk [vmem:[%s368 + $0x30] sm:$0xff] %vm970, %v1469
        %1524 = vst.msk [vmem:[%s368 + $0x38] sm:$0xff] %vm970, %v1474
        %1525 = vst.msk [vmem:[%s368 + $0x40] sm:$0xff] %vm970, %v1479
        %1526 = vst.msk [vmem:[%s368 + $0x48] sm:$0xff] %vm970, %v1484
        %1527 = vst.msk [vmem:[%s368 + $0x50] sm:$0xff] %vm970, %v1489
        %1528 = vst.msk [vmem:[%s368 + $0x58] sm:$0xff] %vm970, %v1494
        %1529 = vst.msk [vmem:[%s368 + $0x60] sm:$0xff] %vm970, %v1499
        %1530 = vst.msk [vmem:[%s368 + $0x68] sm:$0xff] %vm970, %v1504
        %1531 = vst.msk [vmem:[%s368 + $0x70] sm:$0xff] %vm970, %v1509
        %1532 = vst.msk [vmem:[%s368 + $0x78] sm:$0xff] %vm970, %v1514
        %v1533 = vld [vmem:[#allocation3] sm:$0xff]
        %v1534 = vld [vmem:[#allocation3 + $0x8] sm:$0xff]
        %v1535 = vld [vmem:[#allocation3 + $0x10] sm:$0xff]
        %v1536 = vld [vmem:[#allocation3 + $0x18] sm:$0xff]
        %v1537 = vld [vmem:[#allocation3 + $0x20] sm:$0xff]
        %v1538 = vld [vmem:[#allocation3 + $0x28] sm:$0xff]
        %v1539 = vld [vmem:[#allocation3 + $0x30] sm:$0xff]
        %v1540 = vld [vmem:[#allocation3 + $0x38] sm:$0xff]
        %v1541 = vld [vmem:[#allocation3 + $0x40] sm:$0xff]
        %v1542 = vld [vmem:[#allocation3 + $0x48] sm:$0xff]
        %v1543 = vld [vmem:[#allocation3 + $0x50] sm:$0xff]
        %v1544 = vld [vmem:[#allocation3 + $0x58] sm:$0xff]
        %v1545 = vld [vmem:[#allocation3 + $0x60] sm:$0xff]
        %v1546 = vld [vmem:[#allocation3 + $0x68] sm:$0xff]
        %v1547 = vld [vmem:[#allocation3 + $0x70] sm:$0xff]
        %v1548 = vld [vmem:[#allocation3 + $0x78] sm:$0xff]
        %v1549 = vld [vmem:[#allocation2] sm:$0xff]
        %v1550 = vld [vmem:[#allocation2 + $0x8] sm:$0xff]
        %v1551 = vld [vmem:[#allocation2 + $0x10] sm:$0xff]
        %v1552 = vld [vmem:[#allocation2 + $0x18] sm:$0xff]
        %v1553 = vld [vmem:[#allocation2 + $0x20] sm:$0xff]
        %v1554 = vld [vmem:[#allocation2 + $0x28] sm:$0xff]
        %v1555 = vld [vmem:[#allocation2 + $0x30] sm:$0xff]
        %v1556 = vld [vmem:[#allocation2 + $0x38] sm:$0xff]
        %v1557 = vld [vmem:[#allocation2 + $0x40] sm:$0xff]
        %v1558 = vld [vmem:[#allocation2 + $0x48] sm:$0xff]
        %v1559 = vld [vmem:[#allocation2 + $0x50] sm:$0xff]
        %v1560 = vld [vmem:[#allocation2 + $0x58] sm:$0xff]
        %v1561 = vld [vmem:[#allocation2 + $0x60] sm:$0xff]
        %v1562 = vld [vmem:[#allocation2 + $0x68] sm:$0xff]
        %v1563 = vld [vmem:[#allocation2 + $0x70] sm:$0xff]
        %v1564 = vld [vmem:[#allocation2 + $0x78] sm:$0xff]
        %1565 = vrot.lane.b32.xlu0 %v915, 120
        %v1566 = vpop.permute.xlu0 %1565
        %1567 = vrot.lane.b32.xlu0 %v916, 120
        %v1568 = vpop.permute.xlu0 %1567
        %1569 = vrot.lane.b32.xlu0 %v917, 120
        %v1570 = vpop.permute.xlu0 %1569
        %1571 = vrot.lane.b32.xlu0 %v918, 120
        %v1572 = vpop.permute.xlu0 %1571
        %1573 = vrot.lane.b32.xlu0 %v919, 120
        %v1574 = vpop.permute.xlu0 %1573
        %1575 = vrot.lane.b32.xlu0 %v920, 120
        %v1576 = vpop.permute.xlu0 %1575
        %1577 = vrot.lane.b32.xlu0 %v921, 120
        %v1578 = vpop.permute.xlu0 %1577
        %1579 = vrot.lane.b32.xlu0 %v922, 120
        %v1580 = vpop.permute.xlu0 %1579
        %1581 = vrot.lane.b32.xlu0 %v923, 120
        %v1582 = vpop.permute.xlu0 %1581
        %1583 = vrot.lane.b32.xlu0 %v924, 120
        %v1584 = vpop.permute.xlu0 %1583
        %1585 = vrot.lane.b32.xlu0 %v925, 120
        %v1586 = vpop.permute.xlu0 %1585
        %1587 = vrot.lane.b32.xlu0 %v926, 120
        %v1588 = vpop.permute.xlu0 %1587
        %1589 = vrot.lane.b32.xlu0 %v927, 120
        %v1590 = vpop.permute.xlu0 %1589
        %1591 = vrot.lane.b32.xlu0 %v928, 120
        %v1592 = vpop.permute.xlu0 %1591
        %1593 = vrot.lane.b32.xlu0 %v929, 120
        %v1594 = vpop.permute.xlu0 %1593
        %1595 = vrot.lane.b32.xlu0 %v930, 120
        %v1596 = vpop.permute.xlu0 %1595
        %1613 = vrot.lane.b32.xlu0 %v1549, 120
        %v1614 = vpop.permute.xlu0 %1613
        %1615 = vrot.lane.b32.xlu0 %v1550, 120
        %v1616 = vpop.permute.xlu0 %1615
        %1617 = vrot.lane.b32.xlu0 %v1551, 120
        %v1618 = vpop.permute.xlu0 %1617
        %1619 = vrot.lane.b32.xlu0 %v1552, 120
        %v1620 = vpop.permute.xlu0 %1619
        %1621 = vrot.lane.b32.xlu0 %v1553, 120
        %v1622 = vpop.permute.xlu0 %1621
        %1623 = vrot.lane.b32.xlu0 %v1554, 120
        %v1624 = vpop.permute.xlu0 %1623
        %1625 = vrot.lane.b32.xlu0 %v1555, 120
        %v1626 = vpop.permute.xlu0 %1625
        %1627 = vrot.lane.b32.xlu0 %v1556, 120
        %v1628 = vpop.permute.xlu0 %1627
        %1629 = vrot.lane.b32.xlu0 %v1557, 120
        %v1630 = vpop.permute.xlu0 %1629
        %1631 = vrot.lane.b32.xlu0 %v1558, 120
        %v1632 = vpop.permute.xlu0 %1631
        %1633 = vrot.lane.b32.xlu0 %v1559, 120
        %v1634 = vpop.permute.xlu0 %1633
        %1635 = vrot.lane.b32.xlu0 %v1560, 120
        %v1636 = vpop.permute.xlu0 %1635
        %1637 = vrot.lane.b32.xlu0 %v1561, 120
        %v1638 = vpop.permute.xlu0 %1637
        %1639 = vrot.lane.b32.xlu0 %v1562, 120
        %v1640 = vpop.permute.xlu0 %1639
        %1641 = vrot.lane.b32.xlu0 %v1563, 120
        %v1642 = vpop.permute.xlu0 %1641
        %1643 = vrot.lane.b32.xlu0 %v1564, 120
        %v1644 = vpop.permute.xlu0 %1643
        %v1645 = vsel %vm970, %v1566, 0
        %v1647 = vsel %vm970, %v1568, 0
        %v1649 = vsel %vm970, %v1570, 0
        %v1651 = vsel %vm970, %v1572, 0
        %v1653 = vsel %vm970, %v1574, 0
        %v1655 = vsel %vm970, %v1576, 0
        %v1657 = vsel %vm970, %v1578, 0
        %v1659 = vsel %vm970, %v1580, 0
        %v1661 = vsel %vm970, %v1582, 0
        %v1663 = vsel %vm970, %v1584, 0
        %v1665 = vsel %vm970, %v1586, 0
        %v1667 = vsel %vm970, %v1588, 0
        %v1669 = vsel %vm970, %v1590, 0
        %v1671 = vsel %vm970, %v1592, 0
        %v1673 = vsel %vm970, %v1594, 0
        %v1675 = vsel %vm970, %v1596, 0
        %v1677 = vsel %vm970, %v1614, 0
        %v1679 = vsel %vm970, %v1616, 0
        %v1681 = vsel %vm970, %v1618, 0
        %v1683 = vsel %vm970, %v1620, 0
        %v1685 = vsel %vm970, %v1622, 0
        %v1687 = vsel %vm970, %v1624, 0
        %v1689 = vsel %vm970, %v1626, 0
        %v1691 = vsel %vm970, %v1628, 0
        %v1693 = vsel %vm970, %v1630, 0
        %v1695 = vsel %vm970, %v1632, 0
        %v1697 = vsel %vm970, %v1634, 0
        %v1699 = vsel %vm970, %v1636, 0
        %v1701 = vsel %vm970, %v1638, 0
        %v1703 = vsel %vm970, %v1640, 0
        %v1705 = vsel %vm970, %v1642, 0
        %v1707 = vsel %vm970, %v1644, 0
        %1709 = vmatprep.subr.mxu0 0.0
        %1710 = vmatpush1.xpose.msra.mxu0 %v1677
        %1711 = vmatprep.subr.mxu0 0.0
        %1712 = vmatpush1.xpose.msra.mxu0 %v1679
        %1713 = vmatprep.subr.mxu0 0.0
        %1714 = vmatpush1.xpose.msra.mxu0 %v1681
        %1715 = vmatprep.subr.mxu0 0.0
        %1716 = vmatpush1.xpose.msra.mxu0 %v1683
        %1717 = vmatprep.subr.mxu0 0.0
        %1718 = vmatpush1.xpose.msra.mxu0 %v1685
        %1719 = vmatprep.subr.mxu0 0.0
        %1720 = vmatpush1.xpose.msra.mxu0 %v1687
        %1721 = vmatprep.subr.mxu0 0.0
        %1722 = vmatpush1.xpose.msra.mxu0 %v1689
        %1723 = vmatprep.subr.mxu0 0.0
        %1724 = vmatpush1.xpose.msra.mxu0 %v1691
        %1725 = vmatprep.subr.mxu0 0.0
        %1726 = vmatpush1.xpose.msra.mxu0 %v1693
        %1727 = vmatprep.subr.mxu0 0.0
        %1728 = vmatpush1.xpose.msra.mxu0 %v1695
        %1729 = vmatprep.subr.mxu0 0.0
        %1730 = vmatpush1.xpose.msra.mxu0 %v1697
        %1731 = vmatprep.subr.mxu0 0.0
        %1732 = vmatpush1.xpose.msra.mxu0 %v1699
        %1733 = vmatprep.subr.mxu0 0.0
        %1734 = vmatpush1.xpose.msra.mxu0 %v1701
        %1735 = vmatprep.subr.mxu0 0.0
        %1736 = vmatpush1.xpose.msra.mxu0 %v1703
        %1737 = vmatprep.subr.mxu0 0.0
        %1738 = vmatpush1.xpose.msra.mxu0 %v1705
        %1739 = vmatprep.subr.mxu0 0.0
        %1740 = vmatpush1.xpose.msra.mxu0 %v1707
        %1741 = vmatprep.subr.mxu0 0.0
        %1742 = vmatpush1.xpose.msra.mxu0 0.0
        %1743 = vmatprep.subr.mxu0 0.0
        %1744 = vmatpush1.xpose.msra.mxu0 0.0
        %1745 = vmatprep.subr.mxu0 0.0
        %1746 = vmatpush1.xpose.msra.mxu0 0.0
        %1747 = vmatprep.subr.mxu0 0.0
        %1748 = vmatpush1.xpose.msra.mxu0 0.0
        %1749 = vmatprep.subr.mxu0 0.0
        %1750 = vmatpush1.xpose.msra.mxu0 0.0
        %1751 = vmatprep.subr.mxu0 0.0
        %1752 = vmatpush1.xpose.msra.mxu0 0.0
        %1753 = vmatprep.subr.mxu0 0.0
        %1754 = vmatpush1.xpose.msra.mxu0 0.0
        %1755 = vmatprep.subr.mxu0 0.0
        %1756 = vmatpush1.xpose.msra.mxu0 0.0
        %1757 = vmatprep.subr.mxu0 0.0
        %1758 = vmatpush1.xpose.msra.mxu0 0.0
        %1759 = vmatprep.subr.mxu0 0.0
        %1760 = vmatpush1.xpose.msra.mxu0 0.0
        %1761 = vmatprep.subr.mxu0 0.0
        %1762 = vmatpush1.xpose.msra.mxu0 0.0
        %1763 = vmatprep.subr.mxu0 0.0
        %1764 = vmatpush1.xpose.msra.mxu0 0.0
        %1765 = vmatprep.subr.mxu0 0.0
        %1766 = vmatpush1.xpose.msra.mxu0 0.0
        %1767 = vmatprep.subr.mxu0 0.0
        %1768 = vmatpush1.xpose.msra.mxu0 0.0
        %1769 = vmatprep.subr.mxu0 0.0
        %1770 = vmatpush1.xpose.msra.mxu0 0.0
        %1771 = vmatprep.subr.mxu0 0.0
        %1772 = vmatpush1.xpose.msra.mxu0 0.0
        %1773 = vmatprep.mubr.f32.mxu0 0.0
        %1774 = vmatmul.mubr.f32.gmra.mrb[0].mxu0 %v1645
        %v1775 = vpop.f32.mrb[0].mxu0
        %v1776 = vadd.f32 %v936, %v1775
        %v1777 = vpop.f32.mrb[0].mxu0
        %1778 = vmatprep.mubr.f32.mxu0 0.0
        %1779 = vmatmul.mubr.f32.gmra.mrb[0].mxu0 %v1647
        %v1780 = vpop.f32.mrb[0].mxu0
        %v1781 = vadd.f32 %v936, %v1780
        %v1782 = vpop.f32.mrb[0].mxu0
        %1783 = vmatprep.mubr.f32.mxu0 0.0
        %1784 = vmatmul.mubr.f32.gmra.mrb[0].mxu0 %v1649
        %v1785 = vpop.f32.mrb[0].mxu0
        %v1786 = vadd.f32 %v936, %v1785
        %v1787 = vpop.f32.mrb[0].mxu0
        %1788 = vmatprep.mubr.f32.mxu0 0.0
        %1789 = vmatmul.mubr.f32.gmra.mrb[0].mxu0 %v1651
        %v1790 = vpop.f32.mrb[0].mxu0
        %v1791 = vadd.f32 %v936, %v1790
        %v1792 = vpop.f32.mrb[0].mxu0
        %1793 = vmatprep.mubr.f32.mxu0 0.0
        %1794 = vmatmul.mubr.f32.gmra.mrb[0].mxu0 %v1653
        %v1795 = vpop.f32.mrb[0].mxu0
        %v1796 = vadd.f32 %v936, %v1795
        %v1797 = vpop.f32.mrb[0].mxu0
        %1798 = vmatprep.mubr.f32.mxu0 0.0
        %1799 = vmatmul.mubr.f32.gmra.mrb[0].mxu0 %v1655
        %v1800 = vpop.f32.mrb[0].mxu0
        %v1801 = vadd.f32 %v936, %v1800
        %v1802 = vpop.f32.mrb[0].mxu0
        %1803 = vmatprep.mubr.f32.mxu0 0.0
        %1804 = vmatmul.mubr.f32.gmra.mrb[0].mxu0 %v1657
        %v1805 = vpop.f32.mrb[0].mxu0
        %v1806 = vadd.f32 %v936, %v1805
        %v1807 = vpop.f32.mrb[0].mxu0
        %1808 = vmatprep.mubr.f32.mxu0 0.0
        %1809 = vmatmul.mubr.f32.gmra.mrb[0].mxu0 %v1659
        %v1810 = vpop.f32.mrb[0].mxu0
        %v1811 = vadd.f32 %v936, %v1810
        %v1812 = vpop.f32.mrb[0].mxu0
        %1813 = vmatprep.mubr.f32.mxu0 0.0
        %1814 = vmatmul.mubr.f32.gmra.mrb[0].mxu0 %v1661
        %v1815 = vpop.f32.mrb[0].mxu0
        %v1816 = vadd.f32 %v936, %v1815
        %v1817 = vpop.f32.mrb[0].mxu0
        %1818 = vmatprep.mubr.f32.mxu0 0.0
        %1819 = vmatmul.mubr.f32.gmra.mrb[0].mxu0 %v1663
        %v1820 = vpop.f32.mrb[0].mxu0
        %v1821 = vadd.f32 %v936, %v1820
        %v1822 = vpop.f32.mrb[0].mxu0
        %1823 = vmatprep.mubr.f32.mxu0 0.0
        %1824 = vmatmul.mubr.f32.gmra.mrb[0].mxu0 %v1665
        %v1825 = vpop.f32.mrb[0].mxu0
        %v1826 = vadd.f32 %v936, %v1825
        %v1827 = vpop.f32.mrb[0].mxu0
        %1828 = vmatprep.mubr.f32.mxu0 0.0
        %1829 = vmatmul.mubr.f32.gmra.mrb[0].mxu0 %v1667
        %v1830 = vpop.f32.mrb[0].mxu0
        %v1831 = vadd.f32 %v936, %v1830
        %v1832 = vpop.f32.mrb[0].mxu0
        %1833 = vmatprep.mubr.f32.mxu0 0.0
        %1834 = vmatmul.mubr.f32.gmra.mrb[0].mxu0 %v1669
        %v1835 = vpop.f32.mrb[0].mxu0
        %v1836 = vadd.f32 %v936, %v1835
        %v1837 = vpop.f32.mrb[0].mxu0
        %1838 = vmatprep.mubr.f32.mxu0 0.0
        %1839 = vmatmul.mubr.f32.gmra.mrb[0].mxu0 %v1671
        %v1840 = vpop.f32.mrb[0].mxu0
        %v1841 = vadd.f32 %v936, %v1840
        %v1842 = vpop.f32.mrb[0].mxu0
        %1843 = vmatprep.mubr.f32.mxu0 0.0
        %1844 = vmatmul.mubr.f32.gmra.mrb[0].mxu0 %v1673
        %v1845 = vpop.f32.mrb[0].mxu0
        %v1846 = vadd.f32 %v936, %v1845
        %v1847 = vpop.f32.mrb[0].mxu0
        %1848 = vmatprep.mubr.f32.mxu0 0.0
        %1849 = vmatmul.mubr.f32.gmra.mrb[0].mxu0 %v1675
        %v1850 = vpop.f32.mrb[0].mxu0
        %v1851 = vadd.f32 %v936, %v1850
        %v1852 = vpop.f32.mrb[0].mxu0
        %1853 = vdwg.mxu0
        %1854 = vmax.xlane.f32.xlu0 %v1776
        %v1855 = vpop.xlane.xlu0 %1854
        %1856 = vmax.xlane.f32.xlu0 %v1781
        %v1857 = vpop.xlane.xlu0 %1856
        %1858 = vmax.xlane.f32.xlu0 %v1786
        %v1859 = vpop.xlane.xlu0 %1858
        %1860 = vmax.xlane.f32.xlu0 %v1791
        %v1861 = vpop.xlane.xlu0 %1860
        %1862 = vmax.xlane.f32.xlu0 %v1796
        %v1863 = vpop.xlane.xlu0 %1862
        %1864 = vmax.xlane.f32.xlu0 %v1801
        %v1865 = vpop.xlane.xlu0 %1864
        %1866 = vmax.xlane.f32.xlu0 %v1806
        %v1867 = vpop.xlane.xlu0 %1866
        %1868 = vmax.xlane.f32.xlu0 %v1811
        %v1869 = vpop.xlane.xlu0 %1868
        %1870 = vmax.xlane.f32.xlu0 %v1816
        %v1871 = vpop.xlane.xlu0 %1870
        %1872 = vmax.xlane.f32.xlu0 %v1821
        %v1873 = vpop.xlane.xlu0 %1872
        %1874 = vmax.xlane.f32.xlu0 %v1826
        %v1875 = vpop.xlane.xlu0 %1874
        %1876 = vmax.xlane.f32.xlu0 %v1831
        %v1877 = vpop.xlane.xlu0 %1876
        %1878 = vmax.xlane.f32.xlu0 %v1836
        %v1879 = vpop.xlane.xlu0 %1878
        %1880 = vmax.xlane.f32.xlu0 %v1841
        %v1881 = vpop.xlane.xlu0 %1880
        %1882 = vmax.xlane.f32.xlu0 %v1846
        %v1883 = vpop.xlane.xlu0 %1882
        %1884 = vmax.xlane.f32.xlu0 %v1851
        %v1885 = vpop.xlane.xlu0 %1884
        %v1886 = vsub.f32 %v1776, %v1855
        %v1887 = vsub.f32 %v1781, %v1857
        %v1888 = vsub.f32 %v1786, %v1859
        %v1889 = vsub.f32 %v1791, %v1861
        %v1890 = vsub.f32 %v1796, %v1863
        %v1891 = vsub.f32 %v1801, %v1865
        %v1892 = vsub.f32 %v1806, %v1867
        %v1893 = vsub.f32 %v1811, %v1869
        %v1894 = vsub.f32 %v1816, %v1871
        %v1895 = vsub.f32 %v1821, %v1873
        %v1896 = vsub.f32 %v1826, %v1875
        %v1897 = vsub.f32 %v1831, %v1877
        %v1898 = vsub.f32 %v1836, %v1879
        %v1899 = vsub.f32 %v1841, %v1881
        %v1900 = vsub.f32 %v1846, %v1883
        %v1901 = vsub.f32 %v1851, %v1885
        %v1902 = vmul.f32 %v1886, 1.442695
        %v1903 = vpow.pop %v1902
        %v1904 = vmul.f32 %v1887, 1.442695
        %v1905 = vpow.pop %v1904
        %v1906 = vmul.f32 %v1888, 1.442695
        %v1907 = vpow.pop %v1906
        %v1908 = vmul.f32 %v1889, 1.442695
        %v1909 = vpow.pop %v1908
        %v1910 = vmul.f32 %v1890, 1.442695
        %v1911 = vpow.pop %v1910
        %v1912 = vmul.f32 %v1891, 1.442695
        %v1913 = vpow.pop %v1912
        %v1914 = vmul.f32 %v1892, 1.442695
        %v1915 = vpow.pop %v1914
        %v1916 = vmul.f32 %v1893, 1.442695
        %v1917 = vpow.pop %v1916
        %v1918 = vmul.f32 %v1894, 1.442695
        %v1919 = vpow.pop %v1918
        %v1920 = vmul.f32 %v1895, 1.442695
        %v1921 = vpow.pop %v1920
        %v1922 = vmul.f32 %v1896, 1.442695
        %v1923 = vpow.pop %v1922
        %v1924 = vmul.f32 %v1897, 1.442695
        %v1925 = vpow.pop %v1924
        %v1926 = vmul.f32 %v1898, 1.442695
        %v1927 = vpow.pop %v1926
        %v1928 = vmul.f32 %v1899, 1.442695
        %v1929 = vpow.pop %v1928
        %v1930 = vmul.f32 %v1900, 1.442695
        %v1931 = vpow.pop %v1930
        %v1932 = vmul.f32 %v1901, 1.442695
        %v1933 = vpow.pop %v1932
        %1934 = vadd.xlane.f32.xlu0 %v1903
        %v1935 = vpop.xlane.xlu0 %1934
        %1936 = vadd.xlane.f32.xlu0 %v1905
        %v1937 = vpop.xlane.xlu0 %1936
        %1938 = vadd.xlane.f32.xlu0 %v1907
        %v1939 = vpop.xlane.xlu0 %1938
        %1940 = vadd.xlane.f32.xlu0 %v1909
        %v1941 = vpop.xlane.xlu0 %1940
        %1942 = vadd.xlane.f32.xlu0 %v1911
        %v1943 = vpop.xlane.xlu0 %1942
        %1944 = vadd.xlane.f32.xlu0 %v1913
        %v1945 = vpop.xlane.xlu0 %1944
        %1946 = vadd.xlane.f32.xlu0 %v1915
        %v1947 = vpop.xlane.xlu0 %1946
        %1948 = vadd.xlane.f32.xlu0 %v1917
        %v1949 = vpop.xlane.xlu0 %1948
        %1950 = vadd.xlane.f32.xlu0 %v1919
        %v1951 = vpop.xlane.xlu0 %1950
        %1952 = vadd.xlane.f32.xlu0 %v1921
        %v1953 = vpop.xlane.xlu0 %1952
        %1954 = vadd.xlane.f32.xlu0 %v1923
        %v1955 = vpop.xlane.xlu0 %1954
        %1956 = vadd.xlane.f32.xlu0 %v1925
        %v1957 = vpop.xlane.xlu0 %1956
        %1958 = vadd.xlane.f32.xlu0 %v1927
        %v1959 = vpop.xlane.xlu0 %1958
        %1960 = vadd.xlane.f32.xlu0 %v1929
        %v1961 = vpop.xlane.xlu0 %1960
        %1962 = vadd.xlane.f32.xlu0 %v1931
        %v1963 = vpop.xlane.xlu0 %1962
        %1964 = vadd.xlane.f32.xlu0 %v1933
        %v1965 = vpop.xlane.xlu0 %1964
        %v1966 = vrcp.pop %v1935
        %v1967 = vmul.f32 1.0, %v1966
        %v1968 = vrcp.pop %v1937
        %v1969 = vmul.f32 1.0, %v1968
        %v1970 = vrcp.pop %v1939
        %v1971 = vmul.f32 1.0, %v1970
        %v1972 = vrcp.pop %v1941
        %v1973 = vmul.f32 1.0, %v1972
        %v1974 = vrcp.pop %v1943
        %v1975 = vmul.f32 1.0, %v1974
        %v1976 = vrcp.pop %v1945
        %v1977 = vmul.f32 1.0, %v1976
        %v1978 = vrcp.pop %v1947
        %v1979 = vmul.f32 1.0, %v1978
        %v1980 = vrcp.pop %v1949
        %v1981 = vmul.f32 1.0, %v1980
        %v1982 = vrcp.pop %v1951
        %v1983 = vmul.f32 1.0, %v1982
        %v1984 = vrcp.pop %v1953
        %v1985 = vmul.f32 1.0, %v1984
        %v1986 = vrcp.pop %v1955
        %v1987 = vmul.f32 1.0, %v1986
        %v1988 = vrcp.pop %v1957
        %v1989 = vmul.f32 1.0, %v1988
        %v1990 = vrcp.pop %v1959
        %v1991 = vmul.f32 1.0, %v1990
        %v1992 = vrcp.pop %v1961
        %v1993 = vmul.f32 1.0, %v1992
        %v1994 = vrcp.pop %v1963
        %v1995 = vmul.f32 1.0, %v1994
        %v1996 = vrcp.pop %v1965
        %v1997 = vmul.f32 1.0, %v1996
        %v1998 = vmul.f32 %v1903, %v1967
        %v1999 = vmul.f32 %v1905, %v1969
        %v2000 = vmul.f32 %v1907, %v1971
        %v2001 = vmul.f32 %v1909, %v1973
        %v2002 = vmul.f32 %v1911, %v1975
        %v2003 = vmul.f32 %v1913, %v1977
        %v2004 = vmul.f32 %v1915, %v1979
        %v2005 = vmul.f32 %v1917, %v1981
        %v2006 = vmul.f32 %v1919, %v1983
        %v2007 = vmul.f32 %v1921, %v1985
        %v2008 = vmul.f32 %v1923, %v1987
        %v2009 = vmul.f32 %v1925, %v1989
        %v2010 = vmul.f32 %v1927, %v1991
        %v2011 = vmul.f32 %v1929, %v1993
        %v2012 = vmul.f32 %v1931, %v1995
        %v2013 = vmul.f32 %v1933, %v1997
        %2030 = vrot.lane.b32.xlu0 %v1533, 120
        %v2031 = vpop.permute.xlu0 %2030
        %2032 = vrot.lane.b32.xlu0 %v1534, 120
        %v2033 = vpop.permute.xlu0 %2032
        %2034 = vrot.lane.b32.xlu0 %v1535, 120
        %v2035 = vpop.permute.xlu0 %2034
        %2036 = vrot.lane.b32.xlu0 %v1536, 120
        %v2037 = vpop.permute.xlu0 %2036
        %2038 = vrot.lane.b32.xlu0 %v1537, 120
        %v2039 = vpop.permute.xlu0 %2038
        %2040 = vrot.lane.b32.xlu0 %v1538, 120
        %v2041 = vpop.permute.xlu0 %2040
        %2042 = vrot.lane.b32.xlu0 %v1539, 120
        %v2043 = vpop.permute.xlu0 %2042
        %2044 = vrot.lane.b32.xlu0 %v1540, 120
        %v2045 = vpop.permute.xlu0 %2044
        %2046 = vrot.lane.b32.xlu0 %v1541, 120
        %v2047 = vpop.permute.xlu0 %2046
        %2048 = vrot.lane.b32.xlu0 %v1542, 120
        %v2049 = vpop.permute.xlu0 %2048
        %2050 = vrot.lane.b32.xlu0 %v1543, 120
        %v2051 = vpop.permute.xlu0 %2050
        %2052 = vrot.lane.b32.xlu0 %v1544, 120
        %v2053 = vpop.permute.xlu0 %2052
        %2054 = vrot.lane.b32.xlu0 %v1545, 120
        %v2055 = vpop.permute.xlu0 %2054
        %2056 = vrot.lane.b32.xlu0 %v1546, 120
        %v2057 = vpop.permute.xlu0 %2056
        %2058 = vrot.lane.b32.xlu0 %v1547, 120
        %v2059 = vpop.permute.xlu0 %2058
        %2060 = vrot.lane.b32.xlu0 %v1548, 120
        %v2061 = vpop.permute.xlu0 %2060
        %2078 = vmatprep.subr.mxu0 0.0
        %2079 = vmatpush1.msra.mxu0 %v2031
        %2080 = vmatprep.subr.mxu0 0.0
        %2081 = vmatpush1.msra.mxu0 %v2033
        %2082 = vmatprep.subr.mxu0 0.0
        %2083 = vmatpush1.msra.mxu0 %v2035
        %2084 = vmatprep.subr.mxu0 0.0
        %2085 = vmatpush1.msra.mxu0 %v2037
        %2086 = vmatprep.subr.mxu0 0.0
        %2087 = vmatpush1.msra.mxu0 %v2039
        %2088 = vmatprep.subr.mxu0 0.0
        %2089 = vmatpush1.msra.mxu0 %v2041
        %2090 = vmatprep.subr.mxu0 0.0
        %2091 = vmatpush1.msra.mxu0 %v2043
        %2092 = vmatprep.subr.mxu0 0.0
        %2093 = vmatpush1.msra.mxu0 %v2045
        %2094 = vmatprep.subr.mxu0 0.0
        %2095 = vmatpush1.msra.mxu0 %v2047
        %2096 = vmatprep.subr.mxu0 0.0
        %2097 = vmatpush1.msra.mxu0 %v2049
        %2098 = vmatprep.subr.mxu0 0.0
        %2099 = vmatpush1.msra.mxu0 %v2051
        %2100 = vmatprep.subr.mxu0 0.0
        %2101 = vmatpush1.msra.mxu0 %v2053
        %2102 = vmatprep.subr.mxu0 0.0
        %2103 = vmatpush1.msra.mxu0 %v2055
        %2104 = vmatprep.subr.mxu0 0.0
        %2105 = vmatpush1.msra.mxu0 %v2057
        %2106 = vmatprep.subr.mxu0 0.0
        %2107 = vmatpush1.msra.mxu0 %v2059
        %2108 = vmatprep.subr.mxu0 0.0
        %2109 = vmatpush1.msra.mxu0 %v2061
        %2110 = vmatprep.subr.mxu0 0.0
        %2111 = vmatpush1.msra.mxu0 0.0
        %2112 = vmatprep.subr.mxu0 0.0
        %2113 = vmatpush1.msra.mxu0 0.0
        %2114 = vmatprep.subr.mxu0 0.0
        %2115 = vmatpush1.msra.mxu0 0.0
        %2116 = vmatprep.subr.mxu0 0.0
        %2117 = vmatpush1.msra.mxu0 0.0
        %2118 = vmatprep.subr.mxu0 0.0
        %2119 = vmatpush1.msra.mxu0 0.0
        %2120 = vmatprep.subr.mxu0 0.0
        %2121 = vmatpush1.msra.mxu0 0.0
        %2122 = vmatprep.subr.mxu0 0.0
        %2123 = vmatpush1.msra.mxu0 0.0
        %2124 = vmatprep.subr.mxu0 0.0
        %2125 = vmatpush1.msra.mxu0 0.0
        %2126 = vmatprep.subr.mxu0 0.0
        %2127 = vmatpush1.msra.mxu0 0.0
        %2128 = vmatprep.subr.mxu0 0.0
        %2129 = vmatpush1.msra.mxu0 0.0
        %2130 = vmatprep.subr.mxu0 0.0
        %2131 = vmatpush1.msra.mxu0 0.0
        %2132 = vmatprep.subr.mxu0 0.0
        %2133 = vmatpush1.msra.mxu0 0.0
        %2134 = vmatprep.subr.mxu0 0.0
        %2135 = vmatpush1.msra.mxu0 0.0
        %2136 = vmatprep.subr.mxu0 0.0
        %2137 = vmatpush1.msra.mxu0 0.0
        %2138 = vmatprep.subr.mxu0 0.0
        %2139 = vmatpush1.msra.mxu0 0.0
        %2140 = vmatprep.subr.mxu0 0.0
        %2141 = vmatpush1.msra.mxu0 0.0
        %2142 = vmatprep.mubr.f32.mxu0 0.0
        %2143 = vmatmul.mubr.f32.gmra.mrb[0].mxu0 %v1998
        %v2144 = vpop.f32.mrb[0].mxu0
        %v2145 = vadd.f32 0.0, %v2144
        %v2146 = vpop.f32.mrb[0].mxu0
        %2147 = vmatprep.mubr.f32.mxu0 0.0
        %2148 = vmatmul.mubr.f32.gmra.mrb[0].mxu0 %v1999
        %v2149 = vpop.f32.mrb[0].mxu0
        %v2150 = vadd.f32 0.0, %v2149
        %v2151 = vpop.f32.mrb[0].mxu0
        %2152 = vmatprep.mubr.f32.mxu0 0.0
        %2153 = vmatmul.mubr.f32.gmra.mrb[0].mxu0 %v2000
        %v2154 = vpop.f32.mrb[0].mxu0
        %v2155 = vadd.f32 0.0, %v2154
        %v2156 = vpop.f32.mrb[0].mxu0
        %2157 = vmatprep.mubr.f32.mxu0 0.0
        %2158 = vmatmul.mubr.f32.gmra.mrb[0].mxu0 %v2001
        %v2159 = vpop.f32.mrb[0].mxu0
        %v2160 = vadd.f32 0.0, %v2159
        %v2161 = vpop.f32.mrb[0].mxu0
        %2162 = vmatprep.mubr.f32.mxu0 0.0
        %2163 = vmatmul.mubr.f32.gmra.mrb[0].mxu0 %v2002
        %v2164 = vpop.f32.mrb[0].mxu0
        %v2165 = vadd.f32 0.0, %v2164
        %v2166 = vpop.f32.mrb[0].mxu0
        %2167 = vmatprep.mubr.f32.mxu0 0.0
        %2168 = vmatmul.mubr.f32.gmra.mrb[0].mxu0 %v2003
        %v2169 = vpop.f32.mrb[0].mxu0
        %v2170 = vadd.f32 0.0, %v2169
        %v2171 = vpop.f32.mrb[0].mxu0
        %2172 = vmatprep.mubr.f32.mxu0 0.0
        %2173 = vmatmul.mubr.f32.gmra.mrb[0].mxu0 %v2004
        %v2174 = vpop.f32.mrb[0].mxu0
        %v2175 = vadd.f32 0.0, %v2174
        %v2176 = vpop.f32.mrb[0].mxu0
        %2177 = vmatprep.mubr.f32.mxu0 0.0
        %2178 = vmatmul.mubr.f32.gmra.mrb[0].mxu0 %v2005
        %v2179 = vpop.f32.mrb[0].mxu0
        %v2180 = vadd.f32 0.0, %v2179
        %v2181 = vpop.f32.mrb[0].mxu0
        %2182 = vmatprep.mubr.f32.mxu0 0.0
        %2183 = vmatmul.mubr.f32.gmra.mrb[0].mxu0 %v2006
        %v2184 = vpop.f32.mrb[0].mxu0
        %v2185 = vadd.f32 0.0, %v2184
        %v2186 = vpop.f32.mrb[0].mxu0
        %2187 = vmatprep.mubr.f32.mxu0 0.0
        %2188 = vmatmul.mubr.f32.gmra.mrb[0].mxu0 %v2007
        %v2189 = vpop.f32.mrb[0].mxu0
        %v2190 = vadd.f32 0.0, %v2189
        %v2191 = vpop.f32.mrb[0].mxu0
        %2192 = vmatprep.mubr.f32.mxu0 0.0
        %2193 = vmatmul.mubr.f32.gmra.mrb[0].mxu0 %v2008
        %v2194 = vpop.f32.mrb[0].mxu0
        %v2195 = vadd.f32 0.0, %v2194
        %v2196 = vpop.f32.mrb[0].mxu0
        %2197 = vmatprep.mubr.f32.mxu0 0.0
        %2198 = vmatmul.mubr.f32.gmra.mrb[0].mxu0 %v2009
        %v2199 = vpop.f32.mrb[0].mxu0
        %v2200 = vadd.f32 0.0, %v2199
        %v2201 = vpop.f32.mrb[0].mxu0
        %2202 = vmatprep.mubr.f32.mxu0 0.0
        %2203 = vmatmul.mubr.f32.gmra.mrb[0].mxu0 %v2010
        %v2204 = vpop.f32.mrb[0].mxu0
        %v2205 = vadd.f32 0.0, %v2204
        %v2206 = vpop.f32.mrb[0].mxu0
        %2207 = vmatprep.mubr.f32.mxu0 0.0
        %2208 = vmatmul.mubr.f32.gmra.mrb[0].mxu0 %v2011
        %v2209 = vpop.f32.mrb[0].mxu0
        %v2210 = vadd.f32 0.0, %v2209
        %v2211 = vpop.f32.mrb[0].mxu0
        %2212 = vmatprep.mubr.f32.mxu0 0.0
        %2213 = vmatmul.mubr.f32.gmra.mrb[0].mxu0 %v2012
        %v2214 = vpop.f32.mrb[0].mxu0
        %v2215 = vadd.f32 0.0, %v2214
        %v2216 = vpop.f32.mrb[0].mxu0
        %2217 = vmatprep.mubr.f32.mxu0 0.0
        %2218 = vmatmul.mubr.f32.gmra.mrb[0].mxu0 %v2013
        %v2219 = vpop.f32.mrb[0].mxu0
        %v2220 = vadd.f32 0.0, %v2219
        %v2221 = vpop.f32.mrb[0].mxu0
        %2222 = vdwg.mxu0
        %2239 = vrot.lane.b32.xlu0 %v2145, 8
        %v2240 = vpop.permute.xlu0 %2239
        %2241 = vrot.lane.b32.xlu0 %v2150, 8
        %v2242 = vpop.permute.xlu0 %2241
        %2243 = vrot.lane.b32.xlu0 %v2155, 8
        %v2244 = vpop.permute.xlu0 %2243
        %2245 = vrot.lane.b32.xlu0 %v2160, 8
        %v2246 = vpop.permute.xlu0 %2245
        %2247 = vrot.lane.b32.xlu0 %v2165, 8
        %v2248 = vpop.permute.xlu0 %2247
        %2249 = vrot.lane.b32.xlu0 %v2170, 8
        %v2250 = vpop.permute.xlu0 %2249
        %2251 = vrot.lane.b32.xlu0 %v2175, 8
        %v2252 = vpop.permute.xlu0 %2251
        %2253 = vrot.lane.b32.xlu0 %v2180, 8
        %v2254 = vpop.permute.xlu0 %2253
        %2255 = vrot.lane.b32.xlu0 %v2185, 8
        %v2256 = vpop.permute.xlu0 %2255
        %2257 = vrot.lane.b32.xlu0 %v2190, 8
        %v2258 = vpop.permute.xlu0 %2257
        %2259 = vrot.lane.b32.xlu0 %v2195, 8
        %v2260 = vpop.permute.xlu0 %2259
        %2261 = vrot.lane.b32.xlu0 %v2200, 8
        %v2262 = vpop.permute.xlu0 %2261
        %2263 = vrot.lane.b32.xlu0 %v2205, 8
        %v2264 = vpop.permute.xlu0 %2263
        %2265 = vrot.lane.b32.xlu0 %v2210, 8
        %v2266 = vpop.permute.xlu0 %2265
        %2267 = vrot.lane.b32.xlu0 %v2215, 8
        %v2268 = vpop.permute.xlu0 %2267
        %2269 = vrot.lane.b32.xlu0 %v2220, 8
        %v2270 = vpop.permute.xlu0 %2269
        %vm2287 = vcmask 130112
        %2288 = vst.msk [vmem:[%s368] sm:$0xff] %vm2287, %v2240
        %2289 = vst.msk [vmem:[%s368 + $0x8] sm:$0xff] %vm2287, %v2242
        %2290 = vst.msk [vmem:[%s368 + $0x10] sm:$0xff] %vm2287, %v2244
        %2291 = vst.msk [vmem:[%s368 + $0x18] sm:$0xff] %vm2287, %v2246
        %2292 = vst.msk [vmem:[%s368 + $0x20] sm:$0xff] %vm2287, %v2248
        %2293 = vst.msk [vmem:[%s368 + $0x28] sm:$0xff] %vm2287, %v2250
        %2294 = vst.msk [vmem:[%s368 + $0x30] sm:$0xff] %vm2287, %v2252
        %2295 = vst.msk [vmem:[%s368 + $0x38] sm:$0xff] %vm2287, %v2254
        %2296 = vst.msk [vmem:[%s368 + $0x40] sm:$0xff] %vm2287, %v2256
        %2297 = vst.msk [vmem:[%s368 + $0x48] sm:$0xff] %vm2287, %v2258
        %2298 = vst.msk [vmem:[%s368 + $0x50] sm:$0xff] %vm2287, %v2260
        %2299 = vst.msk [vmem:[%s368 + $0x58] sm:$0xff] %vm2287, %v2262
        %2300 = vst.msk [vmem:[%s368 + $0x60] sm:$0xff] %vm2287, %v2264
        %2301 = vst.msk [vmem:[%s368 + $0x68] sm:$0xff] %vm2287, %v2266
        %2302 = vst.msk [vmem:[%s368 + $0x70] sm:$0xff] %vm2287, %v2268
        %2303 = vst.msk [vmem:[%s368 + $0x78] sm:$0xff] %vm2287, %v2270
        %v2304 = vld [vmem:[#allocation3] sm:$0xff]
        %v2305 = vld [vmem:[#allocation3 + $0x8] sm:$0xff]
        %v2306 = vld [vmem:[#allocation3 + $0x10] sm:$0xff]
        %v2307 = vld [vmem:[#allocation3 + $0x18] sm:$0xff]
        %v2308 = vld [vmem:[#allocation3 + $0x20] sm:$0xff]
        %v2309 = vld [vmem:[#allocation3 + $0x28] sm:$0xff]
        %v2310 = vld [vmem:[#allocation3 + $0x30] sm:$0xff]
        %v2311 = vld [vmem:[#allocation3 + $0x38] sm:$0xff]
        %v2312 = vld [vmem:[#allocation3 + $0x40] sm:$0xff]
        %v2313 = vld [vmem:[#allocation3 + $0x48] sm:$0xff]
        %v2314 = vld [vmem:[#allocation3 + $0x50] sm:$0xff]
        %v2315 = vld [vmem:[#allocation3 + $0x58] sm:$0xff]
        %v2316 = vld [vmem:[#allocation3 + $0x60] sm:$0xff]
        %v2317 = vld [vmem:[#allocation3 + $0x68] sm:$0xff]
        %v2318 = vld [vmem:[#allocation3 + $0x70] sm:$0xff]
        %v2319 = vld [vmem:[#allocation3 + $0x78] sm:$0xff]
        %v2320 = vld [vmem:[#allocation2] sm:$0xff]
        %v2321 = vld [vmem:[#allocation2 + $0x8] sm:$0xff]
        %v2322 = vld [vmem:[#allocation2 + $0x10] sm:$0xff]
        %v2323 = vld [vmem:[#allocation2 + $0x18] sm:$0xff]
        %v2324 = vld [vmem:[#allocation2 + $0x20] sm:$0xff]
        %v2325 = vld [vmem:[#allocation2 + $0x28] sm:$0xff]
        %v2326 = vld [vmem:[#allocation2 + $0x30] sm:$0xff]
        %v2327 = vld [vmem:[#allocation2 + $0x38] sm:$0xff]
        %v2328 = vld [vmem:[#allocation2 + $0x40] sm:$0xff]
        %v2329 = vld [vmem:[#allocation2 + $0x48] sm:$0xff]
        %v2330 = vld [vmem:[#allocation2 + $0x50] sm:$0xff]
        %v2331 = vld [vmem:[#allocation2 + $0x58] sm:$0xff]
        %v2332 = vld [vmem:[#allocation2 + $0x60] sm:$0xff]
        %v2333 = vld [vmem:[#allocation2 + $0x68] sm:$0xff]
        %v2334 = vld [vmem:[#allocation2 + $0x70] sm:$0xff]
        %v2335 = vld [vmem:[#allocation2 + $0x78] sm:$0xff]
        %2336 = vrot.lane.b32.xlu0 %v915, 112
        %v2337 = vpop.permute.xlu0 %2336
        %2338 = vrot.lane.b32.xlu0 %v916, 112
        %v2339 = vpop.permute.xlu0 %2338
        %2340 = vrot.lane.b32.xlu0 %v917, 112
        %v2341 = vpop.permute.xlu0 %2340
        %2342 = vrot.lane.b32.xlu0 %v918, 112
        %v2343 = vpop.permute.xlu0 %2342
        %2344 = vrot.lane.b32.xlu0 %v919, 112
        %v2345 = vpop.permute.xlu0 %2344
        %2346 = vrot.lane.b32.xlu0 %v920, 112
        %v2347 = vpop.permute.xlu0 %2346
        %2348 = vrot.lane.b32.xlu0 %v921, 112
        %v2349 = vpop.permute.xlu0 %2348
        %2350 = vrot.lane.b32.xlu0 %v922, 112
        %v2351 = vpop.permute.xlu0 %2350
        %2352 = vrot.lane.b32.xlu0 %v923, 112
        %v2353 = vpop.permute.xlu0 %2352
        %2354 = vrot.lane.b32.xlu0 %v924, 112
        %v2355 = vpop.permute.xlu0 %2354
        %2356 = vrot.lane.b32.xlu0 %v925, 112
        %v2357 = vpop.permute.xlu0 %2356
        %2358 = vrot.lane.b32.xlu0 %v926, 112
        %v2359 = vpop.permute.xlu0 %2358
        %2360 = vrot.lane.b32.xlu0 %v927, 112
        %v2361 = vpop.permute.xlu0 %2360
        %2362 = vrot.lane.b32.xlu0 %v928, 112
        %v2363 = vpop.permute.xlu0 %2362
        %2364 = vrot.lane.b32.xlu0 %v929, 112
        %v2365 = vpop.permute.xlu0 %2364
        %2366 = vrot.lane.b32.xlu0 %v930, 112
        %v2367 = vpop.permute.xlu0 %2366
        %2384 = vrot.lane.b32.xlu0 %v2320, 112
        %v2385 = vpop.permute.xlu0 %2384
        %2386 = vrot.lane.b32.xlu0 %v2321, 112
        %v2387 = vpop.permute.xlu0 %2386
        %2388 = vrot.lane.b32.xlu0 %v2322, 112
        %v2389 = vpop.permute.xlu0 %2388
        %2390 = vrot.lane.b32.xlu0 %v2323, 112
        %v2391 = vpop.permute.xlu0 %2390
        %2392 = vrot.lane.b32.xlu0 %v2324, 112
        %v2393 = vpop.permute.xlu0 %2392
        %2394 = vrot.lane.b32.xlu0 %v2325, 112
        %v2395 = vpop.permute.xlu0 %2394
        %2396 = vrot.lane.b32.xlu0 %v2326, 112
        %v2397 = vpop.permute.xlu0 %2396
        %2398 = vrot.lane.b32.xlu0 %v2327, 112
        %v2399 = vpop.permute.xlu0 %2398
        %2400 = vrot.lane.b32.xlu0 %v2328, 112
        %v2401 = vpop.permute.xlu0 %2400
        %2402 = vrot.lane.b32.xlu0 %v2329, 112
        %v2403 = vpop.permute.xlu0 %2402
        %2404 = vrot.lane.b32.xlu0 %v2330, 112
        %v2405 = vpop.permute.xlu0 %2404
        %2406 = vrot.lane.b32.xlu0 %v2331, 112
        %v2407 = vpop.permute.xlu0 %2406
        %2408 = vrot.lane.b32.xlu0 %v2332, 112
        %v2409 = vpop.permute.xlu0 %2408
        %2410 = vrot.lane.b32.xlu0 %v2333, 112
        %v2411 = vpop.permute.xlu0 %2410
        %2412 = vrot.lane.b32.xlu0 %v2334, 112
        %v2413 = vpop.permute.xlu0 %2412
        %2414 = vrot.lane.b32.xlu0 %v2335, 112
        %v2415 = vpop.permute.xlu0 %2414
        %v2416 = vsel %vm970, %v2337, 0
        %v2418 = vsel %vm970, %v2339, 0
        %v2420 = vsel %vm970, %v2341, 0
        %v2422 = vsel %vm970, %v2343, 0
        %v2424 = vsel %vm970, %v2345, 0
        %v2426 = vsel %vm970, %v2347, 0
        %v2428 = vsel %vm970, %v2349, 0
        %v2430 = vsel %vm970, %v2351, 0
        %v2432 = vsel %vm970, %v2353, 0
        %v2434 = vsel %vm970, %v2355, 0
        %v2436 = vsel %vm970, %v2357, 0
        %v2438 = vsel %vm970, %v2359, 0
        %v2440 = vsel %vm970, %v2361, 0
        %v2442 = vsel %vm970, %v2363, 0
        %v2444 = vsel %vm970, %v2365, 0
        %v2446 = vsel %vm970, %v2367, 0
        %v2448 = vsel %vm970, %v2385, 0
        %v2450 = vsel %vm970, %v2387, 0
        %v2452 = vsel %vm970, %v2389, 0
        %v2454 = vsel %vm970, %v2391, 0
        %v2456 = vsel %vm970, %v2393, 0
        %v2458 = vsel %vm970, %v2395, 0
        %v2460 = vsel %vm970, %v2397, 0
        %v2462 = vsel %vm970, %v2399, 0
        %v2464 = vsel %vm970, %v2401, 0
        %v2466 = vsel %vm970, %v2403, 0
        %v2468 = vsel %vm970, %v2405, 0
        %v2470 = vsel %vm970, %v2407, 0
        %v2472 = vsel %vm970, %v2409, 0
        %v2474 = vsel %vm970, %v2411, 0
        %v2476 = vsel %vm970, %v2413, 0
        %v2478 = vsel %vm970, %v2415, 0
        %2480 = vmatprep.subr.mxu0 0.0
        %2481 = vmatpush1.xpose.msra.mxu0 %v2448
        %2482 = vmatprep.subr.mxu0 0.0
        %2483 = vmatpush1.xpose.msra.mxu0 %v2450
        %2484 = vmatprep.subr.mxu0 0.0
        %2485 = vmatpush1.xpose.msra.mxu0 %v2452
        %2486 = vmatprep.subr.mxu0 0.0
        %2487 = vmatpush1.xpose.msra.mxu0 %v2454
        %2488 = vmatprep.subr.mxu0 0.0
        %2489 = vmatpush1.xpose.msra.mxu0 %v2456
        %2490 = vmatprep.subr.mxu0 0.0
        %2491 = vmatpush1.xpose.msra.mxu0 %v2458
        %2492 = vmatprep.subr.mxu0 0.0
        %2493 = vmatpush1.xpose.msra.mxu0 %v2460
        %2494 = vmatprep.subr.mxu0 0.0
        %2495 = vmatpush1.xpose.msra.mxu0 %v2462
        %2496 = vmatprep.subr.mxu0 0.0
        %2497 = vmatpush1.xpose.msra.mxu0 %v2464
        %2498 = vmatprep.subr.mxu0 0.0
        %2499 = vmatpush1.xpose.msra.mxu0 %v2466
        %2500 = vmatprep.subr.mxu0 0.0
        %2501 = vmatpush1.xpose.msra.mxu0 %v2468
        %2502 = vmatprep.subr.mxu0 0.0
        %2503 = vmatpush1.xpose.msra.mxu0 %v2470
        %2504 = vmatprep.subr.mxu0 0.0
        %2505 = vmatpush1.xpose.msra.mxu0 %v2472
        %2506 = vmatprep.subr.mxu0 0.0
        %2507 = vmatpush1.xpose.msra.mxu0 %v2474
        %2508 = vmatprep.subr.mxu0 0.0
        %2509 = vmatpush1.xpose.msra.mxu0 %v2476
        %2510 = vmatprep.subr.mxu0 0.0
        %2511 = vmatpush1.xpose.msra.mxu0 %v2478
        %2512 = vmatprep.subr.mxu0 0.0
        %2513 = vmatpush1.xpose.msra.mxu0 0.0
        %2514 = vmatprep.subr.mxu0 0.0
        %2515 = vmatpush1.xpose.msra.mxu0 0.0
        %2516 = vmatprep.subr.mxu0 0.0
        %2517 = vmatpush1.xpose.msra.mxu0 0.0
        %2518 = vmatprep.subr.mxu0 0.0
        %2519 = vmatpush1.xpose.msra.mxu0 0.0
        %2520 = vmatprep.subr.mxu0 0.0
        %2521 = vmatpush1.xpose.msra.mxu0 0.0
        %2522 = vmatprep.subr.mxu0 0.0
        %2523 = vmatpush1.xpose.msra.mxu0 0.0
        %2524 = vmatprep.subr.mxu0 0.0
        %2525 = vmatpush1.xpose.msra.mxu0 0.0
        %2526 = vmatprep.subr.mxu0 0.0
        %2527 = vmatpush1.xpose.msra.mxu0 0.0
        %2528 = vmatprep.subr.mxu0 0.0
        %2529 = vmatpush1.xpose.msra.mxu0 0.0
        %2530 = vmatprep.subr.mxu0 0.0
        %2531 = vmatpush1.xpose.msra.mxu0 0.0
        %2532 = vmatprep.subr.mxu0 0.0
        %2533 = vmatpush1.xpose.msra.mxu0 0.0
        %2534 = vmatprep.subr.mxu0 0.0
        %2535 = vmatpush1.xpose.msra.mxu0 0.0
        %2536 = vmatprep.subr.mxu0 0.0
        %2537 = vmatpush1.xpose.msra.mxu0 0.0
        %2538 = vmatprep.subr.mxu0 0.0
        %2539 = vmatpush1.xpose.msra.mxu0 0.0
        %2540 = vmatprep.subr.mxu0 0.0
        %2541 = vmatpush1.xpose.msra.mxu0 0.0
        %2542 = vmatprep.subr.mxu0 0.0
        %2543 = vmatpush1.xpose.msra.mxu0 0.0
        %2544 = vmatprep.mubr.f32.mxu0 0.0
        %2545 = vmatmul.mubr.f32.gmra.mrb[0].mxu0 %v2416
        %v2546 = vpop.f32.mrb[0].mxu0
        %v2547 = vadd.f32 %v936, %v2546
        %v2548 = vpop.f32.mrb[0].mxu0
        %2549 = vmatprep.mubr.f32.mxu0 0.0
        %2550 = vmatmul.mubr.f32.gmra.mrb[0].mxu0 %v2418
        %v2551 = vpop.f32.mrb[0].mxu0
        %v2552 = vadd.f32 %v936, %v2551
        %v2553 = vpop.f32.mrb[0].mxu0
        %2554 = vmatprep.mubr.f32.mxu0 0.0
        %2555 = vmatmul.mubr.f32.gmra.mrb[0].mxu0 %v2420
        %v2556 = vpop.f32.mrb[0].mxu0
        %v2557 = vadd.f32 %v936, %v2556
        %v2558 = vpop.f32.mrb[0].mxu0
        %2559 = vmatprep.mubr.f32.mxu0 0.0
        %2560 = vmatmul.mubr.f32.gmra.mrb[0].mxu0 %v2422
        %v2561 = vpop.f32.mrb[0].mxu0
        %v2562 = vadd.f32 %v936, %v2561
        %v2563 = vpop.f32.mrb[0].mxu0
        %2564 = vmatprep.mubr.f32.mxu0 0.0
        %2565 = vmatmul.mubr.f32.gmra.mrb[0].mxu0 %v2424
        %v2566 = vpop.f32.mrb[0].mxu0
        %v2567 = vadd.f32 %v936, %v2566
        %v2568 = vpop.f32.mrb[0].mxu0
        %2569 = vmatprep.mubr.f32.mxu0 0.0
        %2570 = vmatmul.mubr.f32.gmra.mrb[0].mxu0 %v2426
        %v2571 = vpop.f32.mrb[0].mxu0
        %v2572 = vadd.f32 %v936, %v2571
        %v2573 = vpop.f32.mrb[0].mxu0
        %2574 = vmatprep.mubr.f32.mxu0 0.0
        %2575 = vmatmul.mubr.f32.gmra.mrb[0].mxu0 %v2428
        %v2576 = vpop.f32.mrb[0].mxu0
        %v2577 = vadd.f32 %v936, %v2576
        %v2578 = vpop.f32.mrb[0].mxu0
        %2579 = vmatprep.mubr.f32.mxu0 0.0
        %2580 = vmatmul.mubr.f32.gmra.mrb[0].mxu0 %v2430
        %v2581 = vpop.f32.mrb[0].mxu0
        %v2582 = vadd.f32 %v936, %v2581
        %v2583 = vpop.f32.mrb[0].mxu0
        %2584 = vmatprep.mubr.f32.mxu0 0.0
        %2585 = vmatmul.mubr.f32.gmra.mrb[0].mxu0 %v2432
        %v2586 = vpop.f32.mrb[0].mxu0
        %v2587 = vadd.f32 %v936, %v2586
        %v2588 = vpop.f32.mrb[0].mxu0
        %2589 = vmatprep.mubr.f32.mxu0 0.0
        %2590 = vmatmul.mubr.f32.gmra.mrb[0].mxu0 %v2434
        %v2591 = vpop.f32.mrb[0].mxu0
        %v2592 = vadd.f32 %v936, %v2591
        %v2593 = vpop.f32.mrb[0].mxu0
        %2594 = vmatprep.mubr.f32.mxu0 0.0
        %2595 = vmatmul.mubr.f32.gmra.mrb[0].mxu0 %v2436
        %v2596 = vpop.f32.mrb[0].mxu0
        %v2597 = vadd.f32 %v936, %v2596
        %v2598 = vpop.f32.mrb[0].mxu0
        %2599 = vmatprep.mubr.f32.mxu0 0.0
        %2600 = vmatmul.mubr.f32.gmra.mrb[0].mxu0 %v2438
        %v2601 = vpop.f32.mrb[0].mxu0
        %v2602 = vadd.f32 %v936, %v2601
        %v2603 = vpop.f32.mrb[0].mxu0
        %2604 = vmatprep.mubr.f32.mxu0 0.0
        %2605 = vmatmul.mubr.f32.gmra.mrb[0].mxu0 %v2440
        %v2606 = vpop.f32.mrb[0].mxu0
        %v2607 = vadd.f32 %v936, %v2606
        %v2608 = vpop.f32.mrb[0].mxu0
        %2609 = vmatprep.mubr.f32.mxu0 0.0
        %2610 = vmatmul.mubr.f32.gmra.mrb[0].mxu0 %v2442
        %v2611 = vpop.f32.mrb[0].mxu0
        %v2612 = vadd.f32 %v936, %v2611
        %v2613 = vpop.f32.mrb[0].mxu0
        %2614 = vmatprep.mubr.f32.mxu0 0.0
        %2615 = vmatmul.mubr.f32.gmra.mrb[0].mxu0 %v2444
        %v2616 = vpop.f32.mrb[0].mxu0
        %v2617 = vadd.f32 %v936, %v2616
        %v2618 = vpop.f32.mrb[0].mxu0
        %2619 = vmatprep.mubr.f32.mxu0 0.0
        %2620 = vmatmul.mubr.f32.gmra.mrb[0].mxu0 %v2446
        %v2621 = vpop.f32.mrb[0].mxu0
        %v2622 = vadd.f32 %v936, %v2621
        %v2623 = vpop.f32.mrb[0].mxu0
        %2624 = vdwg.mxu0
        %2625 = vmax.xlane.f32.xlu0 %v2547
        %v2626 = vpop.xlane.xlu0 %2625
        %2627 = vmax.xlane.f32.xlu0 %v2552
        %v2628 = vpop.xlane.xlu0 %2627
        %2629 = vmax.xlane.f32.xlu0 %v2557
        %v2630 = vpop.xlane.xlu0 %2629
        %2631 = vmax.xlane.f32.xlu0 %v2562
        %v2632 = vpop.xlane.xlu0 %2631
        %2633 = vmax.xlane.f32.xlu0 %v2567
        %v2634 = vpop.xlane.xlu0 %2633
        %2635 = vmax.xlane.f32.xlu0 %v2572
        %v2636 = vpop.xlane.xlu0 %2635
        %2637 = vmax.xlane.f32.xlu0 %v2577
        %v2638 = vpop.xlane.xlu0 %2637
        %2639 = vmax.xlane.f32.xlu0 %v2582
        %v2640 = vpop.xlane.xlu0 %2639
        %2641 = vmax.xlane.f32.xlu0 %v2587
        %v2642 = vpop.xlane.xlu0 %2641
        %2643 = vmax.xlane.f32.xlu0 %v2592
        %v2644 = vpop.xlane.xlu0 %2643
        %2645 = vmax.xlane.f32.xlu0 %v2597
        %v2646 = vpop.xlane.xlu0 %2645
        %2647 = vmax.xlane.f32.xlu0 %v2602
        %v2648 = vpop.xlane.xlu0 %2647
        %2649 = vmax.xlane.f32.xlu0 %v2607
        %v2650 = vpop.xlane.xlu0 %2649
        %2651 = vmax.xlane.f32.xlu0 %v2612
        %v2652 = vpop.xlane.xlu0 %2651
        %2653 = vmax.xlane.f32.xlu0 %v2617
        %v2654 = vpop.xlane.xlu0 %2653
        %2655 = vmax.xlane.f32.xlu0 %v2622
        %v2656 = vpop.xlane.xlu0 %2655
        %v2657 = vsub.f32 %v2547, %v2626
        %v2658 = vsub.f32 %v2552, %v2628
        %v2659 = vsub.f32 %v2557, %v2630
        %v2660 = vsub.f32 %v2562, %v2632
        %v2661 = vsub.f32 %v2567, %v2634
        %v2662 = vsub.f32 %v2572, %v2636
        %v2663 = vsub.f32 %v2577, %v2638
        %v2664 = vsub.f32 %v2582, %v2640
        %v2665 = vsub.f32 %v2587, %v2642
        %v2666 = vsub.f32 %v2592, %v2644
        %v2667 = vsub.f32 %v2597, %v2646
        %v2668 = vsub.f32 %v2602, %v2648
        %v2669 = vsub.f32 %v2607, %v2650
        %v2670 = vsub.f32 %v2612, %v2652
        %v2671 = vsub.f32 %v2617, %v2654
        %v2672 = vsub.f32 %v2622, %v2656
        %v2673 = vmul.f32 %v2657, 1.442695
        %v2674 = vpow.pop %v2673
        %v2675 = vmul.f32 %v2658, 1.442695
        %v2676 = vpow.pop %v2675
        %v2677 = vmul.f32 %v2659, 1.442695
        %v2678 = vpow.pop %v2677
        %v2679 = vmul.f32 %v2660, 1.442695
        %v2680 = vpow.pop %v2679
        %v2681 = vmul.f32 %v2661, 1.442695
        %v2682 = vpow.pop %v2681
        %v2683 = vmul.f32 %v2662, 1.442695
        %v2684 = vpow.pop %v2683
        %v2685 = vmul.f32 %v2663, 1.442695
        %v2686 = vpow.pop %v2685
        %v2687 = vmul.f32 %v2664, 1.442695
        %v2688 = vpow.pop %v2687
        %v2689 = vmul.f32 %v2665, 1.442695
        %v2690 = vpow.pop %v2689
        %v2691 = vmul.f32 %v2666, 1.442695
        %v2692 = vpow.pop %v2691
        %v2693 = vmul.f32 %v2667, 1.442695
        %v2694 = vpow.pop %v2693
        %v2695 = vmul.f32 %v2668, 1.442695
        %v2696 = vpow.pop %v2695
        %v2697 = vmul.f32 %v2669, 1.442695
        %v2698 = vpow.pop %v2697
        %v2699 = vmul.f32 %v2670, 1.442695
        %v2700 = vpow.pop %v2699
        %v2701 = vmul.f32 %v2671, 1.442695
        %v2702 = vpow.pop %v2701
        %v2703 = vmul.f32 %v2672, 1.442695
        %v2704 = vpow.pop %v2703
        %2705 = vadd.xlane.f32.xlu0 %v2674
        %v2706 = vpop.xlane.xlu0 %2705
        %2707 = vadd.xlane.f32.xlu0 %v2676
        %v2708 = vpop.xlane.xlu0 %2707
        %2709 = vadd.xlane.f32.xlu0 %v2678
        %v2710 = vpop.xlane.xlu0 %2709
        %2711 = vadd.xlane.f32.xlu0 %v2680
        %v2712 = vpop.xlane.xlu0 %2711
        %2713 = vadd.xlane.f32.xlu0 %v2682
        %v2714 = vpop.xlane.xlu0 %2713
        %2715 = vadd.xlane.f32.xlu0 %v2684
        %v2716 = vpop.xlane.xlu0 %2715
        %2717 = vadd.xlane.f32.xlu0 %v2686
        %v2718 = vpop.xlane.xlu0 %2717
        %2719 = vadd.xlane.f32.xlu0 %v2688
        %v2720 = vpop.xlane.xlu0 %2719
        %2721 = vadd.xlane.f32.xlu0 %v2690
        %v2722 = vpop.xlane.xlu0 %2721
        %2723 = vadd.xlane.f32.xlu0 %v2692
        %v2724 = vpop.xlane.xlu0 %2723
        %2725 = vadd.xlane.f32.xlu0 %v2694
        %v2726 = vpop.xlane.xlu0 %2725
        %2727 = vadd.xlane.f32.xlu0 %v2696
        %v2728 = vpop.xlane.xlu0 %2727
        %2729 = vadd.xlane.f32.xlu0 %v2698
        %v2730 = vpop.xlane.xlu0 %2729
        %2731 = vadd.xlane.f32.xlu0 %v2700
        %v2732 = vpop.xlane.xlu0 %2731
        %2733 = vadd.xlane.f32.xlu0 %v2702
        %v2734 = vpop.xlane.xlu0 %2733
        %2735 = vadd.xlane.f32.xlu0 %v2704
        %v2736 = vpop.xlane.xlu0 %2735
        %v2737 = vrcp.pop %v2706
        %v2738 = vmul.f32 1.0, %v2737
        %v2739 = vrcp.pop %v2708
        %v2740 = vmul.f32 1.0, %v2739
        %v2741 = vrcp.pop %v2710
        %v2742 = vmul.f32 1.0, %v2741
        %v2743 = vrcp.pop %v2712
        %v2744 = vmul.f32 1.0, %v2743
        %v2745 = vrcp.pop %v2714
        %v2746 = vmul.f32 1.0, %v2745
        %v2747 = vrcp.pop %v2716
        %v2748 = vmul.f32 1.0, %v2747
        %v2749 = vrcp.pop %v2718
        %v2750 = vmul.f32 1.0, %v2749
        %v2751 = vrcp.pop %v2720
        %v2752 = vmul.f32 1.0, %v2751
        %v2753 = vrcp.pop %v2722
        %v2754 = vmul.f32 1.0, %v2753
        %v2755 = vrcp.pop %v2724
        %v2756 = vmul.f32 1.0, %v2755
        %v2757 = vrcp.pop %v2726
        %v2758 = vmul.f32 1.0, %v2757
        %v2759 = vrcp.pop %v2728
        %v2760 = vmul.f32 1.0, %v2759
        %v2761 = vrcp.pop %v2730
        %v2762 = vmul.f32 1.0, %v2761
        %v2763 = vrcp.pop %v2732
        %v2764 = vmul.f32 1.0, %v2763
        %v2765 = vrcp.pop %v2734
        %v2766 = vmul.f32 1.0, %v2765
        %v2767 = vrcp.pop %v2736
        %v2768 = vmul.f32 1.0, %v2767
        %v2769 = vmul.f32 %v2674, %v2738
        %v2770 = vmul.f32 %v2676, %v2740
        %v2771 = vmul.f32 %v2678, %v2742
        %v2772 = vmul.f32 %v2680, %v2744
        %v2773 = vmul.f32 %v2682, %v2746
        %v2774 = vmul.f32 %v2684, %v2748
        %v2775 = vmul.f32 %v2686, %v2750
        %v2776 = vmul.f32 %v2688, %v2752
        %v2777 = vmul.f32 %v2690, %v2754
        %v2778 = vmul.f32 %v2692, %v2756
        %v2779 = vmul.f32 %v2694, %v2758
        %v2780 = vmul.f32 %v2696, %v2760
        %v2781 = vmul.f32 %v2698, %v2762
        %v2782 = vmul.f32 %v2700, %v2764
        %v2783 = vmul.f32 %v2702, %v2766
        %v2784 = vmul.f32 %v2704, %v2768
        %2801 = vrot.lane.b32.xlu0 %v2304, 112
        %v2802 = vpop.permute.xlu0 %2801
        %2803 = vrot.lane.b32.xlu0 %v2305, 112
        %v2804 = vpop.permute.xlu0 %2803
        %2805 = vrot.lane.b32.xlu0 %v2306, 112
        %v2806 = vpop.permute.xlu0 %2805
        %2807 = vrot.lane.b32.xlu0 %v2307, 112
        %v2808 = vpop.permute.xlu0 %2807
        %2809 = vrot.lane.b32.xlu0 %v2308, 112
        %v2810 = vpop.permute.xlu0 %2809
        %2811 = vrot.lane.b32.xlu0 %v2309, 112
        %v2812 = vpop.permute.xlu0 %2811
        %2813 = vrot.lane.b32.xlu0 %v2310, 112
        %v2814 = vpop.permute.xlu0 %2813
        %2815 = vrot.lane.b32.xlu0 %v2311, 112
        %v2816 = vpop.permute.xlu0 %2815
        %2817 = vrot.lane.b32.xlu0 %v2312, 112
        %v2818 = vpop.permute.xlu0 %2817
        %2819 = vrot.lane.b32.xlu0 %v2313, 112
        %v2820 = vpop.permute.xlu0 %2819
        %2821 = vrot.lane.b32.xlu0 %v2314, 112
        %v2822 = vpop.permute.xlu0 %2821
        %2823 = vrot.lane.b32.xlu0 %v2315, 112
        %v2824 = vpop.permute.xlu0 %2823
        %2825 = vrot.lane.b32.xlu0 %v2316, 112
        %v2826 = vpop.permute.xlu0 %2825
        %2827 = vrot.lane.b32.xlu0 %v2317, 112
        %v2828 = vpop.permute.xlu0 %2827
        %2829 = vrot.lane.b32.xlu0 %v2318, 112
        %v2830 = vpop.permute.xlu0 %2829
        %2831 = vrot.lane.b32.xlu0 %v2319, 112
        %v2832 = vpop.permute.xlu0 %2831
        %2849 = vmatprep.subr.mxu0 0.0
        %2850 = vmatpush1.msra.mxu0 %v2802
        %2851 = vmatprep.subr.mxu0 0.0
        %2852 = vmatpush1.msra.mxu0 %v2804
        %2853 = vmatprep.subr.mxu0 0.0
        %2854 = vmatpush1.msra.mxu0 %v2806
        %2855 = vmatprep.subr.mxu0 0.0
        %2856 = vmatpush1.msra.mxu0 %v2808
        %2857 = vmatprep.subr.mxu0 0.0
        %2858 = vmatpush1.msra.mxu0 %v2810
        %2859 = vmatprep.subr.mxu0 0.0
        %2860 = vmatpush1.msra.mxu0 %v2812
        %2861 = vmatprep.subr.mxu0 0.0
        %2862 = vmatpush1.msra.mxu0 %v2814
        %2863 = vmatprep.subr.mxu0 0.0
        %2864 = vmatpush1.msra.mxu0 %v2816
        %2865 = vmatprep.subr.mxu0 0.0
        %2866 = vmatpush1.msra.mxu0 %v2818
        %2867 = vmatprep.subr.mxu0 0.0
        %2868 = vmatpush1.msra.mxu0 %v2820
        %2869 = vmatprep.subr.mxu0 0.0
        %2870 = vmatpush1.msra.mxu0 %v2822
        %2871 = vmatprep.subr.mxu0 0.0
        %2872 = vmatpush1.msra.mxu0 %v2824
        %2873 = vmatprep.subr.mxu0 0.0
        %2874 = vmatpush1.msra.mxu0 %v2826
        %2875 = vmatprep.subr.mxu0 0.0
        %2876 = vmatpush1.msra.mxu0 %v2828
        %2877 = vmatprep.subr.mxu0 0.0
        %2878 = vmatpush1.msra.mxu0 %v2830
        %2879 = vmatprep.subr.mxu0 0.0
        %2880 = vmatpush1.msra.mxu0 %v2832
        %2881 = vmatprep.subr.mxu0 0.0
        %2882 = vmatpush1.msra.mxu0 0.0
        %2883 = vmatprep.subr.mxu0 0.0
        %2884 = vmatpush1.msra.mxu0 0.0
        %2885 = vmatprep.subr.mxu0 0.0
        %2886 = vmatpush1.msra.mxu0 0.0
        %2887 = vmatprep.subr.mxu0 0.0
        %2888 = vmatpush1.msra.mxu0 0.0
        %2889 = vmatprep.subr.mxu0 0.0
        %2890 = vmatpush1.msra.mxu0 0.0
        %2891 = vmatprep.subr.mxu0 0.0
        %2892 = vmatpush1.msra.mxu0 0.0
        %2893 = vmatprep.subr.mxu0 0.0
        %2894 = vmatpush1.msra.mxu0 0.0
        %2895 = vmatprep.subr.mxu0 0.0
        %2896 = vmatpush1.msra.mxu0 0.0
        %2897 = vmatprep.subr.mxu0 0.0
        %2898 = vmatpush1.msra.mxu0 0.0
        %2899 = vmatprep.subr.mxu0 0.0
        %2900 = vmatpush1.msra.mxu0 0.0
        %2901 = vmatprep.subr.mxu0 0.0
        %2902 = vmatpush1.msra.mxu0 0.0
        %2903 = vmatprep.subr.mxu0 0.0
        %2904 = vmatpush1.msra.mxu0 0.0
        %2905 = vmatprep.subr.mxu0 0.0
        %2906 = vmatpush1.msra.mxu0 0.0
        %2907 = vmatprep.subr.mxu0 0.0
        %2908 = vmatpush1.msra.mxu0 0.0
        %2909 = vmatprep.subr.mxu0 0.0
        %2910 = vmatpush1.msra.mxu0 0.0
        %2911 = vmatprep.subr.mxu0 0.0
        %2912 = vmatpush1.msra.mxu0 0.0
        %2913 = vmatprep.mubr.f32.mxu0 0.0
        %2914 = vmatmul.mubr.f32.gmra.mrb[0].mxu0 %v2769
        %v2915 = vpop.f32.mrb[0].mxu0
        %v2916 = vadd.f32 0.0, %v2915
        %v2917 = vpop.f32.mrb[0].mxu0
        %2918 = vmatprep.mubr.f32.mxu0 0.0
        %2919 = vmatmul.mubr.f32.gmra.mrb[0].mxu0 %v2770
        %v2920 = vpop.f32.mrb[0].mxu0
        %v2921 = vadd.f32 0.0, %v2920
        %v2922 = vpop.f32.mrb[0].mxu0
        %2923 = vmatprep.mubr.f32.mxu0 0.0
        %2924 = vmatmul.mubr.f32.gmra.mrb[0].mxu0 %v2771
        %v2925 = vpop.f32.mrb[0].mxu0
        %v2926 = vadd.f32 0.0, %v2925
        %v2927 = vpop.f32.mrb[0].mxu0
        %2928 = vmatprep.mubr.f32.mxu0 0.0
        %2929 = vmatmul.mubr.f32.gmra.mrb[0].mxu0 %v2772
        %v2930 = vpop.f32.mrb[0].mxu0
        %v2931 = vadd.f32 0.0, %v2930
        %v2932 = vpop.f32.mrb[0].mxu0
        %2933 = vmatprep.mubr.f32.mxu0 0.0
        %2934 = vmatmul.mubr.f32.gmra.mrb[0].mxu0 %v2773
        %v2935 = vpop.f32.mrb[0].mxu0
        %v2936 = vadd.f32 0.0, %v2935
        %v2937 = vpop.f32.mrb[0].mxu0
        %2938 = vmatprep.mubr.f32.mxu0 0.0
        %2939 = vmatmul.mubr.f32.gmra.mrb[0].mxu0 %v2774
        %v2940 = vpop.f32.mrb[0].mxu0
        %v2941 = vadd.f32 0.0, %v2940
        %v2942 = vpop.f32.mrb[0].mxu0
        %2943 = vmatprep.mubr.f32.mxu0 0.0
        %2944 = vmatmul.mubr.f32.gmra.mrb[0].mxu0 %v2775
        %v2945 = vpop.f32.mrb[0].mxu0
        %v2946 = vadd.f32 0.0, %v2945
        %v2947 = vpop.f32.mrb[0].mxu0
        %2948 = vmatprep.mubr.f32.mxu0 0.0
        %2949 = vmatmul.mubr.f32.gmra.mrb[0].mxu0 %v2776
        %v2950 = vpop.f32.mrb[0].mxu0
        %v2951 = vadd.f32 0.0, %v2950
        %v2952 = vpop.f32.mrb[0].mxu0
        %2953 = vmatprep.mubr.f32.mxu0 0.0
        %2954 = vmatmul.mubr.f32.gmra.mrb[0].mxu0 %v2777
        %v2955 = vpop.f32.mrb[0].mxu0
        %v2956 = vadd.f32 0.0, %v2955
        %v2957 = vpop.f32.mrb[0].mxu0
        %2958 = vmatprep.mubr.f32.mxu0 0.0
        %2959 = vmatmul.mubr.f32.gmra.mrb[0].mxu0 %v2778
        %v2960 = vpop.f32.mrb[0].mxu0
        %v2961 = vadd.f32 0.0, %v2960
        %v2962 = vpop.f32.mrb[0].mxu0
        %2963 = vmatprep.mubr.f32.mxu0 0.0
        %2964 = vmatmul.mubr.f32.gmra.mrb[0].mxu0 %v2779
        %v2965 = vpop.f32.mrb[0].mxu0
        %v2966 = vadd.f32 0.0, %v2965
        %v2967 = vpop.f32.mrb[0].mxu0
        %2968 = vmatprep.mubr.f32.mxu0 0.0
        %2969 = vmatmul.mubr.f32.gmra.mrb[0].mxu0 %v2780
        %v2970 = vpop.f32.mrb[0].mxu0
        %v2971 = vadd.f32 0.0, %v2970
        %v2972 = vpop.f32.mrb[0].mxu0
        %2973 = vmatprep.mubr.f32.mxu0 0.0
        %2974 = vmatmul.mubr.f32.gmra.mrb[0].mxu0 %v2781
        %v2975 = vpop.f32.mrb[0].mxu0
        %v2976 = vadd.f32 0.0, %v2975
        %v2977 = vpop.f32.mrb[0].mxu0
        %2978 = vmatprep.mubr.f32.mxu0 0.0
        %2979 = vmatmul.mubr.f32.gmra.mrb[0].mxu0 %v2782
        %v2980 = vpop.f32.mrb[0].mxu0
        %v2981 = vadd.f32 0.0, %v2980
        %v2982 = vpop.f32.mrb[0].mxu0
        %2983 = vmatprep.mubr.f32.mxu0 0.0
        %2984 = vmatmul.mubr.f32.gmra.mrb[0].mxu0 %v2783
        %v2985 = vpop.f32.mrb[0].mxu0
        %v2986 = vadd.f32 0.0, %v2985
        %v2987 = vpop.f32.mrb[0].mxu0
        %2988 = vmatprep.mubr.f32.mxu0 0.0
        %2989 = vmatmul.mubr.f32.gmra.mrb[0].mxu0 %v2784
        %v2990 = vpop.f32.mrb[0].mxu0
        %v2991 = vadd.f32 0.0, %v2990
        %v2992 = vpop.f32.mrb[0].mxu0
        %2993 = vdwg.mxu0
        %3010 = vrot.lane.b32.xlu0 %v2916, 16
        %v3011 = vpop.permute.xlu0 %3010
        %3012 = vrot.lane.b32.xlu0 %v2921, 16
        %v3013 = vpop.permute.xlu0 %3012
        %3014 = vrot.lane.b32.xlu0 %v2926, 16
        %v3015 = vpop.permute.xlu0 %3014
        %3016 = vrot.lane.b32.xlu0 %v2931, 16
        %v3017 = vpop.permute.xlu0 %3016
        %3018 = vrot.lane.b32.xlu0 %v2936, 16
        %v3019 = vpop.permute.xlu0 %3018
        %3020 = vrot.lane.b32.xlu0 %v2941, 16
        %v3021 = vpop.permute.xlu0 %3020
        %3022 = vrot.lane.b32.xlu0 %v2946, 16
        %v3023 = vpop.permute.xlu0 %3022
        %3024 = vrot.lane.b32.xlu0 %v2951, 16
        %v3025 = vpop.permute.xlu0 %3024
        %3026 = vrot.lane.b32.xlu0 %v2956, 16
        %v3027 = vpop.permute.xlu0 %3026
        %3028 = vrot.lane.b32.xlu0 %v2961, 16
        %v3029 = vpop.permute.xlu0 %3028
        %3030 = vrot.lane.b32.xlu0 %v2966, 16
        %v3031 = vpop.permute.xlu0 %3030
        %3032 = vrot.lane.b32.xlu0 %v2971, 16
        %v3033 = vpop.permute.xlu0 %3032
        %3034 = vrot.lane.b32.xlu0 %v2976, 16
        %v3035 = vpop.permute.xlu0 %3034
        %3036 = vrot.lane.b32.xlu0 %v2981, 16
        %v3037 = vpop.permute.xlu0 %3036
        %3038 = vrot.lane.b32.xlu0 %v2986, 16
        %v3039 = vpop.permute.xlu0 %3038
        %3040 = vrot.lane.b32.xlu0 %v2991, 16
        %v3041 = vpop.permute.xlu0 %3040
        %vm3058 = vcmask 195712
        %3059 = vst.msk [vmem:[%s368] sm:$0xff] %vm3058, %v3011
        %3060 = vst.msk [vmem:[%s368 + $0x8] sm:$0xff] %vm3058, %v3013
        %3061 = vst.msk [vmem:[%s368 + $0x10] sm:$0xff] %vm3058, %v3015
        %3062 = vst.msk [vmem:[%s368 + $0x18] sm:$0xff] %vm3058, %v3017
        %3063 = vst.msk [vmem:[%s368 + $0x20] sm:$0xff] %vm3058, %v3019
        %3064 = vst.msk [vmem:[%s368 + $0x28] sm:$0xff] %vm3058, %v3021
        %3065 = vst.msk [vmem:[%s368 + $0x30] sm:$0xff] %vm3058, %v3023
        %3066 = vst.msk [vmem:[%s368 + $0x38] sm:$0xff] %vm3058, %v3025
        %3067 = vst.msk [vmem:[%s368 + $0x40] sm:$0xff] %vm3058, %v3027
        %3068 = vst.msk [vmem:[%s368 + $0x48] sm:$0xff] %vm3058, %v3029
        %3069 = vst.msk [vmem:[%s368 + $0x50] sm:$0xff] %vm3058, %v3031
        %3070 = vst.msk [vmem:[%s368 + $0x58] sm:$0xff] %vm3058, %v3033
        %3071 = vst.msk [vmem:[%s368 + $0x60] sm:$0xff] %vm3058, %v3035
        %3072 = vst.msk [vmem:[%s368 + $0x68] sm:$0xff] %vm3058, %v3037
        %3073 = vst.msk [vmem:[%s368 + $0x70] sm:$0xff] %vm3058, %v3039
        %3074 = vst.msk [vmem:[%s368 + $0x78] sm:$0xff] %vm3058, %v3041
        %v3075 = vld [vmem:[#allocation3] sm:$0xff]
        %v3076 = vld [vmem:[#allocation3 + $0x8] sm:$0xff]
        %v3077 = vld [vmem:[#allocation3 + $0x10] sm:$0xff]
        %v3078 = vld [vmem:[#allocation3 + $0x18] sm:$0xff]
        %v3079 = vld [vmem:[#allocation3 + $0x20] sm:$0xff]
        %v3080 = vld [vmem:[#allocation3 + $0x28] sm:$0xff]
        %v3081 = vld [vmem:[#allocation3 + $0x30] sm:$0xff]
        %v3082 = vld [vmem:[#allocation3 + $0x38] sm:$0xff]
        %v3083 = vld [vmem:[#allocation3 + $0x40] sm:$0xff]
        %v3084 = vld [vmem:[#allocation3 + $0x48] sm:$0xff]
        %v3085 = vld [vmem:[#allocation3 + $0x50] sm:$0xff]
        %v3086 = vld [vmem:[#allocation3 + $0x58] sm:$0xff]
        %v3087 = vld [vmem:[#allocation3 + $0x60] sm:$0xff]
        %v3088 = vld [vmem:[#allocation3 + $0x68] sm:$0xff]
        %v3089 = vld [vmem:[#allocation3 + $0x70] sm:$0xff]
        %v3090 = vld [vmem:[#allocation3 + $0x78] sm:$0xff]
        %v3091 = vld [vmem:[#allocation2] sm:$0xff]
        %v3092 = vld [vmem:[#allocation2 + $0x8] sm:$0xff]
        %v3093 = vld [vmem:[#allocation2 + $0x10] sm:$0xff]
        %v3094 = vld [vmem:[#allocation2 + $0x18] sm:$0xff]
        %v3095 = vld [vmem:[#allocation2 + $0x20] sm:$0xff]
        %v3096 = vld [vmem:[#allocation2 + $0x28] sm:$0xff]
        %v3097 = vld [vmem:[#allocation2 + $0x30] sm:$0xff]
        %v3098 = vld [vmem:[#allocation2 + $0x38] sm:$0xff]
        %v3099 = vld [vmem:[#allocation2 + $0x40] sm:$0xff]
        %v3100 = vld [vmem:[#allocation2 + $0x48] sm:$0xff]
        %v3101 = vld [vmem:[#allocation2 + $0x50] sm:$0xff]
        %v3102 = vld [vmem:[#allocation2 + $0x58] sm:$0xff]
        %v3103 = vld [vmem:[#allocation2 + $0x60] sm:$0xff]
        %v3104 = vld [vmem:[#allocation2 + $0x68] sm:$0xff]
        %v3105 = vld [vmem:[#allocation2 + $0x70] sm:$0xff]
        %v3106 = vld [vmem:[#allocation2 + $0x78] sm:$0xff]
        %3107 = vrot.lane.b32.xlu0 %v915, 104
        %v3108 = vpop.permute.xlu0 %3107
        %3109 = vrot.lane.b32.xlu0 %v916, 104
        %v3110 = vpop.permute.xlu0 %3109
        %3111 = vrot.lane.b32.xlu0 %v917, 104
        %v3112 = vpop.permute.xlu0 %3111
        %3113 = vrot.lane.b32.xlu0 %v918, 104
        %v3114 = vpop.permute.xlu0 %3113
        %3115 = vrot.lane.b32.xlu0 %v919, 104
        %v3116 = vpop.permute.xlu0 %3115
        %3117 = vrot.lane.b32.xlu0 %v920, 104
        %v3118 = vpop.permute.xlu0 %3117
        %3119 = vrot.lane.b32.xlu0 %v921, 104
        %v3120 = vpop.permute.xlu0 %3119
        %3121 = vrot.lane.b32.xlu0 %v922, 104
        %v3122 = vpop.permute.xlu0 %3121
        %3123 = vrot.lane.b32.xlu0 %v923, 104
        %v3124 = vpop.permute.xlu0 %3123
        %3125 = vrot.lane.b32.xlu0 %v924, 104
        %v3126 = vpop.permute.xlu0 %3125
        %3127 = vrot.lane.b32.xlu0 %v925, 104
        %v3128 = vpop.permute.xlu0 %3127
        %3129 = vrot.lane.b32.xlu0 %v926, 104
        %v3130 = vpop.permute.xlu0 %3129
        %3131 = vrot.lane.b32.xlu0 %v927, 104
        %v3132 = vpop.permute.xlu0 %3131
        %3133 = vrot.lane.b32.xlu0 %v928, 104
        %v3134 = vpop.permute.xlu0 %3133
        %3135 = vrot.lane.b32.xlu0 %v929, 104
        %v3136 = vpop.permute.xlu0 %3135
        %3137 = vrot.lane.b32.xlu0 %v930, 104
        %v3138 = vpop.permute.xlu0 %3137
        %3155 = vrot.lane.b32.xlu0 %v3091, 104
        %v3156 = vpop.permute.xlu0 %3155
        %3157 = vrot.lane.b32.xlu0 %v3092, 104
        %v3158 = vpop.permute.xlu0 %3157
        %3159 = vrot.lane.b32.xlu0 %v3093, 104
        %v3160 = vpop.permute.xlu0 %3159
        %3161 = vrot.lane.b32.xlu0 %v3094, 104
        %v3162 = vpop.permute.xlu0 %3161
        %3163 = vrot.lane.b32.xlu0 %v3095, 104
        %v3164 = vpop.permute.xlu0 %3163
        %3165 = vrot.lane.b32.xlu0 %v3096, 104
        %v3166 = vpop.permute.xlu0 %3165
        %3167 = vrot.lane.b32.xlu0 %v3097, 104
        %v3168 = vpop.permute.xlu0 %3167
        %3169 = vrot.lane.b32.xlu0 %v3098, 104
        %v3170 = vpop.permute.xlu0 %3169
        %3171 = vrot.lane.b32.xlu0 %v3099, 104
        %v3172 = vpop.permute.xlu0 %3171
        %3173 = vrot.lane.b32.xlu0 %v3100, 104
        %v3174 = vpop.permute.xlu0 %3173
        %3175 = vrot.lane.b32.xlu0 %v3101, 104
        %v3176 = vpop.permute.xlu0 %3175
        %3177 = vrot.lane.b32.xlu0 %v3102, 104
        %v3178 = vpop.permute.xlu0 %3177
        %3179 = vrot.lane.b32.xlu0 %v3103, 104
        %v3180 = vpop.permute.xlu0 %3179
        %3181 = vrot.lane.b32.xlu0 %v3104, 104
        %v3182 = vpop.permute.xlu0 %3181
        %3183 = vrot.lane.b32.xlu0 %v3105, 104
        %v3184 = vpop.permute.xlu0 %3183
        %3185 = vrot.lane.b32.xlu0 %v3106, 104
        %v3186 = vpop.permute.xlu0 %3185
        %v3187 = vsel %vm970, %v3108, 0
        %v3189 = vsel %vm970, %v3110, 0
        %v3191 = vsel %vm970, %v3112, 0
        %v3193 = vsel %vm970, %v3114, 0
        %v3195 = vsel %vm970, %v3116, 0
        %v3197 = vsel %vm970, %v3118, 0
        %v3199 = vsel %vm970, %v3120, 0
        %v3201 = vsel %vm970, %v3122, 0
        %v3203 = vsel %vm970, %v3124, 0
        %v3205 = vsel %vm970, %v3126, 0
        %v3207 = vsel %vm970, %v3128, 0
        %v3209 = vsel %vm970, %v3130, 0
        %v3211 = vsel %vm970, %v3132, 0
        %v3213 = vsel %vm970, %v3134, 0
        %v3215 = vsel %vm970, %v3136, 0
        %v3217 = vsel %vm970, %v3138, 0
        %v3219 = vsel %vm970, %v3156, 0
        %v3221 = vsel %vm970, %v3158, 0
        %v3223 = vsel %vm970, %v3160, 0
        %v3225 = vsel %vm970, %v3162, 0
        %v3227 = vsel %vm970, %v3164, 0
        %v3229 = vsel %vm970, %v3166, 0
        %v3231 = vsel %vm970, %v3168, 0
        %v3233 = vsel %vm970, %v3170, 0
        %v3235 = vsel %vm970, %v3172, 0
        %v3237 = vsel %vm970, %v3174, 0
        %v3239 = vsel %vm970, %v3176, 0
        %v3241 = vsel %vm970, %v3178, 0
        %v3243 = vsel %vm970, %v3180, 0
        %v3245 = vsel %vm970, %v3182, 0
        %v3247 = vsel %vm970, %v3184, 0
        %v3249 = vsel %vm970, %v3186, 0
        %3251 = vmatprep.subr.mxu0 0.0
        %3252 = vmatpush1.xpose.msra.mxu0 %v3219
        %3253 = vmatprep.subr.mxu0 0.0
        %3254 = vmatpush1.xpose.msra.mxu0 %v3221
        %3255 = vmatprep.subr.mxu0 0.0
        %3256 = vmatpush1.xpose.msra.mxu0 %v3223
        %3257 = vmatprep.subr.mxu0 0.0
        %3258 = vmatpush1.xpose.msra.mxu0 %v3225
        %3259 = vmatprep.subr.mxu0 0.0
        %3260 = vmatpush1.xpose.msra.mxu0 %v3227
        %3261 = vmatprep.subr.mxu0 0.0
        %3262 = vmatpush1.xpose.msra.mxu0 %v3229
        %3263 = vmatprep.subr.mxu0 0.0
        %3264 = vmatpush1.xpose.msra.mxu0 %v3231
        %3265 = vmatprep.subr.mxu0 0.0
        %3266 = vmatpush1.xpose.msra.mxu0 %v3233
        %3267 = vmatprep.subr.mxu0 0.0
        %3268 = vmatpush1.xpose.msra.mxu0 %v3235
        %3269 = vmatprep.subr.mxu0 0.0
        %3270 = vmatpush1.xpose.msra.mxu0 %v3237
        %3271 = vmatprep.subr.mxu0 0.0
        %3272 = vmatpush1.xpose.msra.mxu0 %v3239
        %3273 = vmatprep.subr.mxu0 0.0
        %3274 = vmatpush1.xpose.msra.mxu0 %v3241
        %3275 = vmatprep.subr.mxu0 0.0
        %3276 = vmatpush1.xpose.msra.mxu0 %v3243
        %3277 = vmatprep.subr.mxu0 0.0
        %3278 = vmatpush1.xpose.msra.mxu0 %v3245
        %3279 = vmatprep.subr.mxu0 0.0
        %3280 = vmatpush1.xpose.msra.mxu0 %v3247
        %3281 = vmatprep.subr.mxu0 0.0
        %3282 = vmatpush1.xpose.msra.mxu0 %v3249
        %3283 = vmatprep.subr.mxu0 0.0
        %3284 = vmatpush1.xpose.msra.mxu0 0.0
        %3285 = vmatprep.subr.mxu0 0.0
        %3286 = vmatpush1.xpose.msra.mxu0 0.0
        %3287 = vmatprep.subr.mxu0 0.0
        %3288 = vmatpush1.xpose.msra.mxu0 0.0
        %3289 = vmatprep.subr.mxu0 0.0
        %3290 = vmatpush1.xpose.msra.mxu0 0.0
        %3291 = vmatprep.subr.mxu0 0.0
        %3292 = vmatpush1.xpose.msra.mxu0 0.0
        %3293 = vmatprep.subr.mxu0 0.0
        %3294 = vmatpush1.xpose.msra.mxu0 0.0
        %3295 = vmatprep.subr.mxu0 0.0
        %3296 = vmatpush1.xpose.msra.mxu0 0.0
        %3297 = vmatprep.subr.mxu0 0.0
        %3298 = vmatpush1.xpose.msra.mxu0 0.0
        %3299 = vmatprep.subr.mxu0 0.0
        %3300 = vmatpush1.xpose.msra.mxu0 0.0
        %3301 = vmatprep.subr.mxu0 0.0
        %3302 = vmatpush1.xpose.msra.mxu0 0.0
        %3303 = vmatprep.subr.mxu0 0.0
        %3304 = vmatpush1.xpose.msra.mxu0 0.0
        %3305 = vmatprep.subr.mxu0 0.0
        %3306 = vmatpush1.xpose.msra.mxu0 0.0
        %3307 = vmatprep.subr.mxu0 0.0
        %3308 = vmatpush1.xpose.msra.mxu0 0.0
        %3309 = vmatprep.subr.mxu0 0.0
        %3310 = vmatpush1.xpose.msra.mxu0 0.0
        %3311 = vmatprep.subr.mxu0 0.0
        %3312 = vmatpush1.xpose.msra.mxu0 0.0
        %3313 = vmatprep.subr.mxu0 0.0
        %3314 = vmatpush1.xpose.msra.mxu0 0.0
        %3315 = vmatprep.mubr.f32.mxu0 0.0
        %3316 = vmatmul.mubr.f32.gmra.mrb[0].mxu0 %v3187
        %v3317 = vpop.f32.mrb[0].mxu0
        %v3318 = vadd.f32 %v936, %v3317
        %v3319 = vpop.f32.mrb[0].mxu0
        %3320 = vmatprep.mubr.f32.mxu0 0.0
        %3321 = vmatmul.mubr.f32.gmra.mrb[0].mxu0 %v3189
        %v3322 = vpop.f32.mrb[0].mxu0
        %v3323 = vadd.f32 %v936, %v3322
        %v3324 = vpop.f32.mrb[0].mxu0
        %3325 = vmatprep.mubr.f32.mxu0 0.0
        %3326 = vmatmul.mubr.f32.gmra.mrb[0].mxu0 %v3191
        %v3327 = vpop.f32.mrb[0].mxu0
        %v3328 = vadd.f32 %v936, %v3327
        %v3329 = vpop.f32.mrb[0].mxu0
        %3330 = vmatprep.mubr.f32.mxu0 0.0
        %3331 = vmatmul.mubr.f32.gmra.mrb[0].mxu0 %v3193
        %v3332 = vpop.f32.mrb[0].mxu0
        %v3333 = vadd.f32 %v936, %v3332
        %v3334 = vpop.f32.mrb[0].mxu0
        %3335 = vmatprep.mubr.f32.mxu0 0.0
        %3336 = vmatmul.mubr.f32.gmra.mrb[0].mxu0 %v3195
        %v3337 = vpop.f32.mrb[0].mxu0
        %v3338 = vadd.f32 %v936, %v3337
        %v3339 = vpop.f32.mrb[0].mxu0
        %3340 = vmatprep.mubr.f32.mxu0 0.0
        %3341 = vmatmul.mubr.f32.gmra.mrb[0].mxu0 %v3197
        %v3342 = vpop.f32.mrb[0].mxu0
        %v3343 = vadd.f32 %v936, %v3342
        %v3344 = vpop.f32.mrb[0].mxu0
        %3345 = vmatprep.mubr.f32.mxu0 0.0
        %3346 = vmatmul.mubr.f32.gmra.mrb[0].mxu0 %v3199
        %v3347 = vpop.f32.mrb[0].mxu0
        %v3348 = vadd.f32 %v936, %v3347
        %v3349 = vpop.f32.mrb[0].mxu0
        %3350 = vmatprep.mubr.f32.mxu0 0.0
        %3351 = vmatmul.mubr.f32.gmra.mrb[0].mxu0 %v3201
        %v3352 = vpop.f32.mrb[0].mxu0
        %v3353 = vadd.f32 %v936, %v3352
        %v3354 = vpop.f32.mrb[0].mxu0
        %3355 = vmatprep.mubr.f32.mxu0 0.0
        %3356 = vmatmul.mubr.f32.gmra.mrb[0].mxu0 %v3203
        %v3357 = vpop.f32.mrb[0].mxu0
        %v3358 = vadd.f32 %v936, %v3357
        %v3359 = vpop.f32.mrb[0].mxu0
        %3360 = vmatprep.mubr.f32.mxu0 0.0
        %3361 = vmatmul.mubr.f32.gmra.mrb[0].mxu0 %v3205
        %v3362 = vpop.f32.mrb[0].mxu0
        %v3363 = vadd.f32 %v936, %v3362
        %v3364 = vpop.f32.mrb[0].mxu0
        %3365 = vmatprep.mubr.f32.mxu0 0.0
        %3366 = vmatmul.mubr.f32.gmra.mrb[0].mxu0 %v3207
        %v3367 = vpop.f32.mrb[0].mxu0
        %v3368 = vadd.f32 %v936, %v3367
        %v3369 = vpop.f32.mrb[0].mxu0
        %3370 = vmatprep.mubr.f32.mxu0 0.0
        %3371 = vmatmul.mubr.f32.gmra.mrb[0].mxu0 %v3209
        %v3372 = vpop.f32.mrb[0].mxu0
        %v3373 = vadd.f32 %v936, %v3372
        %v3374 = vpop.f32.mrb[0].mxu0
        %3375 = vmatprep.mubr.f32.mxu0 0.0
        %3376 = vmatmul.mubr.f32.gmra.mrb[0].mxu0 %v3211
        %v3377 = vpop.f32.mrb[0].mxu0
        %v3378 = vadd.f32 %v936, %v3377
        %v3379 = vpop.f32.mrb[0].mxu0
        %3380 = vmatprep.mubr.f32.mxu0 0.0
        %3381 = vmatmul.mubr.f32.gmra.mrb[0].mxu0 %v3213
        %v3382 = vpop.f32.mrb[0].mxu0
        %v3383 = vadd.f32 %v936, %v3382
        %v3384 = vpop.f32.mrb[0].mxu0
        %3385 = vmatprep.mubr.f32.mxu0 0.0
        %3386 = vmatmul.mubr.f32.gmra.mrb[0].mxu0 %v3215
        %v3387 = vpop.f32.mrb[0].mxu0
        %v3388 = vadd.f32 %v936, %v3387
        %v3389 = vpop.f32.mrb[0].mxu0
        %3390 = vmatprep.mubr.f32.mxu0 0.0
        %3391 = vmatmul.mubr.f32.gmra.mrb[0].mxu0 %v3217
        %v3392 = vpop.f32.mrb[0].mxu0
        %v3393 = vadd.f32 %v936, %v3392
        %v3394 = vpop.f32.mrb[0].mxu0
        %3395 = vdwg.mxu0
        %3396 = vmax.xlane.f32.xlu0 %v3318
        %v3397 = vpop.xlane.xlu0 %3396
        %3398 = vmax.xlane.f32.xlu0 %v3323
        %v3399 = vpop.xlane.xlu0 %3398
        %3400 = vmax.xlane.f32.xlu0 %v3328
        %v3401 = vpop.xlane.xlu0 %3400
        %3402 = vmax.xlane.f32.xlu0 %v3333
        %v3403 = vpop.xlane.xlu0 %3402
        %3404 = vmax.xlane.f32.xlu0 %v3338
        %v3405 = vpop.xlane.xlu0 %3404
        %3406 = vmax.xlane.f32.xlu0 %v3343
        %v3407 = vpop.xlane.xlu0 %3406
        %3408 = vmax.xlane.f32.xlu0 %v3348
        %v3409 = vpop.xlane.xlu0 %3408
        %3410 = vmax.xlane.f32.xlu0 %v3353
        %v3411 = vpop.xlane.xlu0 %3410
        %3412 = vmax.xlane.f32.xlu0 %v3358
        %v3413 = vpop.xlane.xlu0 %3412
        %3414 = vmax.xlane.f32.xlu0 %v3363
        %v3415 = vpop.xlane.xlu0 %3414
        %3416 = vmax.xlane.f32.xlu0 %v3368
        %v3417 = vpop.xlane.xlu0 %3416
        %3418 = vmax.xlane.f32.xlu0 %v3373
        %v3419 = vpop.xlane.xlu0 %3418
        %3420 = vmax.xlane.f32.xlu0 %v3378
        %v3421 = vpop.xlane.xlu0 %3420
        %3422 = vmax.xlane.f32.xlu0 %v3383
        %v3423 = vpop.xlane.xlu0 %3422
        %3424 = vmax.xlane.f32.xlu0 %v3388
        %v3425 = vpop.xlane.xlu0 %3424
        %3426 = vmax.xlane.f32.xlu0 %v3393
        %v3427 = vpop.xlane.xlu0 %3426
        %v3428 = vsub.f32 %v3318, %v3397
        %v3429 = vsub.f32 %v3323, %v3399
        %v3430 = vsub.f32 %v3328, %v3401
        %v3431 = vsub.f32 %v3333, %v3403
        %v3432 = vsub.f32 %v3338, %v3405
        %v3433 = vsub.f32 %v3343, %v3407
        %v3434 = vsub.f32 %v3348, %v3409
        %v3435 = vsub.f32 %v3353, %v3411
        %v3436 = vsub.f32 %v3358, %v3413
        %v3437 = vsub.f32 %v3363, %v3415
        %v3438 = vsub.f32 %v3368, %v3417
        %v3439 = vsub.f32 %v3373, %v3419
        %v3440 = vsub.f32 %v3378, %v3421
        %v3441 = vsub.f32 %v3383, %v3423
        %v3442 = vsub.f32 %v3388, %v3425
        %v3443 = vsub.f32 %v3393, %v3427
        %v3444 = vmul.f32 %v3428, 1.442695
        %v3445 = vpow.pop %v3444
        %v3446 = vmul.f32 %v3429, 1.442695
        %v3447 = vpow.pop %v3446
        %v3448 = vmul.f32 %v3430, 1.442695
        %v3449 = vpow.pop %v3448
        %v3450 = vmul.f32 %v3431, 1.442695
        %v3451 = vpow.pop %v3450
        %v3452 = vmul.f32 %v3432, 1.442695
        %v3453 = vpow.pop %v3452
        %v3454 = vmul.f32 %v3433, 1.442695
        %v3455 = vpow.pop %v3454
        %v3456 = vmul.f32 %v3434, 1.442695
        %v3457 = vpow.pop %v3456
        %v3458 = vmul.f32 %v3435, 1.442695
        %v3459 = vpow.pop %v3458
        %v3460 = vmul.f32 %v3436, 1.442695
        %v3461 = vpow.pop %v3460
        %v3462 = vmul.f32 %v3437, 1.442695
        %v3463 = vpow.pop %v3462
        %v3464 = vmul.f32 %v3438, 1.442695
        %v3465 = vpow.pop %v3464
        %v3466 = vmul.f32 %v3439, 1.442695
        %v3467 = vpow.pop %v3466
        %v3468 = vmul.f32 %v3440, 1.442695
        %v3469 = vpow.pop %v3468
        %v3470 = vmul.f32 %v3441, 1.442695
        %v3471 = vpow.pop %v3470
        %v3472 = vmul.f32 %v3442, 1.442695
        %v3473 = vpow.pop %v3472
        %v3474 = vmul.f32 %v3443, 1.442695
        %v3475 = vpow.pop %v3474
        %3476 = vadd.xlane.f32.xlu0 %v3445
        %v3477 = vpop.xlane.xlu0 %3476
        %3478 = vadd.xlane.f32.xlu0 %v3447
        %v3479 = vpop.xlane.xlu0 %3478
        %3480 = vadd.xlane.f32.xlu0 %v3449
        %v3481 = vpop.xlane.xlu0 %3480
        %3482 = vadd.xlane.f32.xlu0 %v3451
        %v3483 = vpop.xlane.xlu0 %3482
        %3484 = vadd.xlane.f32.xlu0 %v3453
        %v3485 = vpop.xlane.xlu0 %3484
        %3486 = vadd.xlane.f32.xlu0 %v3455
        %v3487 = vpop.xlane.xlu0 %3486
        %3488 = vadd.xlane.f32.xlu0 %v3457
        %v3489 = vpop.xlane.xlu0 %3488
        %3490 = vadd.xlane.f32.xlu0 %v3459
        %v3491 = vpop.xlane.xlu0 %3490
        %3492 = vadd.xlane.f32.xlu0 %v3461
        %v3493 = vpop.xlane.xlu0 %3492
        %3494 = vadd.xlane.f32.xlu0 %v3463
        %v3495 = vpop.xlane.xlu0 %3494
        %3496 = vadd.xlane.f32.xlu0 %v3465
        %v3497 = vpop.xlane.xlu0 %3496
        %3498 = vadd.xlane.f32.xlu0 %v3467
        %v3499 = vpop.xlane.xlu0 %3498
        %3500 = vadd.xlane.f32.xlu0 %v3469
        %v3501 = vpop.xlane.xlu0 %3500
        %3502 = vadd.xlane.f32.xlu0 %v3471
        %v3503 = vpop.xlane.xlu0 %3502
        %3504 = vadd.xlane.f32.xlu0 %v3473
        %v3505 = vpop.xlane.xlu0 %3504
        %3506 = vadd.xlane.f32.xlu0 %v3475
        %v3507 = vpop.xlane.xlu0 %3506
        %v3508 = vrcp.pop %v3477
        %v3509 = vmul.f32 1.0, %v3508
        %v3510 = vrcp.pop %v3479
        %v3511 = vmul.f32 1.0, %v3510
        %v3512 = vrcp.pop %v3481
        %v3513 = vmul.f32 1.0, %v3512
        %v3514 = vrcp.pop %v3483
        %v3515 = vmul.f32 1.0, %v3514
        %v3516 = vrcp.pop %v3485
        %v3517 = vmul.f32 1.0, %v3516
        %v3518 = vrcp.pop %v3487
        %v3519 = vmul.f32 1.0, %v3518
        %v3520 = vrcp.pop %v3489
        %v3521 = vmul.f32 1.0, %v3520
        %v3522 = vrcp.pop %v3491
        %v3523 = vmul.f32 1.0, %v3522
        %v3524 = vrcp.pop %v3493
        %v3525 = vmul.f32 1.0, %v3524
        %v3526 = vrcp.pop %v3495
        %v3527 = vmul.f32 1.0, %v3526
        %v3528 = vrcp.pop %v3497
        %v3529 = vmul.f32 1.0, %v3528
        %v3530 = vrcp.pop %v3499
        %v3531 = vmul.f32 1.0, %v3530
        %v3532 = vrcp.pop %v3501
        %v3533 = vmul.f32 1.0, %v3532
        %v3534 = vrcp.pop %v3503
        %v3535 = vmul.f32 1.0, %v3534
        %v3536 = vrcp.pop %v3505
        %v3537 = vmul.f32 1.0, %v3536
        %v3538 = vrcp.pop %v3507
        %v3539 = vmul.f32 1.0, %v3538
        %v3540 = vmul.f32 %v3445, %v3509
        %v3541 = vmul.f32 %v3447, %v3511
        %v3542 = vmul.f32 %v3449, %v3513
        %v3543 = vmul.f32 %v3451, %v3515
        %v3544 = vmul.f32 %v3453, %v3517
        %v3545 = vmul.f32 %v3455, %v3519
        %v3546 = vmul.f32 %v3457, %v3521
        %v3547 = vmul.f32 %v3459, %v3523
        %v3548 = vmul.f32 %v3461, %v3525
        %v3549 = vmul.f32 %v3463, %v3527
        %v3550 = vmul.f32 %v3465, %v3529
        %v3551 = vmul.f32 %v3467, %v3531
        %v3552 = vmul.f32 %v3469, %v3533
        %v3553 = vmul.f32 %v3471, %v3535
        %v3554 = vmul.f32 %v3473, %v3537
        %v3555 = vmul.f32 %v3475, %v3539
        %3572 = vrot.lane.b32.xlu0 %v3075, 104
        %v3573 = vpop.permute.xlu0 %3572
        %3574 = vrot.lane.b32.xlu0 %v3076, 104
        %v3575 = vpop.permute.xlu0 %3574
        %3576 = vrot.lane.b32.xlu0 %v3077, 104
        %v3577 = vpop.permute.xlu0 %3576
        %3578 = vrot.lane.b32.xlu0 %v3078, 104
        %v3579 = vpop.permute.xlu0 %3578
        %3580 = vrot.lane.b32.xlu0 %v3079, 104
        %v3581 = vpop.permute.xlu0 %3580
        %3582 = vrot.lane.b32.xlu0 %v3080, 104
        %v3583 = vpop.permute.xlu0 %3582
        %3584 = vrot.lane.b32.xlu0 %v3081, 104
        %v3585 = vpop.permute.xlu0 %3584
        %3586 = vrot.lane.b32.xlu0 %v3082, 104
        %v3587 = vpop.permute.xlu0 %3586
        %3588 = vrot.lane.b32.xlu0 %v3083, 104
        %v3589 = vpop.permute.xlu0 %3588
        %3590 = vrot.lane.b32.xlu0 %v3084, 104
        %v3591 = vpop.permute.xlu0 %3590
        %3592 = vrot.lane.b32.xlu0 %v3085, 104
        %v3593 = vpop.permute.xlu0 %3592
        %3594 = vrot.lane.b32.xlu0 %v3086, 104
        %v3595 = vpop.permute.xlu0 %3594
        %3596 = vrot.lane.b32.xlu0 %v3087, 104
        %v3597 = vpop.permute.xlu0 %3596
        %3598 = vrot.lane.b32.xlu0 %v3088, 104
        %v3599 = vpop.permute.xlu0 %3598
        %3600 = vrot.lane.b32.xlu0 %v3089, 104
        %v3601 = vpop.permute.xlu0 %3600
        %3602 = vrot.lane.b32.xlu0 %v3090, 104
        %v3603 = vpop.permute.xlu0 %3602
        %3620 = vmatprep.subr.mxu0 0.0
        %3621 = vmatpush1.msra.mxu0 %v3573
        %3622 = vmatprep.subr.mxu0 0.0
        %3623 = vmatpush1.msra.mxu0 %v3575
        %3624 = vmatprep.subr.mxu0 0.0
        %3625 = vmatpush1.msra.mxu0 %v3577
        %3626 = vmatprep.subr.mxu0 0.0
        %3627 = vmatpush1.msra.mxu0 %v3579
        %3628 = vmatprep.subr.mxu0 0.0
        %3629 = vmatpush1.msra.mxu0 %v3581
        %3630 = vmatprep.subr.mxu0 0.0
        %3631 = vmatpush1.msra.mxu0 %v3583
        %3632 = vmatprep.subr.mxu0 0.0
        %3633 = vmatpush1.msra.mxu0 %v3585
        %3634 = vmatprep.subr.mxu0 0.0
        %3635 = vmatpush1.msra.mxu0 %v3587
        %3636 = vmatprep.subr.mxu0 0.0
        %3637 = vmatpush1.msra.mxu0 %v3589
        %3638 = vmatprep.subr.mxu0 0.0
        %3639 = vmatpush1.msra.mxu0 %v3591
        %3640 = vmatprep.subr.mxu0 0.0
        %3641 = vmatpush1.msra.mxu0 %v3593
        %3642 = vmatprep.subr.mxu0 0.0
        %3643 = vmatpush1.msra.mxu0 %v3595
        %3644 = vmatprep.subr.mxu0 0.0
        %3645 = vmatpush1.msra.mxu0 %v3597
        %3646 = vmatprep.subr.mxu0 0.0
        %3647 = vmatpush1.msra.mxu0 %v3599
        %3648 = vmatprep.subr.mxu0 0.0
        %3649 = vmatpush1.msra.mxu0 %v3601
        %3650 = vmatprep.subr.mxu0 0.0
        %3651 = vmatpush1.msra.mxu0 %v3603
        %3652 = vmatprep.subr.mxu0 0.0
        %3653 = vmatpush1.msra.mxu0 0.0
        %3654 = vmatprep.subr.mxu0 0.0
        %3655 = vmatpush1.msra.mxu0 0.0
        %3656 = vmatprep.subr.mxu0 0.0
        %3657 = vmatpush1.msra.mxu0 0.0
        %3658 = vmatprep.subr.mxu0 0.0
        %3659 = vmatpush1.msra.mxu0 0.0
        %3660 = vmatprep.subr.mxu0 0.0
        %3661 = vmatpush1.msra.mxu0 0.0
        %3662 = vmatprep.subr.mxu0 0.0
        %3663 = vmatpush1.msra.mxu0 0.0
        %3664 = vmatprep.subr.mxu0 0.0
        %3665 = vmatpush1.msra.mxu0 0.0
        %3666 = vmatprep.subr.mxu0 0.0
        %3667 = vmatpush1.msra.mxu0 0.0
        %3668 = vmatprep.subr.mxu0 0.0
        %3669 = vmatpush1.msra.mxu0 0.0
        %3670 = vmatprep.subr.mxu0 0.0
        %3671 = vmatpush1.msra.mxu0 0.0
        %3672 = vmatprep.subr.mxu0 0.0
        %3673 = vmatpush1.msra.mxu0 0.0
        %3674 = vmatprep.subr.mxu0 0.0
        %3675 = vmatpush1.msra.mxu0 0.0
        %3676 = vmatprep.subr.mxu0 0.0
        %3677 = vmatpush1.msra.mxu0 0.0
        %3678 = vmatprep.subr.mxu0 0.0
        %3679 = vmatpush1.msra.mxu0 0.0
        %3680 = vmatprep.subr.mxu0 0.0
        %3681 = vmatpush1.msra.mxu0 0.0
        %3682 = vmatprep.subr.mxu0 0.0
        %3683 = vmatpush1.msra.mxu0 0.0
        %3684 = vmatprep.mubr.f32.mxu0 0.0
        %3685 = vmatmul.mubr.f32.gmra.mrb[0].mxu0 %v3540
        %v3686 = vpop.f32.mrb[0].mxu0
        %v3687 = vadd.f32 0.0, %v3686
        %v3688 = vpop.f32.mrb[0].mxu0
        %3689 = vmatprep.mubr.f32.mxu0 0.0
        %3690 = vmatmul.mubr.f32.gmra.mrb[0].mxu0 %v3541
        %v3691 = vpop.f32.mrb[0].mxu0
        %v3692 = vadd.f32 0.0, %v3691
        %v3693 = vpop.f32.mrb[0].mxu0
        %3694 = vmatprep.mubr.f32.mxu0 0.0
        %3695 = vmatmul.mubr.f32.gmra.mrb[0].mxu0 %v3542
        %v3696 = vpop.f32.mrb[0].mxu0
        %v3697 = vadd.f32 0.0, %v3696
        %v3698 = vpop.f32.mrb[0].mxu0
        %3699 = vmatprep.mubr.f32.mxu0 0.0
        %3700 = vmatmul.mubr.f32.gmra.mrb[0].mxu0 %v3543
        %v3701 = vpop.f32.mrb[0].mxu0
        %v3702 = vadd.f32 0.0, %v3701
        %v3703 = vpop.f32.mrb[0].mxu0
        %3704 = vmatprep.mubr.f32.mxu0 0.0
        %3705 = vmatmul.mubr.f32.gmra.mrb[0].mxu0 %v3544
        %v3706 = vpop.f32.mrb[0].mxu0
        %v3707 = vadd.f32 0.0, %v3706
        %v3708 = vpop.f32.mrb[0].mxu0
        %3709 = vmatprep.mubr.f32.mxu0 0.0
        %3710 = vmatmul.mubr.f32.gmra.mrb[0].mxu0 %v3545
        %v3711 = vpop.f32.mrb[0].mxu0
        %v3712 = vadd.f32 0.0, %v3711
        %v3713 = vpop.f32.mrb[0].mxu0
        %3714 = vmatprep.mubr.f32.mxu0 0.0
        %3715 = vmatmul.mubr.f32.gmra.mrb[0].mxu0 %v3546
        %v3716 = vpop.f32.mrb[0].mxu0
        %v3717 = vadd.f32 0.0, %v3716
        %v3718 = vpop.f32.mrb[0].mxu0
        %3719 = vmatprep.mubr.f32.mxu0 0.0
        %3720 = vmatmul.mubr.f32.gmra.mrb[0].mxu0 %v3547
        %v3721 = vpop.f32.mrb[0].mxu0
        %v3722 = vadd.f32 0.0, %v3721
        %v3723 = vpop.f32.mrb[0].mxu0
        %3724 = vmatprep.mubr.f32.mxu0 0.0
        %3725 = vmatmul.mubr.f32.gmra.mrb[0].mxu0 %v3548
        %v3726 = vpop.f32.mrb[0].mxu0
        %v3727 = vadd.f32 0.0, %v3726
        %v3728 = vpop.f32.mrb[0].mxu0
        %3729 = vmatprep.mubr.f32.mxu0 0.0
        %3730 = vmatmul.mubr.f32.gmra.mrb[0].mxu0 %v3549
        %v3731 = vpop.f32.mrb[0].mxu0
        %v3732 = vadd.f32 0.0, %v3731
        %v3733 = vpop.f32.mrb[0].mxu0
        %3734 = vmatprep.mubr.f32.mxu0 0.0
        %3735 = vmatmul.mubr.f32.gmra.mrb[0].mxu0 %v3550
        %v3736 = vpop.f32.mrb[0].mxu0
        %v3737 = vadd.f32 0.0, %v3736
        %v3738 = vpop.f32.mrb[0].mxu0
        %3739 = vmatprep.mubr.f32.mxu0 0.0
        %3740 = vmatmul.mubr.f32.gmra.mrb[0].mxu0 %v3551
        %v3741 = vpop.f32.mrb[0].mxu0
        %v3742 = vadd.f32 0.0, %v3741
        %v3743 = vpop.f32.mrb[0].mxu0
        %3744 = vmatprep.mubr.f32.mxu0 0.0
        %3745 = vmatmul.mubr.f32.gmra.mrb[0].mxu0 %v3552
        %v3746 = vpop.f32.mrb[0].mxu0
        %v3747 = vadd.f32 0.0, %v3746
        %v3748 = vpop.f32.mrb[0].mxu0
        %3749 = vmatprep.mubr.f32.mxu0 0.0
        %3750 = vmatmul.mubr.f32.gmra.mrb[0].mxu0 %v3553
        %v3751 = vpop.f32.mrb[0].mxu0
        %v3752 = vadd.f32 0.0, %v3751
        %v3753 = vpop.f32.mrb[0].mxu0
        %3754 = vmatprep.mubr.f32.mxu0 0.0
        %3755 = vmatmul.mubr.f32.gmra.mrb[0].mxu0 %v3554
        %v3756 = vpop.f32.mrb[0].mxu0
        %v3757 = vadd.f32 0.0, %v3756
        %v3758 = vpop.f32.mrb[0].mxu0
        %3759 = vmatprep.mubr.f32.mxu0 0.0
        %3760 = vmatmul.mubr.f32.gmra.mrb[0].mxu0 %v3555
        %v3761 = vpop.f32.mrb[0].mxu0
        %v3762 = vadd.f32 0.0, %v3761
        %v3763 = vpop.f32.mrb[0].mxu0
        %3764 = vdwg.mxu0
        %3781 = vrot.lane.b32.xlu0 %v3687, 24
        %v3782 = vpop.permute.xlu0 %3781
        %3783 = vrot.lane.b32.xlu0 %v3692, 24
        %v3784 = vpop.permute.xlu0 %3783
        %3785 = vrot.lane.b32.xlu0 %v3697, 24
        %v3786 = vpop.permute.xlu0 %3785
        %3787 = vrot.lane.b32.xlu0 %v3702, 24
        %v3788 = vpop.permute.xlu0 %3787
        %3789 = vrot.lane.b32.xlu0 %v3707, 24
        %v3790 = vpop.permute.xlu0 %3789
        %3791 = vrot.lane.b32.xlu0 %v3712, 24
        %v3792 = vpop.permute.xlu0 %3791
        %3793 = vrot.lane.b32.xlu0 %v3717, 24
        %v3794 = vpop.permute.xlu0 %3793
        %3795 = vrot.lane.b32.xlu0 %v3722, 24
        %v3796 = vpop.permute.xlu0 %3795
        %3797 = vrot.lane.b32.xlu0 %v3727, 24
        %v3798 = vpop.permute.xlu0 %3797
        %3799 = vrot.lane.b32.xlu0 %v3732, 24
        %v3800 = vpop.permute.xlu0 %3799
        %3801 = vrot.lane.b32.xlu0 %v3737, 24
        %v3802 = vpop.permute.xlu0 %3801
        %3803 = vrot.lane.b32.xlu0 %v3742, 24
        %v3804 = vpop.permute.xlu0 %3803
        %3805 = vrot.lane.b32.xlu0 %v3747, 24
        %v3806 = vpop.permute.xlu0 %3805
        %3807 = vrot.lane.b32.xlu0 %v3752, 24
        %v3808 = vpop.permute.xlu0 %3807
        %3809 = vrot.lane.b32.xlu0 %v3757, 24
        %v3810 = vpop.permute.xlu0 %3809
        %3811 = vrot.lane.b32.xlu0 %v3762, 24
        %v3812 = vpop.permute.xlu0 %3811
        %vm3829 = vcmask 261312
        %3830 = vst.msk [vmem:[%s368] sm:$0xff] %vm3829, %v3782
        %3831 = vst.msk [vmem:[%s368 + $0x8] sm:$0xff] %vm3829, %v3784
        %3832 = vst.msk [vmem:[%s368 + $0x10] sm:$0xff] %vm3829, %v3786
        %3833 = vst.msk [vmem:[%s368 + $0x18] sm:$0xff] %vm3829, %v3788
        %3834 = vst.msk [vmem:[%s368 + $0x20] sm:$0xff] %vm3829, %v3790
        %3835 = vst.msk [vmem:[%s368 + $0x28] sm:$0xff] %vm3829, %v3792
        %3836 = vst.msk [vmem:[%s368 + $0x30] sm:$0xff] %vm3829, %v3794
        %3837 = vst.msk [vmem:[%s368 + $0x38] sm:$0xff] %vm3829, %v3796
        %3838 = vst.msk [vmem:[%s368 + $0x40] sm:$0xff] %vm3829, %v3798
        %3839 = vst.msk [vmem:[%s368 + $0x48] sm:$0xff] %vm3829, %v3800
        %3840 = vst.msk [vmem:[%s368 + $0x50] sm:$0xff] %vm3829, %v3802
        %3841 = vst.msk [vmem:[%s368 + $0x58] sm:$0xff] %vm3829, %v3804
        %3842 = vst.msk [vmem:[%s368 + $0x60] sm:$0xff] %vm3829, %v3806
        %3843 = vst.msk [vmem:[%s368 + $0x68] sm:$0xff] %vm3829, %v3808
        %3844 = vst.msk [vmem:[%s368 + $0x70] sm:$0xff] %vm3829, %v3810
        %3845 = vst.msk [vmem:[%s368 + $0x78] sm:$0xff] %vm3829, %v3812
        %s3846 = smul.u32 16, %s26
        %p3847 = scmp.lt.s32.totalorder %s25, 1
        %s3848 = scalar_select %p3847, %s25, 1
        %p3849 = scmp.lt.s32.totalorder %s3846, 15
        %s3850 = scalar_select %p3849, %s3846, 15
        %s3851 = smul.addr %s3848, 16
        %s3852 = sadd.s32 %s3850, %s3851
        %s3853 = smul.addr %s3852, 8
        %s3854 = scalar_lea.vmem %s8, %s3853
        // Predicated region
        $region65: #{tpu_custom_call.1} parent=51 // pred_check
          %p3855 = pneg %p231
        $region66: #{tpu_custom_call.1} parent=51 // pred_check_branch
          %3857 = sbr.rel (%p3855) target = $region68
        $region67: #{tpu_custom_call.1} parent=51 // pred_region
          %s3858 = smul.u32 16, %s26
        $region68: #{tpu_custom_call.1} parent=51 // pred_fallthru
          _
      $region52: #{tpu_custom_call.1} parent=5 // pred_fallthru
        _
      %p3859 = scmp.le.s32.totalorder 2, %s16
      // Predicated region
      $region69: #{tpu_custom_call.1} parent=5 // pred_check
        %p3860 = pneg %p3859
      $region70: #{tpu_custom_call.1} parent=5 // pred_check_branch
        %3862 = sbr.rel (%p3860) target = $region72
      $region71: #{tpu_custom_call.1} parent=5 // pred_region
        %s3863 = ssub.s32 %s16, 2
        // Predicated region
        $region73: #{tpu_custom_call.1} parent=71 // pred_check
          %p3864 = pneg %p237
        $region74: #{tpu_custom_call.1} parent=71 // pred_check_branch
          %3866 = sbr.rel (%p3864) target = $region76
        $region75: #{tpu_custom_call.1} parent=71 // pred_region
          %s3867 = smul.u32 16, %s28
          %p3868 = scmp.lt.s32.totalorder %s27, 1
          %s3869 = scalar_select %p3868, %s27, 1
          %p3870 = scmp.lt.s32.totalorder %s3867, 15
          %s3871 = scalar_select %p3870, %s3867, 15
          %s3872 = smul.addr %s3869, 16
          %s3873 = sadd.s32 %s3871, %s3872
          %s3874 = smul.addr %s3873, 8
          %s3875 = scalar_lea.vmem %s8, %s3874
        $region76: #{tpu_custom_call.1} parent=71 // pred_fallthru
          _
      $region72: #{tpu_custom_call.1} parent=5 // pred_fallthru
        _
    $region6: #{tpu_custom_call.1} parent=1 // loop_footer
      %s20 = sadd.s32 1, %s16
    $region7: #{tpu_custom_call.1} parent=1 // loop_footer_branch
      %15 = sbr.rel target = $region3
    $region8: #{tpu_custom_call.1} parent=1 // loop_exit
      _
    %3876 = vsyncpa [#allocation5], 1
    %s3877 = scalar_lea.sflag [#allocation5], 1
    %3878 = vsyncpa %s3877, 1
    %3879 = vsyncpa [#allocation7], 1

// kernel: tpu_custom_call.1
$region0: #{tpu_custom_call.1}
  #allocation0 [shape = 'u32[]', space=smem, size = 0x4, offset = 0x4, fixed_abs, tag = 'smem constant byte address 0x4 - core index']
  #allocation1 [shape = 'u32[144,128]{1,0:T(1,128)}', space=vmem, size = 0x12000, scoped, tag = 'internal scratch']
  #allocation2 [shape = 'f32[128,32]{1,0:T(8,128)}', space=vmem, size = 0x10000, scoped, tag = 'scratch operand']
  #allocation3 [shape = 'f32[128,64]{1,0:T(8,128)}', space=vmem, size = 0x10000, scoped, tag = 'scratch operand']
  %s0 = inlined_call_operand.vmem [shape: f32[2,128,32], index: 0, kind: input, shape index: {}]
  %s1 = inlined_call_operand.vmem [shape: f32[32,32], index: 1, kind: input, shape index: {}]
  %s2 = inlined_call_operand.vmem [shape: f32[1,32], index: 2, kind: input, shape index: {}]
  %s3 = inlined_call_operand.vmem [shape: f32[32,96], index: 3, kind: input, shape index: {}]
  %s4 = inlined_call_operand.vmem [shape: f32[1,96], index: 4, kind: input, shape index: {}]
  %s5 = inlined_call_operand.vmem [shape: f32[2,1,128], index: 5, kind: input, shape index: {}]
  %s6 = inlined_call_operand.vmem [shape: f32[1,4], index: 6, kind: input, shape index: {}]
  %s7 = inlined_call_operand.vmem [shape: f32[1,4], index: 7, kind: input, shape index: {}]
  %s8 = inlined_call_operand.vmem [shape: f32[2,128,32], index: 8, kind: output, shape index: {}]
  %s9 = sld [smem:[#allocation0]]
  $region77: #{tpu_custom_call.1} parent=0
    _
  %s11 = ssub.s32 1, %s9
  %s12 = scalar_select 0, %s11, %s9
  $region1: #{tpu_custom_call.1} parent=0
    #allocation4 [shape = 'u8[512]{0}', space=smem, size = 0x200, scoped, tag = 'input window, operand 6, single buffered']
    #allocation5 [shape = 's32[2]{0}', space=sflag, size = 0x8, scoped, tag = 'scoped memory for tpu_custom_call.1']
    #allocation6 [shape = 'u8[512]{0}', space=smem, size = 0x200, scoped, tag = 'input window, operand 7, single buffered']
    #allocation7 [shape = 's32[1]{0}', space=sflag, size = 0x4, scoped, tag = 'scoped memory for tpu_custom_call.1']
    %13 = vsyncpa [#allocation5], 0
    %14 = vsyncpa [#allocation7], 0
    loop: start=0, step=1, limit=4
    $region2: #{tpu_custom_call.1} parent=1 // loop_pre_header
      _
    $region3: #{tpu_custom_call.1} parent=1 // loop_header
      %s16 = sphi 0, %s20
      %p17 = scmp.ge.s32.totalorder %s16, 4
      %s23 = sphi 0, %s35
      %s24 = sphi 0, %s31
      %s25 = sphi 0, %s23
      %s26 = sphi 0, %s24
      %s27 = sphi 0, %s25
      %s28 = sphi 0, %s26
      %s38 = sphi 0, %s40
      %s41 = sphi 0, %s38
      %s42 = sphi 0, %s41
      %s58 = sphi 0, %s42
      %s62 = sphi 0, %s62
      %s64 = sphi 0, %s62
      %s65 = sphi 0, %s64
      %s79 = sphi 0, %s65
      %s83 = sphi 0, %s83
      %s85 = sphi 0, %s83
      %s86 = sphi 0, %s85
      %s100 = sphi 0, %s86
      %s104 = sphi 0, %s104
      %s106 = sphi 0, %s104
      %s107 = sphi 0, %s106
      %s121 = sphi 0, %s107
      %s125 = sphi 0, %s125
      %s127 = sphi 0, %s125
      %s128 = sphi 0, %s127
      %s142 = sphi 0, %s128
      %s148 = sphi 0, %s150
      %s151 = sphi 0, %s148
      %s152 = sphi 0, %s151
      %s168 = sphi 0, %s152
      %s172 = sphi 0, %s172
      %s174 = sphi 0, %s172
      %s175 = sphi 0, %s174
      %s189 = sphi 0, %s175
      %s193 = sphi 0, %s193
      %s195 = sphi 0, %s193
      %s196 = sphi 0, %s195
      %s210 = sphi 0, %s196
      %s218 = sphi 0, %s220
      %s221 = sphi 0, %s218
      %s222 = sphi 0, %s221
      %s238 = sphi 0, %s222
    $region4: #{tpu_custom_call.1} parent=1 // loop_header_branch
      %19 = sbr.rel (%p17) target = $region8
    $region5: #{tpu_custom_call.1} parent=1 // loop_body
      %s21 = ssub.s32 %s16, 1
      %s22 = ssub.s32 %s16, 2
      %s29 = sadd.s32 1, %s24
      %p30 = scmp.ge.s32.totalorder %s29, 1
      %s31 = scalar_select %p30, 0, %s29
      %s32 = sadd.s32 1, %s23
      %s33 = scalar_select %p30, %s32, %s23
      %p34 = scmp.ge.s32.totalorder %s33, 2
      %s35 = scalar_select %p34, 0, %s33
      %s36 = ssub.s32 %s23, %s35
      %p37 = scmp.eq.s32.totalorder %s36, 0
      %s39 = sadd.s32 %s38, 1
      %s40 = scalar_select %p37, %s38, %s39
      %p43 = pneg %p37
      %p44 = scmp.eq.s32.totalorder %s16, 1
      %p45 = por %p43, %p44
      %p46 = scmp.ne.s32.totalorder %s38, %s41
      %p47 = scmp.eq.s32.totalorder %s16, 0
      %p48 = por %p46, %p47
      %p49 = scmp.ne.s32.totalorder %s38, %s41
      %p50 = scmp.eq.s32.totalorder %s21, 1
      %p51 = por %p49, %p50
      %p52 = scmp.ne.s32.totalorder %s41, %s42
      %p53 = scmp.eq.s32.totalorder %s21, 0
      %p54 = por %p52, %p53
      %p55 = scmp.ne.s32.totalorder %s41, %s42
      %p56 = scmp.eq.s32.totalorder %s22, 1
      %p57 = por %p55, %p56
      %p59 = scmp.ne.s32.totalorder %s42, %s58
      %p60 = scmp.eq.s32.totalorder %s22, 0
      %p61 = por %p59, %p60
      %s63 = sadd.s32 %s62, 1
      %p66 = scmp.eq.s32.totalorder %s16, 1
      %p67 = scmp.ne.s32.totalorder %s62, %s64
      %p68 = scmp.eq.s32.totalorder %s16, 0
      %p69 = por %p67, %p68
      %p70 = scmp.ne.s32.totalorder %s62, %s64
      %p71 = scmp.eq.s32.totalorder %s21, 1
      %p72 = por %p70, %p71
      %p73 = scmp.ne.s32.totalorder %s64, %s65
      %p74 = scmp.eq.s32.totalorder %s21, 0
      %p75 = por %p73, %p74
      %p76 = scmp.ne.s32.totalorder %s64, %s65
      %p77 = scmp.eq.s32.totalorder %s22, 1
      %p78 = por %p76, %p77
      %p80 = scmp.ne.s32.totalorder %s65, %s79
      %p81 = scmp.eq.s32.totalorder %s22, 0
      %p82 = por %p80, %p81
      %s84 = sadd.s32 %s83, 1
      %p87 = scmp.eq.s32.totalorder %s16, 1
      %p88 = scmp.ne.s32.totalorder %s83, %s85
      %p89 = scmp.eq.s32.totalorder %s16, 0
      %p90 = por %p88, %p89
      %p91 = scmp.ne.s32.totalorder %s83, %s85
      %p92 = scmp.eq.s32.totalorder %s21, 1
      %p93 = por %p91, %p92
      %p94 = scmp.ne.s32.totalorder %s85, %s86
      %p95 = scmp.eq.s32.totalorder %s21, 0
      %p96 = por %p94, %p95
      %p97 = scmp.ne.s32.totalorder %s85, %s86
      %p98 = scmp.eq.s32.totalorder %s22, 1
      %p99 = por %p97, %p98
      %p101 = scmp.ne.s32.totalorder %s86, %s100
      %p102 = scmp.eq.s32.totalorder %s22, 0
      %p103 = por %p101, %p102
      %s105 = sadd.s32 %s104, 1
      %p108 = scmp.eq.s32.totalorder %s16, 1
      %p109 = scmp.ne.s32.totalorder %s104, %s106
      %p110 = scmp.eq.s32.totalorder %s16, 0
      %p111 = por %p109, %p110
      %p112 = scmp.ne.s32.totalorder %s104, %s106
      %p113 = scmp.eq.s32.totalorder %s21, 1
      %p114 = por %p112, %p113
      %p115 = scmp.ne.s32.totalorder %s106, %s107
      %p116 = scmp.eq.s32.totalorder %s21, 0
      %p117 = por %p115, %p116
      %p118 = scmp.ne.s32.totalorder %s106, %s107
      %p119 = scmp.eq.s32.totalorder %s22, 1
      %p120 = por %p118, %p119
      %p122 = scmp.ne.s32.totalorder %s107, %s121
      %p123 = scmp.eq.s32.totalorder %s22, 0
      %p124 = por %p122, %p123
      %s126 = sadd.s32 %s125, 1
      %p129 = scmp.eq.s32.totalorder %s16, 1
      %p130 = scmp.ne.s32.totalorder %s125, %s127
      %p131 = scmp.eq.s32.totalorder %s16, 0
      %p132 = por %p130, %p131
      %p133 = scmp.ne.s32.totalorder %s125, %s127
      %p134 = scmp.eq.s32.totalorder %s21, 1
      %p135 = por %p133, %p134
      %p136 = scmp.ne.s32.totalorder %s127, %s128
      %p137 = scmp.eq.s32.totalorder %s21, 0
      %p138 = por %p136, %p137
      %p139 = scmp.ne.s32.totalorder %s127, %s128
      %p140 = scmp.eq.s32.totalorder %s22, 1
      %p141 = por %p139, %p140
      %p143 = scmp.ne.s32.totalorder %s128, %s142
      %p144 = scmp.eq.s32.totalorder %s22, 0
      %p145 = por %p143, %p144
      %s146 = ssub.s32 %s23, %s35
      %p147 = scmp.eq.s32.totalorder %s146, 0
      %s149 = sadd.s32 %s148, 1
      %s150 = scalar_select %p147, %s148, %s149
      %p153 = pneg %p147
      %p154 = scmp.eq.s32.totalorder %s16, 1
      %p155 = por %p153, %p154
      %p156 = scmp.ne.s32.totalorder %s148, %s151
      %p157 = scmp.eq.s32.totalorder %s16, 0
      %p158 = por %p156, %p157
      %p159 = scmp.ne.s32.totalorder %s148, %s151
      %p160 = scmp.eq.s32.totalorder %s21, 1
      %p161 = por %p159, %p160
      %p162 = scmp.ne.s32.totalorder %s151, %s152
      %p163 = scmp.eq.s32.totalorder %s21, 0
      %p164 = por %p162, %p163
      %p165 = scmp.ne.s32.totalorder %s151, %s152
      %p166 = scmp.eq.s32.totalorder %s22, 1
      %p167 = por %p165, %p166
      %p169 = scmp.ne.s32.totalorder %s152, %s168
      %p170 = scmp.eq.s32.totalorder %s22, 0
      %p171 = por %p169, %p170
      %s173 = sadd.s32 %s172, 1
      %p176 = scmp.eq.s32.totalorder %s16, 1
      %p177 = scmp.ne.s32.totalorder %s172, %s174
      %p178 = scmp.eq.s32.totalorder %s16, 0
      %p179 = por %p177, %p178
      %p180 = scmp.ne.s32.totalorder %s172, %s174
      %p181 = scmp.eq.s32.totalorder %s21, 1
      %p182 = por %p180, %p181
      %p183 = scmp.ne.s32.totalorder %s174, %s175
      %p184 = scmp.eq.s32.totalorder %s21, 0
      %p185 = por %p183, %p184
      %p186 = scmp.ne.s32.totalorder %s174, %s175
      %p187 = scmp.eq.s32.totalorder %s22, 1
      %p188 = por %p186, %p187
      %p190 = scmp.ne.s32.totalorder %s175, %s189
      %p191 = scmp.eq.s32.totalorder %s22, 0
      %p192 = por %p190, %p191
      %s194 = sadd.s32 %s193, 1
      %p197 = scmp.eq.s32.totalorder %s16, 1
      %p198 = scmp.ne.s32.totalorder %s193, %s195
      %p199 = scmp.eq.s32.totalorder %s16, 0
      %p200 = por %p198, %p199
      %p201 = scmp.ne.s32.totalorder %s193, %s195
      %p202 = scmp.eq.s32.totalorder %s21, 1
      %p203 = por %p201, %p202
      %p204 = scmp.ne.s32.totalorder %s195, %s196
      %p205 = scmp.eq.s32.totalorder %s21, 0
      %p206 = por %p204, %p205
      %p207 = scmp.ne.s32.totalorder %s195, %s196
      %p208 = scmp.eq.s32.totalorder %s22, 1
      %p209 = por %p207, %p208
      %p211 = scmp.ne.s32.totalorder %s196, %s210
      %p212 = scmp.eq.s32.totalorder %s22, 0
      %p213 = por %p211, %p212
      %s214 = ssub.s32 %s23, %s35
      %s215 = ssub.s32 %s24, %s31
      %s216 = sor.u32 %s214, %s215
      %p217 = scmp.eq.s32.totalorder %s216, 0
      %s219 = sadd.s32 %s218, 1
      %s220 = scalar_select %p217, %s218, %s219
      %p223 = pneg %p217
      %p224 = scmp.eq.s32.totalorder %s16, 1
      %p225 = por %p223, %p224
      %p226 = scmp.ne.s32.totalorder %s218, %s221
      %p227 = scmp.eq.s32.totalorder %s16, 0
      %p228 = por %p226, %p227
      %p229 = scmp.ne.s32.totalorder %s218, %s221
      %p230 = scmp.eq.s32.totalorder %s21, 1
      %p231 = por %p229, %p230
      %p232 = scmp.ne.s32.totalorder %s221, %s222
      %p233 = scmp.eq.s32.totalorder %s21, 0
      %p234 = por %p232, %p233
      %p235 = scmp.ne.s32.totalorder %s221, %s222
      %p236 = scmp.eq.s32.totalorder %s22, 1
      %p237 = por %p235, %p236
      %p239 = scmp.ne.s32.totalorder %s222, %s238
      %p240 = scmp.eq.s32.totalorder %s22, 0
      %p241 = por %p239, %p240
      %p242 = scmp.le.s32.totalorder 1, %s16
      %p243 = scmp.lt.s32.totalorder %s16, 3
      %p244 = pnand %p242, %p243
      %p245 = pneg %p244
      // Predicated region
      $region9: #{tpu_custom_call.1} parent=5 // pred_check
        _
      $region10: #{tpu_custom_call.1} parent=5 // pred_check_branch
        %247 = sbr.rel (%p244) target = $region12
      $region11: #{tpu_custom_call.1} parent=5 // pred_region
        %s248 = ssub.s32 %s16, 1
        // Predicated region
        $region13: #{tpu_custom_call.1} parent=11 // pred_check
          %p249 = pneg %p75
        $region14: #{tpu_custom_call.1} parent=11 // pred_check_branch
          %251 = sbr.rel (%p249) target = $region16
        $region15: #{tpu_custom_call.1} parent=11 // pred_region
          _
        $region16: #{tpu_custom_call.1} parent=11 // pred_fallthru
          _
        // Predicated region
        $region17: #{tpu_custom_call.1} parent=11 // pred_check
          %p252 = pneg %p96
        $region18: #{tpu_custom_call.1} parent=11 // pred_check_branch
          %254 = sbr.rel (%p252) target = $region20
        $region19: #{tpu_custom_call.1} parent=11 // pred_region
          _
        $region20: #{tpu_custom_call.1} parent=11 // pred_fallthru
          _
        // Predicated region
        $region21: #{tpu_custom_call.1} parent=11 // pred_check
          %p255 = pneg %p117
        $region22: #{tpu_custom_call.1} parent=11 // pred_check_branch
          %257 = sbr.rel (%p255) target = $region24
        $region23: #{tpu_custom_call.1} parent=11 // pred_region
          _
        $region24: #{tpu_custom_call.1} parent=11 // pred_fallthru
          _
        // Predicated region
        $region25: #{tpu_custom_call.1} parent=11 // pred_check
          %p258 = pneg %p138
        $region26: #{tpu_custom_call.1} parent=11 // pred_check_branch
          %260 = sbr.rel (%p258) target = $region28
        $region27: #{tpu_custom_call.1} parent=11 // pred_region
          _
        $region28: #{tpu_custom_call.1} parent=11 // pred_fallthru
          _
        // Predicated region
        $region29: #{tpu_custom_call.1} parent=11 // pred_check
          %p261 = pneg %p185
        $region30: #{tpu_custom_call.1} parent=11 // pred_check_branch
          %263 = sbr.rel (%p261) target = $region32
        $region31: #{tpu_custom_call.1} parent=11 // pred_region
          %s265 = ssub.s32 16, 16
          %266 = vsyncadd [#allocation5], %s265
          %s268 = sshll.u32 %s6, 4
          %s269 = int_to_ptr.vmem [resolvable:$true] %s268
          %271 = dma.vmem_to_smem %s269, 16, [#allocation4], [#allocation5]
        $region32: #{tpu_custom_call.1} parent=11 // pred_fallthru
          _
        // Predicated region
        $region33: #{tpu_custom_call.1} parent=11 // pred_check
          %p272 = pneg %p206
        $region34: #{tpu_custom_call.1} parent=11 // pred_check_branch
          %274 = sbr.rel (%p272) target = $region36
        $region35: #{tpu_custom_call.1} parent=11 // pred_region
          %s276 = ssub.s32 16, 16
          %277 = vsyncadd [#allocation7], %s276
          %s279 = sshll.u32 %s7, 4
          %s280 = int_to_ptr.vmem [resolvable:$true] %s279
          %282 = dma.vmem_to_smem %s280, 16, [#allocation6], [#allocation7]
        $region36: #{tpu_custom_call.1} parent=11 // pred_fallthru
          _
      $region12: #{tpu_custom_call.1} parent=5 // pred_fallthru
        _
      %p283 = scmp.lt.s32.totalorder %s16, 2
      // Predicated region
      $region37: #{tpu_custom_call.1} parent=5 // pred_check
        %p284 = pneg %p283
      $region38: #{tpu_custom_call.1} parent=5 // pred_check_branch
        %286 = sbr.rel (%p284) target = $region40
      $region39: #{tpu_custom_call.1} parent=5 // pred_region
        // Predicated region
        $region41: #{tpu_custom_call.1} parent=39 // pred_check
          %p287 = pneg %p48
        $region42: #{tpu_custom_call.1} parent=39 // pred_check_branch
          %289 = sbr.rel (%p287) target = $region44
        $region43: #{tpu_custom_call.1} parent=39 // pred_region
          %p290 = scmp.lt.s32.totalorder %s23, 1
          %s291 = scalar_select %p290, %s23, 1
          %s292 = smul.addr %s291, 16
          %s293 = smul.addr %s292, 8
          %s294 = scalar_lea.vmem %s0, %s293
        $region44: #{tpu_custom_call.1} parent=39 // pred_fallthru
          _
        // Predicated region
        $region45: #{tpu_custom_call.1} parent=39 // pred_check
          %p295 = pneg %p158
        $region46: #{tpu_custom_call.1} parent=39 // pred_check_branch
          %297 = sbr.rel (%p295) target = $region48
        $region47: #{tpu_custom_call.1} parent=39 // pred_region
          %p298 = scmp.lt.s32.totalorder %s23, 1
          %s299 = scalar_select %p298, %s23, 1
          %s300 = scalar_lea.vmem %s5, %s299
        $region48: #{tpu_custom_call.1} parent=39 // pred_fallthru
          _
      $region40: #{tpu_custom_call.1} parent=5 // pred_fallthru
        _
      %p301 = scmp.le.s32.totalorder 1, %s16
      %p302 = scmp.lt.s32.totalorder %s16, 3
      %p303 = pnand %p301, %p302
      %p304 = pneg %p303
      // Predicated region
      $region49: #{tpu_custom_call.1} parent=5 // pred_check
        _
      $region50: #{tpu_custom_call.1} parent=5 // pred_check_branch
        %306 = sbr.rel (%p303) target = $region52
      $region51: #{tpu_custom_call.1} parent=5 // pred_region
        %s307 = ssub.s32 %s16, 1
        // Predicated region
        $region53: #{tpu_custom_call.1} parent=51 // pred_check
          %p308 = pneg %p185
        $region54: #{tpu_custom_call.1} parent=51 // pred_check_branch
          %310 = sbr.rel (%p308) target = $region56
        $region55: #{tpu_custom_call.1} parent=51 // pred_region
          %311 = dma.done [#allocation5], 16
        $region56: #{tpu_custom_call.1} parent=51 // pred_fallthru
          _
        // Predicated region
        $region57: #{tpu_custom_call.1} parent=51 // pred_check
          %p312 = pneg %p206
        $region58: #{tpu_custom_call.1} parent=51 // pred_check_branch
          %314 = sbr.rel (%p312) target = $region60
        $region59: #{tpu_custom_call.1} parent=51 // pred_region
          %315 = dma.done [#allocation7], 16
        $region60: #{tpu_custom_call.1} parent=51 // pred_fallthru
          _
        %316 = sfence
        %p317 = scmp.lt.s32.totalorder %s25, 1
        %s318 = scalar_select %p317, %s25, 1
        %s319 = smul.addr %s318, 16
        %s320 = smul.addr %s319, 8
        %s321 = scalar_lea.vmem %s0, %s320
        %p322 = pneg %p54
        %p323 = pneg %p51
        %p324 = pneg %p75
        %p325 = pneg %p72
        %p326 = pneg %p96
        %p327 = pneg %p93
        %p328 = pneg %p117
        %p329 = pneg %p114
        %p330 = pneg %p138
        %p331 = pneg %p135
        %p332 = scmp.lt.s32.totalorder %s25, 1
        %s333 = scalar_select %p332, %s25, 1
        %s334 = scalar_lea.vmem %s5, %s333
        %p335 = pneg %p164
        %p336 = pneg %p161
        %p337 = pneg %p185
        %p338 = pneg %p182
        %p339 = pneg %p206
        %p340 = pneg %p203
        %p341 = pneg %p234
        %p342 = pneg %p231
        %s343 = smul.u32 16, %s26
        %p344 = scmp.lt.s32.totalorder %s25, 1
        %s345 = scalar_select %p344, %s25, 1
        %p346 = scmp.lt.s32.totalorder %s343, 15
        %s347 = scalar_select %p346, %s343, 15
        %s348 = smul.addr %s345, 16
        %s349 = sadd.s32 %s347, %s348
        %s350 = smul.addr %s349, 8
        %s351 = scalar_lea.vmem %s8, %s350
        %p352 = scmp.lt.s32.totalorder %s25, 1
        %s353 = scalar_select %p352, %s25, 1
        %s354 = smul.addr %s353, 16
        %s355 = smul.addr %s354, 8
        %s356 = scalar_lea.vmem %s0, %s355
        %p357 = scmp.lt.s32.totalorder %s25, 1
        %s358 = scalar_select %p357, %s25, 1
        %s359 = scalar_lea.vmem %s5, %s358
        %s360 = smul.u32 16, %s26
        %p361 = scmp.lt.s32.totalorder %s25, 1
        %s362 = scalar_select %p361, %s25, 1
        %p363 = scmp.lt.s32.totalorder %s360, 15
        %s364 = scalar_select %p363, %s360, 15
        %s365 = smul.addr %s362, 16
        %s366 = sadd.s32 %s364, %s365
        %s367 = smul.addr %s366, 8
        %s368 = scalar_lea.vmem %s8, %s367
        %s369 = smul.u32 16, %s26
        %p370 = scmp.eq.s32.totalorder %s26, 0
        // Predicated region
        $region61: #{tpu_custom_call.1} parent=51 // pred_check
          %p371 = pneg %p370
        $region62: #{tpu_custom_call.1} parent=51 // pred_check_branch
          %373 = sbr.rel (%p371) target = $region64
        $region63: #{tpu_custom_call.1} parent=51 // pred_region
          %v374 = vld [vmem:[%s356] sm:$0xff]
          %v375 = vld [vmem:[%s356 + $0x8] sm:$0xff]
          %v376 = vld [vmem:[%s356 + $0x10] sm:$0xff]
          %v377 = vld [vmem:[%s356 + $0x18] sm:$0xff]
          %v378 = vld [vmem:[%s356 + $0x20] sm:$0xff]
          %v379 = vld [vmem:[%s356 + $0x28] sm:$0xff]
          %v380 = vld [vmem:[%s356 + $0x30] sm:$0xff]
          %v381 = vld [vmem:[%s356 + $0x38] sm:$0xff]
          %v382 = vld [vmem:[%s356 + $0x40] sm:$0xff]
          %v383 = vld [vmem:[%s356 + $0x48] sm:$0xff]
          %v384 = vld [vmem:[%s356 + $0x50] sm:$0xff]
          %v385 = vld [vmem:[%s356 + $0x58] sm:$0xff]
          %v386 = vld [vmem:[%s356 + $0x60] sm:$0xff]
          %v387 = vld [vmem:[%s356 + $0x68] sm:$0xff]
          %v388 = vld [vmem:[%s356 + $0x70] sm:$0xff]
          %v389 = vld [vmem:[%s356 + $0x78] sm:$0xff]
          %v390 = vld [vmem:[%s3] sm:$0xff]
          %v391 = vld [vmem:[%s3 + $0x8] sm:$0xff]
          %v392 = vld [vmem:[%s3 + $0x10] sm:$0xff]
          %v393 = vld [vmem:[%s3 + $0x18] sm:$0xff]
          %v394 = vld [vmem:[%s4] sm:$0x1]
          %v396 = vlaneseq
          %v397 = vshrl.u32 %v396, 7
          %v398 = vsub.s32 0, %v397
          %v399 = vrot.slane %v394, %v398
          %vm401 = vcmask 261120
          %v403 = vsel %vm401, %v374, 0
          %v406 = vsel %vm401, %v375, 0
          %v409 = vsel %vm401, %v376, 0
          %v412 = vsel %vm401, %v377, 0
          %v415 = vsel %vm401, %v378, 0
          %v418 = vsel %vm401, %v379, 0
          %v421 = vsel %vm401, %v380, 0
          %v424 = vsel %vm401, %v381, 0
          %v427 = vsel %vm401, %v382, 0
          %v430 = vsel %vm401, %v383, 0
          %v433 = vsel %vm401, %v384, 0
          %v436 = vsel %vm401, %v385, 0
          %v439 = vsel %vm401, %v386, 0
          %v442 = vsel %vm401, %v387, 0
          %v445 = vsel %vm401, %v388, 0
          %v448 = vsel %vm401, %v389, 0
          %450 = vmatprep.subr.mxu0 0.0
          %451 = vmatpush1.msra.mxu0 %v390
          %452 = vmatprep.subr.mxu0 0.0
          %453 = vmatpush1.msra.mxu0 %v391
          %454 = vmatprep.subr.mxu0 0.0
          %455 = vmatpush1.msra.mxu0 %v392
          %456 = vmatprep.subr.mxu0 0.0
          %457 = vmatpush1.msra.mxu0 %v393
          %458 = vmatprep.subr.mxu0 0.0
          %459 = vmatpush1.msra.mxu0 0.0
          %460 = vmatprep.subr.mxu0 0.0
          %461 = vmatpush1.msra.mxu0 0.0
          %462 = vmatprep.subr.mxu0 0.0
          %463 = vmatpush1.msra.mxu0 0.0
          %464 = vmatprep.subr.mxu0 0.0
          %465 = vmatpush1.msra.mxu0 0.0
          %466 = vmatprep.subr.mxu0 0.0
          %467 = vmatpush1.msra.mxu0 0.0
          %468 = vmatprep.subr.mxu0 0.0
          %469 = vmatpush1.msra.mxu0 0.0
          %470 = vmatprep.subr.mxu0 0.0
          %471 = vmatpush1.msra.mxu0 0.0
          %472 = vmatprep.subr.mxu0 0.0
          %473 = vmatpush1.msra.mxu0 0.0
          %474 = vmatprep.subr.mxu0 0.0
          %475 = vmatpush1.msra.mxu0 0.0
          %476 = vmatprep.subr.mxu0 0.0
          %477 = vmatpush1.msra.mxu0 0.0
          %478 = vmatprep.subr.mxu0 0.0
          %479 = vmatpush1.msra.mxu0 0.0
          %480 = vmatprep.subr.mxu0 0.0
          %481 = vmatpush1.msra.mxu0 0.0
          %482 = vmatprep.subr.mxu0 0.0
          %483 = vmatpush1.msra.mxu0 0.0
          %484 = vmatprep.subr.mxu0 0.0
          %485 = vmatpush1.msra.mxu0 0.0
          %486 = vmatprep.subr.mxu0 0.0
          %487 = vmatpush1.msra.mxu0 0.0
          %488 = vmatprep.subr.mxu0 0.0
          %489 = vmatpush1.msra.mxu0 0.0
          %490 = vmatprep.subr.mxu0 0.0
          %491 = vmatpush1.msra.mxu0 0.0
          %492 = vmatprep.subr.mxu0 0.0
          %493 = vmatpush1.msra.mxu0 0.0
          %494 = vmatprep.subr.mxu0 0.0
          %495 = vmatpush1.msra.mxu0 0.0
          %496 = vmatprep.subr.mxu0 0.0
          %497 = vmatpush1.msra.mxu0 0.0
          %498 = vmatprep.subr.mxu0 0.0
          %499 = vmatpush1.msra.mxu0 0.0
          %500 = vmatprep.subr.mxu0 0.0
          %501 = vmatpush1.msra.mxu0 0.0
          %502 = vmatprep.subr.mxu0 0.0
          %503 = vmatpush1.msra.mxu0 0.0
          %504 = vmatprep.subr.mxu0 0.0
          %505 = vmatpush1.msra.mxu0 0.0
          %506 = vmatprep.subr.mxu0 0.0
          %507 = vmatpush1.msra.mxu0 0.0
          %508 = vmatprep.subr.mxu0 0.0
          %509 = vmatpush1.msra.mxu0 0.0
          %510 = vmatprep.subr.mxu0 0.0
          %511 = vmatpush1.msra.mxu0 0.0
          %512 = vmatprep.subr.mxu0 0.0
          %513 = vmatpush1.msra.mxu0 0.0
          %514 = vmatprep.mubr.f32.mxu0 0.0
          %515 = vmatmul.mubr.f32.gmra.mrb[0].mxu0 %v403
          %v516 = vpop.f32.mrb[0].mxu0
          %v517 = vadd.f32 %v399, %v516
          %v518 = vpop.f32.mrb[0].mxu0
          %519 = vmatprep.mubr.f32.mxu0 0.0
          %520 = vmatmul.mubr.f32.gmra.mrb[0].mxu0 %v406
          %v521 = vpop.f32.mrb[0].mxu0
          %v522 = vadd.f32 %v399, %v521
          %v523 = vpop.f32.mrb[0].mxu0
          %524 = vmatprep.mubr.f32.mxu0 0.0
          %525 = vmatmul.mubr.f32.gmra.mrb[0].mxu0 %v409
          %v526 = vpop.f32.mrb[0].mxu0
          %v527 = vadd.f32 %v399, %v526
          %v528 = vpop.f32.mrb[0].mxu0
          %529 = vmatprep.mubr.f32.mxu0 0.0
          %530 = vmatmul.mubr.f32.gmra.mrb[0].mxu0 %v412
          %v531 = vpop.f32.mrb[0].mxu0
          %v532 = vadd.f32 %v399, %v531
          %v533 = vpop.f32.mrb[0].mxu0
          %534 = vmatprep.mubr.f32.mxu0 0.0
          %535 = vmatmul.mubr.f32.gmra.mrb[0].mxu0 %v415
          %v536 = vpop.f32.mrb[0].mxu0
          %v537 = vadd.f32 %v399, %v536
          %v538 = vpop.f32.mrb[0].mxu0
          %539 = vmatprep.mubr.f32.mxu0 0.0
          %540 = vmatmul.mubr.f32.gmra.mrb[0].mxu0 %v418
          %v541 = vpop.f32.mrb[0].mxu0
          %v542 = vadd.f32 %v399, %v541
          %v543 = vpop.f32.mrb[0].mxu0
          %544 = vmatprep.mubr.f32.mxu0 0.0
          %545 = vmatmul.mubr.f32.gmra.mrb[0].mxu0 %v421
          %v546 = vpop.f32.mrb[0].mxu0
          %v547 = vadd.f32 %v399, %v546
          %v548 = vpop.f32.mrb[0].mxu0
          %549 = vmatprep.mubr.f32.mxu0 0.0
          %550 = vmatmul.mubr.f32.gmra.mrb[0].mxu0 %v424
          %v551 = vpop.f32.mrb[0].mxu0
          %v552 = vadd.f32 %v399, %v551
          %v553 = vpop.f32.mrb[0].mxu0
          %554 = vmatprep.mubr.f32.mxu0 0.0
          %555 = vmatmul.mubr.f32.gmra.mrb[0].mxu0 %v427
          %v556 = vpop.f32.mrb[0].mxu0
          %v557 = vadd.f32 %v399, %v556
          %v558 = vpop.f32.mrb[0].mxu0
          %559 = vmatprep.mubr.f32.mxu0 0.0
          %560 = vmatmul.mubr.f32.gmra.mrb[0].mxu0 %v430
          %v561 = vpop.f32.mrb[0].mxu0
          %v562 = vadd.f32 %v399, %v561
          %v563 = vpop.f32.mrb[0].mxu0
          %564 = vmatprep.mubr.f32.mxu0 0.0
          %565 = vmatmul.mubr.f32.gmra.mrb[0].mxu0 %v433
          %v566 = vpop.f32.mrb[0].mxu0
          %v567 = vadd.f32 %v399, %v566
          %v568 = vpop.f32.mrb[0].mxu0
          %569 = vmatprep.mubr.f32.mxu0 0.0
          %570 = vmatmul.mubr.f32.gmra.mrb[0].mxu0 %v436
          %v571 = vpop.f32.mrb[0].mxu0
          %v572 = vadd.f32 %v399, %v571
          %v573 = vpop.f32.mrb[0].mxu0
          %574 = vmatprep.mubr.f32.mxu0 0.0
          %575 = vmatmul.mubr.f32.gmra.mrb[0].mxu0 %v439
          %v576 = vpop.f32.mrb[0].mxu0
          %v577 = vadd.f32 %v399, %v576
          %v578 = vpop.f32.mrb[0].mxu0
          %579 = vmatprep.mubr.f32.mxu0 0.0
          %580 = vmatmul.mubr.f32.gmra.mrb[0].mxu0 %v442
          %v581 = vpop.f32.mrb[0].mxu0
          %v582 = vadd.f32 %v399, %v581
          %v583 = vpop.f32.mrb[0].mxu0
          %584 = vmatprep.mubr.f32.mxu0 0.0
          %585 = vmatmul.mubr.f32.gmra.mrb[0].mxu0 %v445
          %v586 = vpop.f32.mrb[0].mxu0
          %v587 = vadd.f32 %v399, %v586
          %v588 = vpop.f32.mrb[0].mxu0
          %589 = vmatprep.mubr.f32.mxu0 0.0
          %590 = vmatmul.mubr.f32.gmra.mrb[0].mxu0 %v448
          %v591 = vpop.f32.mrb[0].mxu0
          %v592 = vadd.f32 %v399, %v591
          %v593 = vpop.f32.mrb[0].mxu0
          %594 = vdwg.mxu0
          %595 = vst.msk [vmem:[#allocation2] sm:$0xff] %vm401, %v517
          %596 = vst.msk [vmem:[#allocation2 + $0x8] sm:$0xff] %vm401, %v522
          %597 = vst.msk [vmem:[#allocation2 + $0x10] sm:$0xff] %vm401, %v527
          %598 = vst.msk [vmem:[#allocation2 + $0x18] sm:$0xff] %vm401, %v532
          %599 = vst.msk [vmem:[#allocation2 + $0x20] sm:$0xff] %vm401, %v537
          %600 = vst.msk [vmem:[#allocation2 + $0x28] sm:$0xff] %vm401, %v542
          %601 = vst.msk [vmem:[#allocation2 + $0x30] sm:$0xff] %vm401, %v547
          %602 = vst.msk [vmem:[#allocation2 + $0x38] sm:$0xff] %vm401, %v552
          %603 = vst.msk [vmem:[#allocation2 + $0x40] sm:$0xff] %vm401, %v557
          %604 = vst.msk [vmem:[#allocation2 + $0x48] sm:$0xff] %vm401, %v562
          %605 = vst.msk [vmem:[#allocation2 + $0x50] sm:$0xff] %vm401, %v567
          %606 = vst.msk [vmem:[#allocation2 + $0x58] sm:$0xff] %vm401, %v572
          %607 = vst.msk [vmem:[#allocation2 + $0x60] sm:$0xff] %vm401, %v577
          %608 = vst.msk [vmem:[#allocation2 + $0x68] sm:$0xff] %vm401, %v582
          %609 = vst.msk [vmem:[#allocation2 + $0x70] sm:$0xff] %vm401, %v587
          %610 = vst.msk [vmem:[#allocation2 + $0x78] sm:$0xff] %vm401, %v592
          %627 = vrot.lane.b32.xlu0 %v517, 96
          %v628 = vpop.permute.xlu0 %627
          %629 = vrot.lane.b32.xlu0 %v522, 96
          %v630 = vpop.permute.xlu0 %629
          %631 = vrot.lane.b32.xlu0 %v527, 96
          %v632 = vpop.permute.xlu0 %631
          %633 = vrot.lane.b32.xlu0 %v532, 96
          %v634 = vpop.permute.xlu0 %633
          %635 = vrot.lane.b32.xlu0 %v537, 96
          %v636 = vpop.permute.xlu0 %635
          %637 = vrot.lane.b32.xlu0 %v542, 96
          %v638 = vpop.permute.xlu0 %637
          %639 = vrot.lane.b32.xlu0 %v547, 96
          %v640 = vpop.permute.xlu0 %639
          %641 = vrot.lane.b32.xlu0 %v552, 96
          %v642 = vpop.permute.xlu0 %641
          %643 = vrot.lane.b32.xlu0 %v557, 96
          %v644 = vpop.permute.xlu0 %643
          %645 = vrot.lane.b32.xlu0 %v562, 96
          %v646 = vpop.permute.xlu0 %645
          %647 = vrot.lane.b32.xlu0 %v567, 96
          %v648 = vpop.permute.xlu0 %647
          %649 = vrot.lane.b32.xlu0 %v572, 96
          %v650 = vpop.permute.xlu0 %649
          %651 = vrot.lane.b32.xlu0 %v577, 96
          %v652 = vpop.permute.xlu0 %651
          %653 = vrot.lane.b32.xlu0 %v582, 96
          %v654 = vpop.permute.xlu0 %653
          %655 = vrot.lane.b32.xlu0 %v587, 96
          %v656 = vpop.permute.xlu0 %655
          %657 = vrot.lane.b32.xlu0 %v592, 96
          %v658 = vpop.permute.xlu0 %657
          %vm675 = vcmask 523264
          %676 = vst.msk [vmem:[#allocation3] sm:$0xff] %vm675, %v628
          %677 = vst.msk [vmem:[#allocation3 + $0x8] sm:$0xff] %vm675, %v630
          %678 = vst.msk [vmem:[#allocation3 + $0x10] sm:$0xff] %vm675, %v632
          %679 = vst.msk [vmem:[#allocation3 + $0x18] sm:$0xff] %vm675, %v634
          %680 = vst.msk [vmem:[#allocation3 + $0x20] sm:$0xff] %vm675, %v636
          %681 = vst.msk [vmem:[#allocation3 + $0x28] sm:$0xff] %vm675, %v638
          %682 = vst.msk [vmem:[#allocation3 + $0x30] sm:$0xff] %vm675, %v640
          %683 = vst.msk [vmem:[#allocation3 + $0x38] sm:$0xff] %vm675, %v642
          %684 = vst.msk [vmem:[#allocation3 + $0x40] sm:$0xff] %vm675, %v644
          %685 = vst.msk [vmem:[#allocation3 + $0x48] sm:$0xff] %vm675, %v646
          %686 = vst.msk [vmem:[#allocation3 + $0x50] sm:$0xff] %vm675, %v648
          %687 = vst.msk [vmem:[#allocation3 + $0x58] sm:$0xff] %vm675, %v650
          %688 = vst.msk [vmem:[#allocation3 + $0x60] sm:$0xff] %vm675, %v652
          %689 = vst.msk [vmem:[#allocation3 + $0x68] sm:$0xff] %vm675, %v654
          %690 = vst.msk [vmem:[#allocation3 + $0x70] sm:$0xff] %vm675, %v656
          %691 = vst.msk [vmem:[#allocation3 + $0x78] sm:$0xff] %vm675, %v658
        $region64: #{tpu_custom_call.1} parent=51 // pred_fallthru
          _
        %s692 = smul.u32 %s26, 128
        %s693 = scalar_lea.vmem %s356, %s692
        %v694 = vld [vmem:[%s693] sm:$0xff]
        %v695 = vld [vmem:[%s693 + $0x8] sm:$0xff]
        %v696 = vld [vmem:[%s693 + $0x10] sm:$0xff]
        %v697 = vld [vmem:[%s693 + $0x18] sm:$0xff]
        %v698 = vld [vmem:[%s693 + $0x20] sm:$0xff]
        %v699 = vld [vmem:[%s693 + $0x28] sm:$0xff]
        %v700 = vld [vmem:[%s693 + $0x30] sm:$0xff]
        %v701 = vld [vmem:[%s693 + $0x38] sm:$0xff]
        %v702 = vld [vmem:[%s693 + $0x40] sm:$0xff]
        %v703 = vld [vmem:[%s693 + $0x48] sm:$0xff]
        %v704 = vld [vmem:[%s693 + $0x50] sm:$0xff]
        %v705 = vld [vmem:[%s693 + $0x58] sm:$0xff]
        %v706 = vld [vmem:[%s693 + $0x60] sm:$0xff]
        %v707 = vld [vmem:[%s693 + $0x68] sm:$0xff]
        %v708 = vld [vmem:[%s693 + $0x70] sm:$0xff]
        %v709 = vld [vmem:[%s693 + $0x78] sm:$0xff]
        %v710 = vld [vmem:[%s1] sm:$0xff]
        %v711 = vld [vmem:[%s1 + $0x8] sm:$0xff]
        %v712 = vld [vmem:[%s1 + $0x10] sm:$0xff]
        %v713 = vld [vmem:[%s1 + $0x18] sm:$0xff]
        %v714 = vld [vmem:[%s2] sm:$0x1]
        %v716 = vlaneseq
        %v717 = vshrl.u32 %v716, 7
        %v718 = vsub.s32 0, %v717
        %v719 = vrot.slane %v714, %v718
        %vm721 = vcmask 261120
        %v723 = vsel %vm721, %v694, 0
        %v726 = vsel %vm721, %v695, 0
        %v729 = vsel %vm721, %v696, 0
        %v732 = vsel %vm721, %v697, 0
        %v735 = vsel %vm721, %v698, 0
        %v738 = vsel %vm721, %v699, 0
        %v741 = vsel %vm721, %v700, 0
        %v744 = vsel %vm721, %v701, 0
        %v747 = vsel %vm721, %v702, 0
        %v750 = vsel %vm721, %v703, 0
        %v753 = vsel %vm721, %v704, 0
        %v756 = vsel %vm721, %v705, 0
        %v759 = vsel %vm721, %v706, 0
        %v762 = vsel %vm721, %v707, 0
        %v765 = vsel %vm721, %v708, 0
        %v768 = vsel %vm721, %v709, 0
        %770 = vmatprep.subr.mxu0 0.0
        %771 = vmatpush1.msra.mxu0 %v710
        %772 = vmatprep.subr.mxu0 0.0
        %773 = vmatpush1.msra.mxu0 %v711
        %774 = vmatprep.subr.mxu0 0.0
        %775 = vmatpush1.msra.mxu0 %v712
        %776 = vmatprep.subr.mxu0 0.0
        %777 = vmatpush1.msra.mxu0 %v713
        %778 = vmatprep.subr.mxu0 0.0
        %779 = vmatpush1.msra.mxu0 0.0
        %780 = vmatprep.subr.mxu0 0.0
        %781 = vmatpush1.msra.mxu0 0.0
        %782 = vmatprep.subr.mxu0 0.0
        %783 = vmatpush1.msra.mxu0 0.0
        %784 = vmatprep.subr.mxu0 0.0
        %785 = vmatpush1.msra.mxu0 0.0
        %786 = vmatprep.subr.mxu0 0.0
        %787 = vmatpush1.msra.mxu0 0.0
        %788 = vmatprep.subr.mxu0 0.0
        %789 = vmatpush1.msra.mxu0 0.0
        %790 = vmatprep.subr.mxu0 0.0
        %791 = vmatpush1.msra.mxu0 0.0
        %792 = vmatprep.subr.mxu0 0.0
        %793 = vmatpush1.msra.mxu0 0.0
        %794 = vmatprep.subr.mxu0 0.0
        %795 = vmatpush1.msra.mxu0 0.0
        %796 = vmatprep.subr.mxu0 0.0
        %797 = vmatpush1.msra.mxu0 0.0
        %798 = vmatprep.subr.mxu0 0.0
        %799 = vmatpush1.msra.mxu0 0.0
        %800 = vmatprep.subr.mxu0 0.0
        %801 = vmatpush1.msra.mxu0 0.0
        %802 = vmatprep.subr.mxu0 0.0
        %803 = vmatpush1.msra.mxu0 0.0
        %804 = vmatprep.subr.mxu0 0.0
        %805 = vmatpush1.msra.mxu0 0.0
        %806 = vmatprep.subr.mxu0 0.0
        %807 = vmatpush1.msra.mxu0 0.0
        %808 = vmatprep.subr.mxu0 0.0
        %809 = vmatpush1.msra.mxu0 0.0
        %810 = vmatprep.subr.mxu0 0.0
        %811 = vmatpush1.msra.mxu0 0.0
        %812 = vmatprep.subr.mxu0 0.0
        %813 = vmatpush1.msra.mxu0 0.0
        %814 = vmatprep.subr.mxu0 0.0
        %815 = vmatpush1.msra.mxu0 0.0
        %816 = vmatprep.subr.mxu0 0.0
        %817 = vmatpush1.msra.mxu0 0.0
        %818 = vmatprep.subr.mxu0 0.0
        %819 = vmatpush1.msra.mxu0 0.0
        %820 = vmatprep.subr.mxu0 0.0
        %821 = vmatpush1.msra.mxu0 0.0
        %822 = vmatprep.subr.mxu0 0.0
        %823 = vmatpush1.msra.mxu0 0.0
        %824 = vmatprep.subr.mxu0 0.0
        %825 = vmatpush1.msra.mxu0 0.0
        %826 = vmatprep.subr.mxu0 0.0
        %827 = vmatpush1.msra.mxu0 0.0
        %828 = vmatprep.subr.mxu0 0.0
        %829 = vmatpush1.msra.mxu0 0.0
        %830 = vmatprep.subr.mxu0 0.0
        %831 = vmatpush1.msra.mxu0 0.0
        %832 = vmatprep.subr.mxu0 0.0
        %833 = vmatpush1.msra.mxu0 0.0
        %834 = vmatprep.mubr.f32.mxu0 0.0
        %835 = vmatmul.mubr.f32.gmra.mrb[0].mxu0 %v723
        %v836 = vpop.f32.mrb[0].mxu0
        %v837 = vadd.f32 %v719, %v836
        %v838 = vpop.f32.mrb[0].mxu0
        %839 = vmatprep.mubr.f32.mxu0 0.0
        %840 = vmatmul.mubr.f32.gmra.mrb[0].mxu0 %v726
        %v841 = vpop.f32.mrb[0].mxu0
        %v842 = vadd.f32 %v719, %v841
        %v843 = vpop.f32.mrb[0].mxu0
        %844 = vmatprep.mubr.f32.mxu0 0.0
        %845 = vmatmul.mubr.f32.gmra.mrb[0].mxu0 %v729
        %v846 = vpop.f32.mrb[0].mxu0
        %v847 = vadd.f32 %v719, %v846
        %v848 = vpop.f32.mrb[0].mxu0
        %849 = vmatprep.mubr.f32.mxu0 0.0
        %850 = vmatmul.mubr.f32.gmra.mrb[0].mxu0 %v732
        %v851 = vpop.f32.mrb[0].mxu0
        %v852 = vadd.f32 %v719, %v851
        %v853 = vpop.f32.mrb[0].mxu0
        %854 = vmatprep.mubr.f32.mxu0 0.0
        %855 = vmatmul.mubr.f32.gmra.mrb[0].mxu0 %v735
        %v856 = vpop.f32.mrb[0].mxu0
        %v857 = vadd.f32 %v719, %v856
        %v858 = vpop.f32.mrb[0].mxu0
        %859 = vmatprep.mubr.f32.mxu0 0.0
        %860 = vmatmul.mubr.f32.gmra.mrb[0].mxu0 %v738
        %v861 = vpop.f32.mrb[0].mxu0
        %v862 = vadd.f32 %v719, %v861
        %v863 = vpop.f32.mrb[0].mxu0
        %864 = vmatprep.mubr.f32.mxu0 0.0
        %865 = vmatmul.mubr.f32.gmra.mrb[0].mxu0 %v741
        %v866 = vpop.f32.mrb[0].mxu0
        %v867 = vadd.f32 %v719, %v866
        %v868 = vpop.f32.mrb[0].mxu0
        %869 = vmatprep.mubr.f32.mxu0 0.0
        %870 = vmatmul.mubr.f32.gmra.mrb[0].mxu0 %v744
        %v871 = vpop.f32.mrb[0].mxu0
        %v872 = vadd.f32 %v719, %v871
        %v873 = vpop.f32.mrb[0].mxu0
        %874 = vmatprep.mubr.f32.mxu0 0.0
        %875 = vmatmul.mubr.f32.gmra.mrb[0].mxu0 %v747
        %v876 = vpop.f32.mrb[0].mxu0
        %v877 = vadd.f32 %v719, %v876
        %v878 = vpop.f32.mrb[0].mxu0
        %879 = vmatprep.mubr.f32.mxu0 0.0
        %880 = vmatmul.mubr.f32.gmra.mrb[0].mxu0 %v750
        %v881 = vpop.f32.mrb[0].mxu0
        %v882 = vadd.f32 %v719, %v881
        %v883 = vpop.f32.mrb[0].mxu0
        %884 = vmatprep.mubr.f32.mxu0 0.0
        %885 = vmatmul.mubr.f32.gmra.mrb[0].mxu0 %v753
        %v886 = vpop.f32.mrb[0].mxu0
        %v887 = vadd.f32 %v719, %v886
        %v888 = vpop.f32.mrb[0].mxu0
        %889 = vmatprep.mubr.f32.mxu0 0.0
        %890 = vmatmul.mubr.f32.gmra.mrb[0].mxu0 %v756
        %v891 = vpop.f32.mrb[0].mxu0
        %v892 = vadd.f32 %v719, %v891
        %v893 = vpop.f32.mrb[0].mxu0
        %894 = vmatprep.mubr.f32.mxu0 0.0
        %895 = vmatmul.mubr.f32.gmra.mrb[0].mxu0 %v759
        %v896 = vpop.f32.mrb[0].mxu0
        %v897 = vadd.f32 %v719, %v896
        %v898 = vpop.f32.mrb[0].mxu0
        %899 = vmatprep.mubr.f32.mxu0 0.0
        %900 = vmatmul.mubr.f32.gmra.mrb[0].mxu0 %v762
        %v901 = vpop.f32.mrb[0].mxu0
        %v902 = vadd.f32 %v719, %v901
        %v903 = vpop.f32.mrb[0].mxu0
        %904 = vmatprep.mubr.f32.mxu0 0.0
        %905 = vmatmul.mubr.f32.gmra.mrb[0].mxu0 %v765
        %v906 = vpop.f32.mrb[0].mxu0
        %v907 = vadd.f32 %v719, %v906
        %v908 = vpop.f32.mrb[0].mxu0
        %909 = vmatprep.mubr.f32.mxu0 0.0
        %910 = vmatmul.mubr.f32.gmra.mrb[0].mxu0 %v768
        %v911 = vpop.f32.mrb[0].mxu0
        %v912 = vadd.f32 %v719, %v911
        %v913 = vpop.f32.mrb[0].mxu0
        %914 = vdwg.mxu0
        %v915 = vmul.f32 %v837, 0.35355338
        %v916 = vmul.f32 %v842, 0.35355338
        %v917 = vmul.f32 %v847, 0.35355338
        %v918 = vmul.f32 %v852, 0.35355338
        %v919 = vmul.f32 %v857, 0.35355338
        %v920 = vmul.f32 %v862, 0.35355338
        %v921 = vmul.f32 %v867, 0.35355338
        %v922 = vmul.f32 %v872, 0.35355338
        %v923 = vmul.f32 %v877, 0.35355338
        %v924 = vmul.f32 %v882, 0.35355338
        %v925 = vmul.f32 %v887, 0.35355338
        %v926 = vmul.f32 %v892, 0.35355338
        %v927 = vmul.f32 %v897, 0.35355338
        %v928 = vmul.f32 %v902, 0.35355338
        %v929 = vmul.f32 %v907, 0.35355338
        %v930 = vmul.f32 %v912, 0.35355338
        %v931 = vld [vmem:[%s359] sm:$0x1]
        %v933 = vlaneseq
        %v934 = vshrl.u32 %v933, 7
        %v935 = vsub.s32 0, %v934
        %v936 = vrot.slane %v931, %v935
        %v938 = vld [vmem:[#allocation3] sm:$0xff]
        %v939 = vld [vmem:[#allocation3 + $0x8] sm:$0xff]
        %v940 = vld [vmem:[#allocation3 + $0x10] sm:$0xff]
        %v941 = vld [vmem:[#allocation3 + $0x18] sm:$0xff]
        %v942 = vld [vmem:[#allocation3 + $0x20] sm:$0xff]
        %v943 = vld [vmem:[#allocation3 + $0x28] sm:$0xff]
        %v944 = vld [vmem:[#allocation3 + $0x30] sm:$0xff]
        %v945 = vld [vmem:[#allocation3 + $0x38] sm:$0xff]
        %v946 = vld [vmem:[#allocation3 + $0x40] sm:$0xff]
        %v947 = vld [vmem:[#allocation3 + $0x48] sm:$0xff]
        %v948 = vld [vmem:[#allocation3 + $0x50] sm:$0xff]
        %v949 = vld [vmem:[#allocation3 + $0x58] sm:$0xff]
        %v950 = vld [vmem:[#allocation3 + $0x60] sm:$0xff]
        %v951 = vld [vmem:[#allocation3 + $0x68] sm:$0xff]
        %v952 = vld [vmem:[#allocation3 + $0x70] sm:$0xff]
        %v953 = vld [vmem:[#allocation3 + $0x78] sm:$0xff]
        %v954 = vld [vmem:[#allocation2] sm:$0xff]
        %v955 = vld [vmem:[#allocation2 + $0x8] sm:$0xff]
        %v956 = vld [vmem:[#allocation2 + $0x10] sm:$0xff]
        %v957 = vld [vmem:[#allocation2 + $0x18] sm:$0xff]
        %v958 = vld [vmem:[#allocation2 + $0x20] sm:$0xff]
        %v959 = vld [vmem:[#allocation2 + $0x28] sm:$0xff]
        %v960 = vld [vmem:[#allocation2 + $0x30] sm:$0xff]
        %v961 = vld [vmem:[#allocation2 + $0x38] sm:$0xff]
        %v962 = vld [vmem:[#allocation2 + $0x40] sm:$0xff]
        %v963 = vld [vmem:[#allocation2 + $0x48] sm:$0xff]
        %v964 = vld [vmem:[#allocation2 + $0x50] sm:$0xff]
        %v965 = vld [vmem:[#allocation2 + $0x58] sm:$0xff]
        %v966 = vld [vmem:[#allocation2 + $0x60] sm:$0xff]
        %v967 = vld [vmem:[#allocation2 + $0x68] sm:$0xff]
        %v968 = vld [vmem:[#allocation2 + $0x70] sm:$0xff]
        %v969 = vld [vmem:[#allocation2 + $0x78] sm:$0xff]
        %vm970 = vcmask 64512
        %v972 = vsel %vm970, %v915, 0
        %v975 = vsel %vm970, %v916, 0
        %v978 = vsel %vm970, %v917, 0
        %v981 = vsel %vm970, %v918, 0
        %v984 = vsel %vm970, %v919, 0
        %v987 = vsel %vm970, %v920, 0
        %v990 = vsel %vm970, %v921, 0
        %v993 = vsel %vm970, %v922, 0
        %v996 = vsel %vm970, %v923, 0
        %v999 = vsel %vm970, %v924, 0
        %v1002 = vsel %vm970, %v925, 0
        %v1005 = vsel %vm970, %v926, 0
        %v1008 = vsel %vm970, %v927, 0
        %v1011 = vsel %vm970, %v928, 0
        %v1014 = vsel %vm970, %v929, 0
        %v1017 = vsel %vm970, %v930, 0
        %v1020 = vsel %vm970, %v954, 0
        %v1023 = vsel %vm970, %v955, 0
        %v1026 = vsel %vm970, %v956, 0
        %v1029 = vsel %vm970, %v957, 0
        %v1032 = vsel %vm970, %v958, 0
        %v1035 = vsel %vm970, %v959, 0
        %v1038 = vsel %vm970, %v960, 0
        %v1041 = vsel %vm970, %v961, 0
        %v1044 = vsel %vm970, %v962, 0
        %v1047 = vsel %vm970, %v963, 0
        %v1050 = vsel %vm970, %v964, 0
        %v1053 = vsel %vm970, %v965, 0
        %v1056 = vsel %vm970, %v966, 0
        %v1059 = vsel %vm970, %v967, 0
        %v1062 = vsel %vm970, %v968, 0
        %v1065 = vsel %vm970, %v969, 0
        %1067 = vmatprep.subr.mxu0 0.0
        %1068 = vmatpush1.xpose.msra.mxu0 %v1020
        %1069 = vmatprep.subr.mxu0 0.0
        %1070 = vmatpush1.xpose.msra.mxu0 %v1023
        %1071 = vmatprep.subr.mxu0 0.0
        %1072 = vmatpush1.xpose.msra.mxu0 %v1026
        %1073 = vmatprep.subr.mxu0 0.0
        %1074 = vmatpush1.xpose.msra.mxu0 %v1029
        %1075 = vmatprep.subr.mxu0 0.0
        %1076 = vmatpush1.xpose.msra.mxu0 %v1032
        %1077 = vmatprep.subr.mxu0 0.0
        %1078 = vmatpush1.xpose.msra.mxu0 %v1035
        %1079 = vmatprep.subr.mxu0 0.0
        %1080 = vmatpush1.xpose.msra.mxu0 %v1038
        %1081 = vmatprep.subr.mxu0 0.0
        %1082 = vmatpush1.xpose.msra.mxu0 %v1041
        %1083 = vmatprep.subr.mxu0 0.0
        %1084 = vmatpush1.xpose.msra.mxu0 %v1044
        %1085 = vmatprep.subr.mxu0 0.0
        %1086 = vmatpush1.xpose.msra.mxu0 %v1047
        %1087 = vmatprep.subr.mxu0 0.0
        %1088 = vmatpush1.xpose.msra.mxu0 %v1050
        %1089 = vmatprep.subr.mxu0 0.0
        %1090 = vmatpush1.xpose.msra.mxu0 %v1053
        %1091 = vmatprep.subr.mxu0 0.0
        %1092 = vmatpush1.xpose.msra.mxu0 %v1056
        %1093 = vmatprep.subr.mxu0 0.0
        %1094 = vmatpush1.xpose.msra.mxu0 %v1059
        %1095 = vmatprep.subr.mxu0 0.0
        %1096 = vmatpush1.xpose.msra.mxu0 %v1062
        %1097 = vmatprep.subr.mxu0 0.0
        %1098 = vmatpush1.xpose.msra.mxu0 %v1065
        %1099 = vmatprep.subr.mxu0 0.0
        %1100 = vmatpush1.xpose.msra.mxu0 0.0
        %1101 = vmatprep.subr.mxu0 0.0
        %1102 = vmatpush1.xpose.msra.mxu0 0.0
        %1103 = vmatprep.subr.mxu0 0.0
        %1104 = vmatpush1.xpose.msra.mxu0 0.0
        %1105 = vmatprep.subr.mxu0 0.0
        %1106 = vmatpush1.xpose.msra.mxu0 0.0
        %1107 = vmatprep.subr.mxu0 0.0
        %1108 = vmatpush1.xpose.msra.mxu0 0.0
        %1109 = vmatprep.subr.mxu0 0.0
        %1110 = vmatpush1.xpose.msra.mxu0 0.0
        %1111 = vmatprep.subr.mxu0 0.0
        %1112 = vmatpush1.xpose.msra.mxu0 0.0
        %1113 = vmatprep.subr.mxu0 0.0
        %1114 = vmatpush1.xpose.msra.mxu0 0.0
        %1115 = vmatprep.subr.mxu0 0.0
        %1116 = vmatpush1.xpose.msra.mxu0 0.0
        %1117 = vmatprep.subr.mxu0 0.0
        %1118 = vmatpush1.xpose.msra.mxu0 0.0
        %1119 = vmatprep.subr.mxu0 0.0
        %1120 = vmatpush1.xpose.msra.mxu0 0.0
        %1121 = vmatprep.subr.mxu0 0.0
        %1122 = vmatpush1.xpose.msra.mxu0 0.0
        %1123 = vmatprep.subr.mxu0 0.0
        %1124 = vmatpush1.xpose.msra.mxu0 0.0
        %1125 = vmatprep.subr.mxu0 0.0
        %1126 = vmatpush1.xpose.msra.mxu0 0.0
        %1127 = vmatprep.subr.mxu0 0.0
        %1128 = vmatpush1.xpose.msra.mxu0 0.0
        %1129 = vmatprep.subr.mxu0 0.0
        %1130 = vmatpush1.xpose.msra.mxu0 0.0
        %1131 = vmatprep.mubr.f32.mxu0 0.0
        %1132 = vmatmul.mubr.f32.gmra.mrb[0].mxu0 %v972
        %v1133 = vpop.f32.mrb[0].mxu0
        %v1134 = vadd.f32 %v936, %v1133
        %v1135 = vpop.f32.mrb[0].mxu0
        %1136 = vmatprep.mubr.f32.mxu0 0.0
        %1137 = vmatmul.mubr.f32.gmra.mrb[0].mxu0 %v975
        %v1138 = vpop.f32.mrb[0].mxu0
        %v1139 = vadd.f32 %v936, %v1138
        %v1140 = vpop.f32.mrb[0].mxu0
        %1141 = vmatprep.mubr.f32.mxu0 0.0
        %1142 = vmatmul.mubr.f32.gmra.mrb[0].mxu0 %v978
        %v1143 = vpop.f32.mrb[0].mxu0
        %v1144 = vadd.f32 %v936, %v1143
        %v1145 = vpop.f32.mrb[0].mxu0
        %1146 = vmatprep.mubr.f32.mxu0 0.0
        %1147 = vmatmul.mubr.f32.gmra.mrb[0].mxu0 %v981
        %v1148 = vpop.f32.mrb[0].mxu0
        %v1149 = vadd.f32 %v936, %v1148
        %v1150 = vpop.f32.mrb[0].mxu0
        %1151 = vmatprep.mubr.f32.mxu0 0.0
        %1152 = vmatmul.mubr.f32.gmra.mrb[0].mxu0 %v984
        %v1153 = vpop.f32.mrb[0].mxu0
        %v1154 = vadd.f32 %v936, %v1153
        %v1155 = vpop.f32.mrb[0].mxu0
        %1156 = vmatprep.mubr.f32.mxu0 0.0
        %1157 = vmatmul.mubr.f32.gmra.mrb[0].mxu0 %v987
        %v1158 = vpop.f32.mrb[0].mxu0
        %v1159 = vadd.f32 %v936, %v1158
        %v1160 = vpop.f32.mrb[0].mxu0
        %1161 = vmatprep.mubr.f32.mxu0 0.0
        %1162 = vmatmul.mubr.f32.gmra.mrb[0].mxu0 %v990
        %v1163 = vpop.f32.mrb[0].mxu0
        %v1164 = vadd.f32 %v936, %v1163
        %v1165 = vpop.f32.mrb[0].mxu0
        %1166 = vmatprep.mubr.f32.mxu0 0.0
        %1167 = vmatmul.mubr.f32.gmra.mrb[0].mxu0 %v993
        %v1168 = vpop.f32.mrb[0].mxu0
        %v1169 = vadd.f32 %v936, %v1168
        %v1170 = vpop.f32.mrb[0].mxu0
        %1171 = vmatprep.mubr.f32.mxu0 0.0
        %1172 = vmatmul.mubr.f32.gmra.mrb[0].mxu0 %v996
        %v1173 = vpop.f32.mrb[0].mxu0
        %v1174 = vadd.f32 %v936, %v1173
        %v1175 = vpop.f32.mrb[0].mxu0
        %1176 = vmatprep.mubr.f32.mxu0 0.0
        %1177 = vmatmul.mubr.f32.gmra.mrb[0].mxu0 %v999
        %v1178 = vpop.f32.mrb[0].mxu0
        %v1179 = vadd.f32 %v936, %v1178
        %v1180 = vpop.f32.mrb[0].mxu0
        %1181 = vmatprep.mubr.f32.mxu0 0.0
        %1182 = vmatmul.mubr.f32.gmra.mrb[0].mxu0 %v1002
        %v1183 = vpop.f32.mrb[0].mxu0
        %v1184 = vadd.f32 %v936, %v1183
        %v1185 = vpop.f32.mrb[0].mxu0
        %1186 = vmatprep.mubr.f32.mxu0 0.0
        %1187 = vmatmul.mubr.f32.gmra.mrb[0].mxu0 %v1005
        %v1188 = vpop.f32.mrb[0].mxu0
        %v1189 = vadd.f32 %v936, %v1188
        %v1190 = vpop.f32.mrb[0].mxu0
        %1191 = vmatprep.mubr.f32.mxu0 0.0
        %1192 = vmatmul.mubr.f32.gmra.mrb[0].mxu0 %v1008
        %v1193 = vpop.f32.mrb[0].mxu0
        %v1194 = vadd.f32 %v936, %v1193
        %v1195 = vpop.f32.mrb[0].mxu0
        %1196 = vmatprep.mubr.f32.mxu0 0.0
        %1197 = vmatmul.mubr.f32.gmra.mrb[0].mxu0 %v1011
        %v1198 = vpop.f32.mrb[0].mxu0
        %v1199 = vadd.f32 %v936, %v1198
        %v1200 = vpop.f32.mrb[0].mxu0
        %1201 = vmatprep.mubr.f32.mxu0 0.0
        %1202 = vmatmul.mubr.f32.gmra.mrb[0].mxu0 %v1014
        %v1203 = vpop.f32.mrb[0].mxu0
        %v1204 = vadd.f32 %v936, %v1203
        %v1205 = vpop.f32.mrb[0].mxu0
        %1206 = vmatprep.mubr.f32.mxu0 0.0
        %1207 = vmatmul.mubr.f32.gmra.mrb[0].mxu0 %v1017
        %v1208 = vpop.f32.mrb[0].mxu0
        %v1209 = vadd.f32 %v936, %v1208
        %v1210 = vpop.f32.mrb[0].mxu0
        %1211 = vdwg.mxu0
        %1212 = vmax.xlane.f32.xlu0 %v1134
        %v1213 = vpop.xlane.xlu0 %1212
        %1214 = vmax.xlane.f32.xlu0 %v1139
        %v1215 = vpop.xlane.xlu0 %1214
        %1216 = vmax.xlane.f32.xlu0 %v1144
        %v1217 = vpop.xlane.xlu0 %1216
        %1218 = vmax.xlane.f32.xlu0 %v1149
        %v1219 = vpop.xlane.xlu0 %1218
        %1220 = vmax.xlane.f32.xlu0 %v1154
        %v1221 = vpop.xlane.xlu0 %1220
        %1222 = vmax.xlane.f32.xlu0 %v1159
        %v1223 = vpop.xlane.xlu0 %1222
        %1224 = vmax.xlane.f32.xlu0 %v1164
        %v1225 = vpop.xlane.xlu0 %1224
        %1226 = vmax.xlane.f32.xlu0 %v1169
        %v1227 = vpop.xlane.xlu0 %1226
        %1228 = vmax.xlane.f32.xlu0 %v1174
        %v1229 = vpop.xlane.xlu0 %1228
        %1230 = vmax.xlane.f32.xlu0 %v1179
        %v1231 = vpop.xlane.xlu0 %1230
        %1232 = vmax.xlane.f32.xlu0 %v1184
        %v1233 = vpop.xlane.xlu0 %1232
        %1234 = vmax.xlane.f32.xlu0 %v1189
        %v1235 = vpop.xlane.xlu0 %1234
        %1236 = vmax.xlane.f32.xlu0 %v1194
        %v1237 = vpop.xlane.xlu0 %1236
        %1238 = vmax.xlane.f32.xlu0 %v1199
        %v1239 = vpop.xlane.xlu0 %1238
        %1240 = vmax.xlane.f32.xlu0 %v1204
        %v1241 = vpop.xlane.xlu0 %1240
        %1242 = vmax.xlane.f32.xlu0 %v1209
        %v1243 = vpop.xlane.xlu0 %1242
        %v1244 = vsub.f32 %v1134, %v1213
        %v1245 = vsub.f32 %v1139, %v1215
        %v1246 = vsub.f32 %v1144, %v1217
        %v1247 = vsub.f32 %v1149, %v1219
        %v1248 = vsub.f32 %v1154, %v1221
        %v1249 = vsub.f32 %v1159, %v1223
        %v1250 = vsub.f32 %v1164, %v1225
        %v1251 = vsub.f32 %v1169, %v1227
        %v1252 = vsub.f32 %v1174, %v1229
        %v1253 = vsub.f32 %v1179, %v1231
        %v1254 = vsub.f32 %v1184, %v1233
        %v1255 = vsub.f32 %v1189, %v1235
        %v1256 = vsub.f32 %v1194, %v1237
        %v1257 = vsub.f32 %v1199, %v1239
        %v1258 = vsub.f32 %v1204, %v1241
        %v1259 = vsub.f32 %v1209, %v1243
        %v1260 = vmul.f32 %v1244, 1.442695
        %v1261 = vpow.pop %v1260
        %v1262 = vmul.f32 %v1245, 1.442695
        %v1263 = vpow.pop %v1262
        %v1264 = vmul.f32 %v1246, 1.442695
        %v1265 = vpow.pop %v1264
        %v1266 = vmul.f32 %v1247, 1.442695
        %v1267 = vpow.pop %v1266
        %v1268 = vmul.f32 %v1248, 1.442695
        %v1269 = vpow.pop %v1268
        %v1270 = vmul.f32 %v1249, 1.442695
        %v1271 = vpow.pop %v1270
        %v1272 = vmul.f32 %v1250, 1.442695
        %v1273 = vpow.pop %v1272
        %v1274 = vmul.f32 %v1251, 1.442695
        %v1275 = vpow.pop %v1274
        %v1276 = vmul.f32 %v1252, 1.442695
        %v1277 = vpow.pop %v1276
        %v1278 = vmul.f32 %v1253, 1.442695
        %v1279 = vpow.pop %v1278
        %v1280 = vmul.f32 %v1254, 1.442695
        %v1281 = vpow.pop %v1280
        %v1282 = vmul.f32 %v1255, 1.442695
        %v1283 = vpow.pop %v1282
        %v1284 = vmul.f32 %v1256, 1.442695
        %v1285 = vpow.pop %v1284
        %v1286 = vmul.f32 %v1257, 1.442695
        %v1287 = vpow.pop %v1286
        %v1288 = vmul.f32 %v1258, 1.442695
        %v1289 = vpow.pop %v1288
        %v1290 = vmul.f32 %v1259, 1.442695
        %v1291 = vpow.pop %v1290
        %1292 = vadd.xlane.f32.xlu0 %v1261
        %v1293 = vpop.xlane.xlu0 %1292
        %1294 = vadd.xlane.f32.xlu0 %v1263
        %v1295 = vpop.xlane.xlu0 %1294
        %1296 = vadd.xlane.f32.xlu0 %v1265
        %v1297 = vpop.xlane.xlu0 %1296
        %1298 = vadd.xlane.f32.xlu0 %v1267
        %v1299 = vpop.xlane.xlu0 %1298
        %1300 = vadd.xlane.f32.xlu0 %v1269
        %v1301 = vpop.xlane.xlu0 %1300
        %1302 = vadd.xlane.f32.xlu0 %v1271
        %v1303 = vpop.xlane.xlu0 %1302
        %1304 = vadd.xlane.f32.xlu0 %v1273
        %v1305 = vpop.xlane.xlu0 %1304
        %1306 = vadd.xlane.f32.xlu0 %v1275
        %v1307 = vpop.xlane.xlu0 %1306
        %1308 = vadd.xlane.f32.xlu0 %v1277
        %v1309 = vpop.xlane.xlu0 %1308
        %1310 = vadd.xlane.f32.xlu0 %v1279
        %v1311 = vpop.xlane.xlu0 %1310
        %1312 = vadd.xlane.f32.xlu0 %v1281
        %v1313 = vpop.xlane.xlu0 %1312
        %1314 = vadd.xlane.f32.xlu0 %v1283
        %v1315 = vpop.xlane.xlu0 %1314
        %1316 = vadd.xlane.f32.xlu0 %v1285
        %v1317 = vpop.xlane.xlu0 %1316
        %1318 = vadd.xlane.f32.xlu0 %v1287
        %v1319 = vpop.xlane.xlu0 %1318
        %1320 = vadd.xlane.f32.xlu0 %v1289
        %v1321 = vpop.xlane.xlu0 %1320
        %1322 = vadd.xlane.f32.xlu0 %v1291
        %v1323 = vpop.xlane.xlu0 %1322
        %v1324 = vrcp.pop %v1293
        %v1325 = vmul.f32 1.0, %v1324
        %v1326 = vrcp.pop %v1295
        %v1327 = vmul.f32 1.0, %v1326
        %v1328 = vrcp.pop %v1297
        %v1329 = vmul.f32 1.0, %v1328
        %v1330 = vrcp.pop %v1299
        %v1331 = vmul.f32 1.0, %v1330
        %v1332 = vrcp.pop %v1301
        %v1333 = vmul.f32 1.0, %v1332
        %v1334 = vrcp.pop %v1303
        %v1335 = vmul.f32 1.0, %v1334
        %v1336 = vrcp.pop %v1305
        %v1337 = vmul.f32 1.0, %v1336
        %v1338 = vrcp.pop %v1307
        %v1339 = vmul.f32 1.0, %v1338
        %v1340 = vrcp.pop %v1309
        %v1341 = vmul.f32 1.0, %v1340
        %v1342 = vrcp.pop %v1311
        %v1343 = vmul.f32 1.0, %v1342
        %v1344 = vrcp.pop %v1313
        %v1345 = vmul.f32 1.0, %v1344
        %v1346 = vrcp.pop %v1315
        %v1347 = vmul.f32 1.0, %v1346
        %v1348 = vrcp.pop %v1317
        %v1349 = vmul.f32 1.0, %v1348
        %v1350 = vrcp.pop %v1319
        %v1351 = vmul.f32 1.0, %v1350
        %v1352 = vrcp.pop %v1321
        %v1353 = vmul.f32 1.0, %v1352
        %v1354 = vrcp.pop %v1323
        %v1355 = vmul.f32 1.0, %v1354
        %v1356 = vmul.f32 %v1261, %v1325
        %v1357 = vmul.f32 %v1263, %v1327
        %v1358 = vmul.f32 %v1265, %v1329
        %v1359 = vmul.f32 %v1267, %v1331
        %v1360 = vmul.f32 %v1269, %v1333
        %v1361 = vmul.f32 %v1271, %v1335
        %v1362 = vmul.f32 %v1273, %v1337
        %v1363 = vmul.f32 %v1275, %v1339
        %v1364 = vmul.f32 %v1277, %v1341
        %v1365 = vmul.f32 %v1279, %v1343
        %v1366 = vmul.f32 %v1281, %v1345
        %v1367 = vmul.f32 %v1283, %v1347
        %v1368 = vmul.f32 %v1285, %v1349
        %v1369 = vmul.f32 %v1287, %v1351
        %v1370 = vmul.f32 %v1289, %v1353
        %v1371 = vmul.f32 %v1291, %v1355
        %1372 = vmatprep.subr.mxu0 0.0
        %1373 = vmatpush1.msra.mxu0 %v938
        %1374 = vmatprep.subr.mxu0 0.0
        %1375 = vmatpush1.msra.mxu0 %v939
        %1376 = vmatprep.subr.mxu0 0.0
        %1377 = vmatpush1.msra.mxu0 %v940
        %1378 = vmatprep.subr.mxu0 0.0
        %1379 = vmatpush1.msra.mxu0 %v941
        %1380 = vmatprep.subr.mxu0 0.0
        %1381 = vmatpush1.msra.mxu0 %v942
        %1382 = vmatprep.subr.mxu0 0.0
        %1383 = vmatpush1.msra.mxu0 %v943
        %1384 = vmatprep.subr.mxu0 0.0
        %1385 = vmatpush1.msra.mxu0 %v944
        %1386 = vmatprep.subr.mxu0 0.0
        %1387 = vmatpush1.msra.mxu0 %v945
        %1388 = vmatprep.subr.mxu0 0.0
        %1389 = vmatpush1.msra.mxu0 %v946
        %1390 = vmatprep.subr.mxu0 0.0
        %1391 = vmatpush1.msra.mxu0 %v947
        %1392 = vmatprep.subr.mxu0 0.0
        %1393 = vmatpush1.msra.mxu0 %v948
        %1394 = vmatprep.subr.mxu0 0.0
        %1395 = vmatpush1.msra.mxu0 %v949
        %1396 = vmatprep.subr.mxu0 0.0
        %1397 = vmatpush1.msra.mxu0 %v950
        %1398 = vmatprep.subr.mxu0 0.0
        %1399 = vmatpush1.msra.mxu0 %v951
        %1400 = vmatprep.subr.mxu0 0.0
        %1401 = vmatpush1.msra.mxu0 %v952
        %1402 = vmatprep.subr.mxu0 0.0
        %1403 = vmatpush1.msra.mxu0 %v953
        %1404 = vmatprep.subr.mxu0 0.0
        %1405 = vmatpush1.msra.mxu0 0.0
        %1406 = vmatprep.subr.mxu0 0.0
        %1407 = vmatpush1.msra.mxu0 0.0
        %1408 = vmatprep.subr.mxu0 0.0
        %1409 = vmatpush1.msra.mxu0 0.0
        %1410 = vmatprep.subr.mxu0 0.0
        %1411 = vmatpush1.msra.mxu0 0.0
        %1412 = vmatprep.subr.mxu0 0.0
        %1413 = vmatpush1.msra.mxu0 0.0
        %1414 = vmatprep.subr.mxu0 0.0
        %1415 = vmatpush1.msra.mxu0 0.0
        %1416 = vmatprep.subr.mxu0 0.0
        %1417 = vmatpush1.msra.mxu0 0.0
        %1418 = vmatprep.subr.mxu0 0.0
        %1419 = vmatpush1.msra.mxu0 0.0
        %1420 = vmatprep.subr.mxu0 0.0
        %1421 = vmatpush1.msra.mxu0 0.0
        %1422 = vmatprep.subr.mxu0 0.0
        %1423 = vmatpush1.msra.mxu0 0.0
        %1424 = vmatprep.subr.mxu0 0.0
        %1425 = vmatpush1.msra.mxu0 0.0
        %1426 = vmatprep.subr.mxu0 0.0
        %1427 = vmatpush1.msra.mxu0 0.0
        %1428 = vmatprep.subr.mxu0 0.0
        %1429 = vmatpush1.msra.mxu0 0.0
        %1430 = vmatprep.subr.mxu0 0.0
        %1431 = vmatpush1.msra.mxu0 0.0
        %1432 = vmatprep.subr.mxu0 0.0
        %1433 = vmatpush1.msra.mxu0 0.0
        %1434 = vmatprep.subr.mxu0 0.0
        %1435 = vmatpush1.msra.mxu0 0.0
        %1436 = vmatprep.mubr.f32.mxu0 0.0
        %1437 = vmatmul.mubr.f32.gmra.mrb[0].mxu0 %v1356
        %v1438 = vpop.f32.mrb[0].mxu0
        %v1439 = vadd.f32 0.0, %v1438
        %v1440 = vpop.f32.mrb[0].mxu0
        %1441 = vmatprep.mubr.f32.mxu0 0.0
        %1442 = vmatmul.mubr.f32.gmra.mrb[0].mxu0 %v1357
        %v1443 = vpop.f32.mrb[0].mxu0
        %v1444 = vadd.f32 0.0, %v1443
        %v1445 = vpop.f32.mrb[0].mxu0
        %1446 = vmatprep.mubr.f32.mxu0 0.0
        %1447 = vmatmul.mubr.f32.gmra.mrb[0].mxu0 %v1358
        %v1448 = vpop.f32.mrb[0].mxu0
        %v1449 = vadd.f32 0.0, %v1448
        %v1450 = vpop.f32.mrb[0].mxu0
        %1451 = vmatprep.mubr.f32.mxu0 0.0
        %1452 = vmatmul.mubr.f32.gmra.mrb[0].mxu0 %v1359
        %v1453 = vpop.f32.mrb[0].mxu0
        %v1454 = vadd.f32 0.0, %v1453
        %v1455 = vpop.f32.mrb[0].mxu0
        %1456 = vmatprep.mubr.f32.mxu0 0.0
        %1457 = vmatmul.mubr.f32.gmra.mrb[0].mxu0 %v1360
        %v1458 = vpop.f32.mrb[0].mxu0
        %v1459 = vadd.f32 0.0, %v1458
        %v1460 = vpop.f32.mrb[0].mxu0
        %1461 = vmatprep.mubr.f32.mxu0 0.0
        %1462 = vmatmul.mubr.f32.gmra.mrb[0].mxu0 %v1361
        %v1463 = vpop.f32.mrb[0].mxu0
        %v1464 = vadd.f32 0.0, %v1463
        %v1465 = vpop.f32.mrb[0].mxu0
        %1466 = vmatprep.mubr.f32.mxu0 0.0
        %1467 = vmatmul.mubr.f32.gmra.mrb[0].mxu0 %v1362
        %v1468 = vpop.f32.mrb[0].mxu0
        %v1469 = vadd.f32 0.0, %v1468
        %v1470 = vpop.f32.mrb[0].mxu0
        %1471 = vmatprep.mubr.f32.mxu0 0.0
        %1472 = vmatmul.mubr.f32.gmra.mrb[0].mxu0 %v1363
        %v1473 = vpop.f32.mrb[0].mxu0
        %v1474 = vadd.f32 0.0, %v1473
        %v1475 = vpop.f32.mrb[0].mxu0
        %1476 = vmatprep.mubr.f32.mxu0 0.0
        %1477 = vmatmul.mubr.f32.gmra.mrb[0].mxu0 %v1364
        %v1478 = vpop.f32.mrb[0].mxu0
        %v1479 = vadd.f32 0.0, %v1478
        %v1480 = vpop.f32.mrb[0].mxu0
        %1481 = vmatprep.mubr.f32.mxu0 0.0
        %1482 = vmatmul.mubr.f32.gmra.mrb[0].mxu0 %v1365
        %v1483 = vpop.f32.mrb[0].mxu0
        %v1484 = vadd.f32 0.0, %v1483
        %v1485 = vpop.f32.mrb[0].mxu0
        %1486 = vmatprep.mubr.f32.mxu0 0.0
        %1487 = vmatmul.mubr.f32.gmra.mrb[0].mxu0 %v1366
        %v1488 = vpop.f32.mrb[0].mxu0
        %v1489 = vadd.f32 0.0, %v1488
        %v1490 = vpop.f32.mrb[0].mxu0
        %1491 = vmatprep.mubr.f32.mxu0 0.0
        %1492 = vmatmul.mubr.f32.gmra.mrb[0].mxu0 %v1367
        %v1493 = vpop.f32.mrb[0].mxu0
        %v1494 = vadd.f32 0.0, %v1493
        %v1495 = vpop.f32.mrb[0].mxu0
        %1496 = vmatprep.mubr.f32.mxu0 0.0
        %1497 = vmatmul.mubr.f32.gmra.mrb[0].mxu0 %v1368
        %v1498 = vpop.f32.mrb[0].mxu0
        %v1499 = vadd.f32 0.0, %v1498
        %v1500 = vpop.f32.mrb[0].mxu0
        %1501 = vmatprep.mubr.f32.mxu0 0.0
        %1502 = vmatmul.mubr.f32.gmra.mrb[0].mxu0 %v1369
        %v1503 = vpop.f32.mrb[0].mxu0
        %v1504 = vadd.f32 0.0, %v1503
        %v1505 = vpop.f32.mrb[0].mxu0
        %1506 = vmatprep.mubr.f32.mxu0 0.0
        %1507 = vmatmul.mubr.f32.gmra.mrb[0].mxu0 %v1370
        %v1508 = vpop.f32.mrb[0].mxu0
        %v1509 = vadd.f32 0.0, %v1508
        %v1510 = vpop.f32.mrb[0].mxu0
        %1511 = vmatprep.mubr.f32.mxu0 0.0
        %1512 = vmatmul.mubr.f32.gmra.mrb[0].mxu0 %v1371
        %v1513 = vpop.f32.mrb[0].mxu0
        %v1514 = vadd.f32 0.0, %v1513
        %v1515 = vpop.f32.mrb[0].mxu0
        %1516 = vdwg.mxu0
        %1517 = vst.msk [vmem:[%s368] sm:$0xff] %vm970, %v1439
        %1518 = vst.msk [vmem:[%s368 + $0x8] sm:$0xff] %vm970, %v1444
        %1519 = vst.msk [vmem:[%s368 + $0x10] sm:$0xff] %vm970, %v1449
        %1520 = vst.msk [vmem:[%s368 + $0x18] sm:$0xff] %vm970, %v1454
        %1521 = vst.msk [vmem:[%s368 + $0x20] sm:$0xff] %vm970, %v1459
        %1522 = vst.msk [vmem:[%s368 + $0x28] sm:$0xff] %vm970, %v1464
        %1523 = vst.msk [vmem:[%s368 + $0x30] sm:$0xff] %vm970, %v1469
        %1524 = vst.msk [vmem:[%s368 + $0x38] sm:$0xff] %vm970, %v1474
        %1525 = vst.msk [vmem:[%s368 + $0x40] sm:$0xff] %vm970, %v1479
        %1526 = vst.msk [vmem:[%s368 + $0x48] sm:$0xff] %vm970, %v1484
        %1527 = vst.msk [vmem:[%s368 + $0x50] sm:$0xff] %vm970, %v1489
        %1528 = vst.msk [vmem:[%s368 + $0x58] sm:$0xff] %vm970, %v1494
        %1529 = vst.msk [vmem:[%s368 + $0x60] sm:$0xff] %vm970, %v1499
        %1530 = vst.msk [vmem:[%s368 + $0x68] sm:$0xff] %vm970, %v1504
        %1531 = vst.msk [vmem:[%s368 + $0x70] sm:$0xff] %vm970, %v1509
        %1532 = vst.msk [vmem:[%s368 + $0x78] sm:$0xff] %vm970, %v1514
        %v1533 = vld [vmem:[#allocation3] sm:$0xff]
        %v1534 = vld [vmem:[#allocation3 + $0x8] sm:$0xff]
        %v1535 = vld [vmem:[#allocation3 + $0x10] sm:$0xff]
        %v1536 = vld [vmem:[#allocation3 + $0x18] sm:$0xff]
        %v1537 = vld [vmem:[#allocation3 + $0x20] sm:$0xff]
        %v1538 = vld [vmem:[#allocation3 + $0x28] sm:$0xff]
        %v1539 = vld [vmem:[#allocation3 + $0x30] sm:$0xff]
        %v1540 = vld [vmem:[#allocation3 + $0x38] sm:$0xff]
        %v1541 = vld [vmem:[#allocation3 + $0x40] sm:$0xff]
        %v1542 = vld [vmem:[#allocation3 + $0x48] sm:$0xff]
        %v1543 = vld [vmem:[#allocation3 + $0x50] sm:$0xff]
        %v1544 = vld [vmem:[#allocation3 + $0x58] sm:$0xff]
        %v1545 = vld [vmem:[#allocation3 + $0x60] sm:$0xff]
        %v1546 = vld [vmem:[#allocation3 + $0x68] sm:$0xff]
        %v1547 = vld [vmem:[#allocation3 + $0x70] sm:$0xff]
        %v1548 = vld [vmem:[#allocation3 + $0x78] sm:$0xff]
        %v1549 = vld [vmem:[#allocation2] sm:$0xff]
        %v1550 = vld [vmem:[#allocation2 + $0x8] sm:$0xff]
        %v1551 = vld [vmem:[#allocation2 + $0x10] sm:$0xff]
        %v1552 = vld [vmem:[#allocation2 + $0x18] sm:$0xff]
        %v1553 = vld [vmem:[#allocation2 + $0x20] sm:$0xff]
        %v1554 = vld [vmem:[#allocation2 + $0x28] sm:$0xff]
        %v1555 = vld [vmem:[#allocation2 + $0x30] sm:$0xff]
        %v1556 = vld [vmem:[#allocation2 + $0x38] sm:$0xff]
        %v1557 = vld [vmem:[#allocation2 + $0x40] sm:$0xff]
        %v1558 = vld [vmem:[#allocation2 + $0x48] sm:$0xff]
        %v1559 = vld [vmem:[#allocation2 + $0x50] sm:$0xff]
        %v1560 = vld [vmem:[#allocation2 + $0x58] sm:$0xff]
        %v1561 = vld [vmem:[#allocation2 + $0x60] sm:$0xff]
        %v1562 = vld [vmem:[#allocation2 + $0x68] sm:$0xff]
        %v1563 = vld [vmem:[#allocation2 + $0x70] sm:$0xff]
        %v1564 = vld [vmem:[#allocation2 + $0x78] sm:$0xff]
        %1565 = vrot.lane.b32.xlu0 %v915, 120
        %v1566 = vpop.permute.xlu0 %1565
        %1567 = vrot.lane.b32.xlu0 %v916, 120
        %v1568 = vpop.permute.xlu0 %1567
        %1569 = vrot.lane.b32.xlu0 %v917, 120
        %v1570 = vpop.permute.xlu0 %1569
        %1571 = vrot.lane.b32.xlu0 %v918, 120
        %v1572 = vpop.permute.xlu0 %1571
        %1573 = vrot.lane.b32.xlu0 %v919, 120
        %v1574 = vpop.permute.xlu0 %1573
        %1575 = vrot.lane.b32.xlu0 %v920, 120
        %v1576 = vpop.permute.xlu0 %1575
        %1577 = vrot.lane.b32.xlu0 %v921, 120
        %v1578 = vpop.permute.xlu0 %1577
        %1579 = vrot.lane.b32.xlu0 %v922, 120
        %v1580 = vpop.permute.xlu0 %1579
        %1581 = vrot.lane.b32.xlu0 %v923, 120
        %v1582 = vpop.permute.xlu0 %1581
        %1583 = vrot.lane.b32.xlu0 %v924, 120
        %v1584 = vpop.permute.xlu0 %1583
        %1585 = vrot.lane.b32.xlu0 %v925, 120
        %v1586 = vpop.permute.xlu0 %1585
        %1587 = vrot.lane.b32.xlu0 %v926, 120
        %v1588 = vpop.permute.xlu0 %1587
        %1589 = vrot.lane.b32.xlu0 %v927, 120
        %v1590 = vpop.permute.xlu0 %1589
        %1591 = vrot.lane.b32.xlu0 %v928, 120
        %v1592 = vpop.permute.xlu0 %1591
        %1593 = vrot.lane.b32.xlu0 %v929, 120
        %v1594 = vpop.permute.xlu0 %1593
        %1595 = vrot.lane.b32.xlu0 %v930, 120
        %v1596 = vpop.permute.xlu0 %1595
        %1613 = vrot.lane.b32.xlu0 %v1549, 120
        %v1614 = vpop.permute.xlu0 %1613
        %1615 = vrot.lane.b32.xlu0 %v1550, 120
        %v1616 = vpop.permute.xlu0 %1615
        %1617 = vrot.lane.b32.xlu0 %v1551, 120
        %v1618 = vpop.permute.xlu0 %1617
        %1619 = vrot.lane.b32.xlu0 %v1552, 120
        %v1620 = vpop.permute.xlu0 %1619
        %1621 = vrot.lane.b32.xlu0 %v1553, 120
        %v1622 = vpop.permute.xlu0 %1621
        %1623 = vrot.lane.b32.xlu0 %v1554, 120
        %v1624 = vpop.permute.xlu0 %1623
        %1625 = vrot.lane.b32.xlu0 %v1555, 120
        %v1626 = vpop.permute.xlu0 %1625
        %1627 = vrot.lane.b32.xlu0 %v1556, 120
        %v1628 = vpop.permute.xlu0 %1627
        %1629 = vrot.lane.b32.xlu0 %v1557, 120
        %v1630 = vpop.permute.xlu0 %1629
        %1631 = vrot.lane.b32.xlu0 %v1558, 120
        %v1632 = vpop.permute.xlu0 %1631
        %1633 = vrot.lane.b32.xlu0 %v1559, 120
        %v1634 = vpop.permute.xlu0 %1633
        %1635 = vrot.lane.b32.xlu0 %v1560, 120
        %v1636 = vpop.permute.xlu0 %1635
        %1637 = vrot.lane.b32.xlu0 %v1561, 120
        %v1638 = vpop.permute.xlu0 %1637
        %1639 = vrot.lane.b32.xlu0 %v1562, 120
        %v1640 = vpop.permute.xlu0 %1639
        %1641 = vrot.lane.b32.xlu0 %v1563, 120
        %v1642 = vpop.permute.xlu0 %1641
        %1643 = vrot.lane.b32.xlu0 %v1564, 120
        %v1644 = vpop.permute.xlu0 %1643
        %v1645 = vsel %vm970, %v1566, 0
        %v1647 = vsel %vm970, %v1568, 0
        %v1649 = vsel %vm970, %v1570, 0
        %v1651 = vsel %vm970, %v1572, 0
        %v1653 = vsel %vm970, %v1574, 0
        %v1655 = vsel %vm970, %v1576, 0
        %v1657 = vsel %vm970, %v1578, 0
        %v1659 = vsel %vm970, %v1580, 0
        %v1661 = vsel %vm970, %v1582, 0
        %v1663 = vsel %vm970, %v1584, 0
        %v1665 = vsel %vm970, %v1586, 0
        %v1667 = vsel %vm970, %v1588, 0
        %v1669 = vsel %vm970, %v1590, 0
        %v1671 = vsel %vm970, %v1592, 0
        %v1673 = vsel %vm970, %v1594, 0
        %v1675 = vsel %vm970, %v1596, 0
        %v1677 = vsel %vm970, %v1614, 0
        %v1679 = vsel %vm970, %v1616, 0
        %v1681 = vsel %vm970, %v1618, 0
        %v1683 = vsel %vm970, %v1620, 0
        %v1685 = vsel %vm970, %v1622, 0
        %v1687 = vsel %vm970, %v1624, 0
        %v1689 = vsel %vm970, %v1626, 0
        %v1691 = vsel %vm970, %v1628, 0
        %v1693 = vsel %vm970, %v1630, 0
        %v1695 = vsel %vm970, %v1632, 0
        %v1697 = vsel %vm970, %v1634, 0
        %v1699 = vsel %vm970, %v1636, 0
        %v1701 = vsel %vm970, %v1638, 0
        %v1703 = vsel %vm970, %v1640, 0
        %v1705 = vsel %vm970, %v1642, 0
        %v1707 = vsel %vm970, %v1644, 0
        %1709 = vmatprep.subr.mxu0 0.0
        %1710 = vmatpush1.xpose.msra.mxu0 %v1677
        %1711 = vmatprep.subr.mxu0 0.0
        %1712 = vmatpush1.xpose.msra.mxu0 %v1679
        %1713 = vmatprep.subr.mxu0 0.0
        %1714 = vmatpush1.xpose.msra.mxu0 %v1681
        %1715 = vmatprep.subr.mxu0 0.0
        %1716 = vmatpush1.xpose.msra.mxu0 %v1683
        %1717 = vmatprep.subr.mxu0 0.0
        %1718 = vmatpush1.xpose.msra.mxu0 %v1685
        %1719 = vmatprep.subr.mxu0 0.0
        %1720 = vmatpush1.xpose.msra.mxu0 %v1687
        %1721 = vmatprep.subr.mxu0 0.0
        %1722 = vmatpush1.xpose.msra.mxu0 %v1689
        %1723 = vmatprep.subr.mxu0 0.0
        %1724 = vmatpush1.xpose.msra.mxu0 %v1691
        %1725 = vmatprep.subr.mxu0 0.0
        %1726 = vmatpush1.xpose.msra.mxu0 %v1693
        %1727 = vmatprep.subr.mxu0 0.0
        %1728 = vmatpush1.xpose.msra.mxu0 %v1695
        %1729 = vmatprep.subr.mxu0 0.0
        %1730 = vmatpush1.xpose.msra.mxu0 %v1697
        %1731 = vmatprep.subr.mxu0 0.0
        %1732 = vmatpush1.xpose.msra.mxu0 %v1699
        %1733 = vmatprep.subr.mxu0 0.0
        %1734 = vmatpush1.xpose.msra.mxu0 %v1701
        %1735 = vmatprep.subr.mxu0 0.0
        %1736 = vmatpush1.xpose.msra.mxu0 %v1703
        %1737 = vmatprep.subr.mxu0 0.0
        %1738 = vmatpush1.xpose.msra.mxu0 %v1705
        %1739 = vmatprep.subr.mxu0 0.0
        %1740 = vmatpush1.xpose.msra.mxu0 %v1707
        %1741 = vmatprep.subr.mxu0 0.0
        %1742 = vmatpush1.xpose.msra.mxu0 0.0
        %1743 = vmatprep.subr.mxu0 0.0
        %1744 = vmatpush1.xpose.msra.mxu0 0.0
        %1745 = vmatprep.subr.mxu0 0.0
        %1746 = vmatpush1.xpose.msra.mxu0 0.0
        %1747 = vmatprep.subr.mxu0 0.0
        %1748 = vmatpush1.xpose.msra.mxu0 0.0
        %1749 = vmatprep.subr.mxu0 0.0
        %1750 = vmatpush1.xpose.msra.mxu0 0.0
        %1751 = vmatprep.subr.mxu0 0.0
        %1752 = vmatpush1.xpose.msra.mxu0 0.0
        %1753 = vmatprep.subr.mxu0 0.0
        %1754 = vmatpush1.xpose.msra.mxu0 0.0
        %1755 = vmatprep.subr.mxu0 0.0
        %1756 = vmatpush1.xpose.msra.mxu0 0.0
        %1757 = vmatprep.subr.mxu0 0.0
        %1758 = vmatpush1.xpose.msra.mxu0 0.0
        %1759 = vmatprep.subr.mxu0 0.0
        %1760 = vmatpush1.xpose.msra.mxu0 0.0
        %1761 = vmatprep.subr.mxu0 0.0
        %1762 = vmatpush1.xpose.msra.mxu0 0.0
        %1763 = vmatprep.subr.mxu0 0.0
        %1764 = vmatpush1.xpose.msra.mxu0 0.0
        %1765 = vmatprep.subr.mxu0 0.0
        %1766 = vmatpush1.xpose.msra.mxu0 0.0
        %1767 = vmatprep.subr.mxu0 0.0
        %1768 = vmatpush1.xpose.msra.mxu0 0.0
        %1769 = vmatprep.subr.mxu0 0.0
        %1770 = vmatpush1.xpose.msra.mxu0 0.0
        %1771 = vmatprep.subr.mxu0 0.0
        %1772 = vmatpush1.xpose.msra.mxu0 0.0
        %1773 = vmatprep.mubr.f32.mxu0 0.0
        %1774 = vmatmul.mubr.f32.gmra.mrb[0].mxu0 %v1645
        %v1775 = vpop.f32.mrb[0].mxu0
        %v1776 = vadd.f32 %v936, %v1775
        %v1777 = vpop.f32.mrb[0].mxu0
        %1778 = vmatprep.mubr.f32.mxu0 0.0
        %1779 = vmatmul.mubr.f32.gmra.mrb[0].mxu0 %v1647
        %v1780 = vpop.f32.mrb[0].mxu0
        %v1781 = vadd.f32 %v936, %v1780
        %v1782 = vpop.f32.mrb[0].mxu0
        %1783 = vmatprep.mubr.f32.mxu0 0.0
        %1784 = vmatmul.mubr.f32.gmra.mrb[0].mxu0 %v1649
        %v1785 = vpop.f32.mrb[0].mxu0
        %v1786 = vadd.f32 %v936, %v1785
        %v1787 = vpop.f32.mrb[0].mxu0
        %1788 = vmatprep.mubr.f32.mxu0 0.0
        %1789 = vmatmul.mubr.f32.gmra.mrb[0].mxu0 %v1651
        %v1790 = vpop.f32.mrb[0].mxu0
        %v1791 = vadd.f32 %v936, %v1790
        %v1792 = vpop.f32.mrb[0].mxu0
        %1793 = vmatprep.mubr.f32.mxu0 0.0
        %1794 = vmatmul.mubr.f32.gmra.mrb[0].mxu0 %v1653
        %v1795 = vpop.f32.mrb[0].mxu0
        %v1796 = vadd.f32 %v936, %v1795
        %v1797 = vpop.f32.mrb[0].mxu0
        %1798 = vmatprep.mubr.f32.mxu0 0.0
        %1799 = vmatmul.mubr.f32.gmra.mrb[0].mxu0 %v1655
        %v1800 = vpop.f32.mrb[0].mxu0
        %v1801 = vadd.f32 %v936, %v1800
        %v1802 = vpop.f32.mrb[0].mxu0
        %1803 = vmatprep.mubr.f32.mxu0 0.0
        %1804 = vmatmul.mubr.f32.gmra.mrb[0].mxu0 %v1657
        %v1805 = vpop.f32.mrb[0].mxu0
        %v1806 = vadd.f32 %v936, %v1805
        %v1807 = vpop.f32.mrb[0].mxu0
        %1808 = vmatprep.mubr.f32.mxu0 0.0
        %1809 = vmatmul.mubr.f32.gmra.mrb[0].mxu0 %v1659
        %v1810 = vpop.f32.mrb[0].mxu0
        %v1811 = vadd.f32 %v936, %v1810
        %v1812 = vpop.f32.mrb[0].mxu0
        %1813 = vmatprep.mubr.f32.mxu0 0.0
        %1814 = vmatmul.mubr.f32.gmra.mrb[0].mxu0 %v1661
        %v1815 = vpop.f32.mrb[0].mxu0
        %v1816 = vadd.f32 %v936, %v1815
        %v1817 = vpop.f32.mrb[0].mxu0
        %1818 = vmatprep.mubr.f32.mxu0 0.0
        %1819 = vmatmul.mubr.f32.gmra.mrb[0].mxu0 %v1663
        %v1820 = vpop.f32.mrb[0].mxu0
        %v1821 = vadd.f32 %v936, %v1820
        %v1822 = vpop.f32.mrb[0].mxu0
        %1823 = vmatprep.mubr.f32.mxu0 0.0
        %1824 = vmatmul.mubr.f32.gmra.mrb[0].mxu0 %v1665
        %v1825 = vpop.f32.mrb[0].mxu0
        %v1826 = vadd.f32 %v936, %v1825
        %v1827 = vpop.f32.mrb[0].mxu0
        %1828 = vmatprep.mubr.f32.mxu0 0.0
        %1829 = vmatmul.mubr.f32.gmra.mrb[0].mxu0 %v1667
        %v1830 = vpop.f32.mrb[0].mxu0
        %v1831 = vadd.f32 %v936, %v1830
        %v1832 = vpop.f32.mrb[0].mxu0
        %1833 = vmatprep.mubr.f32.mxu0 0.0
        %1834 = vmatmul.mubr.f32.gmra.mrb[0].mxu0 %v1669
        %v1835 = vpop.f32.mrb[0].mxu0
        %v1836 = vadd.f32 %v936, %v1835
        %v1837 = vpop.f32.mrb[0].mxu0
        %1838 = vmatprep.mubr.f32.mxu0 0.0
        %1839 = vmatmul.mubr.f32.gmra.mrb[0].mxu0 %v1671
        %v1840 = vpop.f32.mrb[0].mxu0
        %v1841 = vadd.f32 %v936, %v1840
        %v1842 = vpop.f32.mrb[0].mxu0
        %1843 = vmatprep.mubr.f32.mxu0 0.0
        %1844 = vmatmul.mubr.f32.gmra.mrb[0].mxu0 %v1673
        %v1845 = vpop.f32.mrb[0].mxu0
        %v1846 = vadd.f32 %v936, %v1845
        %v1847 = vpop.f32.mrb[0].mxu0
        %1848 = vmatprep.mubr.f32.mxu0 0.0
        %1849 = vmatmul.mubr.f32.gmra.mrb[0].mxu0 %v1675
        %v1850 = vpop.f32.mrb[0].mxu0
        %v1851 = vadd.f32 %v936, %v1850
        %v1852 = vpop.f32.mrb[0].mxu0
        %1853 = vdwg.mxu0
        %1854 = vmax.xlane.f32.xlu0 %v1776
        %v1855 = vpop.xlane.xlu0 %1854
        %1856 = vmax.xlane.f32.xlu0 %v1781
        %v1857 = vpop.xlane.xlu0 %1856
        %1858 = vmax.xlane.f32.xlu0 %v1786
        %v1859 = vpop.xlane.xlu0 %1858
        %1860 = vmax.xlane.f32.xlu0 %v1791
        %v1861 = vpop.xlane.xlu0 %1860
        %1862 = vmax.xlane.f32.xlu0 %v1796
        %v1863 = vpop.xlane.xlu0 %1862
        %1864 = vmax.xlane.f32.xlu0 %v1801
        %v1865 = vpop.xlane.xlu0 %1864
        %1866 = vmax.xlane.f32.xlu0 %v1806
        %v1867 = vpop.xlane.xlu0 %1866
        %1868 = vmax.xlane.f32.xlu0 %v1811
        %v1869 = vpop.xlane.xlu0 %1868
        %1870 = vmax.xlane.f32.xlu0 %v1816
        %v1871 = vpop.xlane.xlu0 %1870
        %1872 = vmax.xlane.f32.xlu0 %v1821
        %v1873 = vpop.xlane.xlu0 %1872
        %1874 = vmax.xlane.f32.xlu0 %v1826
        %v1875 = vpop.xlane.xlu0 %1874
        %1876 = vmax.xlane.f32.xlu0 %v1831
        %v1877 = vpop.xlane.xlu0 %1876
        %1878 = vmax.xlane.f32.xlu0 %v1836
        %v1879 = vpop.xlane.xlu0 %1878
        %1880 = vmax.xlane.f32.xlu0 %v1841
        %v1881 = vpop.xlane.xlu0 %1880
        %1882 = vmax.xlane.f32.xlu0 %v1846
        %v1883 = vpop.xlane.xlu0 %1882
        %1884 = vmax.xlane.f32.xlu0 %v1851
        %v1885 = vpop.xlane.xlu0 %1884
        %v1886 = vsub.f32 %v1776, %v1855
        %v1887 = vsub.f32 %v1781, %v1857
        %v1888 = vsub.f32 %v1786, %v1859
        %v1889 = vsub.f32 %v1791, %v1861
        %v1890 = vsub.f32 %v1796, %v1863
        %v1891 = vsub.f32 %v1801, %v1865
        %v1892 = vsub.f32 %v1806, %v1867
        %v1893 = vsub.f32 %v1811, %v1869
        %v1894 = vsub.f32 %v1816, %v1871
        %v1895 = vsub.f32 %v1821, %v1873
        %v1896 = vsub.f32 %v1826, %v1875
        %v1897 = vsub.f32 %v1831, %v1877
        %v1898 = vsub.f32 %v1836, %v1879
        %v1899 = vsub.f32 %v1841, %v1881
        %v1900 = vsub.f32 %v1846, %v1883
        %v1901 = vsub.f32 %v1851, %v1885
        %v1902 = vmul.f32 %v1886, 1.442695
        %v1903 = vpow.pop %v1902
        %v1904 = vmul.f32 %v1887, 1.442695
        %v1905 = vpow.pop %v1904
        %v1906 = vmul.f32 %v1888, 1.442695
        %v1907 = vpow.pop %v1906
        %v1908 = vmul.f32 %v1889, 1.442695
        %v1909 = vpow.pop %v1908
        %v1910 = vmul.f32 %v1890, 1.442695
        %v1911 = vpow.pop %v1910
        %v1912 = vmul.f32 %v1891, 1.442695
        %v1913 = vpow.pop %v1912
        %v1914 = vmul.f32 %v1892, 1.442695
        %v1915 = vpow.pop %v1914
        %v1916 = vmul.f32 %v1893, 1.442695
        %v1917 = vpow.pop %v1916
        %v1918 = vmul.f32 %v1894, 1.442695
        %v1919 = vpow.pop %v1918
        %v1920 = vmul.f32 %v1895, 1.442695
        %v1921 = vpow.pop %v1920
        %v1922 = vmul.f32 %v1896, 1.442695
        %v1923 = vpow.pop %v1922
        %v1924 = vmul.f32 %v1897, 1.442695
        %v1925 = vpow.pop %v1924
        %v1926 = vmul.f32 %v1898, 1.442695
        %v1927 = vpow.pop %v1926
        %v1928 = vmul.f32 %v1899, 1.442695
        %v1929 = vpow.pop %v1928
        %v1930 = vmul.f32 %v1900, 1.442695
        %v1931 = vpow.pop %v1930
        %v1932 = vmul.f32 %v1901, 1.442695
        %v1933 = vpow.pop %v1932
        %1934 = vadd.xlane.f32.xlu0 %v1903
        %v1935 = vpop.xlane.xlu0 %1934
        %1936 = vadd.xlane.f32.xlu0 %v1905
        %v1937 = vpop.xlane.xlu0 %1936
        %1938 = vadd.xlane.f32.xlu0 %v1907
        %v1939 = vpop.xlane.xlu0 %1938
        %1940 = vadd.xlane.f32.xlu0 %v1909
        %v1941 = vpop.xlane.xlu0 %1940
        %1942 = vadd.xlane.f32.xlu0 %v1911
        %v1943 = vpop.xlane.xlu0 %1942
        %1944 = vadd.xlane.f32.xlu0 %v1913
        %v1945 = vpop.xlane.xlu0 %1944
        %1946 = vadd.xlane.f32.xlu0 %v1915
        %v1947 = vpop.xlane.xlu0 %1946
        %1948 = vadd.xlane.f32.xlu0 %v1917
        %v1949 = vpop.xlane.xlu0 %1948
        %1950 = vadd.xlane.f32.xlu0 %v1919
        %v1951 = vpop.xlane.xlu0 %1950
        %1952 = vadd.xlane.f32.xlu0 %v1921
        %v1953 = vpop.xlane.xlu0 %1952
        %1954 = vadd.xlane.f32.xlu0 %v1923
        %v1955 = vpop.xlane.xlu0 %1954
        %1956 = vadd.xlane.f32.xlu0 %v1925
        %v1957 = vpop.xlane.xlu0 %1956
        %1958 = vadd.xlane.f32.xlu0 %v1927
        %v1959 = vpop.xlane.xlu0 %1958
        %1960 = vadd.xlane.f32.xlu0 %v1929
        %v1961 = vpop.xlane.xlu0 %1960
        %1962 = vadd.xlane.f32.xlu0 %v1931
        %v1963 = vpop.xlane.xlu0 %1962
        %1964 = vadd.xlane.f32.xlu0 %v1933
        %v1965 = vpop.xlane.xlu0 %1964
        %v1966 = vrcp.pop %v1935
        %v1967 = vmul.f32 1.0, %v1966
        %v1968 = vrcp.pop %v1937
        %v1969 = vmul.f32 1.0, %v1968
        %v1970 = vrcp.pop %v1939
        %v1971 = vmul.f32 1.0, %v1970
        %v1972 = vrcp.pop %v1941
        %v1973 = vmul.f32 1.0, %v1972
        %v1974 = vrcp.pop %v1943
        %v1975 = vmul.f32 1.0, %v1974
        %v1976 = vrcp.pop %v1945
        %v1977 = vmul.f32 1.0, %v1976
        %v1978 = vrcp.pop %v1947
        %v1979 = vmul.f32 1.0, %v1978
        %v1980 = vrcp.pop %v1949
        %v1981 = vmul.f32 1.0, %v1980
        %v1982 = vrcp.pop %v1951
        %v1983 = vmul.f32 1.0, %v1982
        %v1984 = vrcp.pop %v1953
        %v1985 = vmul.f32 1.0, %v1984
        %v1986 = vrcp.pop %v1955
        %v1987 = vmul.f32 1.0, %v1986
        %v1988 = vrcp.pop %v1957
        %v1989 = vmul.f32 1.0, %v1988
        %v1990 = vrcp.pop %v1959
        %v1991 = vmul.f32 1.0, %v1990
        %v1992 = vrcp.pop %v1961
        %v1993 = vmul.f32 1.0, %v1992
        %v1994 = vrcp.pop %v1963
        %v1995 = vmul.f32 1.0, %v1994
        %v1996 = vrcp.pop %v1965
        %v1997 = vmul.f32 1.0, %v1996
        %v1998 = vmul.f32 %v1903, %v1967
        %v1999 = vmul.f32 %v1905, %v1969
        %v2000 = vmul.f32 %v1907, %v1971
        %v2001 = vmul.f32 %v1909, %v1973
        %v2002 = vmul.f32 %v1911, %v1975
        %v2003 = vmul.f32 %v1913, %v1977
        %v2004 = vmul.f32 %v1915, %v1979
        %v2005 = vmul.f32 %v1917, %v1981
        %v2006 = vmul.f32 %v1919, %v1983
        %v2007 = vmul.f32 %v1921, %v1985
        %v2008 = vmul.f32 %v1923, %v1987
        %v2009 = vmul.f32 %v1925, %v1989
        %v2010 = vmul.f32 %v1927, %v1991
        %v2011 = vmul.f32 %v1929, %v1993
        %v2012 = vmul.f32 %v1931, %v1995
        %v2013 = vmul.f32 %v1933, %v1997
        %2030 = vrot.lane.b32.xlu0 %v1533, 120
        %v2031 = vpop.permute.xlu0 %2030
        %2032 = vrot.lane.b32.xlu0 %v1534, 120
        %v2033 = vpop.permute.xlu0 %2032
        %2034 = vrot.lane.b32.xlu0 %v1535, 120
        %v2035 = vpop.permute.xlu0 %2034
        %2036 = vrot.lane.b32.xlu0 %v1536, 120
        %v2037 = vpop.permute.xlu0 %2036
        %2038 = vrot.lane.b32.xlu0 %v1537, 120
        %v2039 = vpop.permute.xlu0 %2038
        %2040 = vrot.lane.b32.xlu0 %v1538, 120
        %v2041 = vpop.permute.xlu0 %2040
        %2042 = vrot.lane.b32.xlu0 %v1539, 120
        %v2043 = vpop.permute.xlu0 %2042
        %2044 = vrot.lane.b32.xlu0 %v1540, 120
        %v2045 = vpop.permute.xlu0 %2044
        %2046 = vrot.lane.b32.xlu0 %v1541, 120
        %v2047 = vpop.permute.xlu0 %2046
        %2048 = vrot.lane.b32.xlu0 %v1542, 120
        %v2049 = vpop.permute.xlu0 %2048
        %2050 = vrot.lane.b32.xlu0 %v1543, 120
        %v2051 = vpop.permute.xlu0 %2050
        %2052 = vrot.lane.b32.xlu0 %v1544, 120
        %v2053 = vpop.permute.xlu0 %2052
        %2054 = vrot.lane.b32.xlu0 %v1545, 120
        %v2055 = vpop.permute.xlu0 %2054
        %2056 = vrot.lane.b32.xlu0 %v1546, 120
        %v2057 = vpop.permute.xlu0 %2056
        %2058 = vrot.lane.b32.xlu0 %v1547, 120
        %v2059 = vpop.permute.xlu0 %2058
        %2060 = vrot.lane.b32.xlu0 %v1548, 120
        %v2061 = vpop.permute.xlu0 %2060
        %2078 = vmatprep.subr.mxu0 0.0
        %2079 = vmatpush1.msra.mxu0 %v2031
        %2080 = vmatprep.subr.mxu0 0.0
        %2081 = vmatpush1.msra.mxu0 %v2033
        %2082 = vmatprep.subr.mxu0 0.0
        %2083 = vmatpush1.msra.mxu0 %v2035
        %2084 = vmatprep.subr.mxu0 0.0
        %2085 = vmatpush1.msra.mxu0 %v2037
        %2086 = vmatprep.subr.mxu0 0.0
        %2087 = vmatpush1.msra.mxu0 %v2039
        %2088 = vmatprep.subr.mxu0 0.0
        %2089 = vmatpush1.msra.mxu0 %v2041
        %2090 = vmatprep.subr.mxu0 0.0
        %2091 = vmatpush1.msra.mxu0 %v2043
        %2092 = vmatprep.subr.mxu0 0.0
        %2093 = vmatpush1.msra.mxu0 %v2045
        %2094 = vmatprep.subr.mxu0 0.0
        %2095 = vmatpush1.msra.mxu0 %v2047
        %2096 = vmatprep.subr.mxu0 0.0
        %2097 = vmatpush1.msra.mxu0 %v2049
        %2098 = vmatprep.subr.mxu0 0.0
        %2099 = vmatpush1.msra.mxu0 %v2051
        %2100 = vmatprep.subr.mxu0 0.0
        %2101 = vmatpush1.msra.mxu0 %v2053
        %2102 = vmatprep.subr.mxu0 0.0
        %2103 = vmatpush1.msra.mxu0 %v2055
        %2104 = vmatprep.subr.mxu0 0.0
        %2105 = vmatpush1.msra.mxu0 %v2057
        %2106 = vmatprep.subr.mxu0 0.0
        %2107 = vmatpush1.msra.mxu0 %v2059
        %2108 = vmatprep.subr.mxu0 0.0
        %2109 = vmatpush1.msra.mxu0 %v2061
        %2110 = vmatprep.subr.mxu0 0.0
        %2111 = vmatpush1.msra.mxu0 0.0
        %2112 = vmatprep.subr.mxu0 0.0
        %2113 = vmatpush1.msra.mxu0 0.0
        %2114 = vmatprep.subr.mxu0 0.0
        %2115 = vmatpush1.msra.mxu0 0.0
        %2116 = vmatprep.subr.mxu0 0.0
        %2117 = vmatpush1.msra.mxu0 0.0
        %2118 = vmatprep.subr.mxu0 0.0
        %2119 = vmatpush1.msra.mxu0 0.0
        %2120 = vmatprep.subr.mxu0 0.0
        %2121 = vmatpush1.msra.mxu0 0.0
        %2122 = vmatprep.subr.mxu0 0.0
        %2123 = vmatpush1.msra.mxu0 0.0
        %2124 = vmatprep.subr.mxu0 0.0
        %2125 = vmatpush1.msra.mxu0 0.0
        %2126 = vmatprep.subr.mxu0 0.0
        %2127 = vmatpush1.msra.mxu0 0.0
        %2128 = vmatprep.subr.mxu0 0.0
        %2129 = vmatpush1.msra.mxu0 0.0
        %2130 = vmatprep.subr.mxu0 0.0
        %2131 = vmatpush1.msra.mxu0 0.0
        %2132 = vmatprep.subr.mxu0 0.0
        %2133 = vmatpush1.msra.mxu0 0.0
        %2134 = vmatprep.subr.mxu0 0.0
        %2135 = vmatpush1.msra.mxu0 0.0
        %2136 = vmatprep.subr.mxu0 0.0
        %2137 = vmatpush1.msra.mxu0 0.0
        %2138 = vmatprep.subr.mxu0 0.0
        %2139 = vmatpush1.msra.mxu0 0.0
        %2140 = vmatprep.subr.mxu0 0.0
        %2141 = vmatpush1.msra.mxu0 0.0
        %2142 = vmatprep.mubr.f32.mxu0 0.0
        %2143 = vmatmul.mubr.f32.gmra.mrb[0].mxu0 %v1998
        %v2144 = vpop.f32.mrb[0].mxu0
        %v2145 = vadd.f32 0.0, %v2144
        %v2146 = vpop.f32.mrb[0].mxu0
        %2147 = vmatprep.mubr.f32.mxu0 0.0
        %2148 = vmatmul.mubr.f32.gmra.mrb[0].mxu0 %v1999
        %v2149 = vpop.f32.mrb[0].mxu0
        %v2150 = vadd.f32 0.0, %v2149
        %v2151 = vpop.f32.mrb[0].mxu0
        %2152 = vmatprep.mubr.f32.mxu0 0.0
        %2153 = vmatmul.mubr.f32.gmra.mrb[0].mxu0 %v2000
        %v2154 = vpop.f32.mrb[0].mxu0
        %v2155 = vadd.f32 0.0, %v2154
        %v2156 = vpop.f32.mrb[0].mxu0
        %2157 = vmatprep.mubr.f32.mxu0 0.0
        %2158 = vmatmul.mubr.f32.gmra.mrb[0].mxu0 %v2001
        %v2159 = vpop.f32.mrb[0].mxu0
        %v2160 = vadd.f32 0.0, %v2159
        %v2161 = vpop.f32.mrb[0].mxu0
        %2162 = vmatprep.mubr.f32.mxu0 0.0
        %2163 = vmatmul.mubr.f32.gmra.mrb[0].mxu0 %v2002
        %v2164 = vpop.f32.mrb[0].mxu0
        %v2165 = vadd.f32 0.0, %v2164
        %v2166 = vpop.f32.mrb[0].mxu0
        %2167 = vmatprep.mubr.f32.mxu0 0.0
        %2168 = vmatmul.mubr.f32.gmra.mrb[0].mxu0 %v2003
        %v2169 = vpop.f32.mrb[0].mxu0
        %v2170 = vadd.f32 0.0, %v2169
        %v2171 = vpop.f32.mrb[0].mxu0
        %2172 = vmatprep.mubr.f32.mxu0 0.0
        %2173 = vmatmul.mubr.f32.gmra.mrb[0].mxu0 %v2004
        %v2174 = vpop.f32.mrb[0].mxu0
        %v2175 = vadd.f32 0.0, %v2174
        %v2176 = vpop.f32.mrb[0].mxu0
        %2177 = vmatprep.mubr.f32.mxu0 0.0
        %2178 = vmatmul.mubr.f32.gmra.mrb[0].mxu0 %v2005
        %v2179 = vpop.f32.mrb[0].mxu0
        %v2180 = vadd.f32 0.0, %v2179
        %v2181 = vpop.f32.mrb[0].mxu0
        %2182 = vmatprep.mubr.f32.mxu0 0.0
        %2183 = vmatmul.mubr.f32.gmra.mrb[0].mxu0 %v2006
        %v2184 = vpop.f32.mrb[0].mxu0
        %v2185 = vadd.f32 0.0, %v2184
        %v2186 = vpop.f32.mrb[0].mxu0
        %2187 = vmatprep.mubr.f32.mxu0 0.0
        %2188 = vmatmul.mubr.f32.gmra.mrb[0].mxu0 %v2007
        %v2189 = vpop.f32.mrb[0].mxu0
        %v2190 = vadd.f32 0.0, %v2189
        %v2191 = vpop.f32.mrb[0].mxu0
        %2192 = vmatprep.mubr.f32.mxu0 0.0
        %2193 = vmatmul.mubr.f32.gmra.mrb[0].mxu0 %v2008
        %v2194 = vpop.f32.mrb[0].mxu0
        %v2195 = vadd.f32 0.0, %v2194
        %v2196 = vpop.f32.mrb[0].mxu0
        %2197 = vmatprep.mubr.f32.mxu0 0.0
        %2198 = vmatmul.mubr.f32.gmra.mrb[0].mxu0 %v2009
        %v2199 = vpop.f32.mrb[0].mxu0
        %v2200 = vadd.f32 0.0, %v2199
        %v2201 = vpop.f32.mrb[0].mxu0
        %2202 = vmatprep.mubr.f32.mxu0 0.0
        %2203 = vmatmul.mubr.f32.gmra.mrb[0].mxu0 %v2010
        %v2204 = vpop.f32.mrb[0].mxu0
        %v2205 = vadd.f32 0.0, %v2204
        %v2206 = vpop.f32.mrb[0].mxu0
        %2207 = vmatprep.mubr.f32.mxu0 0.0
        %2208 = vmatmul.mubr.f32.gmra.mrb[0].mxu0 %v2011
        %v2209 = vpop.f32.mrb[0].mxu0
        %v2210 = vadd.f32 0.0, %v2209
        %v2211 = vpop.f32.mrb[0].mxu0
        %2212 = vmatprep.mubr.f32.mxu0 0.0
        %2213 = vmatmul.mubr.f32.gmra.mrb[0].mxu0 %v2012
        %v2214 = vpop.f32.mrb[0].mxu0
        %v2215 = vadd.f32 0.0, %v2214
        %v2216 = vpop.f32.mrb[0].mxu0
        %2217 = vmatprep.mubr.f32.mxu0 0.0
        %2218 = vmatmul.mubr.f32.gmra.mrb[0].mxu0 %v2013
        %v2219 = vpop.f32.mrb[0].mxu0
        %v2220 = vadd.f32 0.0, %v2219
        %v2221 = vpop.f32.mrb[0].mxu0
        %2222 = vdwg.mxu0
        %2239 = vrot.lane.b32.xlu0 %v2145, 8
        %v2240 = vpop.permute.xlu0 %2239
        %2241 = vrot.lane.b32.xlu0 %v2150, 8
        %v2242 = vpop.permute.xlu0 %2241
        %2243 = vrot.lane.b32.xlu0 %v2155, 8
        %v2244 = vpop.permute.xlu0 %2243
        %2245 = vrot.lane.b32.xlu0 %v2160, 8
        %v2246 = vpop.permute.xlu0 %2245
        %2247 = vrot.lane.b32.xlu0 %v2165, 8
        %v2248 = vpop.permute.xlu0 %2247
        %2249 = vrot.lane.b32.xlu0 %v2170, 8
        %v2250 = vpop.permute.xlu0 %2249
        %2251 = vrot.lane.b32.xlu0 %v2175, 8
        %v2252 = vpop.permute.xlu0 %2251
        %2253 = vrot.lane.b32.xlu0 %v2180, 8
        %v2254 = vpop.permute.xlu0 %2253
        %2255 = vrot.lane.b32.xlu0 %v2185, 8
        %v2256 = vpop.permute.xlu0 %2255
        %2257 = vrot.lane.b32.xlu0 %v2190, 8
        %v2258 = vpop.permute.xlu0 %2257
        %2259 = vrot.lane.b32.xlu0 %v2195, 8
        %v2260 = vpop.permute.xlu0 %2259
        %2261 = vrot.lane.b32.xlu0 %v2200, 8
        %v2262 = vpop.permute.xlu0 %2261
        %2263 = vrot.lane.b32.xlu0 %v2205, 8
        %v2264 = vpop.permute.xlu0 %2263
        %2265 = vrot.lane.b32.xlu0 %v2210, 8
        %v2266 = vpop.permute.xlu0 %2265
        %2267 = vrot.lane.b32.xlu0 %v2215, 8
        %v2268 = vpop.permute.xlu0 %2267
        %2269 = vrot.lane.b32.xlu0 %v2220, 8
        %v2270 = vpop.permute.xlu0 %2269
        %vm2287 = vcmask 130112
        %2288 = vst.msk [vmem:[%s368] sm:$0xff] %vm2287, %v2240
        %2289 = vst.msk [vmem:[%s368 + $0x8] sm:$0xff] %vm2287, %v2242
        %2290 = vst.msk [vmem:[%s368 + $0x10] sm:$0xff] %vm2287, %v2244
        %2291 = vst.msk [vmem:[%s368 + $0x18] sm:$0xff] %vm2287, %v2246
        %2292 = vst.msk [vmem:[%s368 + $0x20] sm:$0xff] %vm2287, %v2248
        %2293 = vst.msk [vmem:[%s368 + $0x28] sm:$0xff] %vm2287, %v2250
        %2294 = vst.msk [vmem:[%s368 + $0x30] sm:$0xff] %vm2287, %v2252
        %2295 = vst.msk [vmem:[%s368 + $0x38] sm:$0xff] %vm2287, %v2254
        %2296 = vst.msk [vmem:[%s368 + $0x40] sm:$0xff] %vm2287, %v2256
        %2297 = vst.msk [vmem:[%s368 + $0x48] sm:$0xff] %vm2287, %v2258
        %2298 = vst.msk [vmem:[%s368 + $0x50] sm:$0xff] %vm2287, %v2260
        %2299 = vst.msk [vmem:[%s368 + $0x58] sm:$0xff] %vm2287, %v2262
        %2300 = vst.msk [vmem:[%s368 + $0x60] sm:$0xff] %vm2287, %v2264
        %2301 = vst.msk [vmem:[%s368 + $0x68] sm:$0xff] %vm2287, %v2266
        %2302 = vst.msk [vmem:[%s368 + $0x70] sm:$0xff] %vm2287, %v2268
        %2303 = vst.msk [vmem:[%s368 + $0x78] sm:$0xff] %vm2287, %v2270
        %v2304 = vld [vmem:[#allocation3] sm:$0xff]
        %v2305 = vld [vmem:[#allocation3 + $0x8] sm:$0xff]
        %v2306 = vld [vmem:[#allocation3 + $0x10] sm:$0xff]
        %v2307 = vld [vmem:[#allocation3 + $0x18] sm:$0xff]
        %v2308 = vld [vmem:[#allocation3 + $0x20] sm:$0xff]
        %v2309 = vld [vmem:[#allocation3 + $0x28] sm:$0xff]
        %v2310 = vld [vmem:[#allocation3 + $0x30] sm:$0xff]
        %v2311 = vld [vmem:[#allocation3 + $0x38] sm:$0xff]
        %v2312 = vld [vmem:[#allocation3 + $0x40] sm:$0xff]
        %v2313 = vld [vmem:[#allocation3 + $0x48] sm:$0xff]
        %v2314 = vld [vmem:[#allocation3 + $0x50] sm:$0xff]
        %v2315 = vld [vmem:[#allocation3 + $0x58] sm:$0xff]
        %v2316 = vld [vmem:[#allocation3 + $0x60] sm:$0xff]
        %v2317 = vld [vmem:[#allocation3 + $0x68] sm:$0xff]
        %v2318 = vld [vmem:[#allocation3 + $0x70] sm:$0xff]
        %v2319 = vld [vmem:[#allocation3 + $0x78] sm:$0xff]
        %v2320 = vld [vmem:[#allocation2] sm:$0xff]
        %v2321 = vld [vmem:[#allocation2 + $0x8] sm:$0xff]
        %v2322 = vld [vmem:[#allocation2 + $0x10] sm:$0xff]
        %v2323 = vld [vmem:[#allocation2 + $0x18] sm:$0xff]
        %v2324 = vld [vmem:[#allocation2 + $0x20] sm:$0xff]
        %v2325 = vld [vmem:[#allocation2 + $0x28] sm:$0xff]
        %v2326 = vld [vmem:[#allocation2 + $0x30] sm:$0xff]
        %v2327 = vld [vmem:[#allocation2 + $0x38] sm:$0xff]
        %v2328 = vld [vmem:[#allocation2 + $0x40] sm:$0xff]
        %v2329 = vld [vmem:[#allocation2 + $0x48] sm:$0xff]
        %v2330 = vld [vmem:[#allocation2 + $0x50] sm:$0xff]
        %v2331 = vld [vmem:[#allocation2 + $0x58] sm:$0xff]
        %v2332 = vld [vmem:[#allocation2 + $0x60] sm:$0xff]
        %v2333 = vld [vmem:[#allocation2 + $0x68] sm:$0xff]
        %v2334 = vld [vmem:[#allocation2 + $0x70] sm:$0xff]
        %v2335 = vld [vmem:[#allocation2 + $0x78] sm:$0xff]
        %2336 = vrot.lane.b32.xlu0 %v915, 112
        %v2337 = vpop.permute.xlu0 %2336
        %2338 = vrot.lane.b32.xlu0 %v916, 112
        %v2339 = vpop.permute.xlu0 %2338
        %2340 = vrot.lane.b32.xlu0 %v917, 112
        %v2341 = vpop.permute.xlu0 %2340
        %2342 = vrot.lane.b32.xlu0 %v918, 112
        %v2343 = vpop.permute.xlu0 %2342
        %2344 = vrot.lane.b32.xlu0 %v919, 112
        %v2345 = vpop.permute.xlu0 %2344
        %2346 = vrot.lane.b32.xlu0 %v920, 112
        %v2347 = vpop.permute.xlu0 %2346
        %2348 = vrot.lane.b32.xlu0 %v921, 112
        %v2349 = vpop.permute.xlu0 %2348
        %2350 = vrot.lane.b32.xlu0 %v922, 112
        %v2351 = vpop.permute.xlu0 %2350
        %2352 = vrot.lane.b32.xlu0 %v923, 112
        %v2353 = vpop.permute.xlu0 %2352
        %2354 = vrot.lane.b32.xlu0 %v924, 112
        %v2355 = vpop.permute.xlu0 %2354
        %2356 = vrot.lane.b32.xlu0 %v925, 112
        %v2357 = vpop.permute.xlu0 %2356
        %2358 = vrot.lane.b32.xlu0 %v926, 112
        %v2359 = vpop.permute.xlu0 %2358
        %2360 = vrot.lane.b32.xlu0 %v927, 112
        %v2361 = vpop.permute.xlu0 %2360
        %2362 = vrot.lane.b32.xlu0 %v928, 112
        %v2363 = vpop.permute.xlu0 %2362
        %2364 = vrot.lane.b32.xlu0 %v929, 112
        %v2365 = vpop.permute.xlu0 %2364
        %2366 = vrot.lane.b32.xlu0 %v930, 112
        %v2367 = vpop.permute.xlu0 %2366
        %2384 = vrot.lane.b32.xlu0 %v2320, 112
        %v2385 = vpop.permute.xlu0 %2384
        %2386 = vrot.lane.b32.xlu0 %v2321, 112
        %v2387 = vpop.permute.xlu0 %2386
        %2388 = vrot.lane.b32.xlu0 %v2322, 112
        %v2389 = vpop.permute.xlu0 %2388
        %2390 = vrot.lane.b32.xlu0 %v2323, 112
        %v2391 = vpop.permute.xlu0 %2390
        %2392 = vrot.lane.b32.xlu0 %v2324, 112
        %v2393 = vpop.permute.xlu0 %2392
        %2394 = vrot.lane.b32.xlu0 %v2325, 112
        %v2395 = vpop.permute.xlu0 %2394
        %2396 = vrot.lane.b32.xlu0 %v2326, 112
        %v2397 = vpop.permute.xlu0 %2396
        %2398 = vrot.lane.b32.xlu0 %v2327, 112
        %v2399 = vpop.permute.xlu0 %2398
        %2400 = vrot.lane.b32.xlu0 %v2328, 112
        %v2401 = vpop.permute.xlu0 %2400
        %2402 = vrot.lane.b32.xlu0 %v2329, 112
        %v2403 = vpop.permute.xlu0 %2402
        %2404 = vrot.lane.b32.xlu0 %v2330, 112
        %v2405 = vpop.permute.xlu0 %2404
        %2406 = vrot.lane.b32.xlu0 %v2331, 112
        %v2407 = vpop.permute.xlu0 %2406
        %2408 = vrot.lane.b32.xlu0 %v2332, 112
        %v2409 = vpop.permute.xlu0 %2408
        %2410 = vrot.lane.b32.xlu0 %v2333, 112
        %v2411 = vpop.permute.xlu0 %2410
        %2412 = vrot.lane.b32.xlu0 %v2334, 112
        %v2413 = vpop.permute.xlu0 %2412
        %2414 = vrot.lane.b32.xlu0 %v2335, 112
        %v2415 = vpop.permute.xlu0 %2414
        %v2416 = vsel %vm970, %v2337, 0
        %v2418 = vsel %vm970, %v2339, 0
        %v2420 = vsel %vm970, %v2341, 0
        %v2422 = vsel %vm970, %v2343, 0
        %v2424 = vsel %vm970, %v2345, 0
        %v2426 = vsel %vm970, %v2347, 0
        %v2428 = vsel %vm970, %v2349, 0
        %v2430 = vsel %vm970, %v2351, 0
        %v2432 = vsel %vm970, %v2353, 0
        %v2434 = vsel %vm970, %v2355, 0
        %v2436 = vsel %vm970, %v2357, 0
        %v2438 = vsel %vm970, %v2359, 0
        %v2440 = vsel %vm970, %v2361, 0
        %v2442 = vsel %vm970, %v2363, 0
        %v2444 = vsel %vm970, %v2365, 0
        %v2446 = vsel %vm970, %v2367, 0
        %v2448 = vsel %vm970, %v2385, 0
        %v2450 = vsel %vm970, %v2387, 0
        %v2452 = vsel %vm970, %v2389, 0
        %v2454 = vsel %vm970, %v2391, 0
        %v2456 = vsel %vm970, %v2393, 0
        %v2458 = vsel %vm970, %v2395, 0
        %v2460 = vsel %vm970, %v2397, 0
        %v2462 = vsel %vm970, %v2399, 0
        %v2464 = vsel %vm970, %v2401, 0
        %v2466 = vsel %vm970, %v2403, 0
        %v2468 = vsel %vm970, %v2405, 0
        %v2470 = vsel %vm970, %v2407, 0
        %v2472 = vsel %vm970, %v2409, 0
        %v2474 = vsel %vm970, %v2411, 0
        %v2476 = vsel %vm970, %v2413, 0
        %v2478 = vsel %vm970, %v2415, 0
        %2480 = vmatprep.subr.mxu0 0.0
        %2481 = vmatpush1.xpose.msra.mxu0 %v2448
        %2482 = vmatprep.subr.mxu0 0.0
        %2483 = vmatpush1.xpose.msra.mxu0 %v2450
        %2484 = vmatprep.subr.mxu0 0.0
        %2485 = vmatpush1.xpose.msra.mxu0 %v2452
        %2486 = vmatprep.subr.mxu0 0.0
        %2487 = vmatpush1.xpose.msra.mxu0 %v2454
        %2488 = vmatprep.subr.mxu0 0.0
        %2489 = vmatpush1.xpose.msra.mxu0 %v2456
        %2490 = vmatprep.subr.mxu0 0.0
        %2491 = vmatpush1.xpose.msra.mxu0 %v2458
        %2492 = vmatprep.subr.mxu0 0.0
        %2493 = vmatpush1.xpose.msra.mxu0 %v2460
        %2494 = vmatprep.subr.mxu0 0.0
        %2495 = vmatpush1.xpose.msra.mxu0 %v2462
        %2496 = vmatprep.subr.mxu0 0.0
        %2497 = vmatpush1.xpose.msra.mxu0 %v2464
        %2498 = vmatprep.subr.mxu0 0.0
        %2499 = vmatpush1.xpose.msra.mxu0 %v2466
        %2500 = vmatprep.subr.mxu0 0.0
        %2501 = vmatpush1.xpose.msra.mxu0 %v2468
        %2502 = vmatprep.subr.mxu0 0.0
        %2503 = vmatpush1.xpose.msra.mxu0 %v2470
        %2504 = vmatprep.subr.mxu0 0.0
        %2505 = vmatpush1.xpose.msra.mxu0 %v2472
        %2506 = vmatprep.subr.mxu0 0.0
        %2507 = vmatpush1.xpose.msra.mxu0 %v2474
        %2508 = vmatprep.subr.mxu0 0.0
        %2509 = vmatpush1.xpose.msra.mxu0 %v2476
        %2510 = vmatprep.subr.mxu0 0.0
        %2511 = vmatpush1.xpose.msra.mxu0 %v2478
        %2512 = vmatprep.subr.mxu0 0.0
        %2513 = vmatpush1.xpose.msra.mxu0 0.0
        %2514 = vmatprep.subr.mxu0 0.0
        %2515 = vmatpush1.xpose.msra.mxu0 0.0
        %2516 = vmatprep.subr.mxu0 0.0
        %2517 = vmatpush1.xpose.msra.mxu0 0.0
        %2518 = vmatprep.subr.mxu0 0.0
        %2519 = vmatpush1.xpose.msra.mxu0 0.0
        %2520 = vmatprep.subr.mxu0 0.0
        %2521 = vmatpush1.xpose.msra.mxu0 0.0
        %2522 = vmatprep.subr.mxu0 0.0
        %2523 = vmatpush1.xpose.msra.mxu0 0.0
        %2524 = vmatprep.subr.mxu0 0.0
        %2525 = vmatpush1.xpose.msra.mxu0 0.0
        %2526 = vmatprep.subr.mxu0 0.0
        %2527 = vmatpush1.xpose.msra.mxu0 0.0
        %2528 = vmatprep.subr.mxu0 0.0
        %2529 = vmatpush1.xpose.msra.mxu0 0.0
        %2530 = vmatprep.subr.mxu0 0.0
        %2531 = vmatpush1.xpose.msra.mxu0 0.0
        %2532 = vmatprep.subr.mxu0 0.0
        %2533 = vmatpush1.xpose.msra.mxu0 0.0
        %2534 = vmatprep.subr.mxu0 0.0
        %2535 = vmatpush1.xpose.msra.mxu0 0.0
        %2536 = vmatprep.subr.mxu0 0.0
        %2537 = vmatpush1.xpose.msra.mxu0 0.0
        %2538 = vmatprep.subr.mxu0 0.0
        %2539 = vmatpush1.xpose.msra.mxu0 0.0
        %2540 = vmatprep.subr.mxu0 0.0
        %2541 = vmatpush1.xpose.msra.mxu0 0.0
        %2542 = vmatprep.subr.mxu0 0.0
        %2543 = vmatpush1.xpose.msra.mxu0 0.0
        %2544 = vmatprep.mubr.f32.mxu0 0.0
        %2545 = vmatmul.mubr.f32.gmra.mrb[0].mxu0 %v2416
        %v2546 = vpop.f32.mrb[0].mxu0
        %v2547 = vadd.f32 %v936, %v2546
        %v2548 = vpop.f32.mrb[0].mxu0
        %2549 = vmatprep.mubr.f32.mxu0 0.0
        %2550 = vmatmul.mubr.f32.gmra.mrb[0].mxu0 %v2418
        %v2551 = vpop.f32.mrb[0].mxu0
        %v2552 = vadd.f32 %v936, %v2551
        %v2553 = vpop.f32.mrb[0].mxu0
        %2554 = vmatprep.mubr.f32.mxu0 0.0
        %2555 = vmatmul.mubr.f32.gmra.mrb[0].mxu0 %v2420
        %v2556 = vpop.f32.mrb[0].mxu0
        %v2557 = vadd.f32 %v936, %v2556
        %v2558 = vpop.f32.mrb[0].mxu0
        %2559 = vmatprep.mubr.f32.mxu0 0.0
        %2560 = vmatmul.mubr.f32.gmra.mrb[0].mxu0 %v2422
        %v2561 = vpop.f32.mrb[0].mxu0
        %v2562 = vadd.f32 %v936, %v2561
        %v2563 = vpop.f32.mrb[0].mxu0
        %2564 = vmatprep.mubr.f32.mxu0 0.0
        %2565 = vmatmul.mubr.f32.gmra.mrb[0].mxu0 %v2424
        %v2566 = vpop.f32.mrb[0].mxu0
        %v2567 = vadd.f32 %v936, %v2566
        %v2568 = vpop.f32.mrb[0].mxu0
        %2569 = vmatprep.mubr.f32.mxu0 0.0
        %2570 = vmatmul.mubr.f32.gmra.mrb[0].mxu0 %v2426
        %v2571 = vpop.f32.mrb[0].mxu0
        %v2572 = vadd.f32 %v936, %v2571
        %v2573 = vpop.f32.mrb[0].mxu0
        %2574 = vmatprep.mubr.f32.mxu0 0.0
        %2575 = vmatmul.mubr.f32.gmra.mrb[0].mxu0 %v2428
        %v2576 = vpop.f32.mrb[0].mxu0
        %v2577 = vadd.f32 %v936, %v2576
        %v2578 = vpop.f32.mrb[0].mxu0
        %2579 = vmatprep.mubr.f32.mxu0 0.0
        %2580 = vmatmul.mubr.f32.gmra.mrb[0].mxu0 %v2430
        %v2581 = vpop.f32.mrb[0].mxu0
        %v2582 = vadd.f32 %v936, %v2581
        %v2583 = vpop.f32.mrb[0].mxu0
        %2584 = vmatprep.mubr.f32.mxu0 0.0
        %2585 = vmatmul.mubr.f32.gmra.mrb[0].mxu0 %v2432
        %v2586 = vpop.f32.mrb[0].mxu0
        %v2587 = vadd.f32 %v936, %v2586
        %v2588 = vpop.f32.mrb[0].mxu0
        %2589 = vmatprep.mubr.f32.mxu0 0.0
        %2590 = vmatmul.mubr.f32.gmra.mrb[0].mxu0 %v2434
        %v2591 = vpop.f32.mrb[0].mxu0
        %v2592 = vadd.f32 %v936, %v2591
        %v2593 = vpop.f32.mrb[0].mxu0
        %2594 = vmatprep.mubr.f32.mxu0 0.0
        %2595 = vmatmul.mubr.f32.gmra.mrb[0].mxu0 %v2436
        %v2596 = vpop.f32.mrb[0].mxu0
        %v2597 = vadd.f32 %v936, %v2596
        %v2598 = vpop.f32.mrb[0].mxu0
        %2599 = vmatprep.mubr.f32.mxu0 0.0
        %2600 = vmatmul.mubr.f32.gmra.mrb[0].mxu0 %v2438
        %v2601 = vpop.f32.mrb[0].mxu0
        %v2602 = vadd.f32 %v936, %v2601
        %v2603 = vpop.f32.mrb[0].mxu0
        %2604 = vmatprep.mubr.f32.mxu0 0.0
        %2605 = vmatmul.mubr.f32.gmra.mrb[0].mxu0 %v2440
        %v2606 = vpop.f32.mrb[0].mxu0
        %v2607 = vadd.f32 %v936, %v2606
        %v2608 = vpop.f32.mrb[0].mxu0
        %2609 = vmatprep.mubr.f32.mxu0 0.0
        %2610 = vmatmul.mubr.f32.gmra.mrb[0].mxu0 %v2442
        %v2611 = vpop.f32.mrb[0].mxu0
        %v2612 = vadd.f32 %v936, %v2611
        %v2613 = vpop.f32.mrb[0].mxu0
        %2614 = vmatprep.mubr.f32.mxu0 0.0
        %2615 = vmatmul.mubr.f32.gmra.mrb[0].mxu0 %v2444
        %v2616 = vpop.f32.mrb[0].mxu0
        %v2617 = vadd.f32 %v936, %v2616
        %v2618 = vpop.f32.mrb[0].mxu0
        %2619 = vmatprep.mubr.f32.mxu0 0.0
        %2620 = vmatmul.mubr.f32.gmra.mrb[0].mxu0 %v2446
        %v2621 = vpop.f32.mrb[0].mxu0
        %v2622 = vadd.f32 %v936, %v2621
        %v2623 = vpop.f32.mrb[0].mxu0
        %2624 = vdwg.mxu0
        %2625 = vmax.xlane.f32.xlu0 %v2547
        %v2626 = vpop.xlane.xlu0 %2625
        %2627 = vmax.xlane.f32.xlu0 %v2552
        %v2628 = vpop.xlane.xlu0 %2627
        %2629 = vmax.xlane.f32.xlu0 %v2557
        %v2630 = vpop.xlane.xlu0 %2629
        %2631 = vmax.xlane.f32.xlu0 %v2562
        %v2632 = vpop.xlane.xlu0 %2631
        %2633 = vmax.xlane.f32.xlu0 %v2567
        %v2634 = vpop.xlane.xlu0 %2633
        %2635 = vmax.xlane.f32.xlu0 %v2572
        %v2636 = vpop.xlane.xlu0 %2635
        %2637 = vmax.xlane.f32.xlu0 %v2577
        %v2638 = vpop.xlane.xlu0 %2637
        %2639 = vmax.xlane.f32.xlu0 %v2582
        %v2640 = vpop.xlane.xlu0 %2639
        %2641 = vmax.xlane.f32.xlu0 %v2587
        %v2642 = vpop.xlane.xlu0 %2641
        %2643 = vmax.xlane.f32.xlu0 %v2592
        %v2644 = vpop.xlane.xlu0 %2643
        %2645 = vmax.xlane.f32.xlu0 %v2597
        %v2646 = vpop.xlane.xlu0 %2645
        %2647 = vmax.xlane.f32.xlu0 %v2602
        %v2648 = vpop.xlane.xlu0 %2647
        %2649 = vmax.xlane.f32.xlu0 %v2607
        %v2650 = vpop.xlane.xlu0 %2649
        %2651 = vmax.xlane.f32.xlu0 %v2612
        %v2652 = vpop.xlane.xlu0 %2651
        %2653 = vmax.xlane.f32.xlu0 %v2617
        %v2654 = vpop.xlane.xlu0 %2653
        %2655 = vmax.xlane.f32.xlu0 %v2622
        %v2656 = vpop.xlane.xlu0 %2655
        %v2657 = vsub.f32 %v2547, %v2626
        %v2658 = vsub.f32 %v2552, %v2628
        %v2659 = vsub.f32 %v2557, %v2630
        %v2660 = vsub.f32 %v2562, %v2632
        %v2661 = vsub.f32 %v2567, %v2634
        %v2662 = vsub.f32 %v2572, %v2636
        %v2663 = vsub.f32 %v2577, %v2638
        %v2664 = vsub.f32 %v2582, %v2640
        %v2665 = vsub.f32 %v2587, %v2642
        %v2666 = vsub.f32 %v2592, %v2644
        %v2667 = vsub.f32 %v2597, %v2646
        %v2668 = vsub.f32 %v2602, %v2648
        %v2669 = vsub.f32 %v2607, %v2650
        %v2670 = vsub.f32 %v2612, %v2652
        %v2671 = vsub.f32 %v2617, %v2654
        %v2672 = vsub.f32 %v2622, %v2656
        %v2673 = vmul.f32 %v2657, 1.442695
        %v2674 = vpow.pop %v2673
        %v2675 = vmul.f32 %v2658, 1.442695
        %v2676 = vpow.pop %v2675
        %v2677 = vmul.f32 %v2659, 1.442695
        %v2678 = vpow.pop %v2677
        %v2679 = vmul.f32 %v2660, 1.442695
        %v2680 = vpow.pop %v2679
        %v2681 = vmul.f32 %v2661, 1.442695
        %v2682 = vpow.pop %v2681
        %v2683 = vmul.f32 %v2662, 1.442695
        %v2684 = vpow.pop %v2683
        %v2685 = vmul.f32 %v2663, 1.442695
        %v2686 = vpow.pop %v2685
        %v2687 = vmul.f32 %v2664, 1.442695
        %v2688 = vpow.pop %v2687
        %v2689 = vmul.f32 %v2665, 1.442695
        %v2690 = vpow.pop %v2689
        %v2691 = vmul.f32 %v2666, 1.442695
        %v2692 = vpow.pop %v2691
        %v2693 = vmul.f32 %v2667, 1.442695
        %v2694 = vpow.pop %v2693
        %v2695 = vmul.f32 %v2668, 1.442695
        %v2696 = vpow.pop %v2695
        %v2697 = vmul.f32 %v2669, 1.442695
        %v2698 = vpow.pop %v2697
        %v2699 = vmul.f32 %v2670, 1.442695
        %v2700 = vpow.pop %v2699
        %v2701 = vmul.f32 %v2671, 1.442695
        %v2702 = vpow.pop %v2701
        %v2703 = vmul.f32 %v2672, 1.442695
        %v2704 = vpow.pop %v2703
        %2705 = vadd.xlane.f32.xlu0 %v2674
        %v2706 = vpop.xlane.xlu0 %2705
        %2707 = vadd.xlane.f32.xlu0 %v2676
        %v2708 = vpop.xlane.xlu0 %2707
        %2709 = vadd.xlane.f32.xlu0 %v2678
        %v2710 = vpop.xlane.xlu0 %2709
        %2711 = vadd.xlane.f32.xlu0 %v2680
        %v2712 = vpop.xlane.xlu0 %2711
        %2713 = vadd.xlane.f32.xlu0 %v2682
        %v2714 = vpop.xlane.xlu0 %2713
        %2715 = vadd.xlane.f32.xlu0 %v2684
        %v2716 = vpop.xlane.xlu0 %2715
        %2717 = vadd.xlane.f32.xlu0 %v2686
        %v2718 = vpop.xlane.xlu0 %2717
        %2719 = vadd.xlane.f32.xlu0 %v2688
        %v2720 = vpop.xlane.xlu0 %2719
        %2721 = vadd.xlane.f32.xlu0 %v2690
        %v2722 = vpop.xlane.xlu0 %2721
        %2723 = vadd.xlane.f32.xlu0 %v2692
        %v2724 = vpop.xlane.xlu0 %2723
        %2725 = vadd.xlane.f32.xlu0 %v2694
        %v2726 = vpop.xlane.xlu0 %2725
        %2727 = vadd.xlane.f32.xlu0 %v2696
        %v2728 = vpop.xlane.xlu0 %2727
        %2729 = vadd.xlane.f32.xlu0 %v2698
        %v2730 = vpop.xlane.xlu0 %2729
        %2731 = vadd.xlane.f32.xlu0 %v2700
        %v2732 = vpop.xlane.xlu0 %2731
        %2733 = vadd.xlane.f32.xlu0 %v2702
        %v2734 = vpop.xlane.xlu0 %2733
        %2735 = vadd.xlane.f32.xlu0 %v2704
        %v2736 = vpop.xlane.xlu0 %2735
        %v2737 = vrcp.pop %v2706
        %v2738 = vmul.f32 1.0, %v2737
        %v2739 = vrcp.pop %v2708
        %v2740 = vmul.f32 1.0, %v2739
        %v2741 = vrcp.pop %v2710
        %v2742 = vmul.f32 1.0, %v2741
        %v2743 = vrcp.pop %v2712
        %v2744 = vmul.f32 1.0, %v2743
        %v2745 = vrcp.pop %v2714
        %v2746 = vmul.f32 1.0, %v2745
        %v2747 = vrcp.pop %v2716
        %v2748 = vmul.f32 1.0, %v2747
        %v2749 = vrcp.pop %v2718
        %v2750 = vmul.f32 1.0, %v2749
        %v2751 = vrcp.pop %v2720
        %v2752 = vmul.f32 1.0, %v2751
        %v2753 = vrcp.pop %v2722
        %v2754 = vmul.f32 1.0, %v2753
        %v2755 = vrcp.pop %v2724
        %v2756 = vmul.f32 1.0, %v2755
        %v2757 = vrcp.pop %v2726
        %v2758 = vmul.f32 1.0, %v2757
        %v2759 = vrcp.pop %v2728
        %v2760 = vmul.f32 1.0, %v2759
        %v2761 = vrcp.pop %v2730
        %v2762 = vmul.f32 1.0, %v2761
        %v2763 = vrcp.pop %v2732
        %v2764 = vmul.f32 1.0, %v2763
        %v2765 = vrcp.pop %v2734
        %v2766 = vmul.f32 1.0, %v2765
        %v2767 = vrcp.pop %v2736
        %v2768 = vmul.f32 1.0, %v2767
        %v2769 = vmul.f32 %v2674, %v2738
        %v2770 = vmul.f32 %v2676, %v2740
        %v2771 = vmul.f32 %v2678, %v2742
        %v2772 = vmul.f32 %v2680, %v2744
        %v2773 = vmul.f32 %v2682, %v2746
        %v2774 = vmul.f32 %v2684, %v2748
        %v2775 = vmul.f32 %v2686, %v2750
        %v2776 = vmul.f32 %v2688, %v2752
        %v2777 = vmul.f32 %v2690, %v2754
        %v2778 = vmul.f32 %v2692, %v2756
        %v2779 = vmul.f32 %v2694, %v2758
        %v2780 = vmul.f32 %v2696, %v2760
        %v2781 = vmul.f32 %v2698, %v2762
        %v2782 = vmul.f32 %v2700, %v2764
        %v2783 = vmul.f32 %v2702, %v2766
        %v2784 = vmul.f32 %v2704, %v2768
        %2801 = vrot.lane.b32.xlu0 %v2304, 112
        %v2802 = vpop.permute.xlu0 %2801
        %2803 = vrot.lane.b32.xlu0 %v2305, 112
        %v2804 = vpop.permute.xlu0 %2803
        %2805 = vrot.lane.b32.xlu0 %v2306, 112
        %v2806 = vpop.permute.xlu0 %2805
        %2807 = vrot.lane.b32.xlu0 %v2307, 112
        %v2808 = vpop.permute.xlu0 %2807
        %2809 = vrot.lane.b32.xlu0 %v2308, 112
        %v2810 = vpop.permute.xlu0 %2809
        %2811 = vrot.lane.b32.xlu0 %v2309, 112
        %v2812 = vpop.permute.xlu0 %2811
        %2813 = vrot.lane.b32.xlu0 %v2310, 112
        %v2814 = vpop.permute.xlu0 %2813
        %2815 = vrot.lane.b32.xlu0 %v2311, 112
        %v2816 = vpop.permute.xlu0 %2815
        %2817 = vrot.lane.b32.xlu0 %v2312, 112
        %v2818 = vpop.permute.xlu0 %2817
        %2819 = vrot.lane.b32.xlu0 %v2313, 112
        %v2820 = vpop.permute.xlu0 %2819
        %2821 = vrot.lane.b32.xlu0 %v2314, 112
        %v2822 = vpop.permute.xlu0 %2821
        %2823 = vrot.lane.b32.xlu0 %v2315, 112
        %v2824 = vpop.permute.xlu0 %2823
        %2825 = vrot.lane.b32.xlu0 %v2316, 112
        %v2826 = vpop.permute.xlu0 %2825
        %2827 = vrot.lane.b32.xlu0 %v2317, 112
        %v2828 = vpop.permute.xlu0 %2827
        %2829 = vrot.lane.b32.xlu0 %v2318, 112
        %v2830 = vpop.permute.xlu0 %2829
        %2831 = vrot.lane.b32.xlu0 %v2319, 112
        %v2832 = vpop.permute.xlu0 %2831
        %2849 = vmatprep.subr.mxu0 0.0
        %2850 = vmatpush1.msra.mxu0 %v2802
        %2851 = vmatprep.subr.mxu0 0.0
        %2852 = vmatpush1.msra.mxu0 %v2804
        %2853 = vmatprep.subr.mxu0 0.0
        %2854 = vmatpush1.msra.mxu0 %v2806
        %2855 = vmatprep.subr.mxu0 0.0
        %2856 = vmatpush1.msra.mxu0 %v2808
        %2857 = vmatprep.subr.mxu0 0.0
        %2858 = vmatpush1.msra.mxu0 %v2810
        %2859 = vmatprep.subr.mxu0 0.0
        %2860 = vmatpush1.msra.mxu0 %v2812
        %2861 = vmatprep.subr.mxu0 0.0
        %2862 = vmatpush1.msra.mxu0 %v2814
        %2863 = vmatprep.subr.mxu0 0.0
        %2864 = vmatpush1.msra.mxu0 %v2816
        %2865 = vmatprep.subr.mxu0 0.0
        %2866 = vmatpush1.msra.mxu0 %v2818
        %2867 = vmatprep.subr.mxu0 0.0
        %2868 = vmatpush1.msra.mxu0 %v2820
        %2869 = vmatprep.subr.mxu0 0.0
        %2870 = vmatpush1.msra.mxu0 %v2822
        %2871 = vmatprep.subr.mxu0 0.0
        %2872 = vmatpush1.msra.mxu0 %v2824
        %2873 = vmatprep.subr.mxu0 0.0
        %2874 = vmatpush1.msra.mxu0 %v2826
        %2875 = vmatprep.subr.mxu0 0.0
        %2876 = vmatpush1.msra.mxu0 %v2828
        %2877 = vmatprep.subr.mxu0 0.0
        %2878 = vmatpush1.msra.mxu0 %v2830
        %2879 = vmatprep.subr.mxu0 0.0
        %2880 = vmatpush1.msra.mxu0 %v2832
        %2881 = vmatprep.subr.mxu0 0.0
        %2882 = vmatpush1.msra.mxu0 0.0
        %2883 = vmatprep.subr.mxu0 0.0
        %2884 = vmatpush1.msra.mxu0 0.0
        %2885 = vmatprep.subr.mxu0 0.0
        %2886 = vmatpush1.msra.mxu0 0.0
        %2887 = vmatprep.subr.mxu0 0.0
        %2888 = vmatpush1.msra.mxu0 0.0
        %2889 = vmatprep.subr.mxu0 0.0
        %2890 = vmatpush1.msra.mxu0 0.0
        %2891 = vmatprep.subr.mxu0 0.0
        %2892 = vmatpush1.msra.mxu0 0.0
        %2893 = vmatprep.subr.mxu0 0.0
        %2894 = vmatpush1.msra.mxu0 0.0
        %2895 = vmatprep.subr.mxu0 0.0
        %2896 = vmatpush1.msra.mxu0 0.0
        %2897 = vmatprep.subr.mxu0 0.0
        %2898 = vmatpush1.msra.mxu0 0.0
        %2899 = vmatprep.subr.mxu0 0.0
        %2900 = vmatpush1.msra.mxu0 0.0
        %2901 = vmatprep.subr.mxu0 0.0
        %2902 = vmatpush1.msra.mxu0 0.0
        %2903 = vmatprep.subr.mxu0 0.0
        %2904 = vmatpush1.msra.mxu0 0.0
        %2905 = vmatprep.subr.mxu0 0.0
        %2906 = vmatpush1.msra.mxu0 0.0
        %2907 = vmatprep.subr.mxu0 0.0
        %2908 = vmatpush1.msra.mxu0 0.0
        %2909 = vmatprep.subr.mxu0 0.0
        %2910 = vmatpush1.msra.mxu0 0.0
        %2911 = vmatprep.subr.mxu0 0.0
        %2912 = vmatpush1.msra.mxu0 0.0
        %2913 = vmatprep.mubr.f32.mxu0 0.0
        %2914 = vmatmul.mubr.f32.gmra.mrb[0].mxu0 %v2769
        %v2915 = vpop.f32.mrb[0].mxu0
        %v2916 = vadd.f32 0.0, %v2915
        %v2917 = vpop.f32.mrb[0].mxu0
        %2918 = vmatprep.mubr.f32.mxu0 0.0
        %2919 = vmatmul.mubr.f32.gmra.mrb[0].mxu0 %v2770
        %v2920 = vpop.f32.mrb[0].mxu0
        %v2921 = vadd.f32 0.0, %v2920
        %v2922 = vpop.f32.mrb[0].mxu0
        %2923 = vmatprep.mubr.f32.mxu0 0.0
        %2924 = vmatmul.mubr.f32.gmra.mrb[0].mxu0 %v2771
        %v2925 = vpop.f32.mrb[0].mxu0
        %v2926 = vadd.f32 0.0, %v2925
        %v2927 = vpop.f32.mrb[0].mxu0
        %2928 = vmatprep.mubr.f32.mxu0 0.0
        %2929 = vmatmul.mubr.f32.gmra.mrb[0].mxu0 %v2772
        %v2930 = vpop.f32.mrb[0].mxu0
        %v2931 = vadd.f32 0.0, %v2930
        %v2932 = vpop.f32.mrb[0].mxu0
        %2933 = vmatprep.mubr.f32.mxu0 0.0
        %2934 = vmatmul.mubr.f32.gmra.mrb[0].mxu0 %v2773
        %v2935 = vpop.f32.mrb[0].mxu0
        %v2936 = vadd.f32 0.0, %v2935
        %v2937 = vpop.f32.mrb[0].mxu0
        %2938 = vmatprep.mubr.f32.mxu0 0.0
        %2939 = vmatmul.mubr.f32.gmra.mrb[0].mxu0 %v2774
        %v2940 = vpop.f32.mrb[0].mxu0
        %v2941 = vadd.f32 0.0, %v2940
        %v2942 = vpop.f32.mrb[0].mxu0
        %2943 = vmatprep.mubr.f32.mxu0 0.0
        %2944 = vmatmul.mubr.f32.gmra.mrb[0].mxu0 %v2775
        %v2945 = vpop.f32.mrb[0].mxu0
        %v2946 = vadd.f32 0.0, %v2945
        %v2947 = vpop.f32.mrb[0].mxu0
        %2948 = vmatprep.mubr.f32.mxu0 0.0
        %2949 = vmatmul.mubr.f32.gmra.mrb[0].mxu0 %v2776
        %v2950 = vpop.f32.mrb[0].mxu0
        %v2951 = vadd.f32 0.0, %v2950
        %v2952 = vpop.f32.mrb[0].mxu0
        %2953 = vmatprep.mubr.f32.mxu0 0.0
        %2954 = vmatmul.mubr.f32.gmra.mrb[0].mxu0 %v2777
        %v2955 = vpop.f32.mrb[0].mxu0
        %v2956 = vadd.f32 0.0, %v2955
        %v2957 = vpop.f32.mrb[0].mxu0
        %2958 = vmatprep.mubr.f32.mxu0 0.0
        %2959 = vmatmul.mubr.f32.gmra.mrb[0].mxu0 %v2778
        %v2960 = vpop.f32.mrb[0].mxu0
        %v2961 = vadd.f32 0.0, %v2960
        %v2962 = vpop.f32.mrb[0].mxu0
        %2963 = vmatprep.mubr.f32.mxu0 0.0
        %2964 = vmatmul.mubr.f32.gmra.mrb[0].mxu0 %v2779
        %v2965 = vpop.f32.mrb[0].mxu0
        %v2966 = vadd.f32 0.0, %v2965
        %v2967 = vpop.f32.mrb[0].mxu0
        %2968 = vmatprep.mubr.f32.mxu0 0.0
        %2969 = vmatmul.mubr.f32.gmra.mrb[0].mxu0 %v2780
        %v2970 = vpop.f32.mrb[0].mxu0
        %v2971 = vadd.f32 0.0, %v2970
        %v2972 = vpop.f32.mrb[0].mxu0
        %2973 = vmatprep.mubr.f32.mxu0 0.0
        %2974 = vmatmul.mubr.f32.gmra.mrb[0].mxu0 %v2781
        %v2975 = vpop.f32.mrb[0].mxu0
        %v2976 = vadd.f32 0.0, %v2975
        %v2977 = vpop.f32.mrb[0].mxu0
        %2978 = vmatprep.mubr.f32.mxu0 0.0
        %2979 = vmatmul.mubr.f32.gmra.mrb[0].mxu0 %v2782
        %v2980 = vpop.f32.mrb[0].mxu0
        %v2981 = vadd.f32 0.0, %v2980
        %v2982 = vpop.f32.mrb[0].mxu0
        %2983 = vmatprep.mubr.f32.mxu0 0.0
        %2984 = vmatmul.mubr.f32.gmra.mrb[0].mxu0 %v2783
        %v2985 = vpop.f32.mrb[0].mxu0
        %v2986 = vadd.f32 0.0, %v2985
        %v2987 = vpop.f32.mrb[0].mxu0
        %2988 = vmatprep.mubr.f32.mxu0 0.0
        %2989 = vmatmul.mubr.f32.gmra.mrb[0].mxu0 %v2784
        %v2990 = vpop.f32.mrb[0].mxu0
        %v2991 = vadd.f32 0.0, %v2990
        %v2992 = vpop.f32.mrb[0].mxu0
        %2993 = vdwg.mxu0
        %3010 = vrot.lane.b32.xlu0 %v2916, 16
        %v3011 = vpop.permute.xlu0 %3010
        %3012 = vrot.lane.b32.xlu0 %v2921, 16
        %v3013 = vpop.permute.xlu0 %3012
        %3014 = vrot.lane.b32.xlu0 %v2926, 16
        %v3015 = vpop.permute.xlu0 %3014
        %3016 = vrot.lane.b32.xlu0 %v2931, 16
        %v3017 = vpop.permute.xlu0 %3016
        %3018 = vrot.lane.b32.xlu0 %v2936, 16
        %v3019 = vpop.permute.xlu0 %3018
        %3020 = vrot.lane.b32.xlu0 %v2941, 16
        %v3021 = vpop.permute.xlu0 %3020
        %3022 = vrot.lane.b32.xlu0 %v2946, 16
        %v3023 = vpop.permute.xlu0 %3022
        %3024 = vrot.lane.b32.xlu0 %v2951, 16
        %v3025 = vpop.permute.xlu0 %3024
        %3026 = vrot.lane.b32.xlu0 %v2956, 16
        %v3027 = vpop.permute.xlu0 %3026
        %3028 = vrot.lane.b32.xlu0 %v2961, 16
        %v3029 = vpop.permute.xlu0 %3028
        %3030 = vrot.lane.b32.xlu0 %v2966, 16
        %v3031 = vpop.permute.xlu0 %3030
        %3032 = vrot.lane.b32.xlu0 %v2971, 16
        %v3033 = vpop.permute.xlu0 %3032
        %3034 = vrot.lane.b32.xlu0 %v2976, 16
        %v3035 = vpop.permute.xlu0 %3034
        %3036 = vrot.lane.b32.xlu0 %v2981, 16
        %v3037 = vpop.permute.xlu0 %3036
        %3038 = vrot.lane.b32.xlu0 %v2986, 16
        %v3039 = vpop.permute.xlu0 %3038
        %3040 = vrot.lane.b32.xlu0 %v2991, 16
        %v3041 = vpop.permute.xlu0 %3040
        %vm3058 = vcmask 195712
        %3059 = vst.msk [vmem:[%s368] sm:$0xff] %vm3058, %v3011
        %3060 = vst.msk [vmem:[%s368 + $0x8] sm:$0xff] %vm3058, %v3013
        %3061 = vst.msk [vmem:[%s368 + $0x10] sm:$0xff] %vm3058, %v3015
        %3062 = vst.msk [vmem:[%s368 + $0x18] sm:$0xff] %vm3058, %v3017
        %3063 = vst.msk [vmem:[%s368 + $0x20] sm:$0xff] %vm3058, %v3019
        %3064 = vst.msk [vmem:[%s368 + $0x28] sm:$0xff] %vm3058, %v3021
        %3065 = vst.msk [vmem:[%s368 + $0x30] sm:$0xff] %vm3058, %v3023
        %3066 = vst.msk [vmem:[%s368 + $0x38] sm:$0xff] %vm3058, %v3025
        %3067 = vst.msk [vmem:[%s368 + $0x40] sm:$0xff] %vm3058, %v3027
        %3068 = vst.msk [vmem:[%s368 + $0x48] sm:$0xff] %vm3058, %v3029
        %3069 = vst.msk [vmem:[%s368 + $0x50] sm:$0xff] %vm3058, %v3031
        %3070 = vst.msk [vmem:[%s368 + $0x58] sm:$0xff] %vm3058, %v3033
        %3071 = vst.msk [vmem:[%s368 + $0x60] sm:$0xff] %vm3058, %v3035
        %3072 = vst.msk [vmem:[%s368 + $0x68] sm:$0xff] %vm3058, %v3037
        %3073 = vst.msk [vmem:[%s368 + $0x70] sm:$0xff] %vm3058, %v3039
        %3074 = vst.msk [vmem:[%s368 + $0x78] sm:$0xff] %vm3058, %v3041
        %v3075 = vld [vmem:[#allocation3] sm:$0xff]
        %v3076 = vld [vmem:[#allocation3 + $0x8] sm:$0xff]
        %v3077 = vld [vmem:[#allocation3 + $0x10] sm:$0xff]
        %v3078 = vld [vmem:[#allocation3 + $0x18] sm:$0xff]
        %v3079 = vld [vmem:[#allocation3 + $0x20] sm:$0xff]
        %v3080 = vld [vmem:[#allocation3 + $0x28] sm:$0xff]
        %v3081 = vld [vmem:[#allocation3 + $0x30] sm:$0xff]
        %v3082 = vld [vmem:[#allocation3 + $0x38] sm:$0xff]
        %v3083 = vld [vmem:[#allocation3 + $0x40] sm:$0xff]
        %v3084 = vld [vmem:[#allocation3 + $0x48] sm:$0xff]
        %v3085 = vld [vmem:[#allocation3 + $0x50] sm:$0xff]
        %v3086 = vld [vmem:[#allocation3 + $0x58] sm:$0xff]
        %v3087 = vld [vmem:[#allocation3 + $0x60] sm:$0xff]
        %v3088 = vld [vmem:[#allocation3 + $0x68] sm:$0xff]
        %v3089 = vld [vmem:[#allocation3 + $0x70] sm:$0xff]
        %v3090 = vld [vmem:[#allocation3 + $0x78] sm:$0xff]
        %v3091 = vld [vmem:[#allocation2] sm:$0xff]
        %v3092 = vld [vmem:[#allocation2 + $0x8] sm:$0xff]
        %v3093 = vld [vmem:[#allocation2 + $0x10] sm:$0xff]
        %v3094 = vld [vmem:[#allocation2 + $0x18] sm:$0xff]
        %v3095 = vld [vmem:[#allocation2 + $0x20] sm:$0xff]
        %v3096 = vld [vmem:[#allocation2 + $0x28] sm:$0xff]
        %v3097 = vld [vmem:[#allocation2 + $0x30] sm:$0xff]
        %v3098 = vld [vmem:[#allocation2 + $0x38] sm:$0xff]
        %v3099 = vld [vmem:[#allocation2 + $0x40] sm:$0xff]
        %v3100 = vld [vmem:[#allocation2 + $0x48] sm:$0xff]
        %v3101 = vld [vmem:[#allocation2 + $0x50] sm:$0xff]
        %v3102 = vld [vmem:[#allocation2 + $0x58] sm:$0xff]
        %v3103 = vld [vmem:[#allocation2 + $0x60] sm:$0xff]
        %v3104 = vld [vmem:[#allocation2 + $0x68] sm:$0xff]
        %v3105 = vld [vmem:[#allocation2 + $0x70] sm:$0xff]
        %v3106 = vld [vmem:[#allocation2 + $0x78] sm:$0xff]
        %3107 = vrot.lane.b32.xlu0 %v915, 104
        %v3108 = vpop.permute.xlu0 %3107
        %3109 = vrot.lane.b32.xlu0 %v916, 104
        %v3110 = vpop.permute.xlu0 %3109
        %3111 = vrot.lane.b32.xlu0 %v917, 104
        %v3112 = vpop.permute.xlu0 %3111
        %3113 = vrot.lane.b32.xlu0 %v918, 104
        %v3114 = vpop.permute.xlu0 %3113
        %3115 = vrot.lane.b32.xlu0 %v919, 104
        %v3116 = vpop.permute.xlu0 %3115
        %3117 = vrot.lane.b32.xlu0 %v920, 104
        %v3118 = vpop.permute.xlu0 %3117
        %3119 = vrot.lane.b32.xlu0 %v921, 104
        %v3120 = vpop.permute.xlu0 %3119
        %3121 = vrot.lane.b32.xlu0 %v922, 104
        %v3122 = vpop.permute.xlu0 %3121
        %3123 = vrot.lane.b32.xlu0 %v923, 104
        %v3124 = vpop.permute.xlu0 %3123
        %3125 = vrot.lane.b32.xlu0 %v924, 104
        %v3126 = vpop.permute.xlu0 %3125
        %3127 = vrot.lane.b32.xlu0 %v925, 104
        %v3128 = vpop.permute.xlu0 %3127
        %3129 = vrot.lane.b32.xlu0 %v926, 104
        %v3130 = vpop.permute.xlu0 %3129
        %3131 = vrot.lane.b32.xlu0 %v927, 104
        %v3132 = vpop.permute.xlu0 %3131
        %3133 = vrot.lane.b32.xlu0 %v928, 104
        %v3134 = vpop.permute.xlu0 %3133
        %3135 = vrot.lane.b32.xlu0 %v929, 104
        %v3136 = vpop.permute.xlu0 %3135
        %3137 = vrot.lane.b32.xlu0 %v930, 104
        %v3138 = vpop.permute.xlu0 %3137
        %3155 = vrot.lane.b32.xlu0 %v3091, 104
        %v3156 = vpop.permute.xlu0 %3155
        %3157 = vrot.lane.b32.xlu0 %v3092, 104
        %v3158 = vpop.permute.xlu0 %3157
        %3159 = vrot.lane.b32.xlu0 %v3093, 104
        %v3160 = vpop.permute.xlu0 %3159
        %3161 = vrot.lane.b32.xlu0 %v3094, 104
        %v3162 = vpop.permute.xlu0 %3161
        %3163 = vrot.lane.b32.xlu0 %v3095, 104
        %v3164 = vpop.permute.xlu0 %3163
        %3165 = vrot.lane.b32.xlu0 %v3096, 104
        %v3166 = vpop.permute.xlu0 %3165
        %3167 = vrot.lane.b32.xlu0 %v3097, 104
        %v3168 = vpop.permute.xlu0 %3167
        %3169 = vrot.lane.b32.xlu0 %v3098, 104
        %v3170 = vpop.permute.xlu0 %3169
        %3171 = vrot.lane.b32.xlu0 %v3099, 104
        %v3172 = vpop.permute.xlu0 %3171
        %3173 = vrot.lane.b32.xlu0 %v3100, 104
        %v3174 = vpop.permute.xlu0 %3173
        %3175 = vrot.lane.b32.xlu0 %v3101, 104
        %v3176 = vpop.permute.xlu0 %3175
        %3177 = vrot.lane.b32.xlu0 %v3102, 104
        %v3178 = vpop.permute.xlu0 %3177
        %3179 = vrot.lane.b32.xlu0 %v3103, 104
        %v3180 = vpop.permute.xlu0 %3179
        %3181 = vrot.lane.b32.xlu0 %v3104, 104
        %v3182 = vpop.permute.xlu0 %3181
        %3183 = vrot.lane.b32.xlu0 %v3105, 104
        %v3184 = vpop.permute.xlu0 %3183
        %3185 = vrot.lane.b32.xlu0 %v3106, 104
        %v3186 = vpop.permute.xlu0 %3185
        %v3187 = vsel %vm970, %v3108, 0
        %v3189 = vsel %vm970, %v3110, 0
        %v3191 = vsel %vm970, %v3112, 0
        %v3193 = vsel %vm970, %v3114, 0
        %v3195 = vsel %vm970, %v3116, 0
        %v3197 = vsel %vm970, %v3118, 0
        %v3199 = vsel %vm970, %v3120, 0
        %v3201 = vsel %vm970, %v3122, 0
        %v3203 = vsel %vm970, %v3124, 0
        %v3205 = vsel %vm970, %v3126, 0
        %v3207 = vsel %vm970, %v3128, 0
        %v3209 = vsel %vm970, %v3130, 0
        %v3211 = vsel %vm970, %v3132, 0
        %v3213 = vsel %vm970, %v3134, 0
        %v3215 = vsel %vm970, %v3136, 0
        %v3217 = vsel %vm970, %v3138, 0
        %v3219 = vsel %vm970, %v3156, 0
        %v3221 = vsel %vm970, %v3158, 0
        %v3223 = vsel %vm970, %v3160, 0
        %v3225 = vsel %vm970, %v3162, 0
        %v3227 = vsel %vm970, %v3164, 0
        %v3229 = vsel %vm970, %v3166, 0
        %v3231 = vsel %vm970, %v3168, 0
        %v3233 = vsel %vm970, %v3170, 0
        %v3235 = vsel %vm970, %v3172, 0
        %v3237 = vsel %vm970, %v3174, 0
        %v3239 = vsel %vm970, %v3176, 0
        %v3241 = vsel %vm970, %v3178, 0
        %v3243 = vsel %vm970, %v3180, 0
        %v3245 = vsel %vm970, %v3182, 0
        %v3247 = vsel %vm970, %v3184, 0
        %v3249 = vsel %vm970, %v3186, 0
        %3251 = vmatprep.subr.mxu0 0.0
        %3252 = vmatpush1.xpose.msra.mxu0 %v3219
        %3253 = vmatprep.subr.mxu0 0.0
        %3254 = vmatpush1.xpose.msra.mxu0 %v3221
        %3255 = vmatprep.subr.mxu0 0.0
        %3256 = vmatpush1.xpose.msra.mxu0 %v3223
        %3257 = vmatprep.subr.mxu0 0.0
        %3258 = vmatpush1.xpose.msra.mxu0 %v3225
        %3259 = vmatprep.subr.mxu0 0.0
        %3260 = vmatpush1.xpose.msra.mxu0 %v3227
        %3261 = vmatprep.subr.mxu0 0.0
        %3262 = vmatpush1.xpose.msra.mxu0 %v3229
        %3263 = vmatprep.subr.mxu0 0.0
        %3264 = vmatpush1.xpose.msra.mxu0 %v3231
        %3265 = vmatprep.subr.mxu0 0.0
        %3266 = vmatpush1.xpose.msra.mxu0 %v3233
        %3267 = vmatprep.subr.mxu0 0.0
        %3268 = vmatpush1.xpose.msra.mxu0 %v3235
        %3269 = vmatprep.subr.mxu0 0.0
        %3270 = vmatpush1.xpose.msra.mxu0 %v3237
        %3271 = vmatprep.subr.mxu0 0.0
        %3272 = vmatpush1.xpose.msra.mxu0 %v3239
        %3273 = vmatprep.subr.mxu0 0.0
        %3274 = vmatpush1.xpose.msra.mxu0 %v3241
        %3275 = vmatprep.subr.mxu0 0.0
        %3276 = vmatpush1.xpose.msra.mxu0 %v3243
        %3277 = vmatprep.subr.mxu0 0.0
        %3278 = vmatpush1.xpose.msra.mxu0 %v3245
        %3279 = vmatprep.subr.mxu0 0.0
        %3280 = vmatpush1.xpose.msra.mxu0 %v3247
        %3281 = vmatprep.subr.mxu0 0.0
        %3282 = vmatpush1.xpose.msra.mxu0 %v3249
        %3283 = vmatprep.subr.mxu0 0.0
        %3284 = vmatpush1.xpose.msra.mxu0 0.0
        %3285 = vmatprep.subr.mxu0 0.0
        %3286 = vmatpush1.xpose.msra.mxu0 0.0
        %3287 = vmatprep.subr.mxu0 0.0
        %3288 = vmatpush1.xpose.msra.mxu0 0.0
        %3289 = vmatprep.subr.mxu0 0.0
        %3290 = vmatpush1.xpose.msra.mxu0 0.0
        %3291 = vmatprep.subr.mxu0 0.0
        %3292 = vmatpush1.xpose.msra.mxu0 0.0
        %3293 = vmatprep.subr.mxu0 0.0
        %3294 = vmatpush1.xpose.msra.mxu0 0.0
        %3295 = vmatprep.subr.mxu0 0.0
        %3296 = vmatpush1.xpose.msra.mxu0 0.0
        %3297 = vmatprep.subr.mxu0 0.0
        %3298 = vmatpush1.xpose.msra.mxu0 0.0
        %3299 = vmatprep.subr.mxu0 0.0
        %3300 = vmatpush1.xpose.msra.mxu0 0.0
        %3301 = vmatprep.subr.mxu0 0.0
        %3302 = vmatpush1.xpose.msra.mxu0 0.0
        %3303 = vmatprep.subr.mxu0 0.0
        %3304 = vmatpush1.xpose.msra.mxu0 0.0
        %3305 = vmatprep.subr.mxu0 0.0
        %3306 = vmatpush1.xpose.msra.mxu0 0.0
        %3307 = vmatprep.subr.mxu0 0.0
        %3308 = vmatpush1.xpose.msra.mxu0 0.0
        %3309 = vmatprep.subr.mxu0 0.0
        %3310 = vmatpush1.xpose.msra.mxu0 0.0
        %3311 = vmatprep.subr.mxu0 0.0
        %3312 = vmatpush1.xpose.msra.mxu0 0.0
        %3313 = vmatprep.subr.mxu0 0.0
        %3314 = vmatpush1.xpose.msra.mxu0 0.0
        %3315 = vmatprep.mubr.f32.mxu0 0.0
        %3316 = vmatmul.mubr.f32.gmra.mrb[0].mxu0 %v3187
        %v3317 = vpop.f32.mrb[0].mxu0
        %v3318 = vadd.f32 %v936, %v3317
        %v3319 = vpop.f32.mrb[0].mxu0
        %3320 = vmatprep.mubr.f32.mxu0 0.0
        %3321 = vmatmul.mubr.f32.gmra.mrb[0].mxu0 %v3189
        %v3322 = vpop.f32.mrb[0].mxu0
        %v3323 = vadd.f32 %v936, %v3322
        %v3324 = vpop.f32.mrb[0].mxu0
        %3325 = vmatprep.mubr.f32.mxu0 0.0
        %3326 = vmatmul.mubr.f32.gmra.mrb[0].mxu0 %v3191
        %v3327 = vpop.f32.mrb[0].mxu0
        %v3328 = vadd.f32 %v936, %v3327
        %v3329 = vpop.f32.mrb[0].mxu0
        %3330 = vmatprep.mubr.f32.mxu0 0.0
        %3331 = vmatmul.mubr.f32.gmra.mrb[0].mxu0 %v3193
        %v3332 = vpop.f32.mrb[0].mxu0
        %v3333 = vadd.f32 %v936, %v3332
        %v3334 = vpop.f32.mrb[0].mxu0
        %3335 = vmatprep.mubr.f32.mxu0 0.0
        %3336 = vmatmul.mubr.f32.gmra.mrb[0].mxu0 %v3195
        %v3337 = vpop.f32.mrb[0].mxu0
        %v3338 = vadd.f32 %v936, %v3337
        %v3339 = vpop.f32.mrb[0].mxu0
        %3340 = vmatprep.mubr.f32.mxu0 0.0
        %3341 = vmatmul.mubr.f32.gmra.mrb[0].mxu0 %v3197
        %v3342 = vpop.f32.mrb[0].mxu0
        %v3343 = vadd.f32 %v936, %v3342
        %v3344 = vpop.f32.mrb[0].mxu0
        %3345 = vmatprep.mubr.f32.mxu0 0.0
        %3346 = vmatmul.mubr.f32.gmra.mrb[0].mxu0 %v3199
        %v3347 = vpop.f32.mrb[0].mxu0
        %v3348 = vadd.f32 %v936, %v3347
        %v3349 = vpop.f32.mrb[0].mxu0
        %3350 = vmatprep.mubr.f32.mxu0 0.0
        %3351 = vmatmul.mubr.f32.gmra.mrb[0].mxu0 %v3201
        %v3352 = vpop.f32.mrb[0].mxu0
        %v3353 = vadd.f32 %v936, %v3352
        %v3354 = vpop.f32.mrb[0].mxu0
        %3355 = vmatprep.mubr.f32.mxu0 0.0
        %3356 = vmatmul.mubr.f32.gmra.mrb[0].mxu0 %v3203
        %v3357 = vpop.f32.mrb[0].mxu0
        %v3358 = vadd.f32 %v936, %v3357
        %v3359 = vpop.f32.mrb[0].mxu0
        %3360 = vmatprep.mubr.f32.mxu0 0.0
        %3361 = vmatmul.mubr.f32.gmra.mrb[0].mxu0 %v3205
        %v3362 = vpop.f32.mrb[0].mxu0
        %v3363 = vadd.f32 %v936, %v3362
        %v3364 = vpop.f32.mrb[0].mxu0
        %3365 = vmatprep.mubr.f32.mxu0 0.0
        %3366 = vmatmul.mubr.f32.gmra.mrb[0].mxu0 %v3207
        %v3367 = vpop.f32.mrb[0].mxu0
        %v3368 = vadd.f32 %v936, %v3367
        %v3369 = vpop.f32.mrb[0].mxu0
        %3370 = vmatprep.mubr.f32.mxu0 0.0
        %3371 = vmatmul.mubr.f32.gmra.mrb[0].mxu0 %v3209
        %v3372 = vpop.f32.mrb[0].mxu0
        %v3373 = vadd.f32 %v936, %v3372
        %v3374 = vpop.f32.mrb[0].mxu0
        %3375 = vmatprep.mubr.f32.mxu0 0.0
        %3376 = vmatmul.mubr.f32.gmra.mrb[0].mxu0 %v3211
        %v3377 = vpop.f32.mrb[0].mxu0
        %v3378 = vadd.f32 %v936, %v3377
        %v3379 = vpop.f32.mrb[0].mxu0
        %3380 = vmatprep.mubr.f32.mxu0 0.0
        %3381 = vmatmul.mubr.f32.gmra.mrb[0].mxu0 %v3213
        %v3382 = vpop.f32.mrb[0].mxu0
        %v3383 = vadd.f32 %v936, %v3382
        %v3384 = vpop.f32.mrb[0].mxu0
        %3385 = vmatprep.mubr.f32.mxu0 0.0
        %3386 = vmatmul.mubr.f32.gmra.mrb[0].mxu0 %v3215
        %v3387 = vpop.f32.mrb[0].mxu0
        %v3388 = vadd.f32 %v936, %v3387
        %v3389 = vpop.f32.mrb[0].mxu0
        %3390 = vmatprep.mubr.f32.mxu0 0.0
        %3391 = vmatmul.mubr.f32.gmra.mrb[0].mxu0 %v3217
        %v3392 = vpop.f32.mrb[0].mxu0
        %v3393 = vadd.f32 %v936, %v3392
        %v3394 = vpop.f32.mrb[0].mxu0
        %3395 = vdwg.mxu0
        %3396 = vmax.xlane.f32.xlu0 %v3318
        %v3397 = vpop.xlane.xlu0 %3396
        %3398 = vmax.xlane.f32.xlu0 %v3323
        %v3399 = vpop.xlane.xlu0 %3398
        %3400 = vmax.xlane.f32.xlu0 %v3328
        %v3401 = vpop.xlane.xlu0 %3400
        %3402 = vmax.xlane.f32.xlu0 %v3333
        %v3403 = vpop.xlane.xlu0 %3402
        %3404 = vmax.xlane.f32.xlu0 %v3338
        %v3405 = vpop.xlane.xlu0 %3404
        %3406 = vmax.xlane.f32.xlu0 %v3343
        %v3407 = vpop.xlane.xlu0 %3406
        %3408 = vmax.xlane.f32.xlu0 %v3348
        %v3409 = vpop.xlane.xlu0 %3408
        %3410 = vmax.xlane.f32.xlu0 %v3353
        %v3411 = vpop.xlane.xlu0 %3410
        %3412 = vmax.xlane.f32.xlu0 %v3358
        %v3413 = vpop.xlane.xlu0 %3412
        %3414 = vmax.xlane.f32.xlu0 %v3363
        %v3415 = vpop.xlane.xlu0 %3414
        %3416 = vmax.xlane.f32.xlu0 %v3368
        %v3417 = vpop.xlane.xlu0 %3416
        %3418 = vmax.xlane.f32.xlu0 %v3373
        %v3419 = vpop.xlane.xlu0 %3418
        %3420 = vmax.xlane.f32.xlu0 %v3378
        %v3421 = vpop.xlane.xlu0 %3420
        %3422 = vmax.xlane.f32.xlu0 %v3383
        %v3423 = vpop.xlane.xlu0 %3422
        %3424 = vmax.xlane.f32.xlu0 %v3388
        %v3425 = vpop.xlane.xlu0 %3424
        %3426 = vmax.xlane.f32.xlu0 %v3393
        %v3427 = vpop.xlane.xlu0 %3426
        %v3428 = vsub.f32 %v3318, %v3397
        %v3429 = vsub.f32 %v3323, %v3399
        %v3430 = vsub.f32 %v3328, %v3401
        %v3431 = vsub.f32 %v3333, %v3403
        %v3432 = vsub.f32 %v3338, %v3405
        %v3433 = vsub.f32 %v3343, %v3407
        %v3434 = vsub.f32 %v3348, %v3409
        %v3435 = vsub.f32 %v3353, %v3411
        %v3436 = vsub.f32 %v3358, %v3413
        %v3437 = vsub.f32 %v3363, %v3415
        %v3438 = vsub.f32 %v3368, %v3417
        %v3439 = vsub.f32 %v3373, %v3419
        %v3440 = vsub.f32 %v3378, %v3421
        %v3441 = vsub.f32 %v3383, %v3423
        %v3442 = vsub.f32 %v3388, %v3425
        %v3443 = vsub.f32 %v3393, %v3427
        %v3444 = vmul.f32 %v3428, 1.442695
        %v3445 = vpow.pop %v3444
        %v3446 = vmul.f32 %v3429, 1.442695
        %v3447 = vpow.pop %v3446
        %v3448 = vmul.f32 %v3430, 1.442695
        %v3449 = vpow.pop %v3448
        %v3450 = vmul.f32 %v3431, 1.442695
        %v3451 = vpow.pop %v3450
        %v3452 = vmul.f32 %v3432, 1.442695
        %v3453 = vpow.pop %v3452
        %v3454 = vmul.f32 %v3433, 1.442695
        %v3455 = vpow.pop %v3454
        %v3456 = vmul.f32 %v3434, 1.442695
        %v3457 = vpow.pop %v3456
        %v3458 = vmul.f32 %v3435, 1.442695
        %v3459 = vpow.pop %v3458
        %v3460 = vmul.f32 %v3436, 1.442695
        %v3461 = vpow.pop %v3460
        %v3462 = vmul.f32 %v3437, 1.442695
        %v3463 = vpow.pop %v3462
        %v3464 = vmul.f32 %v3438, 1.442695
        %v3465 = vpow.pop %v3464
        %v3466 = vmul.f32 %v3439, 1.442695
        %v3467 = vpow.pop %v3466
        %v3468 = vmul.f32 %v3440, 1.442695
        %v3469 = vpow.pop %v3468
        %v3470 = vmul.f32 %v3441, 1.442695
        %v3471 = vpow.pop %v3470
        %v3472 = vmul.f32 %v3442, 1.442695
        %v3473 = vpow.pop %v3472
        %v3474 = vmul.f32 %v3443, 1.442695
        %v3475 = vpow.pop %v3474
        %3476 = vadd.xlane.f32.xlu0 %v3445
        %v3477 = vpop.xlane.xlu0 %3476
        %3478 = vadd.xlane.f32.xlu0 %v3447
        %v3479 = vpop.xlane.xlu0 %3478
        %3480 = vadd.xlane.f32.xlu0 %v3449
        %v3481 = vpop.xlane.xlu0 %3480
        %3482 = vadd.xlane.f32.xlu0 %v3451
        %v3483 = vpop.xlane.xlu0 %3482
        %3484 = vadd.xlane.f32.xlu0 %v3453
        %v3485 = vpop.xlane.xlu0 %3484
        %3486 = vadd.xlane.f32.xlu0 %v3455
        %v3487 = vpop.xlane.xlu0 %3486
        %3488 = vadd.xlane.f32.xlu0 %v3457
        %v3489 = vpop.xlane.xlu0 %3488
        %3490 = vadd.xlane.f32.xlu0 %v3459
        %v3491 = vpop.xlane.xlu0 %3490
        %3492 = vadd.xlane.f32.xlu0 %v3461
        %v3493 = vpop.xlane.xlu0 %3492
        %3494 = vadd.xlane.f32.xlu0 %v3463
        %v3495 = vpop.xlane.xlu0 %3494
        %3496 = vadd.xlane.f32.xlu0 %v3465
        %v3497 = vpop.xlane.xlu0 %3496
        %3498 = vadd.xlane.f32.xlu0 %v3467
        %v3499 = vpop.xlane.xlu0 %3498
        %3500 = vadd.xlane.f32.xlu0 %v3469
        %v3501 = vpop.xlane.xlu0 %3500
        %3502 = vadd.xlane.f32.xlu0 %v3471
        %v3503 = vpop.xlane.xlu0 %3502
        %3504 = vadd.xlane.f32.xlu0 %v3473
        %v3505 = vpop.xlane.xlu0 %3504
        %3506 = vadd.xlane.f32.xlu0 %v3475
        %v3507 = vpop.xlane.xlu0 %3506
        %v3508 = vrcp.pop %v3477
        %v3509 = vmul.f32 1.0, %v3508
        %v3510 = vrcp.pop %v3479
        %v3511 = vmul.f32 1.0, %v3510
        %v3512 = vrcp.pop %v3481
        %v3513 = vmul.f32 1.0, %v3512
        %v3514 = vrcp.pop %v3483
        %v3515 = vmul.f32 1.0, %v3514
        %v3516 = vrcp.pop %v3485
        %v3517 = vmul.f32 1.0, %v3516
        %v3518 = vrcp.pop %v3487
        %v3519 = vmul.f32 1.0, %v3518
        %v3520 = vrcp.pop %v3489
        %v3521 = vmul.f32 1.0, %v3520
        %v3522 = vrcp.pop %v3491
        %v3523 = vmul.f32 1.0, %v3522
        %v3524 = vrcp.pop %v3493
        %v3525 = vmul.f32 1.0, %v3524
        %v3526 = vrcp.pop %v3495
        %v3527 = vmul.f32 1.0, %v3526
        %v3528 = vrcp.pop %v3497
        %v3529 = vmul.f32 1.0, %v3528
        %v3530 = vrcp.pop %v3499
        %v3531 = vmul.f32 1.0, %v3530
        %v3532 = vrcp.pop %v3501
        %v3533 = vmul.f32 1.0, %v3532
        %v3534 = vrcp.pop %v3503
        %v3535 = vmul.f32 1.0, %v3534
        %v3536 = vrcp.pop %v3505
        %v3537 = vmul.f32 1.0, %v3536
        %v3538 = vrcp.pop %v3507
        %v3539 = vmul.f32 1.0, %v3538
        %v3540 = vmul.f32 %v3445, %v3509
        %v3541 = vmul.f32 %v3447, %v3511
        %v3542 = vmul.f32 %v3449, %v3513
        %v3543 = vmul.f32 %v3451, %v3515
        %v3544 = vmul.f32 %v3453, %v3517
        %v3545 = vmul.f32 %v3455, %v3519
        %v3546 = vmul.f32 %v3457, %v3521
        %v3547 = vmul.f32 %v3459, %v3523
        %v3548 = vmul.f32 %v3461, %v3525
        %v3549 = vmul.f32 %v3463, %v3527
        %v3550 = vmul.f32 %v3465, %v3529
        %v3551 = vmul.f32 %v3467, %v3531
        %v3552 = vmul.f32 %v3469, %v3533
        %v3553 = vmul.f32 %v3471, %v3535
        %v3554 = vmul.f32 %v3473, %v3537
        %v3555 = vmul.f32 %v3475, %v3539
        %3572 = vrot.lane.b32.xlu0 %v3075, 104
        %v3573 = vpop.permute.xlu0 %3572
        %3574 = vrot.lane.b32.xlu0 %v3076, 104
        %v3575 = vpop.permute.xlu0 %3574
        %3576 = vrot.lane.b32.xlu0 %v3077, 104
        %v3577 = vpop.permute.xlu0 %3576
        %3578 = vrot.lane.b32.xlu0 %v3078, 104
        %v3579 = vpop.permute.xlu0 %3578
        %3580 = vrot.lane.b32.xlu0 %v3079, 104
        %v3581 = vpop.permute.xlu0 %3580
        %3582 = vrot.lane.b32.xlu0 %v3080, 104
        %v3583 = vpop.permute.xlu0 %3582
        %3584 = vrot.lane.b32.xlu0 %v3081, 104
        %v3585 = vpop.permute.xlu0 %3584
        %3586 = vrot.lane.b32.xlu0 %v3082, 104
        %v3587 = vpop.permute.xlu0 %3586
        %3588 = vrot.lane.b32.xlu0 %v3083, 104
        %v3589 = vpop.permute.xlu0 %3588
        %3590 = vrot.lane.b32.xlu0 %v3084, 104
        %v3591 = vpop.permute.xlu0 %3590
        %3592 = vrot.lane.b32.xlu0 %v3085, 104
        %v3593 = vpop.permute.xlu0 %3592
        %3594 = vrot.lane.b32.xlu0 %v3086, 104
        %v3595 = vpop.permute.xlu0 %3594
        %3596 = vrot.lane.b32.xlu0 %v3087, 104
        %v3597 = vpop.permute.xlu0 %3596
        %3598 = vrot.lane.b32.xlu0 %v3088, 104
        %v3599 = vpop.permute.xlu0 %3598
        %3600 = vrot.lane.b32.xlu0 %v3089, 104
        %v3601 = vpop.permute.xlu0 %3600
        %3602 = vrot.lane.b32.xlu0 %v3090, 104
        %v3603 = vpop.permute.xlu0 %3602
        %3620 = vmatprep.subr.mxu0 0.0
        %3621 = vmatpush1.msra.mxu0 %v3573
        %3622 = vmatprep.subr.mxu0 0.0
        %3623 = vmatpush1.msra.mxu0 %v3575
        %3624 = vmatprep.subr.mxu0 0.0
        %3625 = vmatpush1.msra.mxu0 %v3577
        %3626 = vmatprep.subr.mxu0 0.0
        %3627 = vmatpush1.msra.mxu0 %v3579
        %3628 = vmatprep.subr.mxu0 0.0
        %3629 = vmatpush1.msra.mxu0 %v3581
        %3630 = vmatprep.subr.mxu0 0.0
        %3631 = vmatpush1.msra.mxu0 %v3583
        %3632 = vmatprep.subr.mxu0 0.0
        %3633 = vmatpush1.msra.mxu0 %v3585
        %3634 = vmatprep.subr.mxu0 0.0
        %3635 = vmatpush1.msra.mxu0 %v3587
        %3636 = vmatprep.subr.mxu0 0.0
        %3637 = vmatpush1.msra.mxu0 %v3589
        %3638 = vmatprep.subr.mxu0 0.0
        %3639 = vmatpush1.msra.mxu0 %v3591
        %3640 = vmatprep.subr.mxu0 0.0
        %3641 = vmatpush1.msra.mxu0 %v3593
        %3642 = vmatprep.subr.mxu0 0.0
        %3643 = vmatpush1.msra.mxu0 %v3595
        %3644 = vmatprep.subr.mxu0 0.0
        %3645 = vmatpush1.msra.mxu0 %v3597
        %3646 = vmatprep.subr.mxu0 0.0
        %3647 = vmatpush1.msra.mxu0 %v3599
        %3648 = vmatprep.subr.mxu0 0.0
        %3649 = vmatpush1.msra.mxu0 %v3601
        %3650 = vmatprep.subr.mxu0 0.0
        %3651 = vmatpush1.msra.mxu0 %v3603
        %3652 = vmatprep.subr.mxu0 0.0
        %3653 = vmatpush1.msra.mxu0 0.0
        %3654 = vmatprep.subr.mxu0 0.0
        %3655 = vmatpush1.msra.mxu0 0.0
        %3656 = vmatprep.subr.mxu0 0.0
        %3657 = vmatpush1.msra.mxu0 0.0
        %3658 = vmatprep.subr.mxu0 0.0
        %3659 = vmatpush1.msra.mxu0 0.0
        %3660 = vmatprep.subr.mxu0 0.0
        %3661 = vmatpush1.msra.mxu0 0.0
        %3662 = vmatprep.subr.mxu0 0.0
        %3663 = vmatpush1.msra.mxu0 0.0
        %3664 = vmatprep.subr.mxu0 0.0
        %3665 = vmatpush1.msra.mxu0 0.0
        %3666 = vmatprep.subr.mxu0 0.0
        %3667 = vmatpush1.msra.mxu0 0.0
        %3668 = vmatprep.subr.mxu0 0.0
        %3669 = vmatpush1.msra.mxu0 0.0
        %3670 = vmatprep.subr.mxu0 0.0
        %3671 = vmatpush1.msra.mxu0 0.0
        %3672 = vmatprep.subr.mxu0 0.0
        %3673 = vmatpush1.msra.mxu0 0.0
        %3674 = vmatprep.subr.mxu0 0.0
        %3675 = vmatpush1.msra.mxu0 0.0
        %3676 = vmatprep.subr.mxu0 0.0
        %3677 = vmatpush1.msra.mxu0 0.0
        %3678 = vmatprep.subr.mxu0 0.0
        %3679 = vmatpush1.msra.mxu0 0.0
        %3680 = vmatprep.subr.mxu0 0.0
        %3681 = vmatpush1.msra.mxu0 0.0
        %3682 = vmatprep.subr.mxu0 0.0
        %3683 = vmatpush1.msra.mxu0 0.0
        %3684 = vmatprep.mubr.f32.mxu0 0.0
        %3685 = vmatmul.mubr.f32.gmra.mrb[0].mxu0 %v3540
        %v3686 = vpop.f32.mrb[0].mxu0
        %v3687 = vadd.f32 0.0, %v3686
        %v3688 = vpop.f32.mrb[0].mxu0
        %3689 = vmatprep.mubr.f32.mxu0 0.0
        %3690 = vmatmul.mubr.f32.gmra.mrb[0].mxu0 %v3541
        %v3691 = vpop.f32.mrb[0].mxu0
        %v3692 = vadd.f32 0.0, %v3691
        %v3693 = vpop.f32.mrb[0].mxu0
        %3694 = vmatprep.mubr.f32.mxu0 0.0
        %3695 = vmatmul.mubr.f32.gmra.mrb[0].mxu0 %v3542
        %v3696 = vpop.f32.mrb[0].mxu0
        %v3697 = vadd.f32 0.0, %v3696
        %v3698 = vpop.f32.mrb[0].mxu0
        %3699 = vmatprep.mubr.f32.mxu0 0.0
        %3700 = vmatmul.mubr.f32.gmra.mrb[0].mxu0 %v3543
        %v3701 = vpop.f32.mrb[0].mxu0
        %v3702 = vadd.f32 0.0, %v3701
        %v3703 = vpop.f32.mrb[0].mxu0
        %3704 = vmatprep.mubr.f32.mxu0 0.0
        %3705 = vmatmul.mubr.f32.gmra.mrb[0].mxu0 %v3544
        %v3706 = vpop.f32.mrb[0].mxu0
        %v3707 = vadd.f32 0.0, %v3706
        %v3708 = vpop.f32.mrb[0].mxu0
        %3709 = vmatprep.mubr.f32.mxu0 0.0
        %3710 = vmatmul.mubr.f32.gmra.mrb[0].mxu0 %v3545
        %v3711 = vpop.f32.mrb[0].mxu0
        %v3712 = vadd.f32 0.0, %v3711
        %v3713 = vpop.f32.mrb[0].mxu0
        %3714 = vmatprep.mubr.f32.mxu0 0.0
        %3715 = vmatmul.mubr.f32.gmra.mrb[0].mxu0 %v3546
        %v3716 = vpop.f32.mrb[0].mxu0
        %v3717 = vadd.f32 0.0, %v3716
        %v3718 = vpop.f32.mrb[0].mxu0
        %3719 = vmatprep.mubr.f32.mxu0 0.0
        %3720 = vmatmul.mubr.f32.gmra.mrb[0].mxu0 %v3547
        %v3721 = vpop.f32.mrb[0].mxu0
        %v3722 = vadd.f32 0.0, %v3721
        %v3723 = vpop.f32.mrb[0].mxu0
        %3724 = vmatprep.mubr.f32.mxu0 0.0
        %3725 = vmatmul.mubr.f32.gmra.mrb[0].mxu0 %v3548
        %v3726 = vpop.f32.mrb[0].mxu0
        %v3727 = vadd.f32 0.0, %v3726
        %v3728 = vpop.f32.mrb[0].mxu0
        %3729 = vmatprep.mubr.f32.mxu0 0.0
        %3730 = vmatmul.mubr.f32.gmra.mrb[0].mxu0 %v3549
        %v3731 = vpop.f32.mrb[0].mxu0
        %v3732 = vadd.f32 0.0, %v3731
        %v3733 = vpop.f32.mrb[0].mxu0
        %3734 = vmatprep.mubr.f32.mxu0 0.0
        %3735 = vmatmul.mubr.f32.gmra.mrb[0].mxu0 %v3550
        %v3736 = vpop.f32.mrb[0].mxu0
        %v3737 = vadd.f32 0.0, %v3736
        %v3738 = vpop.f32.mrb[0].mxu0
        %3739 = vmatprep.mubr.f32.mxu0 0.0
        %3740 = vmatmul.mubr.f32.gmra.mrb[0].mxu0 %v3551
        %v3741 = vpop.f32.mrb[0].mxu0
        %v3742 = vadd.f32 0.0, %v3741
        %v3743 = vpop.f32.mrb[0].mxu0
        %3744 = vmatprep.mubr.f32.mxu0 0.0
        %3745 = vmatmul.mubr.f32.gmra.mrb[0].mxu0 %v3552
        %v3746 = vpop.f32.mrb[0].mxu0
        %v3747 = vadd.f32 0.0, %v3746
        %v3748 = vpop.f32.mrb[0].mxu0
        %3749 = vmatprep.mubr.f32.mxu0 0.0
        %3750 = vmatmul.mubr.f32.gmra.mrb[0].mxu0 %v3553
        %v3751 = vpop.f32.mrb[0].mxu0
        %v3752 = vadd.f32 0.0, %v3751
        %v3753 = vpop.f32.mrb[0].mxu0
        %3754 = vmatprep.mubr.f32.mxu0 0.0
        %3755 = vmatmul.mubr.f32.gmra.mrb[0].mxu0 %v3554
        %v3756 = vpop.f32.mrb[0].mxu0
        %v3757 = vadd.f32 0.0, %v3756
        %v3758 = vpop.f32.mrb[0].mxu0
        %3759 = vmatprep.mubr.f32.mxu0 0.0
        %3760 = vmatmul.mubr.f32.gmra.mrb[0].mxu0 %v3555
        %v3761 = vpop.f32.mrb[0].mxu0
        %v3762 = vadd.f32 0.0, %v3761
        %v3763 = vpop.f32.mrb[0].mxu0
        %3764 = vdwg.mxu0
        %3781 = vrot.lane.b32.xlu0 %v3687, 24
        %v3782 = vpop.permute.xlu0 %3781
        %3783 = vrot.lane.b32.xlu0 %v3692, 24
        %v3784 = vpop.permute.xlu0 %3783
        %3785 = vrot.lane.b32.xlu0 %v3697, 24
        %v3786 = vpop.permute.xlu0 %3785
        %3787 = vrot.lane.b32.xlu0 %v3702, 24
        %v3788 = vpop.permute.xlu0 %3787
        %3789 = vrot.lane.b32.xlu0 %v3707, 24
        %v3790 = vpop.permute.xlu0 %3789
        %3791 = vrot.lane.b32.xlu0 %v3712, 24
        %v3792 = vpop.permute.xlu0 %3791
        %3793 = vrot.lane.b32.xlu0 %v3717, 24
        %v3794 = vpop.permute.xlu0 %3793
        %3795 = vrot.lane.b32.xlu0 %v3722, 24
        %v3796 = vpop.permute.xlu0 %3795
        %3797 = vrot.lane.b32.xlu0 %v3727, 24
        %v3798 = vpop.permute.xlu0 %3797
        %3799 = vrot.lane.b32.xlu0 %v3732, 24
        %v3800 = vpop.permute.xlu0 %3799
        %3801 = vrot.lane.b32.xlu0 %v3737, 24
        %v3802 = vpop.permute.xlu0 %3801
        %3803 = vrot.lane.b32.xlu0 %v3742, 24
        %v3804 = vpop.permute.xlu0 %3803
        %3805 = vrot.lane.b32.xlu0 %v3747, 24
        %v3806 = vpop.permute.xlu0 %3805
        %3807 = vrot.lane.b32.xlu0 %v3752, 24
        %v3808 = vpop.permute.xlu0 %3807
        %3809 = vrot.lane.b32.xlu0 %v3757, 24
        %v3810 = vpop.permute.xlu0 %3809
        %3811 = vrot.lane.b32.xlu0 %v3762, 24
        %v3812 = vpop.permute.xlu0 %3811
        %vm3829 = vcmask 261312
        %3830 = vst.msk [vmem:[%s368] sm:$0xff] %vm3829, %v3782
        %3831 = vst.msk [vmem:[%s368 + $0x8] sm:$0xff] %vm3829, %v3784
        %3832 = vst.msk [vmem:[%s368 + $0x10] sm:$0xff] %vm3829, %v3786
        %3833 = vst.msk [vmem:[%s368 + $0x18] sm:$0xff] %vm3829, %v3788
        %3834 = vst.msk [vmem:[%s368 + $0x20] sm:$0xff] %vm3829, %v3790
        %3835 = vst.msk [vmem:[%s368 + $0x28] sm:$0xff] %vm3829, %v3792
        %3836 = vst.msk [vmem:[%s368 + $0x30] sm:$0xff] %vm3829, %v3794
        %3837 = vst.msk [vmem:[%s368 + $0x38] sm:$0xff] %vm3829, %v3796
        %3838 = vst.msk [vmem:[%s368 + $0x40] sm:$0xff] %vm3829, %v3798
        %3839 = vst.msk [vmem:[%s368 + $0x48] sm:$0xff] %vm3829, %v3800
        %3840 = vst.msk [vmem:[%s368 + $0x50] sm:$0xff] %vm3829, %v3802
        %3841 = vst.msk [vmem:[%s368 + $0x58] sm:$0xff] %vm3829, %v3804
        %3842 = vst.msk [vmem:[%s368 + $0x60] sm:$0xff] %vm3829, %v3806
        %3843 = vst.msk [vmem:[%s368 + $0x68] sm:$0xff] %vm3829, %v3808
        %3844 = vst.msk [vmem:[%s368 + $0x70] sm:$0xff] %vm3829, %v3810
        %3845 = vst.msk [vmem:[%s368 + $0x78] sm:$0xff] %vm3829, %v3812
        %s3846 = smul.u32 16, %s26
        %p3847 = scmp.lt.s32.totalorder %s25, 1
        %s3848 = scalar_select %p3847, %s25, 1
        %p3849 = scmp.lt.s32.totalorder %s3846, 15
        %s3850 = scalar_select %p3849, %s3846, 15
        %s3851 = smul.addr %s3848, 16
        %s3852 = sadd.s32 %s3850, %s3851
        %s3853 = smul.addr %s3852, 8
        %s3854 = scalar_lea.vmem %s8, %s3853
        // Predicated region
        $region65: #{tpu_custom_call.1} parent=51 // pred_check
          %p3855 = pneg %p231
        $region66: #{tpu_custom_call.1} parent=51 // pred_check_branch
          %3857 = sbr.rel (%p3855) target = $region68
        $region67: #{tpu_custom_call.1} parent=51 // pred_region
          %s3858 = smul.u32 16, %s26
        $region68: #{tpu_custom_call.1} parent=51 // pred_fallthru
          _
      $region52: #{tpu_custom_call.1} parent=5 // pred_fallthru
        _
      %p3859 = scmp.le.s32.totalorder 2, %s16
      // Predicated region
      $region69: #{tpu_custom_call.1} parent=5 // pred_check
        %p3860 = pneg %p3859
      $region70: #{tpu_custom_call.1} parent=5 // pred_check_branch
        %3862 = sbr.rel (%p3860) target = $region72
      $region71: #{tpu_custom_call.1} parent=5 // pred_region
        %s3863 = ssub.s32 %s16, 2
        // Predicated region
        $region73: #{tpu_custom_call.1} parent=71 // pred_check
          %p3864 = pneg %p237
        $region74: #{tpu_custom_call.1} parent=71 // pred_check_branch
          %3866 = sbr.rel (%p3864) target = $region76
        $region75: #{tpu_custom_call.1} parent=71 // pred_region
          %s3867 = smul.u32 16, %s28
          %p3868 = scmp.lt.s32.totalorder %s27, 1
          %s3869 = scalar_select %p3868, %s27, 1
          %p3870 = scmp.lt.s32.totalorder %s3867, 15
          %s3871 = scalar_select %p3870, %s3867, 15
          %s3872 = smul.addr %s3869, 16
          %s3873 = sadd.s32 %s3871, %s3872
          %s3874 = smul.addr %s3873, 8
          %s3875 = scalar_lea.vmem %s8, %s3874
        $region76: #{tpu_custom_call.1} parent=71 // pred_fallthru
          _
      $region72: #{tpu_custom_call.1} parent=5 // pred_fallthru
        _
    $region6: #{tpu_custom_call.1} parent=1 // loop_footer
      %s20 = sadd.s32 1, %s16
    $region7: #{tpu_custom_call.1} parent=1 // loop_footer_branch
      %15 = sbr.rel target = $region3
    $region8: #{tpu_custom_call.1} parent=1 // loop_exit
      _
    %3876 = vsyncpa [#allocation5], 1
    %s3877 = scalar_lea.sflag [#allocation5], 1
    %3878 = vsyncpa %s3877, 1
    %3879 = vsyncpa [#allocation7], 1

</llo_original>
